<compile_context>
chip_gen: v6e
topology: v6e:2x2x1
jax: 0.10.0
libtpu: 0.0.40
codegen_flags: <defaults>
</compile_context>

<pallas_src>
import functools
from dataclasses import dataclass

import jax
import jax.numpy as jnp
from jax import lax
from jax.experimental import pallas as pl
from jax.experimental.pallas import tpu as pltpu


# ----------------------------------------------------------------------------- config
@dataclass
class Config:
    vocab_size: int = 50
    text_len: int = 8
    cand_len: int = 4
    fact_len: int = 3
    max_episodic: int = 2
    q_lstm_dim: int = 64
    s_lstm_dim: int = 64
    o_dim: int = 512      # must equal g_dim (512) for the .view(bs,-1,g_dim) to hold
    l_dim: int = 128      # hard-coded 128 in the torch forward's .view(bs,-1,128)
    g1_dim: int = 256


G_DIM = 512
G_ATTND_DIM = 512
EPS = 1e-5


# ----------------------------------------------------------------------------- helpers
def _spec(shape):
    nd = len(shape)
    return pl.BlockSpec(shape, lambda i, _n=nd: (0,) * _n)


_CPARAMS = pltpu.CompilerParams(dimension_semantics=("arbitrary",))


def _bn(x, relu=False):
    """Training-mode BatchNorm1d (gamma=1, beta=0) over axis 0, f32 math."""
    mean = jnp.mean(x, axis=0, keepdims=True)
    var = jnp.mean((x - mean) ** 2, axis=0, keepdims=True)
    y = (x - mean) * lax.rsqrt(var + EPS)
    if relu:
        y = jnp.maximum(y, 0.0)
    return y


def _lstm_gates(gates, H):
    """Gate layout [i, f, o | g]: one sigmoid over the first 3H, one tanh over last H."""
    sg = jax.nn.sigmoid(gates[:, : 3 * H])
    g = jnp.tanh(gates[:, 3 * H:])
    return sg[:, :H], sg[:, H:2 * H], sg[:, 2 * H:3 * H], g


def _dot(a, b):
    return jnp.dot(a, b, preferred_element_type=jnp.float32)


# ----------------------------------------------------------------------------- kernel L
def _lstm_pool_bn_kernel(gx_ref, mask_ref, whh_ref, o_ref, *, T, H):
    """LSTM recurrence (input projection precomputed) + masked pooling + BatchNorm."""
    B = o_ref.shape[0]
    whh = whh_ref[...]                                     # (H, 4H) f32
    h = jnp.zeros((B, H), jnp.float32)
    c = jnp.zeros((B, H), jnp.float32)
    pooled = jnp.zeros((B, H), jnp.float32)
    for t in range(T):                                     # static unroll, T=8
        gates = gx_ref[t] + _dot(h, whh)
        i_, f_, o_, g_ = _lstm_gates(gates, H)
        c = f_ * c + i_ * g_
        h = o_ * jnp.tanh(c)
        pooled = pooled + mask_ref[:, t:t + 1] * h         # masked bmm pooling
    o_ref[...] = _bn(pooled)                               # exp_bn / fact_bn


def pallas_lstm_pool_bn(gx_tbg, mask_bt, whh):
    T, B, G4 = gx_tbg.shape
    H = G4 // 4
    return pl.pallas_call(
        functools.partial(_lstm_pool_bn_kernel, T=T, H=H),
        grid=(1,),
        in_specs=[_spec((T, B, G4)), _spec((B, T)), _spec((H, G4))],
        out_specs=_spec((B, H)),
        out_shape=jax.ShapeDtypeStruct((B, H), jnp.float32),
        compiler_params=_CPARAMS,
    )(gx_tbg, mask_bt, whh)


def _lstm_input_proj(x_btd, wih, b):
    """Hoisted LSTM input projection, done once for all timesteps (wrapper-side XLA)."""
    x_tbd = jnp.transpose(x_btd, (1, 0, 2))
    gx = jnp.einsum("tbd,dg->tbg", x_tbd, wih, preferred_element_type=jnp.float32)
    return gx + b                                          # (T, B, 4H) f32


# ----------------------------------------------------------------------------- kernel V
def _visual_kernel(pat_ref, pool_ref, fe_ref, loc_ref,
                   vw_ref, vb_ref, wgg_ref, bgg_ref, wgq_ref, bgq_ref, wfc_ref, bfc_ref,
                   wfl_ref, bfl_ref, wlo_ref, blo_ref,
                   fglobal_ref, flocal_ref, floc_ref, *, B, P):
    # ---- conv-as-matmul (whole + all candidate crops merged), ReLU ---------
    y = _dot(pat_ref[...], vw_ref[...]) + vb_ref[...]
    y = jnp.maximum(y, 0.0)                                         # (B*P + NC*P, G) f32

    # ---- image attention over the whole-image feature map ------------------
    gq = _dot(fe_ref[...], wgq_ref[...]) + bgq_ref[...]             # (B, A)
    gg = _dot(y[:B * P, :], wgg_ref[...]) + bgg_ref[...]            # (B*P, A)
    wfc = wfc_ref[...]                                              # (1, A) f32
    for b in range(B):                                              # B=2 unrolled
        fg_b = y[b * P:(b + 1) * P, :]                              # (P, G)
        a = jnp.tanh(gg[b * P:(b + 1) * P, :] + gq[b:b + 1, :])     # (P, A)
        logits = jnp.sum(a * wfc, axis=1, keepdims=True) + bfc_ref[...]      # (P, 1)
        logits = logits - jnp.max(logits, axis=0, keepdims=True)
        w = jnp.exp(logits)
        w = w / jnp.sum(w, axis=0, keepdims=True)                            # softmax over P
        fglobal_ref[b:b + 1, :] = jnp.sum(fg_b * w, axis=0, keepdims=True)   # (1, G)

    # ---- candidate visual: avg_pool2d as one matmul + Linear + BN + ReLU ----
    pooled = _dot(pool_ref[...], y)                                 # (NC, G)
    fl = _dot(pooled, wfl_ref[...]) + bfl_ref[...]
    flocal_ref[...] = _bn(fl, relu=True)

    # ---- candidate location: Linear + BN + ReLU ----------------------------
    lo = _dot(loc_ref[...], wlo_ref[...]) + blo_ref[...]
    floc_ref[...] = _bn(lo, relu=True)


def pallas_visual(pat, pool_mat, f_expression, loc, p, *, B, P):
    NC = pool_mat.shape[0]
    out_shapes = (jax.ShapeDtypeStruct((B, G_DIM), jnp.float32),
                  jax.ShapeDtypeStruct((NC, p["w_flocal"].shape[1]), jnp.float32),
                  jax.ShapeDtypeStruct((NC, p["w_floc"].shape[1]), jnp.float32))
    args = (pat, pool_mat, f_expression, loc,
            p["vgg_w"], p["vgg_b"], p["wgg"], p["bgg"], p["wgq"], p["bgq"],
            p["wfc"], p["bfc"], p["w_flocal"], p["b_flocal"], p["w_floc"], p["b_floc"])
    return pl.pallas_call(
        functools.partial(_visual_kernel, B=B, P=P),
        grid=(1,),
        in_specs=[_spec(a.shape) for a in args],
        out_specs=tuple(_spec(s.shape) for s in out_shapes),
        out_shape=out_shapes,
        compiler_params=_CPARAMS,
    )(*args)


# ----------------------------------------------------------------------------- kernel E
def _episodic_final_kernel(facts_ref, fexp_ref, fe_ref, fg_ref, fl_ref, flo_ref,
                           fmask_ref, ffmask_ref, cmask_ref,
                           wg1_ref, bg1_ref, wg2_ref, bg2_ref,
                           mn_wih_ref, mn_whh_ref, mn_b_ref,
                           mc_w_ref, mc_b_ref, wfin_ref, bfin_ref,
                           scores_ref, *, F, H, E, B, C):
    fexp = fexp_ref[...]                                   # (BC, H) expanded expression
    facts = [facts_ref[i] for i in range(F)]               # F x (BC, H), resident in VMEM
    BC = fexp.shape[0]

    # hoisted mn-LSTMCell input projection (facts fixed across facts-loop and episodes)
    facts_all = jnp.concatenate(facts, axis=0)             # (F*BC, H)
    gx_all = _dot(facts_all, mn_wih_ref[...]) + mn_b_ref[...]
    gx = [gx_all[i * BC:(i + 1) * BC, :] for i in range(F)]

    mn_whh = mn_whh_ref[...]
    mc_w, mc_b = mc_w_ref[...], mc_b_ref[...]
    wg1, bg1 = wg1_ref[...], bg1_ref[...]
    wg2, bg2 = wg2_ref[...], bg2_ref[...]                  # wg2 as (1, G1) row -> VPU reduce
    fmask, ffm = fmask_ref[...], ffmask_ref[...]

    m = fexp
    for _ in range(E):                                     # both episodes fused
        # ----- attention gate Z: one batched matmul over all F facts --------
        zrows = [jnp.concatenate([fi * fexp, fi * m, jnp.abs(fi - fexp), jnp.abs(fi - m)],
                                 axis=1) for fi in facts]
        z = jnp.concatenate(zrows, axis=0)                                   # (F*BC, 4H)
        t = jnp.tanh(_dot(z, wg1) + bg1)
        zcol = jnp.sum(t * wg2, axis=1, keepdims=True) + bg2                 # (F*BC, 1)
        Z = jnp.concatenate([zcol[i * BC:(i + 1) * BC, :] for i in range(F)], axis=1)
        Z = jnp.where(fmask == 0, -9999999.0, Z)                             # masked_fill_
        Z = Z - jnp.max(Z, axis=1, keepdims=True)
        ew = jnp.exp(Z)
        w = ew / jnp.sum(ew, axis=1, keepdims=True)                          # softmax over F

        # ----- gated LSTMCell scan over facts + ff_mask pooling --------------
        h_pre = jnp.zeros((BC, H), jnp.float32)
        c_pre = jnp.zeros((BC, H), jnp.float32)
        h_acc = jnp.zeros((BC, H), jnp.float32)
        c_acc = jnp.zeros((BC, H), jnp.float32)
        for i in range(F):
            gates = gx[i] + _dot(h_pre, mn_whh)
            i_, f_, o_, g_ = _lstm_gates(gates, H)
            c = f_ * c_pre + i_ * g_
            h = o_ * jnp.tanh(c)
            wi = w[:, i:i + 1]
            h_pre = wi * h + (1.0 - wi) * h_pre
            c_pre = c
            h_acc = h_acc + ffm[:, i:i + 1] * h_pre
            c_acc = c_acc + ffm[:, i:i + 1] * c_pre

        # ----- m_Cell: input=h_acc, hidden=m, cell=c_acc; stacked [x,h] weight
        xh = jnp.concatenate([h_acc, m], axis=1)                             # (BC, 2H)
        gates = _dot(xh, mc_w) + mc_b
        i_, f_, o_, g_ = _lstm_gates(gates, H)
        c_new = f_ * c_acc + i_ * g_
        m = o_ * jnp.tanh(c_new)

    # ----- final projection + masked score softmax ---------------------------
    cat = jnp.concatenate([m, fg_ref[...], fl_ref[...], flo_ref[...]], axis=1)   # (BC, 1216)
    f = _dot(cat, wfin_ref[...]) + bfin_ref[...]                                 # (BC, D)
    fe = fe_ref[...]                                                             # (B, D)
    S = _dot(fe, f.T)                                                            # (B, BC)
    cmask = cmask_ref[...]
    for b in range(B):                                                           # B=2 unrolled
        s_b = S[b:b + 1, b * C:(b + 1) * C]                                      # (1, C)
        s_b = jnp.where(cmask[b:b + 1, :] == 0, -9999999.0, s_b)
        s_b = s_b - jnp.max(s_b, axis=1, keepdims=True)
        e = jnp.exp(s_b)
        scores_ref[b:b + 1, :] = e / jnp.sum(e, axis=1, keepdims=True)


def pallas_episodic_final(facts_fbh, f_expr_exp, f_expression, f_global_exp,
                          f_local, f_location, fmask, ffmask, c_mask, p, *, E):
    F, NC, H = facts_fbh.shape
    B, C = c_mask.shape
    args = (facts_fbh, f_expr_exp, f_expression, f_global_exp, f_local, f_location,
            fmask, ffmask, c_mask,
            p["wg1"], p["bg1"], p["wg2"], p["bg2"],
            p["mn_wih"], p["mn_whh"], p["mn_b"],
            p["mc_w"], p["mc_b"], p["w_final"], p["b_final"])
    return pl.pallas_call(
        functools.partial(_episodic_final_kernel, F=F, H=H, E=E, B=B, C=C),
        grid=(1,),
        in_specs=[_spec(a.shape) for a in args],
        out_specs=_spec((B, C)),
        out_shape=jax.ShapeDtypeStruct((B, C), jnp.float32),
        compiler_params=_CPARAMS,
    )(*args)


# ----------------------------------------------------------------------------- VGG stand-in glue
def _im2col3x3(x_nchw):
    """3x3, pad=1, stride=1 im2col (NCHW -> (N*H*W, 9*C)), wrapper-side XLA glue."""
    x = jnp.transpose(x_nchw, (0, 2, 3, 1))                # NCHW -> NHWC
    N, Hh, Ww, Cc = x.shape
    xp = jnp.pad(x, ((0, 0), (1, 1), (1, 1), (0, 0)))
    patches = [xp[:, dh:dh + Hh, dw:dw + Ww, :] for dh in range(3) for dw in range(3)]
    return jnp.concatenate(patches, axis=-1).reshape(N * Hh * Ww, 9 * Cc)


# ----------------------------------------------------------------------------- params
def init_params(key, cfg: Config):
    keys = iter(jax.random.split(key, 40))

    def nrm(shape, scale=0.1):
        return scale * jax.random.normal(next(keys), shape, dtype=jnp.float32)

    D, H = cfg.q_lstm_dim, cfg.s_lstm_dim
    G, A = G_DIM, G_ATTND_DIM
    p = {}
    p["embed"] = nrm((cfg.vocab_size, D))
    # LSTM weights stored pre-transposed, gate layout [i, f, o | g]; all weights f32.
    p["exp_wih"], p["exp_whh"] = nrm((D, 4 * D)), nrm((D, 4 * D))
    p["exp_b"] = nrm((1, 4 * D), 0.01)
    p["fact_wih"], p["fact_whh"] = nrm((D, 4 * H)), nrm((H, 4 * H))
    p["fact_b"] = nrm((1, 4 * H), 0.01)
    p["vgg_w"], p["vgg_b"] = nrm((27, G)), jnp.zeros((1, G), jnp.float32)
    p["wgg"], p["bgg"] = nrm((G, A)), jnp.zeros((1, A), jnp.float32)
    p["wgq"], p["bgq"] = nrm((D, A)), jnp.zeros((1, A), jnp.float32)
    p["wfc"], p["bfc"] = nrm((1, A)), jnp.zeros((1, 1), jnp.float32)            # g_fc (N=1) as VPU reduce
    p["w_flocal"], p["b_flocal"] = nrm((G, cfg.o_dim)), jnp.zeros((1, cfg.o_dim), jnp.float32)
    p["w_floc"], p["b_floc"] = nrm((5, cfg.l_dim)), jnp.zeros((1, cfg.l_dim), jnp.float32)
    p["wg1"], p["bg1"] = nrm((4 * H, cfg.g1_dim)), jnp.zeros((1, cfg.g1_dim), jnp.float32)
    p["wg2"], p["bg2"] = nrm((1, cfg.g1_dim)), jnp.zeros((1, 1), jnp.float32)   # g2 (N=1) as VPU reduce
    p["mn_wih"], p["mn_whh"] = nrm((H, 4 * H)), nrm((H, 4 * H))
    p["mn_b"] = nrm((1, 4 * H), 0.01)
    p["mc_w"] = nrm((2 * H, 4 * H))                                             # stacked [W_ih ; W_hh]
    p["mc_b"] = nrm((1, 4 * H), 0.01)
    fin = G + H + cfg.o_dim + cfg.l_dim
    p["w_final"], p["b_final"] = nrm((fin, D)), jnp.zeros((1, D), jnp.float32)
    return p


# ----------------------------------------------------------------------------- forward
def basenet_forward(p, cfg: Config, whole, expression, e_mask, locals_, locations,
                    facts, mask, f_mask, ff_mask, c_mask):
    B = expression.shape[0]
    D, H, G = cfg.q_lstm_dim, cfg.s_lstm_dim, G_DIM
    C, F, T = cfg.cand_len, cfg.fact_len, cfg.text_len
    NC = B * C

    # --- expression encoding: embed -> (dropout = identity) -> LSTM+pool+BN ---
    emb_e = jnp.take(p["embed"], expression, axis=0)                  # (B, T, D)
    gx_e = _lstm_input_proj(emb_e, p["exp_wih"], p["exp_b"])          # hoisted input proj
    f_expression = pallas_lstm_pool_bn(gx_e, e_mask.astype(jnp.float32), p["exp_whh"])

    # --- fact encoding ---------------------------------------------------------
    emb_f = jnp.take(p["embed"], facts, axis=0).reshape(-1, T, D)     # (B*C*F, T, D)
    gx_f = _lstm_input_proj(emb_f, p["fact_wih"], p["fact_b"])
    f_facts = pallas_lstm_pool_bn(gx_f, mask.reshape(-1, T).astype(jnp.float32),
                                  p["fact_whh"])                      # (B*C*F, H)

    # --- fused visual kernel: conv + attention + f_local + f_location ---------
    hh, ww = whole.shape[2], whole.shape[3]
    P = hh * ww
    pat = jnp.concatenate(
        [_im2col3x3(whole), _im2col3x3(locals_.reshape(-1, 3, hh, ww))],
        axis=0).astype(jnp.float32)                                   # merged im2col (B*P + NC*P, 27)
    rows = jnp.arange(NC)[:, None]
    cols = jnp.arange(pat.shape[0])[None, :]
    pool_mat = jnp.where((cols >= B * P + rows * P) & (cols < B * P + (rows + 1) * P),
                         1.0 / P, 0.0).astype(jnp.float32)            # avg_pool2d(7,7) as matmul
    f_global, f_local, f_location = pallas_visual(
        pat, pool_mat, f_expression, locations.reshape(-1, 5).astype(jnp.float32), p, B=B, P=P)

    # --- fused episodic memory (all episodes) + final linear + score ----------
    facts_fbh = jnp.transpose(f_facts.reshape(NC, F, H), (1, 0, 2))   # (F, NC, H)
    f_expr_exp = jnp.broadcast_to(f_expression[:, None, :], (B, C, D)).reshape(NC, D)
    f_global_exp = jnp.broadcast_to(f_global[:, None, :], (B, C, G)).reshape(NC, G)
    scores = pallas_episodic_final(
        facts_fbh, f_expr_exp, f_expression, f_global_exp, f_local, f_location,
        f_mask.reshape(NC, F).astype(jnp.float32),
        ff_mask.reshape(NC, F).astype(jnp.float32),
        c_mask.reshape(B, C).astype(jnp.float32), p, E=cfg.max_episodic)
    return scores


# ----------------------------------------------------------------------------- main
if __name__ == "__main__":
    cfg = Config()
    key = jax.random.PRNGKey(0)
    kp, ki = jax.random.split(key)
    params = init_params(kp, cfg)
    ks = jax.random.split(ki, 8)

    B = 2
    whole = jax.random.normal(ks[0], (B, 3, 7, 7), jnp.float32)
    expression = jax.random.randint(ks[1], (B, cfg.text_len), 0, cfg.vocab_size)
    lengths = jnp.array([5, cfg.text_len])
    e_mask = (jnp.arange(cfg.text_len)[None, :] < lengths[:, None]).astype(jnp.float32)
    locals_ = jax.random.normal(ks[2], (B, cfg.cand_len * 3, 7, 7), jnp.float32)
    locations = jax.random.normal(ks[3], (B, cfg.cand_len, 5), jnp.float32)
    facts = jax.random.randint(ks[4], (B, cfg.cand_len, cfg.fact_len, cfg.text_len),
                               0, cfg.vocab_size)
    mask = (jax.random.uniform(ks[5], facts.shape) > 0.3).astype(jnp.float32)
    f_mask = jnp.ones((B, cfg.cand_len, cfg.fact_len), jnp.float32).at[:, :, -1].set(0.0)
    ff_mask = jnp.zeros((B, cfg.cand_len, cfg.fact_len), jnp.float32).at[:, :, 1].set(1.0)
    c_mask = jnp.ones((B, cfg.cand_len), jnp.float32).at[0, -1].set(0.0)

    fwd = jax.jit(lambda *a: basenet_forward(params, cfg, *a))
    scores = fwd(whole, expression, e_mask, locals_, locations,
                 facts, mask, f_mask, ff_mask, c_mask)
    scores = jax.block_until_ready(scores)
    assert scores.shape == (B, cfg.cand_len)
    assert bool(jnp.all(jnp.isfinite(scores)))
    print("KERNEL_OK")
</pallas_src>

<mosaic_0001>
module attributes {stable_mosaic.version = 11 : i64} {
  func.func @_visual_kernel(%arg0: i32, %arg1: memref<490x27xf32, #tpu.memory_space<vmem>>, %arg2: memref<8x490xf32, #tpu.memory_space<vmem>>, %arg3: memref<2x64xf32, #tpu.memory_space<vmem>>, %arg4: memref<8x5xf32, #tpu.memory_space<vmem>>, %arg5: memref<27x512xf32, #tpu.memory_space<vmem>>, %arg6: memref<1x512xf32, #tpu.memory_space<vmem>>, %arg7: memref<512x512xf32, #tpu.memory_space<vmem>>, %arg8: memref<1x512xf32, #tpu.memory_space<vmem>>, %arg9: memref<64x512xf32, #tpu.memory_space<vmem>>, %arg10: memref<1x512xf32, #tpu.memory_space<vmem>>, %arg11: memref<1x512xf32, #tpu.memory_space<vmem>>, %arg12: memref<1x1xf32, #tpu.memory_space<vmem>>, %arg13: memref<512x512xf32, #tpu.memory_space<vmem>>, %arg14: memref<1x512xf32, #tpu.memory_space<vmem>>, %arg15: memref<5x128xf32, #tpu.memory_space<vmem>>, %arg16: memref<1x128xf32, #tpu.memory_space<vmem>>, %arg17: memref<2x512xf32, #tpu.memory_space<vmem>>, %arg18: memref<8x512xf32, #tpu.memory_space<vmem>>, %arg19: memref<8x128xf32, #tpu.memory_space<vmem>>) attributes {dimension_semantics = [#tpu.dimension_semantics<arbitrary>], iteration_bounds = array<i64: 1>, scalar_prefetch = 0 : i64, scratch_operands = 0 : i64, tpu.core_type = #tpu.core_type<tc>, window_params = [{pipeline_mode = #tpu.pipeline_mode<synchronous>, transform_indices = @transform_0, window_bounds = array<i64: 490, 27>}, {pipeline_mode = #tpu.pipeline_mode<synchronous>, transform_indices = @transform_1, window_bounds = array<i64: 8, 490>}, {pipeline_mode = #tpu.pipeline_mode<synchronous>, transform_indices = @transform_2, window_bounds = array<i64: 2, 64>}, {pipeline_mode = #tpu.pipeline_mode<synchronous>, transform_indices = @transform_3, window_bounds = array<i64: 8, 5>}, {pipeline_mode = #tpu.pipeline_mode<synchronous>, transform_indices = @transform_4, window_bounds = array<i64: 27, 512>}, {pipeline_mode = #tpu.pipeline_mode<synchronous>, transform_indices = @transform_5, window_bounds = array<i64: 1, 512>}, {pipeline_mode = #tpu.pipeline_mode<synchronous>, transform_indices = @transform_6, window_bounds = array<i64: 512, 512>}, {pipeline_mode = #tpu.pipeline_mode<synchronous>, transform_indices = @transform_7, window_bounds = array<i64: 1, 512>}, {pipeline_mode = #tpu.pipeline_mode<synchronous>, transform_indices = @transform_8, window_bounds = array<i64: 64, 512>}, {pipeline_mode = #tpu.pipeline_mode<synchronous>, transform_indices = @transform_9, window_bounds = array<i64: 1, 512>}, {pipeline_mode = #tpu.pipeline_mode<synchronous>, transform_indices = @transform_10, window_bounds = array<i64: 1, 512>}, {pipeline_mode = #tpu.pipeline_mode<synchronous>, transform_indices = @transform_11, window_bounds = array<i64: 1, 1>}, {pipeline_mode = #tpu.pipeline_mode<synchronous>, transform_indices = @transform_12, window_bounds = array<i64: 512, 512>}, {pipeline_mode = #tpu.pipeline_mode<synchronous>, transform_indices = @transform_13, window_bounds = array<i64: 1, 512>}, {pipeline_mode = #tpu.pipeline_mode<synchronous>, transform_indices = @transform_14, window_bounds = array<i64: 5, 128>}, {pipeline_mode = #tpu.pipeline_mode<synchronous>, transform_indices = @transform_15, window_bounds = array<i64: 1, 128>}, {pipeline_mode = #tpu.pipeline_mode<synchronous>, transform_indices = @transform_16, window_bounds = array<i64: 2, 512>}, {pipeline_mode = #tpu.pipeline_mode<synchronous>, transform_indices = @transform_17, window_bounds = array<i64: 8, 512>}, {pipeline_mode = #tpu.pipeline_mode<synchronous>, transform_indices = @transform_18, window_bounds = array<i64: 8, 128>}]} {
    %c0 = arith.constant 0 : index
    %c0_0 = arith.constant 0 : index
    %0 = vector.load %arg1[%c0, %c0_0] : memref<490x27xf32, #tpu.memory_space<vmem>>, vector<490x27xf32>
    %c0_1 = arith.constant 0 : index
    %c0_2 = arith.constant 0 : index
    %1 = vector.load %arg5[%c0_1, %c0_2] : memref<27x512xf32, #tpu.memory_space<vmem>>, vector<27x512xf32>
    %cst = arith.constant dense<0.000000e+00> : vector<490x512xf32>
    %2 = tpu.matmul %0, %1, %cst {dimension_numbers = #tpu.dot_dimension_numbers<[1], [0], [0], [1], [0, 0, 1, 1], [], []>} : vector<490x27xf32>, vector<27x512xf32>, vector<490x512xf32> -> vector<490x512xf32>
    %c0_3 = arith.constant 0 : index
    %c0_4 = arith.constant 0 : index
    %3 = vector.load %arg6[%c0_3, %c0_4] : memref<1x512xf32, #tpu.memory_space<vmem>>, vector<1x512xf32>
    %4 = vector.broadcast %3 : vector<1x512xf32> to vector<490x512xf32>
    %5 = arith.addf %2, %4 : vector<490x512xf32>
    %cst_5 = arith.constant 0.000000e+00 : f32
    %6 = vector.broadcast %cst_5 : f32 to vector<490x512xf32>
    %7 = arith.maximumf %5, %6 : vector<490x512xf32>
    %c0_6 = arith.constant 0 : index
    %c0_7 = arith.constant 0 : index
    %8 = vector.load %arg3[%c0_6, %c0_7] : memref<2x64xf32, #tpu.memory_space<vmem>>, vector<2x64xf32>
    %c0_8 = arith.constant 0 : index
    %c0_9 = arith.constant 0 : index
    %9 = vector.load %arg9[%c0_8, %c0_9] : memref<64x512xf32, #tpu.memory_space<vmem>>, vector<64x512xf32>
    %cst_10 = arith.constant dense<0.000000e+00> : vector<2x512xf32>
    %10 = tpu.matmul %8, %9, %cst_10 {dimension_numbers = #tpu.dot_dimension_numbers<[1], [0], [0], [1], [0, 0, 1, 1], [], []>} : vector<2x64xf32>, vector<64x512xf32>, vector<2x512xf32> -> vector<2x512xf32>
    %c0_11 = arith.constant 0 : index
    %c0_12 = arith.constant 0 : index
    %11 = vector.load %arg10[%c0_11, %c0_12] : memref<1x512xf32, #tpu.memory_space<vmem>>, vector<1x512xf32>
    %12 = vector.broadcast %11 : vector<1x512xf32> to vector<2x512xf32>
    %13 = arith.addf %10, %12 : vector<2x512xf32>
    %14 = vector.extract_strided_slice %7 {offsets = [0, 0], sizes = [98, 512], strides = [1, 1]} : vector<490x512xf32> to vector<98x512xf32>
    %c0_13 = arith.constant 0 : index
    %c0_14 = arith.constant 0 : index
    %15 = vector.load %arg7[%c0_13, %c0_14] : memref<512x512xf32, #tpu.memory_space<vmem>>, vector<512x512xf32>
    %cst_15 = arith.constant dense<0.000000e+00> : vector<98x512xf32>
    %16 = tpu.matmul %14, %15, %cst_15 {dimension_numbers = #tpu.dot_dimension_numbers<[1], [0], [0], [1], [0, 0, 1, 1], [], []>} : vector<98x512xf32>, vector<512x512xf32>, vector<98x512xf32> -> vector<98x512xf32>
    %c0_16 = arith.constant 0 : index
    %c0_17 = arith.constant 0 : index
    %17 = vector.load %arg8[%c0_16, %c0_17] : memref<1x512xf32, #tpu.memory_space<vmem>>, vector<1x512xf32>
    %18 = vector.broadcast %17 : vector<1x512xf32> to vector<98x512xf32>
    %19 = arith.addf %16, %18 : vector<98x512xf32>
    %c0_18 = arith.constant 0 : index
    %c0_19 = arith.constant 0 : index
    %20 = vector.load %arg11[%c0_18, %c0_19] : memref<1x512xf32, #tpu.memory_space<vmem>>, vector<1x512xf32>
    %21 = vector.extract_strided_slice %7 {offsets = [0, 0], sizes = [49, 512], strides = [1, 1]} : vector<490x512xf32> to vector<49x512xf32>
    %22 = vector.extract_strided_slice %19 {offsets = [0, 0], sizes = [49, 512], strides = [1, 1]} : vector<98x512xf32> to vector<49x512xf32>
    %23 = vector.extract_strided_slice %13 {offsets = [0, 0], sizes = [1, 512], strides = [1, 1]} : vector<2x512xf32> to vector<1x512xf32>
    %24 = vector.broadcast %23 : vector<1x512xf32> to vector<49x512xf32>
    %25 = arith.addf %22, %24 : vector<49x512xf32>
    %26 = math.tanh %25 : vector<49x512xf32>
    %27 = vector.broadcast %20 : vector<1x512xf32> to vector<49x512xf32>
    %28 = arith.mulf %26, %27 : vector<49x512xf32>
    %cst_20 = arith.constant dense<0.000000e+00> : vector<49xf32>
    %29 = vector.multi_reduction <add>, %28, %cst_20 [1] : vector<49x512xf32> to vector<49xf32>
    %30 = vector.shape_cast %29 : vector<49xf32> to vector<49x1xf32>
    %c0_21 = arith.constant 0 : index
    %c0_22 = arith.constant 0 : index
    %31 = vector.load %arg12[%c0_21, %c0_22] : memref<1x1xf32, #tpu.memory_space<vmem>>, vector<1x1xf32>
    %32 = vector.broadcast %31 : vector<1x1xf32> to vector<49x1xf32>
    %33 = arith.addf %30, %32 : vector<49x1xf32>
    %cst_23 = arith.constant dense<0xFF800000> : vector<1xf32>
    %34 = vector.multi_reduction <maximumf>, %33, %cst_23 [0] : vector<49x1xf32> to vector<1xf32>
    %35 = vector.shape_cast %34 : vector<1xf32> to vector<1x1xf32>
    %36 = vector.broadcast %35 : vector<1x1xf32> to vector<49x1xf32>
    %37 = arith.subf %33, %36 : vector<49x1xf32>
    %38 = math.exp %37 : vector<49x1xf32>
    %cst_24 = arith.constant dense<0.000000e+00> : vector<1xf32>
    %39 = vector.multi_reduction <add>, %38, %cst_24 [0] : vector<49x1xf32> to vector<1xf32>
    %40 = vector.shape_cast %39 : vector<1xf32> to vector<1x1xf32>
    %41 = vector.broadcast %40 : vector<1x1xf32> to vector<49x1xf32>
    %42 = arith.divf %38, %41 : vector<49x1xf32>
    %43 = vector.broadcast %42 : vector<49x1xf32> to vector<49x512xf32>
    %44 = arith.mulf %21, %43 : vector<49x512xf32>
    %cst_25 = arith.constant dense<0.000000e+00> : vector<512xf32>
    %45 = vector.multi_reduction <add>, %44, %cst_25 [0] : vector<49x512xf32> to vector<512xf32>
    %46 = vector.shape_cast %45 : vector<512xf32> to vector<1x512xf32>
    %c0_26 = arith.constant 0 : index
    %c0_27 = arith.constant 0 : index
    %47 = vector.load %arg17[%c0_26, %c0_27] : memref<2x512xf32, #tpu.memory_space<vmem>>, vector<1x512xf32>
    tpu.vector_store %arg17[%c0_26, %c0_27], %46 {strides = array<i32>} : memref<2x512xf32, #tpu.memory_space<vmem>>, vector<1x512xf32>,
    %48 = vector.extract_strided_slice %7 {offsets = [49, 0], sizes = [49, 512], strides = [1, 1]} : vector<490x512xf32> to vector<49x512xf32>
    %49 = vector.extract_strided_slice %19 {offsets = [49, 0], sizes = [49, 512], strides = [1, 1]} : vector<98x512xf32> to vector<49x512xf32>
    %50 = vector.extract_strided_slice %13 {offsets = [1, 0], sizes = [1, 512], strides = [1, 1]} : vector<2x512xf32> to vector<1x512xf32>
    %51 = vector.broadcast %50 : vector<1x512xf32> to vector<49x512xf32>
    %52 = arith.addf %49, %51 : vector<49x512xf32>
    %53 = math.tanh %52 : vector<49x512xf32>
    %54 = vector.broadcast %20 : vector<1x512xf32> to vector<49x512xf32>
    %55 = arith.mulf %53, %54 : vector<49x512xf32>
    %cst_28 = arith.constant dense<0.000000e+00> : vector<49xf32>
    %56 = vector.multi_reduction <add>, %55, %cst_28 [1] : vector<49x512xf32> to vector<49xf32>
    %57 = vector.shape_cast %56 : vector<49xf32> to vector<49x1xf32>
    %c0_29 = arith.constant 0 : index
    %c0_30 = arith.constant 0 : index
    %58 = vector.load %arg12[%c0_29, %c0_30] : memref<1x1xf32, #tpu.memory_space<vmem>>, vector<1x1xf32>
    %59 = vector.broadcast %58 : vector<1x1xf32> to vector<49x1xf32>
    %60 = arith.addf %57, %59 : vector<49x1xf32>
    %cst_31 = arith.constant dense<0xFF800000> : vector<1xf32>
    %61 = vector.multi_reduction <maximumf>, %60, %cst_31 [0] : vector<49x1xf32> to vector<1xf32>
    %62 = vector.shape_cast %61 : vector<1xf32> to vector<1x1xf32>
    %63 = vector.broadcast %62 : vector<1x1xf32> to vector<49x1xf32>
    %64 = arith.subf %60, %63 : vector<49x1xf32>
    %65 = math.exp %64 : vector<49x1xf32>
    %cst_32 = arith.constant dense<0.000000e+00> : vector<1xf32>
    %66 = vector.multi_reduction <add>, %65, %cst_32 [0] : vector<49x1xf32> to vector<1xf32>
    %67 = vector.shape_cast %66 : vector<1xf32> to vector<1x1xf32>
    %68 = vector.broadcast %67 : vector<1x1xf32> to vector<49x1xf32>
    %69 = arith.divf %65, %68 : vector<49x1xf32>
    %70 = vector.broadcast %69 : vector<49x1xf32> to vector<49x512xf32>
    %71 = arith.mulf %48, %70 : vector<49x512xf32>
    %cst_33 = arith.constant dense<0.000000e+00> : vector<512xf32>
    %72 = vector.multi_reduction <add>, %71, %cst_33 [0] : vector<49x512xf32> to vector<512xf32>
    %73 = vector.shape_cast %72 : vector<512xf32> to vector<1x512xf32>
    %c1 = arith.constant 1 : index
    %c0_34 = arith.constant 0 : index
    %74 = vector.load %arg17[%c1, %c0_34] : memref<2x512xf32, #tpu.memory_space<vmem>>, vector<1x512xf32>
    tpu.vector_store %arg17[%c1, %c0_34], %73 {strides = array<i32>} : memref<2x512xf32, #tpu.memory_space<vmem>>, vector<1x512xf32>,
    %c0_35 = arith.constant 0 : index
    %c0_36 = arith.constant 0 : index
    %75 = vector.load %arg2[%c0_35, %c0_36] : memref<8x490xf32, #tpu.memory_space<vmem>>, vector<8x490xf32>
    %cst_37 = arith.constant dense<0.000000e+00> : vector<8x512xf32>
    %76 = tpu.matmul %75, %7, %cst_37 {dimension_numbers = #tpu.dot_dimension_numbers<[1], [0], [0], [1], [0, 0, 1, 1], [], []>} : vector<8x490xf32>, vector<490x512xf32>, vector<8x512xf32> -> vector<8x512xf32>
    %c0_38 = arith.constant 0 : index
    %c0_39 = arith.constant 0 : index
    %77 = vector.load %arg13[%c0_38, %c0_39] : memref<512x512xf32, #tpu.memory_space<vmem>>, vector<512x512xf32>
    %cst_40 = arith.constant dense<0.000000e+00> : vector<8x512xf32>
    %78 = tpu.matmul %76, %77, %cst_40 {dimension_numbers = #tpu.dot_dimension_numbers<[1], [0], [0], [1], [0, 0, 1, 1], [], []>} : vector<8x512xf32>, vector<512x512xf32>, vector<8x512xf32> -> vector<8x512xf32>
    %c0_41 = arith.constant 0 : index
    %c0_42 = arith.constant 0 : index
    %79 = vector.load %arg14[%c0_41, %c0_42] : memref<1x512xf32, #tpu.memory_space<vmem>>, vector<1x512xf32>
    %80 = vector.broadcast %79 : vector<1x512xf32> to vector<8x512xf32>
    %81 = arith.addf %78, %80 : vector<8x512xf32>
    %cst_43 = arith.constant dense<0.000000e+00> : vector<512xf32>
    %82 = vector.multi_reduction <add>, %81, %cst_43 [0] : vector<8x512xf32> to vector<512xf32>
    %83 = vector.shape_cast %82 : vector<512xf32> to vector<1x512xf32>
    %cst_44 = arith.constant 8.000000e+00 : f32
    %84 = vector.broadcast %cst_44 : f32 to vector<1x512xf32>
    %85 = arith.divf %83, %84 : vector<1x512xf32>
    %86 = vector.broadcast %85 : vector<1x512xf32> to vector<8x512xf32>
    %87 = arith.subf %81, %86 : vector<8x512xf32>
    %88 = arith.mulf %87, %87 : vector<8x512xf32>
    %cst_45 = arith.constant dense<0.000000e+00> : vector<512xf32>
    %89 = vector.multi_reduction <add>, %88, %cst_45 [0] : vector<8x512xf32> to vector<512xf32>
    %90 = vector.shape_cast %89 : vector<512xf32> to vector<1x512xf32>
    %cst_46 = arith.constant 8.000000e+00 : f32
    %91 = vector.broadcast %cst_46 : f32 to vector<1x512xf32>
    %92 = arith.divf %90, %91 : vector<1x512xf32>
    %93 = vector.broadcast %85 : vector<1x512xf32> to vector<8x512xf32>
    %94 = arith.subf %81, %93 : vector<8x512xf32>
    %cst_47 = arith.constant 9.99999974E-6 : f32
    %95 = vector.broadcast %cst_47 : f32 to vector<1x512xf32>
    %96 = arith.addf %92, %95 : vector<1x512xf32>
    %97 = math.rsqrt %96 : vector<1x512xf32>
    %98 = vector.broadcast %97 : vector<1x512xf32> to vector<8x512xf32>
    %99 = arith.mulf %94, %98 : vector<8x512xf32>
    %cst_48 = arith.constant 0.000000e+00 : f32
    %100 = vector.broadcast %cst_48 : f32 to vector<8x512xf32>
    %101 = arith.maximumf %99, %100 : vector<8x512xf32>
    %c0_49 = arith.constant 0 : index
    %c0_50 = arith.constant 0 : index
    %102 = vector.load %arg18[%c0_49, %c0_50] : memref<8x512xf32, #tpu.memory_space<vmem>>, vector<8x512xf32>
    tpu.vector_store %arg18[%c0_49, %c0_50], %101 {strides = array<i32>} : memref<8x512xf32, #tpu.memory_space<vmem>>, vector<8x512xf32>,
    %c0_51 = arith.constant 0 : index
    %c0_52 = arith.constant 0 : index
    %103 = vector.load %arg4[%c0_51, %c0_52] : memref<8x5xf32, #tpu.memory_space<vmem>>, vector<8x5xf32>
    %c0_53 = arith.constant 0 : index
    %c0_54 = arith.constant 0 : index
    %104 = vector.load %arg15[%c0_53, %c0_54] : memref<5x128xf32, #tpu.memory_space<vmem>>, vector<5x128xf32>
    %cst_55 = arith.constant dense<0.000000e+00> : vector<8x128xf32>
    %105 = tpu.matmul %103, %104, %cst_55 {dimension_numbers = #tpu.dot_dimension_numbers<[1], [0], [0], [1], [0, 0, 1, 1], [], []>} : vector<8x5xf32>, vector<5x128xf32>, vector<8x128xf32> -> vector<8x128xf32>
    %c0_56 = arith.constant 0 : index
    %c0_57 = arith.constant 0 : index
    %106 = vector.load %arg16[%c0_56, %c0_57] : memref<1x128xf32, #tpu.memory_space<vmem>>, vector<1x128xf32>
    %107 = vector.broadcast %106 : vector<1x128xf32> to vector<8x128xf32>
    %108 = arith.addf %105, %107 : vector<8x128xf32>
    %cst_58 = arith.constant dense<0.000000e+00> : vector<128xf32>
    %109 = vector.multi_reduction <add>, %108, %cst_58 [0] : vector<8x128xf32> to vector<128xf32>
    %110 = vector.shape_cast %109 : vector<128xf32> to vector<1x128xf32>
    %cst_59 = arith.constant 8.000000e+00 : f32
    %111 = vector.broadcast %cst_59 : f32 to vector<1x128xf32>
    %112 = arith.divf %110, %111 : vector<1x128xf32>
    %113 = vector.broadcast %112 : vector<1x128xf32> to vector<8x128xf32>
    %114 = arith.subf %108, %113 : vector<8x128xf32>
    %115 = arith.mulf %114, %114 : vector<8x128xf32>
    %cst_60 = arith.constant dense<0.000000e+00> : vector<128xf32>
    %116 = vector.multi_reduction <add>, %115, %cst_60 [0] : vector<8x128xf32> to vector<128xf32>
    %117 = vector.shape_cast %116 : vector<128xf32> to vector<1x128xf32>
    %cst_61 = arith.constant 8.000000e+00 : f32
    %118 = vector.broadcast %cst_61 : f32 to vector<1x128xf32>
    %119 = arith.divf %117, %118 : vector<1x128xf32>
    %120 = vector.broadcast %112 : vector<1x128xf32> to vector<8x128xf32>
    %121 = arith.subf %108, %120 : vector<8x128xf32>
    %cst_62 = arith.constant 9.99999974E-6 : f32
    %122 = vector.broadcast %cst_62 : f32 to vector<1x128xf32>
    %123 = arith.addf %119, %122 : vector<1x128xf32>
    %124 = math.rsqrt %123 : vector<1x128xf32>
    %125 = vector.broadcast %124 : vector<1x128xf32> to vector<8x128xf32>
    %126 = arith.mulf %121, %125 : vector<8x128xf32>
    %cst_63 = arith.constant 0.000000e+00 : f32
    %127 = vector.broadcast %cst_63 : f32 to vector<8x128xf32>
    %128 = arith.maximumf %126, %127 : vector<8x128xf32>
    %c0_64 = arith.constant 0 : index
    %c0_65 = arith.constant 0 : index
    %129 = vector.load %arg19[%c0_64, %c0_65] : memref<8x128xf32, #tpu.memory_space<vmem>>, vector<8x128xf32>
    tpu.vector_store %arg19[%c0_64, %c0_65], %128 {strides = array<i32>} : memref<8x128xf32, #tpu.memory_space<vmem>>, vector<8x128xf32>,
    return
  }
  func.func @transform_0(%arg0: i32) -> (i32, i32) {
    %c0_i32 = arith.constant 0 : i32
    %c0_i32_0 = arith.constant 0 : i32
    %c0_i32_1 = arith.constant 0 : i32
    return %c0_i32, %c0_i32_0 : i32, i32
  }
  func.func @transform_1(%arg0: i32) -> (i32, i32) {
    %c0_i32 = arith.constant 0 : i32
    %c0_i32_0 = arith.constant 0 : i32
    %c0_i32_1 = arith.constant 0 : i32
    return %c0_i32, %c0_i32_0 : i32, i32
  }
  func.func @transform_2(%arg0: i32) -> (i32, i32) {
    %c0_i32 = arith.constant 0 : i32
    %c0_i32_0 = arith.constant 0 : i32
    %c0_i32_1 = arith.constant 0 : i32
    return %c0_i32, %c0_i32_0 : i32, i32
  }
  func.func @transform_3(%arg0: i32) -> (i32, i32) {
    %c0_i32 = arith.constant 0 : i32
    %c0_i32_0 = arith.constant 0 : i32
    %c0_i32_1 = arith.constant 0 : i32
    return %c0_i32, %c0_i32_0 : i32, i32
  }
  func.func @transform_4(%arg0: i32) -> (i32, i32) {
    %c0_i32 = arith.constant 0 : i32
    %c0_i32_0 = arith.constant 0 : i32
    %c0_i32_1 = arith.constant 0 : i32
    return %c0_i32, %c0_i32_0 : i32, i32
  }
  func.func @transform_5(%arg0: i32) -> (i32, i32) {
    %c0_i32 = arith.constant 0 : i32
    %c0_i32_0 = arith.constant 0 : i32
    %c0_i32_1 = arith.constant 0 : i32
    return %c0_i32, %c0_i32_0 : i32, i32
  }
  func.func @transform_6(%arg0: i32) -> (i32, i32) {
    %c0_i32 = arith.constant 0 : i32
    %c0_i32_0 = arith.constant 0 : i32
    %c0_i32_1 = arith.constant 0 : i32
    return %c0_i32, %c0_i32_0 : i32, i32
  }
  func.func @transform_7(%arg0: i32) -> (i32, i32) {
    %c0_i32 = arith.constant 0 : i32
    %c0_i32_0 = arith.constant 0 : i32
    %c0_i32_1 = arith.constant 0 : i32
    return %c0_i32, %c0_i32_0 : i32, i32
  }
  func.func @transform_8(%arg0: i32) -> (i32, i32) {
    %c0_i32 = arith.constant 0 : i32
    %c0_i32_0 = arith.constant 0 : i32
    %c0_i32_1 = arith.constant 0 : i32
    return %c0_i32, %c0_i32_0 : i32, i32
  }
  func.func @transform_9(%arg0: i32) -> (i32, i32) {
    %c0_i32 = arith.constant 0 : i32
    %c0_i32_0 = arith.constant 0 : i32
    %c0_i32_1 = arith.constant 0 : i32
    return %c0_i32, %c0_i32_0 : i32, i32
  }
  func.func @transform_10(%arg0: i32) -> (i32, i32) {
    %c0_i32 = arith.constant 0 : i32
    %c0_i32_0 = arith.constant 0 : i32
    %c0_i32_1 = arith.constant 0 : i32
    return %c0_i32, %c0_i32_0 : i32, i32
  }
  func.func @transform_11(%arg0: i32) -> (i32, i32) {
    %c0_i32 = arith.constant 0 : i32
    %c0_i32_0 = arith.constant 0 : i32
    %c0_i32_1 = arith.constant 0 : i32
    return %c0_i32, %c0_i32_0 : i32, i32
  }
  func.func @transform_12(%arg0: i32) -> (i32, i32) {
    %c0_i32 = arith.constant 0 : i32
    %c0_i32_0 = arith.constant 0 : i32
    %c0_i32_1 = arith.constant 0 : i32
    return %c0_i32, %c0_i32_0 : i32, i32
  }
  func.func @transform_13(%arg0: i32) -> (i32, i32) {
    %c0_i32 = arith.constant 0 : i32
    %c0_i32_0 = arith.constant 0 : i32
    %c0_i32_1 = arith.constant 0 : i32
    return %c0_i32, %c0_i32_0 : i32, i32
  }
  func.func @transform_14(%arg0: i32) -> (i32, i32) {
    %c0_i32 = arith.constant 0 : i32
    %c0_i32_0 = arith.constant 0 : i32
    %c0_i32_1 = arith.constant 0 : i32
    return %c0_i32, %c0_i32_0 : i32, i32
  }
  func.func @transform_15(%arg0: i32) -> (i32, i32) {
    %c0_i32 = arith.constant 0 : i32
    %c0_i32_0 = arith.constant 0 : i32
    %c0_i32_1 = arith.constant 0 : i32
    return %c0_i32, %c0_i32_0 : i32, i32
  }
  func.func @transform_16(%arg0: i32) -> (i32, i32) {
    %c0_i32 = arith.constant 0 : i32
    %c0_i32_0 = arith.constant 0 : i32
    %c0_i32_1 = arith.constant 0 : i32
    return %c0_i32, %c0_i32_0 : i32, i32
  }
  func.func @transform_17(%arg0: i32) -> (i32, i32) {
    %c0_i32 = arith.constant 0 : i32
    %c0_i32_0 = arith.constant 0 : i32
    %c0_i32_1 = arith.constant 0 : i32
    return %c0_i32, %c0_i32_0 : i32, i32
  }
  func.func @transform_18(%arg0: i32) -> (i32, i32) {
    %c0_i32 = arith.constant 0 : i32
    %c0_i32_0 = arith.constant 0 : i32
    %c0_i32_1 = arith.constant 0 : i32
    return %c0_i32, %c0_i32_0 : i32, i32
  }
}

module attributes {stable_mosaic.version = 11 : i64} {
  func.func @_lstm_pool_bn_kernel(%arg0: i32, %arg1: memref<8x2x256xf32, #tpu.memory_space<vmem>>, %arg2: memref<2x8xf32, #tpu.memory_space<vmem>>, %arg3: memref<64x256xf32, #tpu.memory_space<vmem>>, %arg4: memref<2x64xf32, #tpu.memory_space<vmem>>) attributes {dimension_semantics = [#tpu.dimension_semantics<arbitrary>], iteration_bounds = array<i64: 1>, scalar_prefetch = 0 : i64, scratch_operands = 0 : i64, tpu.core_type = #tpu.core_type<tc>, window_params = [{pipeline_mode = #tpu.pipeline_mode<synchronous>, transform_indices = @transform_0, window_bounds = array<i64: 8, 2, 256>}, {pipeline_mode = #tpu.pipeline_mode<synchronous>, transform_indices = @transform_1, window_bounds = array<i64: 2, 8>}, {pipeline_mode = #tpu.pipeline_mode<synchronous>, transform_indices = @transform_2, window_bounds = array<i64: 64, 256>}, {pipeline_mode = #tpu.pipeline_mode<synchronous>, transform_indices = @transform_3, window_bounds = array<i64: 2, 64>}]} {
    %c0 = arith.constant 0 : index
    %c0_0 = arith.constant 0 : index
    %0 = vector.load %arg3[%c0, %c0_0] : memref<64x256xf32, #tpu.memory_space<vmem>>, vector<64x256xf32>
    %cst = arith.constant 0.000000e+00 : f32
    %1 = vector.broadcast %cst : f32 to vector<2x64xf32>
    %cst_1 = arith.constant 0.000000e+00 : f32
    %2 = vector.broadcast %cst_1 : f32 to vector<2x64xf32>
    %cst_2 = arith.constant 0.000000e+00 : f32
    %3 = vector.broadcast %cst_2 : f32 to vector<2x64xf32>
    %c0_3 = arith.constant 0 : index
    %c0_4 = arith.constant 0 : index
    %c0_5 = arith.constant 0 : index
    %4 = vector.load %arg1[%c0_3, %c0_4, %c0_5] : memref<8x2x256xf32, #tpu.memory_space<vmem>>, vector<1x2x256xf32>
    %5 = vector.shape_cast %4 : vector<1x2x256xf32> to vector<2x256xf32>
    %cst_6 = arith.constant dense<0.000000e+00> : vector<2x256xf32>
    %6 = tpu.matmul %1, %0, %cst_6 {dimension_numbers = #tpu.dot_dimension_numbers<[1], [0], [0], [1], [0, 0, 1, 1], [], []>} : vector<2x64xf32>, vector<64x256xf32>, vector<2x256xf32> -> vector<2x256xf32>
    %7 = arith.addf %5, %6 : vector<2x256xf32>
    %8 = vector.extract_strided_slice %7 {offsets = [0, 0], sizes = [2, 192], strides = [1, 1]} : vector<2x256xf32> to vector<2x192xf32>
    %9 = arith.negf %8 : vector<2x192xf32>
    %10 = math.exp %9 : vector<2x192xf32>
    %cst_7 = arith.constant 1.000000e+00 : f32
    %11 = vector.broadcast %cst_7 : f32 to vector<2x192xf32>
    %12 = arith.addf %11, %10 : vector<2x192xf32>
    %13 = arith.divf %11, %12 : vector<2x192xf32>
    %14 = vector.extract_strided_slice %7 {offsets = [0, 192], sizes = [2, 64], strides = [1, 1]} : vector<2x256xf32> to vector<2x64xf32>
    %15 = math.tanh %14 : vector<2x64xf32>
    %16 = vector.extract_strided_slice %13 {offsets = [0, 0], sizes = [2, 64], strides = [1, 1]} : vector<2x192xf32> to vector<2x64xf32>
    %17 = vector.extract_strided_slice %13 {offsets = [0, 64], sizes = [2, 64], strides = [1, 1]} : vector<2x192xf32> to vector<2x64xf32>
    %18 = vector.extract_strided_slice %13 {offsets = [0, 128], sizes = [2, 64], strides = [1, 1]} : vector<2x192xf32> to vector<2x64xf32>
    %19 = arith.mulf %17, %2 : vector<2x64xf32>
    %20 = arith.mulf %16, %15 : vector<2x64xf32>
    %21 = arith.addf %19, %20 : vector<2x64xf32>
    %22 = math.tanh %21 : vector<2x64xf32>
    %23 = arith.mulf %18, %22 : vector<2x64xf32>
    %c0_8 = arith.constant 0 : index
    %c0_9 = arith.constant 0 : index
    %24 = vector.load %arg2[%c0_8, %c0_9] : memref<2x8xf32, #tpu.memory_space<vmem>>, vector<2x1xf32>
    %25 = vector.broadcast %24 : vector<2x1xf32> to vector<2x64xf32>
    %26 = arith.mulf %25, %23 : vector<2x64xf32>
    %27 = arith.addf %3, %26 : vector<2x64xf32>
    %c1 = arith.constant 1 : index
    %c0_10 = arith.constant 0 : index
    %c0_11 = arith.constant 0 : index
    %28 = vector.load %arg1[%c1, %c0_10, %c0_11] : memref<8x2x256xf32, #tpu.memory_space<vmem>>, vector<1x2x256xf32>
    %29 = vector.shape_cast %28 : vector<1x2x256xf32> to vector<2x256xf32>
    %cst_12 = arith.constant dense<0.000000e+00> : vector<2x256xf32>
    %30 = tpu.matmul %23, %0, %cst_12 {dimension_numbers = #tpu.dot_dimension_numbers<[1], [0], [0], [1], [0, 0, 1, 1], [], []>} : vector<2x64xf32>, vector<64x256xf32>, vector<2x256xf32> -> vector<2x256xf32>
    %31 = arith.addf %29, %30 : vector<2x256xf32>
    %32 = vector.extract_strided_slice %31 {offsets = [0, 0], sizes = [2, 192], strides = [1, 1]} : vector<2x256xf32> to vector<2x192xf32>
    %33 = arith.negf %32 : vector<2x192xf32>
    %34 = math.exp %33 : vector<2x192xf32>
    %cst_13 = arith.constant 1.000000e+00 : f32
    %35 = vector.broadcast %cst_13 : f32 to vector<2x192xf32>
    %36 = arith.addf %35, %34 : vector<2x192xf32>
    %37 = arith.divf %35, %36 : vector<2x192xf32>
    %38 = vector.extract_strided_slice %31 {offsets = [0, 192], sizes = [2, 64], strides = [1, 1]} : vector<2x256xf32> to vector<2x64xf32>
    %39 = math.tanh %38 : vector<2x64xf32>
    %40 = vector.extract_strided_slice %37 {offsets = [0, 0], sizes = [2, 64], strides = [1, 1]} : vector<2x192xf32> to vector<2x64xf32>
    %41 = vector.extract_strided_slice %37 {offsets = [0, 64], sizes = [2, 64], strides = [1, 1]} : vector<2x192xf32> to vector<2x64xf32>
    %42 = vector.extract_strided_slice %37 {offsets = [0, 128], sizes = [2, 64], strides = [1, 1]} : vector<2x192xf32> to vector<2x64xf32>
    %43 = arith.mulf %41, %21 : vector<2x64xf32>
    %44 = arith.mulf %40, %39 : vector<2x64xf32>
    %45 = arith.addf %43, %44 : vector<2x64xf32>
    %46 = math.tanh %45 : vector<2x64xf32>
    %47 = arith.mulf %42, %46 : vector<2x64xf32>
    %c0_14 = arith.constant 0 : index
    %c1_15 = arith.constant 1 : index
    %48 = vector.load %arg2[%c0_14, %c1_15] : memref<2x8xf32, #tpu.memory_space<vmem>>, vector<2x1xf32>
    %49 = vector.broadcast %48 : vector<2x1xf32> to vector<2x64xf32>
    %50 = arith.mulf %49, %47 : vector<2x64xf32>
    %51 = arith.addf %27, %50 : vector<2x64xf32>
    %c2 = arith.constant 2 : index
    %c0_16 = arith.constant 0 : index
    %c0_17 = arith.constant 0 : index
    %52 = vector.load %arg1[%c2, %c0_16, %c0_17] : memref<8x2x256xf32, #tpu.memory_space<vmem>>, vector<1x2x256xf32>
    %53 = vector.shape_cast %52 : vector<1x2x256xf32> to vector<2x256xf32>
    %cst_18 = arith.constant dense<0.000000e+00> : vector<2x256xf32>
    %54 = tpu.matmul %47, %0, %cst_18 {dimension_numbers = #tpu.dot_dimension_numbers<[1], [0], [0], [1], [0, 0, 1, 1], [], []>} : vector<2x64xf32>, vector<64x256xf32>, vector<2x256xf32> -> vector<2x256xf32>
    %55 = arith.addf %53, %54 : vector<2x256xf32>
    %56 = vector.extract_strided_slice %55 {offsets = [0, 0], sizes = [2, 192], strides = [1, 1]} : vector<2x256xf32> to vector<2x192xf32>
    %57 = arith.negf %56 : vector<2x192xf32>
    %58 = math.exp %57 : vector<2x192xf32>
    %cst_19 = arith.constant 1.000000e+00 : f32
    %59 = vector.broadcast %cst_19 : f32 to vector<2x192xf32>
    %60 = arith.addf %59, %58 : vector<2x192xf32>
    %61 = arith.divf %59, %60 : vector<2x192xf32>
    %62 = vector.extract_strided_slice %55 {offsets = [0, 192], sizes = [2, 64], strides = [1, 1]} : vector<2x256xf32> to vector<2x64xf32>
    %63 = math.tanh %62 : vector<2x64xf32>
    %64 = vector.extract_strided_slice %61 {offsets = [0, 0], sizes = [2, 64], strides = [1, 1]} : vector<2x192xf32> to vector<2x64xf32>
    %65 = vector.extract_strided_slice %61 {offsets = [0, 64], sizes = [2, 64], strides = [1, 1]} : vector<2x192xf32> to vector<2x64xf32>
    %66 = vector.extract_strided_slice %61 {offsets = [0, 128], sizes = [2, 64], strides = [1, 1]} : vector<2x192xf32> to vector<2x64xf32>
    %67 = arith.mulf %65, %45 : vector<2x64xf32>
    %68 = arith.mulf %64, %63 : vector<2x64xf32>
    %69 = arith.addf %67, %68 : vector<2x64xf32>
    %70 = math.tanh %69 : vector<2x64xf32>
    %71 = arith.mulf %66, %70 : vector<2x64xf32>
    %c0_20 = arith.constant 0 : index
    %c2_21 = arith.constant 2 : index
    %72 = vector.load %arg2[%c0_20, %c2_21] : memref<2x8xf32, #tpu.memory_space<vmem>>, vector<2x1xf32>
    %73 = vector.broadcast %72 : vector<2x1xf32> to vector<2x64xf32>
    %74 = arith.mulf %73, %71 : vector<2x64xf32>
    %75 = arith.addf %51, %74 : vector<2x64xf32>
    %c3 = arith.constant 3 : index
    %c0_22 = arith.constant 0 : index
    %c0_23 = arith.constant 0 : index
    %76 = vector.load %arg1[%c3, %c0_22, %c0_23] : memref<8x2x256xf32, #tpu.memory_space<vmem>>, vector<1x2x256xf32>
    %77 = vector.shape_cast %76 : vector<1x2x256xf32> to vector<2x256xf32>
    %cst_24 = arith.constant dense<0.000000e+00> : vector<2x256xf32>
    %78 = tpu.matmul %71, %0, %cst_24 {dimension_numbers = #tpu.dot_dimension_numbers<[1], [0], [0], [1], [0, 0, 1, 1], [], []>} : vector<2x64xf32>, vector<64x256xf32>, vector<2x256xf32> -> vector<2x256xf32>
    %79 = arith.addf %77, %78 : vector<2x256xf32>
    %80 = vector.extract_strided_slice %79 {offsets = [0, 0], sizes = [2, 192], strides = [1, 1]} : vector<2x256xf32> to vector<2x192xf32>
    %81 = arith.negf %80 : vector<2x192xf32>
    %82 = math.exp %81 : vector<2x192xf32>
    %cst_25 = arith.constant 1.000000e+00 : f32
    %83 = vector.broadcast %cst_25 : f32 to vector<2x192xf32>
    %84 = arith.addf %83, %82 : vector<2x192xf32>
    %85 = arith.divf %83, %84 : vector<2x192xf32>
    %86 = vector.extract_strided_slice %79 {offsets = [0, 192], sizes = [2, 64], strides = [1, 1]} : vector<2x256xf32> to vector<2x64xf32>
    %87 = math.tanh %86 : vector<2x64xf32>
    %88 = vector.extract_strided_slice %85 {offsets = [0, 0], sizes = [2, 64], strides = [1, 1]} : vector<2x192xf32> to vector<2x64xf32>
    %89 = vector.extract_strided_slice %85 {offsets = [0, 64], sizes = [2, 64], strides = [1, 1]} : vector<2x192xf32> to vector<2x64xf32>
    %90 = vector.extract_strided_slice %85 {offsets = [0, 128], sizes = [2, 64], strides = [1, 1]} : vector<2x192xf32> to vector<2x64xf32>
    %91 = arith.mulf %89, %69 : vector<2x64xf32>
    %92 = arith.mulf %88, %87 : vector<2x64xf32>
    %93 = arith.addf %91, %92 : vector<2x64xf32>
    %94 = math.tanh %93 : vector<2x64xf32>
    %95 = arith.mulf %90, %94 : vector<2x64xf32>
    %c0_26 = arith.constant 0 : index
    %c3_27 = arith.constant 3 : index
    %96 = vector.load %arg2[%c0_26, %c3_27] : memref<2x8xf32, #tpu.memory_space<vmem>>, vector<2x1xf32>
    %97 = vector.broadcast %96 : vector<2x1xf32> to vector<2x64xf32>
    %98 = arith.mulf %97, %95 : vector<2x64xf32>
    %99 = arith.addf %75, %98 : vector<2x64xf32>
    %c4 = arith.constant 4 : index
    %c0_28 = arith.constant 0 : index
    %c0_29 = arith.constant 0 : index
    %100 = vector.load %arg1[%c4, %c0_28, %c0_29] : memref<8x2x256xf32, #tpu.memory_space<vmem>>, vector<1x2x256xf32>
    %101 = vector.shape_cast %100 : vector<1x2x256xf32> to vector<2x256xf32>
    %cst_30 = arith.constant dense<0.000000e+00> : vector<2x256xf32>
    %102 = tpu.matmul %95, %0, %cst_30 {dimension_numbers = #tpu.dot_dimension_numbers<[1], [0], [0], [1], [0, 0, 1, 1], [], []>} : vector<2x64xf32>, vector<64x256xf32>, vector<2x256xf32> -> vector<2x256xf32>
    %103 = arith.addf %101, %102 : vector<2x256xf32>
    %104 = vector.extract_strided_slice %103 {offsets = [0, 0], sizes = [2, 192], strides = [1, 1]} : vector<2x256xf32> to vector<2x192xf32>
    %105 = arith.negf %104 : vector<2x192xf32>
    %106 = math.exp %105 : vector<2x192xf32>
    %cst_31 = arith.constant 1.000000e+00 : f32
    %107 = vector.broadcast %cst_31 : f32 to vector<2x192xf32>
    %108 = arith.addf %107, %106 : vector<2x192xf32>
    %109 = arith.divf %107, %108 : vector<2x192xf32>
    %110 = vector.extract_strided_slice %103 {offsets = [0, 192], sizes = [2, 64], strides = [1, 1]} : vector<2x256xf32> to vector<2x64xf32>
    %111 = math.tanh %110 : vector<2x64xf32>
    %112 = vector.extract_strided_slice %109 {offsets = [0, 0], sizes = [2, 64], strides = [1, 1]} : vector<2x192xf32> to vector<2x64xf32>
    %113 = vector.extract_strided_slice %109 {offsets = [0, 64], sizes = [2, 64], strides = [1, 1]} : vector<2x192xf32> to vector<2x64xf32>
    %114 = vector.extract_strided_slice %109 {offsets = [0, 128], sizes = [2, 64], strides = [1, 1]} : vector<2x192xf32> to vector<2x64xf32>
    %115 = arith.mulf %113, %93 : vector<2x64xf32>
    %116 = arith.mulf %112, %111 : vector<2x64xf32>
    %117 = arith.addf %115, %116 : vector<2x64xf32>
    %118 = math.tanh %117 : vector<2x64xf32>
    %119 = arith.mulf %114, %118 : vector<2x64xf32>
    %c0_32 = arith.constant 0 : index
    %c4_33 = arith.constant 4 : index
    %120 = vector.load %arg2[%c0_32, %c4_33] : memref<2x8xf32, #tpu.memory_space<vmem>>, vector<2x1xf32>
    %121 = vector.broadcast %120 : vector<2x1xf32> to vector<2x64xf32>
    %122 = arith.mulf %121, %119 : vector<2x64xf32>
    %123 = arith.addf %99, %122 : vector<2x64xf32>
    %c5 = arith.constant 5 : index
    %c0_34 = arith.constant 0 : index
    %c0_35 = arith.constant 0 : index
    %124 = vector.load %arg1[%c5, %c0_34, %c0_35] : memref<8x2x256xf32, #tpu.memory_space<vmem>>, vector<1x2x256xf32>
    %125 = vector.shape_cast %124 : vector<1x2x256xf32> to vector<2x256xf32>
    %cst_36 = arith.constant dense<0.000000e+00> : vector<2x256xf32>
    %126 = tpu.matmul %119, %0, %cst_36 {dimension_numbers = #tpu.dot_dimension_numbers<[1], [0], [0], [1], [0, 0, 1, 1], [], []>} : vector<2x64xf32>, vector<64x256xf32>, vector<2x256xf32> -> vector<2x256xf32>
    %127 = arith.addf %125, %126 : vector<2x256xf32>
    %128 = vector.extract_strided_slice %127 {offsets = [0, 0], sizes = [2, 192], strides = [1, 1]} : vector<2x256xf32> to vector<2x192xf32>
    %129 = arith.negf %128 : vector<2x192xf32>
    %130 = math.exp %129 : vector<2x192xf32>
    %cst_37 = arith.constant 1.000000e+00 : f32
    %131 = vector.broadcast %cst_37 : f32 to vector<2x192xf32>
    %132 = arith.addf %131, %130 : vector<2x192xf32>
    %133 = arith.divf %131, %132 : vector<2x192xf32>
    %134 = vector.extract_strided_slice %127 {offsets = [0, 192], sizes = [2, 64], strides = [1, 1]} : vector<2x256xf32> to vector<2x64xf32>
    %135 = math.tanh %134 : vector<2x64xf32>
    %136 = vector.extract_strided_slice %133 {offsets = [0, 0], sizes = [2, 64], strides = [1, 1]} : vector<2x192xf32> to vector<2x64xf32>
    %137 = vector.extract_strided_slice %133 {offsets = [0, 64], sizes = [2, 64], strides = [1, 1]} : vector<2x192xf32> to vector<2x64xf32>
    %138 = vector.extract_strided_slice %133 {offsets = [0, 128], sizes = [2, 64], strides = [1, 1]} : vector<2x192xf32> to vector<2x64xf32>
    %139 = arith.mulf %137, %117 : vector<2x64xf32>
    %140 = arith.mulf %136, %135 : vector<2x64xf32>
    %141 = arith.addf %139, %140 : vector<2x64xf32>
    %142 = math.tanh %141 : vector<2x64xf32>
    %143 = arith.mulf %138, %142 : vector<2x64xf32>
    %c0_38 = arith.constant 0 : index
    %c5_39 = arith.constant 5 : index
    %144 = vector.load %arg2[%c0_38, %c5_39] : memref<2x8xf32, #tpu.memory_space<vmem>>, vector<2x1xf32>
    %145 = vector.broadcast %144 : vector<2x1xf32> to vector<2x64xf32>
    %146 = arith.mulf %145, %143 : vector<2x64xf32>
    %147 = arith.addf %123, %146 : vector<2x64xf32>
    %c6 = arith.constant 6 : index
    %c0_40 = arith.constant 0 : index
    %c0_41 = arith.constant 0 : index
    %148 = vector.load %arg1[%c6, %c0_40, %c0_41] : memref<8x2x256xf32, #tpu.memory_space<vmem>>, vector<1x2x256xf32>
    %149 = vector.shape_cast %148 : vector<1x2x256xf32> to vector<2x256xf32>
    %cst_42 = arith.constant dense<0.000000e+00> : vector<2x256xf32>
    %150 = tpu.matmul %143, %0, %cst_42 {dimension_numbers = #tpu.dot_dimension_numbers<[1], [0], [0], [1], [0, 0, 1, 1], [], []>} : vector<2x64xf32>, vector<64x256xf32>, vector<2x256xf32> -> vector<2x256xf32>
    %151 = arith.addf %149, %150 : vector<2x256xf32>
    %152 = vector.extract_strided_slice %151 {offsets = [0, 0], sizes = [2, 192], strides = [1, 1]} : vector<2x256xf32> to vector<2x192xf32>
    %153 = arith.negf %152 : vector<2x192xf32>
    %154 = math.exp %153 : vector<2x192xf32>
    %cst_43 = arith.constant 1.000000e+00 : f32
    %155 = vector.broadcast %cst_43 : f32 to vector<2x192xf32>
    %156 = arith.addf %155, %154 : vector<2x192xf32>
    %157 = arith.divf %155, %156 : vector<2x192xf32>
    %158 = vector.extract_strided_slice %151 {offsets = [0, 192], sizes = [2, 64], strides = [1, 1]} : vector<2x256xf32> to vector<2x64xf32>
    %159 = math.tanh %158 : vector<2x64xf32>
    %160 = vector.extract_strided_slice %157 {offsets = [0, 0], sizes = [2, 64], strides = [1, 1]} : vector<2x192xf32> to vector<2x64xf32>
    %161 = vector.extract_strided_slice %157 {offsets = [0, 64], sizes = [2, 64], strides = [1, 1]} : vector<2x192xf32> to vector<2x64xf32>
    %162 = vector.extract_strided_slice %157 {offsets = [0, 128], sizes = [2, 64], strides = [1, 1]} : vector<2x192xf32> to vector<2x64xf32>
    %163 = arith.mulf %161, %141 : vector<2x64xf32>
    %164 = arith.mulf %160, %159 : vector<2x64xf32>
    %165 = arith.addf %163, %164 : vector<2x64xf32>
    %166 = math.tanh %165 : vector<2x64xf32>
    %167 = arith.mulf %162, %166 : vector<2x64xf32>
    %c0_44 = arith.constant 0 : index
    %c6_45 = arith.constant 6 : index
    %168 = vector.load %arg2[%c0_44, %c6_45] : memref<2x8xf32, #tpu.memory_space<vmem>>, vector<2x1xf32>
    %169 = vector.broadcast %168 : vector<2x1xf32> to vector<2x64xf32>
    %170 = arith.mulf %169, %167 : vector<2x64xf32>
    %171 = arith.addf %147, %170 : vector<2x64xf32>
    %c7 = arith.constant 7 : index
    %c0_46 = arith.constant 0 : index
    %c0_47 = arith.constant 0 : index
    %172 = vector.load %arg1[%c7, %c0_46, %c0_47] : memref<8x2x256xf32, #tpu.memory_space<vmem>>, vector<1x2x256xf32>
    %173 = vector.shape_cast %172 : vector<1x2x256xf32> to vector<2x256xf32>
    %cst_48 = arith.constant dense<0.000000e+00> : vector<2x256xf32>
    %174 = tpu.matmul %167, %0, %cst_48 {dimension_numbers = #tpu.dot_dimension_numbers<[1], [0], [0], [1], [0, 0, 1, 1], [], []>} : vector<2x64xf32>, vector<64x256xf32>, vector<2x256xf32> -> vector<2x256xf32>
    %175 = arith.addf %173, %174 : vector<2x256xf32>
    %176 = vector.extract_strided_slice %175 {offsets = [0, 0], sizes = [2, 192], strides = [1, 1]} : vector<2x256xf32> to vector<2x192xf32>
    %177 = arith.negf %176 : vector<2x192xf32>
    %178 = math.exp %177 : vector<2x192xf32>
    %cst_49 = arith.constant 1.000000e+00 : f32
    %179 = vector.broadcast %cst_49 : f32 to vector<2x192xf32>
    %180 = arith.addf %179, %178 : vector<2x192xf32>
    %181 = arith.divf %179, %180 : vector<2x192xf32>
    %182 = vector.extract_strided_slice %175 {offsets = [0, 192], sizes = [2, 64], strides = [1, 1]} : vector<2x256xf32> to vector<2x64xf32>
    %183 = math.tanh %182 : vector<2x64xf32>
    %184 = vector.extract_strided_slice %181 {offsets = [0, 0], sizes = [2, 64], strides = [1, 1]} : vector<2x192xf32> to vector<2x64xf32>
    %185 = vector.extract_strided_slice %181 {offsets = [0, 64], sizes = [2, 64], strides = [1, 1]} : vector<2x192xf32> to vector<2x64xf32>
    %186 = vector.extract_strided_slice %181 {offsets = [0, 128], sizes = [2, 64], strides = [1, 1]} : vector<2x192xf32> to vector<2x64xf32>
    %187 = arith.mulf %185, %165 : vector<2x64xf32>
    %188 = arith.mulf %184, %183 : vector<2x64xf32>
    %189 = arith.addf %187, %188 : vector<2x64xf32>
    %190 = math.tanh %189 : vector<2x64xf32>
    %191 = arith.mulf %186, %190 : vector<2x64xf32>
    %c0_50 = arith.constant 0 : index
    %c7_51 = arith.constant 7 : index
    %192 = vector.load %arg2[%c0_50, %c7_51] : memref<2x8xf32, #tpu.memory_space<vmem>>, vector<2x1xf32>
    %193 = vector.broadcast %192 : vector<2x1xf32> to vector<2x64xf32>
    %194 = arith.mulf %193, %191 : vector<2x64xf32>
    %195 = arith.addf %171, %194 : vector<2x64xf32>
    %cst_52 = arith.constant dense<0.000000e+00> : vector<64xf32>
    %196 = vector.multi_reduction <add>, %195, %cst_52 [0] : vector<2x64xf32> to vector<64xf32>
    %197 = vector.shape_cast %196 : vector<64xf32> to vector<1x64xf32>
    %cst_53 = arith.constant 2.000000e+00 : f32
    %198 = vector.broadcast %cst_53 : f32 to vector<1x64xf32>
    %199 = arith.divf %197, %198 : vector<1x64xf32>
    %200 = vector.broadcast %199 : vector<1x64xf32> to vector<2x64xf32>
    %201 = arith.subf %195, %200 : vector<2x64xf32>
    %202 = arith.mulf %201, %201 : vector<2x64xf32>
    %cst_54 = arith.constant dense<0.000000e+00> : vector<64xf32>
    %203 = vector.multi_reduction <add>, %202, %cst_54 [0] : vector<2x64xf32> to vector<64xf32>
    %204 = vector.shape_cast %203 : vector<64xf32> to vector<1x64xf32>
    %cst_55 = arith.constant 2.000000e+00 : f32
    %205 = vector.broadcast %cst_55 : f32 to vector<1x64xf32>
    %206 = arith.divf %204, %205 : vector<1x64xf32>
    %207 = vector.broadcast %199 : vector<1x64xf32> to vector<2x64xf32>
    %208 = arith.subf %195, %207 : vector<2x64xf32>
    %cst_56 = arith.constant 9.99999974E-6 : f32
    %209 = vector.broadcast %cst_56 : f32 to vector<1x64xf32>
    %210 = arith.addf %206, %209 : vector<1x64xf32>
    %211 = math.rsqrt %210 : vector<1x64xf32>
    %212 = vector.broadcast %211 : vector<1x64xf32> to vector<2x64xf32>
    %213 = arith.mulf %208, %212 : vector<2x64xf32>
    %c0_57 = arith.constant 0 : index
    %c0_58 = arith.constant 0 : index
    %214 = vector.load %arg4[%c0_57, %c0_58] : memref<2x64xf32, #tpu.memory_space<vmem>>, vector<2x64xf32>
    tpu.vector_store %arg4[%c0_57, %c0_58], %213 {strides = array<i32>} : memref<2x64xf32, #tpu.memory_space<vmem>>, vector<2x64xf32>,
    return
  }
  func.func @transform_0(%arg0: i32) -> (i32, i32, i32) {
    %c0_i32 = arith.constant 0 : i32
    %c0_i32_0 = arith.constant 0 : i32
    %c0_i32_1 = arith.constant 0 : i32
    %c0_i32_2 = arith.constant 0 : i32
    return %c0_i32, %c0_i32_0, %c0_i32_1 : i32, i32, i32
  }
  func.func @transform_1(%arg0: i32) -> (i32, i32) {
    %c0_i32 = arith.constant 0 : i32
    %c0_i32_0 = arith.constant 0 : i32
    %c0_i32_1 = arith.constant 0 : i32
    return %c0_i32, %c0_i32_0 : i32, i32
  }
  func.func @transform_2(%arg0: i32) -> (i32, i32) {
    %c0_i32 = arith.constant 0 : i32
    %c0_i32_0 = arith.constant 0 : i32
    %c0_i32_1 = arith.constant 0 : i32
    return %c0_i32, %c0_i32_0 : i32, i32
  }
  func.func @transform_3(%arg0: i32) -> (i32, i32) {
    %c0_i32 = arith.constant 0 : i32
    %c0_i32_0 = arith.constant 0 : i32
    %c0_i32_1 = arith.constant 0 : i32
    return %c0_i32, %c0_i32_0 : i32, i32
  }
}

module attributes {stable_mosaic.version = 11 : i64} {
  func.func @_lstm_pool_bn_kernel(%arg0: i32, %arg1: memref<8x24x256xf32, #tpu.memory_space<vmem>>, %arg2: memref<24x8xf32, #tpu.memory_space<vmem>>, %arg3: memref<64x256xf32, #tpu.memory_space<vmem>>, %arg4: memref<24x64xf32, #tpu.memory_space<vmem>>) attributes {dimension_semantics = [#tpu.dimension_semantics<arbitrary>], iteration_bounds = array<i64: 1>, scalar_prefetch = 0 : i64, scratch_operands = 0 : i64, tpu.core_type = #tpu.core_type<tc>, window_params = [{pipeline_mode = #tpu.pipeline_mode<synchronous>, transform_indices = @transform_0, window_bounds = array<i64: 8, 24, 256>}, {pipeline_mode = #tpu.pipeline_mode<synchronous>, transform_indices = @transform_1, window_bounds = array<i64: 24, 8>}, {pipeline_mode = #tpu.pipeline_mode<synchronous>, transform_indices = @transform_2, window_bounds = array<i64: 64, 256>}, {pipeline_mode = #tpu.pipeline_mode<synchronous>, transform_indices = @transform_3, window_bounds = array<i64: 24, 64>}]} {
    %c0 = arith.constant 0 : index
    %c0_0 = arith.constant 0 : index
    %0 = vector.load %arg3[%c0, %c0_0] : memref<64x256xf32, #tpu.memory_space<vmem>>, vector<64x256xf32>
    %cst = arith.constant 0.000000e+00 : f32
    %1 = vector.broadcast %cst : f32 to vector<24x64xf32>
    %cst_1 = arith.constant 0.000000e+00 : f32
    %2 = vector.broadcast %cst_1 : f32 to vector<24x64xf32>
    %cst_2 = arith.constant 0.000000e+00 : f32
    %3 = vector.broadcast %cst_2 : f32 to vector<24x64xf32>
    %c0_3 = arith.constant 0 : index
    %c0_4 = arith.constant 0 : index
    %c0_5 = arith.constant 0 : index
    %4 = vector.load %arg1[%c0_3, %c0_4, %c0_5] : memref<8x24x256xf32, #tpu.memory_space<vmem>>, vector<1x24x256xf32>
    %5 = vector.shape_cast %4 : vector<1x24x256xf32> to vector<24x256xf32>
    %cst_6 = arith.constant dense<0.000000e+00> : vector<24x256xf32>
    %6 = tpu.matmul %1, %0, %cst_6 {dimension_numbers = #tpu.dot_dimension_numbers<[1], [0], [0], [1], [0, 0, 1, 1], [], []>} : vector<24x64xf32>, vector<64x256xf32>, vector<24x256xf32> -> vector<24x256xf32>
    %7 = arith.addf %5, %6 : vector<24x256xf32>
    %8 = vector.extract_strided_slice %7 {offsets = [0, 0], sizes = [24, 192], strides = [1, 1]} : vector<24x256xf32> to vector<24x192xf32>
    %9 = arith.negf %8 : vector<24x192xf32>
    %10 = math.exp %9 : vector<24x192xf32>
    %cst_7 = arith.constant 1.000000e+00 : f32
    %11 = vector.broadcast %cst_7 : f32 to vector<24x192xf32>
    %12 = arith.addf %11, %10 : vector<24x192xf32>
    %13 = arith.divf %11, %12 : vector<24x192xf32>
    %14 = vector.extract_strided_slice %7 {offsets = [0, 192], sizes = [24, 64], strides = [1, 1]} : vector<24x256xf32> to vector<24x64xf32>
    %15 = math.tanh %14 : vector<24x64xf32>
    %16 = vector.extract_strided_slice %13 {offsets = [0, 0], sizes = [24, 64], strides = [1, 1]} : vector<24x192xf32> to vector<24x64xf32>
    %17 = vector.extract_strided_slice %13 {offsets = [0, 64], sizes = [24, 64], strides = [1, 1]} : vector<24x192xf32> to vector<24x64xf32>
    %18 = vector.extract_strided_slice %13 {offsets = [0, 128], sizes = [24, 64], strides = [1, 1]} : vector<24x192xf32> to vector<24x64xf32>
    %19 = arith.mulf %17, %2 : vector<24x64xf32>
    %20 = arith.mulf %16, %15 : vector<24x64xf32>
    %21 = arith.addf %19, %20 : vector<24x64xf32>
    %22 = math.tanh %21 : vector<24x64xf32>
    %23 = arith.mulf %18, %22 : vector<24x64xf32>
    %c0_8 = arith.constant 0 : index
    %c0_9 = arith.constant 0 : index
    %24 = vector.load %arg2[%c0_8, %c0_9] : memref<24x8xf32, #tpu.memory_space<vmem>>, vector<24x1xf32>
    %25 = vector.broadcast %24 : vector<24x1xf32> to vector<24x64xf32>
    %26 = arith.mulf %25, %23 : vector<24x64xf32>
    %27 = arith.addf %3, %26 : vector<24x64xf32>
    %c1 = arith.constant 1 : index
    %c0_10 = arith.constant 0 : index
    %c0_11 = arith.constant 0 : index
    %28 = vector.load %arg1[%c1, %c0_10, %c0_11] : memref<8x24x256xf32, #tpu.memory_space<vmem>>, vector<1x24x256xf32>
    %29 = vector.shape_cast %28 : vector<1x24x256xf32> to vector<24x256xf32>
    %cst_12 = arith.constant dense<0.000000e+00> : vector<24x256xf32>
    %30 = tpu.matmul %23, %0, %cst_12 {dimension_numbers = #tpu.dot_dimension_numbers<[1], [0], [0], [1], [0, 0, 1, 1], [], []>} : vector<24x64xf32>, vector<64x256xf32>, vector<24x256xf32> -> vector<24x256xf32>
    %31 = arith.addf %29, %30 : vector<24x256xf32>
    %32 = vector.extract_strided_slice %31 {offsets = [0, 0], sizes = [24, 192], strides = [1, 1]} : vector<24x256xf32> to vector<24x192xf32>
    %33 = arith.negf %32 : vector<24x192xf32>
    %34 = math.exp %33 : vector<24x192xf32>
    %cst_13 = arith.constant 1.000000e+00 : f32
    %35 = vector.broadcast %cst_13 : f32 to vector<24x192xf32>
    %36 = arith.addf %35, %34 : vector<24x192xf32>
    %37 = arith.divf %35, %36 : vector<24x192xf32>
    %38 = vector.extract_strided_slice %31 {offsets = [0, 192], sizes = [24, 64], strides = [1, 1]} : vector<24x256xf32> to vector<24x64xf32>
    %39 = math.tanh %38 : vector<24x64xf32>
    %40 = vector.extract_strided_slice %37 {offsets = [0, 0], sizes = [24, 64], strides = [1, 1]} : vector<24x192xf32> to vector<24x64xf32>
    %41 = vector.extract_strided_slice %37 {offsets = [0, 64], sizes = [24, 64], strides = [1, 1]} : vector<24x192xf32> to vector<24x64xf32>
    %42 = vector.extract_strided_slice %37 {offsets = [0, 128], sizes = [24, 64], strides = [1, 1]} : vector<24x192xf32> to vector<24x64xf32>
    %43 = arith.mulf %41, %21 : vector<24x64xf32>
    %44 = arith.mulf %40, %39 : vector<24x64xf32>
    %45 = arith.addf %43, %44 : vector<24x64xf32>
    %46 = math.tanh %45 : vector<24x64xf32>
    %47 = arith.mulf %42, %46 : vector<24x64xf32>
    %c0_14 = arith.constant 0 : index
    %c1_15 = arith.constant 1 : index
    %48 = vector.load %arg2[%c0_14, %c1_15] : memref<24x8xf32, #tpu.memory_space<vmem>>, vector<24x1xf32>
    %49 = vector.broadcast %48 : vector<24x1xf32> to vector<24x64xf32>
    %50 = arith.mulf %49, %47 : vector<24x64xf32>
    %51 = arith.addf %27, %50 : vector<24x64xf32>
    %c2 = arith.constant 2 : index
    %c0_16 = arith.constant 0 : index
    %c0_17 = arith.constant 0 : index
    %52 = vector.load %arg1[%c2, %c0_16, %c0_17] : memref<8x24x256xf32, #tpu.memory_space<vmem>>, vector<1x24x256xf32>
    %53 = vector.shape_cast %52 : vector<1x24x256xf32> to vector<24x256xf32>
    %cst_18 = arith.constant dense<0.000000e+00> : vector<24x256xf32>
    %54 = tpu.matmul %47, %0, %cst_18 {dimension_numbers = #tpu.dot_dimension_numbers<[1], [0], [0], [1], [0, 0, 1, 1], [], []>} : vector<24x64xf32>, vector<64x256xf32>, vector<24x256xf32> -> vector<24x256xf32>
    %55 = arith.addf %53, %54 : vector<24x256xf32>
    %56 = vector.extract_strided_slice %55 {offsets = [0, 0], sizes = [24, 192], strides = [1, 1]} : vector<24x256xf32> to vector<24x192xf32>
    %57 = arith.negf %56 : vector<24x192xf32>
    %58 = math.exp %57 : vector<24x192xf32>
    %cst_19 = arith.constant 1.000000e+00 : f32
    %59 = vector.broadcast %cst_19 : f32 to vector<24x192xf32>
    %60 = arith.addf %59, %58 : vector<24x192xf32>
    %61 = arith.divf %59, %60 : vector<24x192xf32>
    %62 = vector.extract_strided_slice %55 {offsets = [0, 192], sizes = [24, 64], strides = [1, 1]} : vector<24x256xf32> to vector<24x64xf32>
    %63 = math.tanh %62 : vector<24x64xf32>
    %64 = vector.extract_strided_slice %61 {offsets = [0, 0], sizes = [24, 64], strides = [1, 1]} : vector<24x192xf32> to vector<24x64xf32>
    %65 = vector.extract_strided_slice %61 {offsets = [0, 64], sizes = [24, 64], strides = [1, 1]} : vector<24x192xf32> to vector<24x64xf32>
    %66 = vector.extract_strided_slice %61 {offsets = [0, 128], sizes = [24, 64], strides = [1, 1]} : vector<24x192xf32> to vector<24x64xf32>
    %67 = arith.mulf %65, %45 : vector<24x64xf32>
    %68 = arith.mulf %64, %63 : vector<24x64xf32>
    %69 = arith.addf %67, %68 : vector<24x64xf32>
    %70 = math.tanh %69 : vector<24x64xf32>
    %71 = arith.mulf %66, %70 : vector<24x64xf32>
    %c0_20 = arith.constant 0 : index
    %c2_21 = arith.constant 2 : index
    %72 = vector.load %arg2[%c0_20, %c2_21] : memref<24x8xf32, #tpu.memory_space<vmem>>, vector<24x1xf32>
    %73 = vector.broadcast %72 : vector<24x1xf32> to vector<24x64xf32>
    %74 = arith.mulf %73, %71 : vector<24x64xf32>
    %75 = arith.addf %51, %74 : vector<24x64xf32>
    %c3 = arith.constant 3 : index
    %c0_22 = arith.constant 0 : index
    %c0_23 = arith.constant 0 : index
    %76 = vector.load %arg1[%c3, %c0_22, %c0_23] : memref<8x24x256xf32, #tpu.memory_space<vmem>>, vector<1x24x256xf32>
    %77 = vector.shape_cast %76 : vector<1x24x256xf32> to vector<24x256xf32>
    %cst_24 = arith.constant dense<0.000000e+00> : vector<24x256xf32>
    %78 = tpu.matmul %71, %0, %cst_24 {dimension_numbers = #tpu.dot_dimension_numbers<[1], [0], [0], [1], [0, 0, 1, 1], [], []>} : vector<24x64xf32>, vector<64x256xf32>, vector<24x256xf32> -> vector<24x256xf32>
    %79 = arith.addf %77, %78 : vector<24x256xf32>
    %80 = vector.extract_strided_slice %79 {offsets = [0, 0], sizes = [24, 192], strides = [1, 1]} : vector<24x256xf32> to vector<24x192xf32>
    %81 = arith.negf %80 : vector<24x192xf32>
    %82 = math.exp %81 : vector<24x192xf32>
    %cst_25 = arith.constant 1.000000e+00 : f32
    %83 = vector.broadcast %cst_25 : f32 to vector<24x192xf32>
    %84 = arith.addf %83, %82 : vector<24x192xf32>
    %85 = arith.divf %83, %84 : vector<24x192xf32>
    %86 = vector.extract_strided_slice %79 {offsets = [0, 192], sizes = [24, 64], strides = [1, 1]} : vector<24x256xf32> to vector<24x64xf32>
    %87 = math.tanh %86 : vector<24x64xf32>
    %88 = vector.extract_strided_slice %85 {offsets = [0, 0], sizes = [24, 64], strides = [1, 1]} : vector<24x192xf32> to vector<24x64xf32>
    %89 = vector.extract_strided_slice %85 {offsets = [0, 64], sizes = [24, 64], strides = [1, 1]} : vector<24x192xf32> to vector<24x64xf32>
    %90 = vector.extract_strided_slice %85 {offsets = [0, 128], sizes = [24, 64], strides = [1, 1]} : vector<24x192xf32> to vector<24x64xf32>
    %91 = arith.mulf %89, %69 : vector<24x64xf32>
    %92 = arith.mulf %88, %87 : vector<24x64xf32>
    %93 = arith.addf %91, %92 : vector<24x64xf32>
    %94 = math.tanh %93 : vector<24x64xf32>
    %95 = arith.mulf %90, %94 : vector<24x64xf32>
    %c0_26 = arith.constant 0 : index
    %c3_27 = arith.constant 3 : index
    %96 = vector.load %arg2[%c0_26, %c3_27] : memref<24x8xf32, #tpu.memory_space<vmem>>, vector<24x1xf32>
    %97 = vector.broadcast %96 : vector<24x1xf32> to vector<24x64xf32>
    %98 = arith.mulf %97, %95 : vector<24x64xf32>
    %99 = arith.addf %75, %98 : vector<24x64xf32>
    %c4 = arith.constant 4 : index
    %c0_28 = arith.constant 0 : index
    %c0_29 = arith.constant 0 : index
    %100 = vector.load %arg1[%c4, %c0_28, %c0_29] : memref<8x24x256xf32, #tpu.memory_space<vmem>>, vector<1x24x256xf32>
    %101 = vector.shape_cast %100 : vector<1x24x256xf32> to vector<24x256xf32>
    %cst_30 = arith.constant dense<0.000000e+00> : vector<24x256xf32>
    %102 = tpu.matmul %95, %0, %cst_30 {dimension_numbers = #tpu.dot_dimension_numbers<[1], [0], [0], [1], [0, 0, 1, 1], [], []>} : vector<24x64xf32>, vector<64x256xf32>, vector<24x256xf32> -> vector<24x256xf32>
    %103 = arith.addf %101, %102 : vector<24x256xf32>
    %104 = vector.extract_strided_slice %103 {offsets = [0, 0], sizes = [24, 192], strides = [1, 1]} : vector<24x256xf32> to vector<24x192xf32>
    %105 = arith.negf %104 : vector<24x192xf32>
    %106 = math.exp %105 : vector<24x192xf32>
    %cst_31 = arith.constant 1.000000e+00 : f32
    %107 = vector.broadcast %cst_31 : f32 to vector<24x192xf32>
    %108 = arith.addf %107, %106 : vector<24x192xf32>
    %109 = arith.divf %107, %108 : vector<24x192xf32>
    %110 = vector.extract_strided_slice %103 {offsets = [0, 192], sizes = [24, 64], strides = [1, 1]} : vector<24x256xf32> to vector<24x64xf32>
    %111 = math.tanh %110 : vector<24x64xf32>
    %112 = vector.extract_strided_slice %109 {offsets = [0, 0], sizes = [24, 64], strides = [1, 1]} : vector<24x192xf32> to vector<24x64xf32>
    %113 = vector.extract_strided_slice %109 {offsets = [0, 64], sizes = [24, 64], strides = [1, 1]} : vector<24x192xf32> to vector<24x64xf32>
    %114 = vector.extract_strided_slice %109 {offsets = [0, 128], sizes = [24, 64], strides = [1, 1]} : vector<24x192xf32> to vector<24x64xf32>
    %115 = arith.mulf %113, %93 : vector<24x64xf32>
    %116 = arith.mulf %112, %111 : vector<24x64xf32>
    %117 = arith.addf %115, %116 : vector<24x64xf32>
    %118 = math.tanh %117 : vector<24x64xf32>
    %119 = arith.mulf %114, %118 : vector<24x64xf32>
    %c0_32 = arith.constant 0 : index
    %c4_33 = arith.constant 4 : index
    %120 = vector.load %arg2[%c0_32, %c4_33] : memref<24x8xf32, #tpu.memory_space<vmem>>, vector<24x1xf32>
    %121 = vector.broadcast %120 : vector<24x1xf32> to vector<24x64xf32>
    %122 = arith.mulf %121, %119 : vector<24x64xf32>
    %123 = arith.addf %99, %122 : vector<24x64xf32>
    %c5 = arith.constant 5 : index
    %c0_34 = arith.constant 0 : index
    %c0_35 = arith.constant 0 : index
    %124 = vector.load %arg1[%c5, %c0_34, %c0_35] : memref<8x24x256xf32, #tpu.memory_space<vmem>>, vector<1x24x256xf32>
    %125 = vector.shape_cast %124 : vector<1x24x256xf32> to vector<24x256xf32>
    %cst_36 = arith.constant dense<0.000000e+00> : vector<24x256xf32>
    %126 = tpu.matmul %119, %0, %cst_36 {dimension_numbers = #tpu.dot_dimension_numbers<[1], [0], [0], [1], [0, 0, 1, 1], [], []>} : vector<24x64xf32>, vector<64x256xf32>, vector<24x256xf32> -> vector<24x256xf32>
    %127 = arith.addf %125, %126 : vector<24x256xf32>
    %128 = vector.extract_strided_slice %127 {offsets = [0, 0], sizes = [24, 192], strides = [1, 1]} : vector<24x256xf32> to vector<24x192xf32>
    %129 = arith.negf %128 : vector<24x192xf32>
    %130 = math.exp %129 : vector<24x192xf32>
    %cst_37 = arith.constant 1.000000e+00 : f32
    %131 = vector.broadcast %cst_37 : f32 to vector<24x192xf32>
    %132 = arith.addf %131, %130 : vector<24x192xf32>
    %133 = arith.divf %131, %132 : vector<24x192xf32>
    %134 = vector.extract_strided_slice %127 {offsets = [0, 192], sizes = [24, 64], strides = [1, 1]} : vector<24x256xf32> to vector<24x64xf32>
    %135 = math.tanh %134 : vector<24x64xf32>
    %136 = vector.extract_strided_slice %133 {offsets = [0, 0], sizes = [24, 64], strides = [1, 1]} : vector<24x192xf32> to vector<24x64xf32>
    %137 = vector.extract_strided_slice %133 {offsets = [0, 64], sizes = [24, 64], strides = [1, 1]} : vector<24x192xf32> to vector<24x64xf32>
    %138 = vector.extract_strided_slice %133 {offsets = [0, 128], sizes = [24, 64], strides = [1, 1]} : vector<24x192xf32> to vector<24x64xf32>
    %139 = arith.mulf %137, %117 : vector<24x64xf32>
    %140 = arith.mulf %136, %135 : vector<24x64xf32>
    %141 = arith.addf %139, %140 : vector<24x64xf32>
    %142 = math.tanh %141 : vector<24x64xf32>
    %143 = arith.mulf %138, %142 : vector<24x64xf32>
    %c0_38 = arith.constant 0 : index
    %c5_39 = arith.constant 5 : index
    %144 = vector.load %arg2[%c0_38, %c5_39] : memref<24x8xf32, #tpu.memory_space<vmem>>, vector<24x1xf32>
    %145 = vector.broadcast %144 : vector<24x1xf32> to vector<24x64xf32>
    %146 = arith.mulf %145, %143 : vector<24x64xf32>
    %147 = arith.addf %123, %146 : vector<24x64xf32>
    %c6 = arith.constant 6 : index
    %c0_40 = arith.constant 0 : index
    %c0_41 = arith.constant 0 : index
    %148 = vector.load %arg1[%c6, %c0_40, %c0_41] : memref<8x24x256xf32, #tpu.memory_space<vmem>>, vector<1x24x256xf32>
    %149 = vector.shape_cast %148 : vector<1x24x256xf32> to vector<24x256xf32>
    %cst_42 = arith.constant dense<0.000000e+00> : vector<24x256xf32>
    %150 = tpu.matmul %143, %0, %cst_42 {dimension_numbers = #tpu.dot_dimension_numbers<[1], [0], [0], [1], [0, 0, 1, 1], [], []>} : vector<24x64xf32>, vector<64x256xf32>, vector<24x256xf32> -> vector<24x256xf32>
    %151 = arith.addf %149, %150 : vector<24x256xf32>
    %152 = vector.extract_strided_slice %151 {offsets = [0, 0], sizes = [24, 192], strides = [1, 1]} : vector<24x256xf32> to vector<24x192xf32>
    %153 = arith.negf %152 : vector<24x192xf32>
    %154 = math.exp %153 : vector<24x192xf32>
    %cst_43 = arith.constant 1.000000e+00 : f32
    %155 = vector.broadcast %cst_43 : f32 to vector<24x192xf32>
    %156 = arith.addf %155, %154 : vector<24x192xf32>
    %157 = arith.divf %155, %156 : vector<24x192xf32>
    %158 = vector.extract_strided_slice %151 {offsets = [0, 192], sizes = [24, 64], strides = [1, 1]} : vector<24x256xf32> to vector<24x64xf32>
    %159 = math.tanh %158 : vector<24x64xf32>
    %160 = vector.extract_strided_slice %157 {offsets = [0, 0], sizes = [24, 64], strides = [1, 1]} : vector<24x192xf32> to vector<24x64xf32>
    %161 = vector.extract_strided_slice %157 {offsets = [0, 64], sizes = [24, 64], strides = [1, 1]} : vector<24x192xf32> to vector<24x64xf32>
    %162 = vector.extract_strided_slice %157 {offsets = [0, 128], sizes = [24, 64], strides = [1, 1]} : vector<24x192xf32> to vector<24x64xf32>
    %163 = arith.mulf %161, %141 : vector<24x64xf32>
    %164 = arith.mulf %160, %159 : vector<24x64xf32>
    %165 = arith.addf %163, %164 : vector<24x64xf32>
    %166 = math.tanh %165 : vector<24x64xf32>
    %167 = arith.mulf %162, %166 : vector<24x64xf32>
    %c0_44 = arith.constant 0 : index
    %c6_45 = arith.constant 6 : index
    %168 = vector.load %arg2[%c0_44, %c6_45] : memref<24x8xf32, #tpu.memory_space<vmem>>, vector<24x1xf32>
    %169 = vector.broadcast %168 : vector<24x1xf32> to vector<24x64xf32>
    %170 = arith.mulf %169, %167 : vector<24x64xf32>
    %171 = arith.addf %147, %170 : vector<24x64xf32>
    %c7 = arith.constant 7 : index
    %c0_46 = arith.constant 0 : index
    %c0_47 = arith.constant 0 : index
    %172 = vector.load %arg1[%c7, %c0_46, %c0_47] : memref<8x24x256xf32, #tpu.memory_space<vmem>>, vector<1x24x256xf32>
    %173 = vector.shape_cast %172 : vector<1x24x256xf32> to vector<24x256xf32>
    %cst_48 = arith.constant dense<0.000000e+00> : vector<24x256xf32>
    %174 = tpu.matmul %167, %0, %cst_48 {dimension_numbers = #tpu.dot_dimension_numbers<[1], [0], [0], [1], [0, 0, 1, 1], [], []>} : vector<24x64xf32>, vector<64x256xf32>, vector<24x256xf32> -> vector<24x256xf32>
    %175 = arith.addf %173, %174 : vector<24x256xf32>
    %176 = vector.extract_strided_slice %175 {offsets = [0, 0], sizes = [24, 192], strides = [1, 1]} : vector<24x256xf32> to vector<24x192xf32>
    %177 = arith.negf %176 : vector<24x192xf32>
    %178 = math.exp %177 : vector<24x192xf32>
    %cst_49 = arith.constant 1.000000e+00 : f32
    %179 = vector.broadcast %cst_49 : f32 to vector<24x192xf32>
    %180 = arith.addf %179, %178 : vector<24x192xf32>
    %181 = arith.divf %179, %180 : vector<24x192xf32>
    %182 = vector.extract_strided_slice %175 {offsets = [0, 192], sizes = [24, 64], strides = [1, 1]} : vector<24x256xf32> to vector<24x64xf32>
    %183 = math.tanh %182 : vector<24x64xf32>
    %184 = vector.extract_strided_slice %181 {offsets = [0, 0], sizes = [24, 64], strides = [1, 1]} : vector<24x192xf32> to vector<24x64xf32>
    %185 = vector.extract_strided_slice %181 {offsets = [0, 64], sizes = [24, 64], strides = [1, 1]} : vector<24x192xf32> to vector<24x64xf32>
    %186 = vector.extract_strided_slice %181 {offsets = [0, 128], sizes = [24, 64], strides = [1, 1]} : vector<24x192xf32> to vector<24x64xf32>
    %187 = arith.mulf %185, %165 : vector<24x64xf32>
    %188 = arith.mulf %184, %183 : vector<24x64xf32>
    %189 = arith.addf %187, %188 : vector<24x64xf32>
    %190 = math.tanh %189 : vector<24x64xf32>
    %191 = arith.mulf %186, %190 : vector<24x64xf32>
    %c0_50 = arith.constant 0 : index
    %c7_51 = arith.constant 7 : index
    %192 = vector.load %arg2[%c0_50, %c7_51] : memref<24x8xf32, #tpu.memory_space<vmem>>, vector<24x1xf32>
    %193 = vector.broadcast %192 : vector<24x1xf32> to vector<24x64xf32>
    %194 = arith.mulf %193, %191 : vector<24x64xf32>
    %195 = arith.addf %171, %194 : vector<24x64xf32>
    %cst_52 = arith.constant dense<0.000000e+00> : vector<64xf32>
    %196 = vector.multi_reduction <add>, %195, %cst_52 [0] : vector<24x64xf32> to vector<64xf32>
    %197 = vector.shape_cast %196 : vector<64xf32> to vector<1x64xf32>
    %cst_53 = arith.constant 2.400000e+01 : f32
    %198 = vector.broadcast %cst_53 : f32 to vector<1x64xf32>
    %199 = arith.divf %197, %198 : vector<1x64xf32>
    %200 = vector.broadcast %199 : vector<1x64xf32> to vector<24x64xf32>
    %201 = arith.subf %195, %200 : vector<24x64xf32>
    %202 = arith.mulf %201, %201 : vector<24x64xf32>
    %cst_54 = arith.constant dense<0.000000e+00> : vector<64xf32>
    %203 = vector.multi_reduction <add>, %202, %cst_54 [0] : vector<24x64xf32> to vector<64xf32>
    %204 = vector.shape_cast %203 : vector<64xf32> to vector<1x64xf32>
    %cst_55 = arith.constant 2.400000e+01 : f32
    %205 = vector.broadcast %cst_55 : f32 to vector<1x64xf32>
    %206 = arith.divf %204, %205 : vector<1x64xf32>
    %207 = vector.broadcast %199 : vector<1x64xf32> to vector<24x64xf32>
    %208 = arith.subf %195, %207 : vector<24x64xf32>
    %cst_56 = arith.constant 9.99999974E-6 : f32
    %209 = vector.broadcast %cst_56 : f32 to vector<1x64xf32>
    %210 = arith.addf %206, %209 : vector<1x64xf32>
    %211 = math.rsqrt %210 : vector<1x64xf32>
    %212 = vector.broadcast %211 : vector<1x64xf32> to vector<24x64xf32>
    %213 = arith.mulf %208, %212 : vector<24x64xf32>
    %c0_57 = arith.constant 0 : index
    %c0_58 = arith.constant 0 : index
    %214 = vector.load %arg4[%c0_57, %c0_58] : memref<24x64xf32, #tpu.memory_space<vmem>>, vector<24x64xf32>
    tpu.vector_store %arg4[%c0_57, %c0_58], %213 {strides = array<i32>} : memref<24x64xf32, #tpu.memory_space<vmem>>, vector<24x64xf32>,
    return
  }
  func.func @transform_0(%arg0: i32) -> (i32, i32, i32) {
    %c0_i32 = arith.constant 0 : i32
    %c0_i32_0 = arith.constant 0 : i32
    %c0_i32_1 = arith.constant 0 : i32
    %c0_i32_2 = arith.constant 0 : i32
    return %c0_i32, %c0_i32_0, %c0_i32_1 : i32, i32, i32
  }
  func.func @transform_1(%arg0: i32) -> (i32, i32) {
    %c0_i32 = arith.constant 0 : i32
    %c0_i32_0 = arith.constant 0 : i32
    %c0_i32_1 = arith.constant 0 : i32
    return %c0_i32, %c0_i32_0 : i32, i32
  }
  func.func @transform_2(%arg0: i32) -> (i32, i32) {
    %c0_i32 = arith.constant 0 : i32
    %c0_i32_0 = arith.constant 0 : i32
    %c0_i32_1 = arith.constant 0 : i32
    return %c0_i32, %c0_i32_0 : i32, i32
  }
  func.func @transform_3(%arg0: i32) -> (i32, i32) {
    %c0_i32 = arith.constant 0 : i32
    %c0_i32_0 = arith.constant 0 : i32
    %c0_i32_1 = arith.constant 0 : i32
    return %c0_i32, %c0_i32_0 : i32, i32
  }
}

module attributes {stable_mosaic.version = 11 : i64} {
  func.func @_episodic_final_kernel(%arg0: i32, %arg1: memref<3x8x64xf32, #tpu.memory_space<vmem>>, %arg2: memref<8x64xf32, #tpu.memory_space<vmem>>, %arg3: memref<2x64xf32, #tpu.memory_space<vmem>>, %arg4: memref<8x512xf32, #tpu.memory_space<vmem>>, %arg5: memref<8x512xf32, #tpu.memory_space<vmem>>, %arg6: memref<8x128xf32, #tpu.memory_space<vmem>>, %arg7: memref<8x3xf32, #tpu.memory_space<vmem>>, %arg8: memref<8x3xf32, #tpu.memory_space<vmem>>, %arg9: memref<2x4xf32, #tpu.memory_space<vmem>>, %arg10: memref<256x256xf32, #tpu.memory_space<vmem>>, %arg11: memref<1x256xf32, #tpu.memory_space<vmem>>, %arg12: memref<1x256xf32, #tpu.memory_space<vmem>>, %arg13: memref<1x1xf32, #tpu.memory_space<vmem>>, %arg14: memref<64x256xf32, #tpu.memory_space<vmem>>, %arg15: memref<64x256xf32, #tpu.memory_space<vmem>>, %arg16: memref<1x256xf32, #tpu.memory_space<vmem>>, %arg17: memref<128x256xf32, #tpu.memory_space<vmem>>, %arg18: memref<1x256xf32, #tpu.memory_space<vmem>>, %arg19: memref<1216x64xf32, #tpu.memory_space<vmem>>, %arg20: memref<1x64xf32, #tpu.memory_space<vmem>>, %arg21: memref<2x4xf32, #tpu.memory_space<vmem>>) attributes {dimension_semantics = [#tpu.dimension_semantics<arbitrary>], iteration_bounds = array<i64: 1>, scalar_prefetch = 0 : i64, scratch_operands = 0 : i64, tpu.core_type = #tpu.core_type<tc>, window_params = [{pipeline_mode = #tpu.pipeline_mode<synchronous>, transform_indices = @transform_0, window_bounds = array<i64: 3, 8, 64>}, {pipeline_mode = #tpu.pipeline_mode<synchronous>, transform_indices = @transform_1, window_bounds = array<i64: 8, 64>}, {pipeline_mode = #tpu.pipeline_mode<synchronous>, transform_indices = @transform_2, window_bounds = array<i64: 2, 64>}, {pipeline_mode = #tpu.pipeline_mode<synchronous>, transform_indices = @transform_3, window_bounds = array<i64: 8, 512>}, {pipeline_mode = #tpu.pipeline_mode<synchronous>, transform_indices = @transform_4, window_bounds = array<i64: 8, 512>}, {pipeline_mode = #tpu.pipeline_mode<synchronous>, transform_indices = @transform_5, window_bounds = array<i64: 8, 128>}, {pipeline_mode = #tpu.pipeline_mode<synchronous>, transform_indices = @transform_6, window_bounds = array<i64: 8, 3>}, {pipeline_mode = #tpu.pipeline_mode<synchronous>, transform_indices = @transform_7, window_bounds = array<i64: 8, 3>}, {pipeline_mode = #tpu.pipeline_mode<synchronous>, transform_indices = @transform_8, window_bounds = array<i64: 2, 4>}, {pipeline_mode = #tpu.pipeline_mode<synchronous>, transform_indices = @transform_9, window_bounds = array<i64: 256, 256>}, {pipeline_mode = #tpu.pipeline_mode<synchronous>, transform_indices = @transform_10, window_bounds = array<i64: 1, 256>}, {pipeline_mode = #tpu.pipeline_mode<synchronous>, transform_indices = @transform_11, window_bounds = array<i64: 1, 256>}, {pipeline_mode = #tpu.pipeline_mode<synchronous>, transform_indices = @transform_12, window_bounds = array<i64: 1, 1>}, {pipeline_mode = #tpu.pipeline_mode<synchronous>, transform_indices = @transform_13, window_bounds = array<i64: 64, 256>}, {pipeline_mode = #tpu.pipeline_mode<synchronous>, transform_indices = @transform_14, window_bounds = array<i64: 64, 256>}, {pipeline_mode = #tpu.pipeline_mode<synchronous>, transform_indices = @transform_15, window_bounds = array<i64: 1, 256>}, {pipeline_mode = #tpu.pipeline_mode<synchronous>, transform_indices = @transform_16, window_bounds = array<i64: 128, 256>}, {pipeline_mode = #tpu.pipeline_mode<synchronous>, transform_indices = @transform_17, window_bounds = array<i64: 1, 256>}, {pipeline_mode = #tpu.pipeline_mode<synchronous>, transform_indices = @transform_18, window_bounds = array<i64: 1216, 64>}, {pipeline_mode = #tpu.pipeline_mode<synchronous>, transform_indices = @transform_19, window_bounds = array<i64: 1, 64>}, {pipeline_mode = #tpu.pipeline_mode<synchronous>, transform_indices = @transform_20, window_bounds = array<i64: 2, 4>}]} {
    %c0 = arith.constant 0 : index
    %c0_0 = arith.constant 0 : index
    %0 = vector.load %arg2[%c0, %c0_0] : memref<8x64xf32, #tpu.memory_space<vmem>>, vector<8x64xf32>
    %c0_1 = arith.constant 0 : index
    %c0_2 = arith.constant 0 : index
    %c0_3 = arith.constant 0 : index
    %1 = vector.load %arg1[%c0_1, %c0_2, %c0_3] : memref<3x8x64xf32, #tpu.memory_space<vmem>>, vector<1x8x64xf32>
    %2 = vector.shape_cast %1 : vector<1x8x64xf32> to vector<8x64xf32>
    %c1 = arith.constant 1 : index
    %c0_4 = arith.constant 0 : index
    %c0_5 = arith.constant 0 : index
    %3 = vector.load %arg1[%c1, %c0_4, %c0_5] : memref<3x8x64xf32, #tpu.memory_space<vmem>>, vector<1x8x64xf32>
    %4 = vector.shape_cast %3 : vector<1x8x64xf32> to vector<8x64xf32>
    %c2 = arith.constant 2 : index
    %c0_6 = arith.constant 0 : index
    %c0_7 = arith.constant 0 : index
    %5 = vector.load %arg1[%c2, %c0_6, %c0_7] : memref<3x8x64xf32, #tpu.memory_space<vmem>>, vector<1x8x64xf32>
    %6 = vector.shape_cast %5 : vector<1x8x64xf32> to vector<8x64xf32>
    %7 = tpu.concatenate %2, %4, %6 in 0 : vector<8x64xf32>, vector<8x64xf32>, vector<8x64xf32> -> vector<24x64xf32>
    %c0_8 = arith.constant 0 : index
    %c0_9 = arith.constant 0 : index
    %8 = vector.load %arg14[%c0_8, %c0_9] : memref<64x256xf32, #tpu.memory_space<vmem>>, vector<64x256xf32>
    %cst = arith.constant dense<0.000000e+00> : vector<24x256xf32>
    %9 = tpu.matmul %7, %8, %cst {dimension_numbers = #tpu.dot_dimension_numbers<[1], [0], [0], [1], [0, 0, 1, 1], [], []>} : vector<24x64xf32>, vector<64x256xf32>, vector<24x256xf32> -> vector<24x256xf32>
    %c0_10 = arith.constant 0 : index
    %c0_11 = arith.constant 0 : index
    %10 = vector.load %arg16[%c0_10, %c0_11] : memref<1x256xf32, #tpu.memory_space<vmem>>, vector<1x256xf32>
    %11 = vector.broadcast %10 : vector<1x256xf32> to vector<24x256xf32>
    %12 = arith.addf %9, %11 : vector<24x256xf32>
    %13 = vector.extract_strided_slice %12 {offsets = [0, 0], sizes = [8, 256], strides = [1, 1]} : vector<24x256xf32> to vector<8x256xf32>
    %14 = vector.extract_strided_slice %12 {offsets = [8, 0], sizes = [8, 256], strides = [1, 1]} : vector<24x256xf32> to vector<8x256xf32>
    %15 = vector.extract_strided_slice %12 {offsets = [16, 0], sizes = [8, 256], strides = [1, 1]} : vector<24x256xf32> to vector<8x256xf32>
    %c0_12 = arith.constant 0 : index
    %c0_13 = arith.constant 0 : index
    %16 = vector.load %arg15[%c0_12, %c0_13] : memref<64x256xf32, #tpu.memory_space<vmem>>, vector<64x256xf32>
    %c0_14 = arith.constant 0 : index
    %c0_15 = arith.constant 0 : index
    %17 = vector.load %arg17[%c0_14, %c0_15] : memref<128x256xf32, #tpu.memory_space<vmem>>, vector<128x256xf32>
    %c0_16 = arith.constant 0 : index
    %c0_17 = arith.constant 0 : index
    %18 = vector.load %arg18[%c0_16, %c0_17] : memref<1x256xf32, #tpu.memory_space<vmem>>, vector<1x256xf32>
    %c0_18 = arith.constant 0 : index
    %c0_19 = arith.constant 0 : index
    %19 = vector.load %arg10[%c0_18, %c0_19] : memref<256x256xf32, #tpu.memory_space<vmem>>, vector<256x256xf32>
    %c0_20 = arith.constant 0 : index
    %c0_21 = arith.constant 0 : index
    %20 = vector.load %arg11[%c0_20, %c0_21] : memref<1x256xf32, #tpu.memory_space<vmem>>, vector<1x256xf32>
    %c0_22 = arith.constant 0 : index
    %c0_23 = arith.constant 0 : index
    %21 = vector.load %arg12[%c0_22, %c0_23] : memref<1x256xf32, #tpu.memory_space<vmem>>, vector<1x256xf32>
    %c0_24 = arith.constant 0 : index
    %c0_25 = arith.constant 0 : index
    %22 = vector.load %arg13[%c0_24, %c0_25] : memref<1x1xf32, #tpu.memory_space<vmem>>, vector<1x1xf32>
    %c0_26 = arith.constant 0 : index
    %c0_27 = arith.constant 0 : index
    %23 = vector.load %arg7[%c0_26, %c0_27] : memref<8x3xf32, #tpu.memory_space<vmem>>, vector<8x3xf32>
    %c0_28 = arith.constant 0 : index
    %c0_29 = arith.constant 0 : index
    %24 = vector.load %arg8[%c0_28, %c0_29] : memref<8x3xf32, #tpu.memory_space<vmem>>, vector<8x3xf32>
    %25 = arith.mulf %2, %0 : vector<8x64xf32>
    %26 = arith.mulf %2, %0 : vector<8x64xf32>
    %27 = arith.subf %2, %0 : vector<8x64xf32>
    %28 = math.absf %27 : vector<8x64xf32>
    %29 = arith.subf %2, %0 : vector<8x64xf32>
    %30 = math.absf %29 : vector<8x64xf32>
    %31 = tpu.concatenate %25, %26, %28, %30 in 1 : vector<8x64xf32>, vector<8x64xf32>, vector<8x64xf32>, vector<8x64xf32> -> vector<8x256xf32>
    %32 = arith.mulf %4, %0 : vector<8x64xf32>
    %33 = arith.mulf %4, %0 : vector<8x64xf32>
    %34 = arith.subf %4, %0 : vector<8x64xf32>
    %35 = math.absf %34 : vector<8x64xf32>
    %36 = arith.subf %4, %0 : vector<8x64xf32>
    %37 = math.absf %36 : vector<8x64xf32>
    %38 = tpu.concatenate %32, %33, %35, %37 in 1 : vector<8x64xf32>, vector<8x64xf32>, vector<8x64xf32>, vector<8x64xf32> -> vector<8x256xf32>
    %39 = arith.mulf %6, %0 : vector<8x64xf32>
    %40 = arith.mulf %6, %0 : vector<8x64xf32>
    %41 = arith.subf %6, %0 : vector<8x64xf32>
    %42 = math.absf %41 : vector<8x64xf32>
    %43 = arith.subf %6, %0 : vector<8x64xf32>
    %44 = math.absf %43 : vector<8x64xf32>
    %45 = tpu.concatenate %39, %40, %42, %44 in 1 : vector<8x64xf32>, vector<8x64xf32>, vector<8x64xf32>, vector<8x64xf32> -> vector<8x256xf32>
    %46 = tpu.concatenate %31, %38, %45 in 0 : vector<8x256xf32>, vector<8x256xf32>, vector<8x256xf32> -> vector<24x256xf32>
    %cst_30 = arith.constant dense<0.000000e+00> : vector<24x256xf32>
    %47 = tpu.matmul %46, %19, %cst_30 {dimension_numbers = #tpu.dot_dimension_numbers<[1], [0], [0], [1], [0, 0, 1, 1], [], []>} : vector<24x256xf32>, vector<256x256xf32>, vector<24x256xf32> -> vector<24x256xf32>
    %48 = vector.broadcast %20 : vector<1x256xf32> to vector<24x256xf32>
    %49 = arith.addf %47, %48 : vector<24x256xf32>
    %50 = math.tanh %49 : vector<24x256xf32>
    %51 = vector.broadcast %21 : vector<1x256xf32> to vector<24x256xf32>
    %52 = arith.mulf %50, %51 : vector<24x256xf32>
    %cst_31 = arith.constant dense<0.000000e+00> : vector<24xf32>
    %53 = vector.multi_reduction <add>, %52, %cst_31 [1] : vector<24x256xf32> to vector<24xf32>
    %54 = vector.shape_cast %53 : vector<24xf32> to vector<24x1xf32>
    %55 = vector.broadcast %22 : vector<1x1xf32> to vector<24x1xf32>
    %56 = arith.addf %54, %55 : vector<24x1xf32>
    %57 = vector.extract_strided_slice %56 {offsets = [0, 0], sizes = [8, 1], strides = [1, 1]} : vector<24x1xf32> to vector<8x1xf32>
    %58 = vector.extract_strided_slice %56 {offsets = [8, 0], sizes = [8, 1], strides = [1, 1]} : vector<24x1xf32> to vector<8x1xf32>
    %59 = vector.extract_strided_slice %56 {offsets = [16, 0], sizes = [8, 1], strides = [1, 1]} : vector<24x1xf32> to vector<8x1xf32>
    %60 = tpu.concatenate %57, %58, %59 in 1 : vector<8x1xf32>, vector<8x1xf32>, vector<8x1xf32> -> vector<8x3xf32>
    %cst_32 = arith.constant 0.000000e+00 : f32
    %61 = vector.broadcast %cst_32 : f32 to vector<8x3xf32>
    %62 = arith.cmpf oeq, %23, %61 : vector<8x3xf32>
    %cst_33 = arith.constant 0xCB18967F : f32
    %63 = vector.broadcast %cst_33 : f32 to vector<8x3xf32>
    %64 = arith.select %62, %63, %60 : vector<8x3xi1>, vector<8x3xf32>
    %cst_34 = arith.constant dense<0xFF800000> : vector<8xf32>
    %65 = vector.multi_reduction <maximumf>, %64, %cst_34 [1] : vector<8x3xf32> to vector<8xf32>
    %66 = vector.shape_cast %65 : vector<8xf32> to vector<8x1xf32>
    %67 = vector.broadcast %66 : vector<8x1xf32> to vector<8x3xf32>
    %68 = arith.subf %64, %67 : vector<8x3xf32>
    %69 = math.exp %68 : vector<8x3xf32>
    %cst_35 = arith.constant dense<0.000000e+00> : vector<8xf32>
    %70 = vector.multi_reduction <add>, %69, %cst_35 [1] : vector<8x3xf32> to vector<8xf32>
    %71 = vector.shape_cast %70 : vector<8xf32> to vector<8x1xf32>
    %72 = vector.broadcast %71 : vector<8x1xf32> to vector<8x3xf32>
    %73 = arith.divf %69, %72 : vector<8x3xf32>
    %cst_36 = arith.constant 0.000000e+00 : f32
    %74 = vector.broadcast %cst_36 : f32 to vector<8x64xf32>
    %cst_37 = arith.constant 0.000000e+00 : f32
    %75 = vector.broadcast %cst_37 : f32 to vector<8x64xf32>
    %cst_38 = arith.constant 0.000000e+00 : f32
    %76 = vector.broadcast %cst_38 : f32 to vector<8x64xf32>
    %cst_39 = arith.constant 0.000000e+00 : f32
    %77 = vector.broadcast %cst_39 : f32 to vector<8x64xf32>
    %cst_40 = arith.constant dense<0.000000e+00> : vector<8x256xf32>
    %78 = tpu.matmul %74, %16, %cst_40 {dimension_numbers = #tpu.dot_dimension_numbers<[1], [0], [0], [1], [0, 0, 1, 1], [], []>} : vector<8x64xf32>, vector<64x256xf32>, vector<8x256xf32> -> vector<8x256xf32>
    %79 = arith.addf %13, %78 : vector<8x256xf32>
    %80 = vector.extract_strided_slice %79 {offsets = [0, 0], sizes = [8, 192], strides = [1, 1]} : vector<8x256xf32> to vector<8x192xf32>
    %81 = arith.negf %80 : vector<8x192xf32>
    %82 = math.exp %81 : vector<8x192xf32>
    %cst_41 = arith.constant 1.000000e+00 : f32
    %83 = vector.broadcast %cst_41 : f32 to vector<8x192xf32>
    %84 = arith.addf %83, %82 : vector<8x192xf32>
    %85 = arith.divf %83, %84 : vector<8x192xf32>
    %86 = vector.extract_strided_slice %79 {offsets = [0, 192], sizes = [8, 64], strides = [1, 1]} : vector<8x256xf32> to vector<8x64xf32>
    %87 = math.tanh %86 : vector<8x64xf32>
    %88 = vector.extract_strided_slice %85 {offsets = [0, 0], sizes = [8, 64], strides = [1, 1]} : vector<8x192xf32> to vector<8x64xf32>
    %89 = vector.extract_strided_slice %85 {offsets = [0, 64], sizes = [8, 64], strides = [1, 1]} : vector<8x192xf32> to vector<8x64xf32>
    %90 = vector.extract_strided_slice %85 {offsets = [0, 128], sizes = [8, 64], strides = [1, 1]} : vector<8x192xf32> to vector<8x64xf32>
    %91 = arith.mulf %89, %75 : vector<8x64xf32>
    %92 = arith.mulf %88, %87 : vector<8x64xf32>
    %93 = arith.addf %91, %92 : vector<8x64xf32>
    %94 = math.tanh %93 : vector<8x64xf32>
    %95 = arith.mulf %90, %94 : vector<8x64xf32>
    %96 = vector.extract_strided_slice %73 {offsets = [0, 0], sizes = [8, 1], strides = [1, 1]} : vector<8x3xf32> to vector<8x1xf32>
    %97 = vector.broadcast %96 : vector<8x1xf32> to vector<8x64xf32>
    %98 = arith.mulf %97, %95 : vector<8x64xf32>
    %cst_42 = arith.constant 1.000000e+00 : f32
    %99 = vector.broadcast %cst_42 : f32 to vector<8x1xf32>
    %100 = arith.subf %99, %96 : vector<8x1xf32>
    %101 = vector.broadcast %100 : vector<8x1xf32> to vector<8x64xf32>
    %102 = arith.mulf %101, %74 : vector<8x64xf32>
    %103 = arith.addf %98, %102 : vector<8x64xf32>
    %104 = vector.extract_strided_slice %24 {offsets = [0, 0], sizes = [8, 1], strides = [1, 1]} : vector<8x3xf32> to vector<8x1xf32>
    %105 = vector.broadcast %104 : vector<8x1xf32> to vector<8x64xf32>
    %106 = arith.mulf %105, %103 : vector<8x64xf32>
    %107 = arith.addf %76, %106 : vector<8x64xf32>
    %108 = vector.extract_strided_slice %24 {offsets = [0, 0], sizes = [8, 1], strides = [1, 1]} : vector<8x3xf32> to vector<8x1xf32>
    %109 = vector.broadcast %108 : vector<8x1xf32> to vector<8x64xf32>
    %110 = arith.mulf %109, %93 : vector<8x64xf32>
    %111 = arith.addf %77, %110 : vector<8x64xf32>
    %cst_43 = arith.constant dense<0.000000e+00> : vector<8x256xf32>
    %112 = tpu.matmul %103, %16, %cst_43 {dimension_numbers = #tpu.dot_dimension_numbers<[1], [0], [0], [1], [0, 0, 1, 1], [], []>} : vector<8x64xf32>, vector<64x256xf32>, vector<8x256xf32> -> vector<8x256xf32>
    %113 = arith.addf %14, %112 : vector<8x256xf32>
    %114 = vector.extract_strided_slice %113 {offsets = [0, 0], sizes = [8, 192], strides = [1, 1]} : vector<8x256xf32> to vector<8x192xf32>
    %115 = arith.negf %114 : vector<8x192xf32>
    %116 = math.exp %115 : vector<8x192xf32>
    %cst_44 = arith.constant 1.000000e+00 : f32
    %117 = vector.broadcast %cst_44 : f32 to vector<8x192xf32>
    %118 = arith.addf %117, %116 : vector<8x192xf32>
    %119 = arith.divf %117, %118 : vector<8x192xf32>
    %120 = vector.extract_strided_slice %113 {offsets = [0, 192], sizes = [8, 64], strides = [1, 1]} : vector<8x256xf32> to vector<8x64xf32>
    %121 = math.tanh %120 : vector<8x64xf32>
    %122 = vector.extract_strided_slice %119 {offsets = [0, 0], sizes = [8, 64], strides = [1, 1]} : vector<8x192xf32> to vector<8x64xf32>
    %123 = vector.extract_strided_slice %119 {offsets = [0, 64], sizes = [8, 64], strides = [1, 1]} : vector<8x192xf32> to vector<8x64xf32>
    %124 = vector.extract_strided_slice %119 {offsets = [0, 128], sizes = [8, 64], strides = [1, 1]} : vector<8x192xf32> to vector<8x64xf32>
    %125 = arith.mulf %123, %93 : vector<8x64xf32>
    %126 = arith.mulf %122, %121 : vector<8x64xf32>
    %127 = arith.addf %125, %126 : vector<8x64xf32>
    %128 = math.tanh %127 : vector<8x64xf32>
    %129 = arith.mulf %124, %128 : vector<8x64xf32>
    %130 = vector.extract_strided_slice %73 {offsets = [0, 1], sizes = [8, 1], strides = [1, 1]} : vector<8x3xf32> to vector<8x1xf32>
    %131 = vector.broadcast %130 : vector<8x1xf32> to vector<8x64xf32>
    %132 = arith.mulf %131, %129 : vector<8x64xf32>
    %cst_45 = arith.constant 1.000000e+00 : f32
    %133 = vector.broadcast %cst_45 : f32 to vector<8x1xf32>
    %134 = arith.subf %133, %130 : vector<8x1xf32>
    %135 = vector.broadcast %134 : vector<8x1xf32> to vector<8x64xf32>
    %136 = arith.mulf %135, %103 : vector<8x64xf32>
    %137 = arith.addf %132, %136 : vector<8x64xf32>
    %138 = vector.extract_strided_slice %24 {offsets = [0, 1], sizes = [8, 1], strides = [1, 1]} : vector<8x3xf32> to vector<8x1xf32>
    %139 = vector.broadcast %138 : vector<8x1xf32> to vector<8x64xf32>
    %140 = arith.mulf %139, %137 : vector<8x64xf32>
    %141 = arith.addf %107, %140 : vector<8x64xf32>
    %142 = vector.extract_strided_slice %24 {offsets = [0, 1], sizes = [8, 1], strides = [1, 1]} : vector<8x3xf32> to vector<8x1xf32>
    %143 = vector.broadcast %142 : vector<8x1xf32> to vector<8x64xf32>
    %144 = arith.mulf %143, %127 : vector<8x64xf32>
    %145 = arith.addf %111, %144 : vector<8x64xf32>
    %cst_46 = arith.constant dense<0.000000e+00> : vector<8x256xf32>
    %146 = tpu.matmul %137, %16, %cst_46 {dimension_numbers = #tpu.dot_dimension_numbers<[1], [0], [0], [1], [0, 0, 1, 1], [], []>} : vector<8x64xf32>, vector<64x256xf32>, vector<8x256xf32> -> vector<8x256xf32>
    %147 = arith.addf %15, %146 : vector<8x256xf32>
    %148 = vector.extract_strided_slice %147 {offsets = [0, 0], sizes = [8, 192], strides = [1, 1]} : vector<8x256xf32> to vector<8x192xf32>
    %149 = arith.negf %148 : vector<8x192xf32>
    %150 = math.exp %149 : vector<8x192xf32>
    %cst_47 = arith.constant 1.000000e+00 : f32
    %151 = vector.broadcast %cst_47 : f32 to vector<8x192xf32>
    %152 = arith.addf %151, %150 : vector<8x192xf32>
    %153 = arith.divf %151, %152 : vector<8x192xf32>
    %154 = vector.extract_strided_slice %147 {offsets = [0, 192], sizes = [8, 64], strides = [1, 1]} : vector<8x256xf32> to vector<8x64xf32>
    %155 = math.tanh %154 : vector<8x64xf32>
    %156 = vector.extract_strided_slice %153 {offsets = [0, 0], sizes = [8, 64], strides = [1, 1]} : vector<8x192xf32> to vector<8x64xf32>
    %157 = vector.extract_strided_slice %153 {offsets = [0, 64], sizes = [8, 64], strides = [1, 1]} : vector<8x192xf32> to vector<8x64xf32>
    %158 = vector.extract_strided_slice %153 {offsets = [0, 128], sizes = [8, 64], strides = [1, 1]} : vector<8x192xf32> to vector<8x64xf32>
    %159 = arith.mulf %157, %127 : vector<8x64xf32>
    %160 = arith.mulf %156, %155 : vector<8x64xf32>
    %161 = arith.addf %159, %160 : vector<8x64xf32>
    %162 = math.tanh %161 : vector<8x64xf32>
    %163 = arith.mulf %158, %162 : vector<8x64xf32>
    %164 = vector.extract_strided_slice %73 {offsets = [0, 2], sizes = [8, 1], strides = [1, 1]} : vector<8x3xf32> to vector<8x1xf32>
    %165 = vector.broadcast %164 : vector<8x1xf32> to vector<8x64xf32>
    %166 = arith.mulf %165, %163 : vector<8x64xf32>
    %cst_48 = arith.constant 1.000000e+00 : f32
    %167 = vector.broadcast %cst_48 : f32 to vector<8x1xf32>
    %168 = arith.subf %167, %164 : vector<8x1xf32>
    %169 = vector.broadcast %168 : vector<8x1xf32> to vector<8x64xf32>
    %170 = arith.mulf %169, %137 : vector<8x64xf32>
    %171 = arith.addf %166, %170 : vector<8x64xf32>
    %172 = vector.extract_strided_slice %24 {offsets = [0, 2], sizes = [8, 1], strides = [1, 1]} : vector<8x3xf32> to vector<8x1xf32>
    %173 = vector.broadcast %172 : vector<8x1xf32> to vector<8x64xf32>
    %174 = arith.mulf %173, %171 : vector<8x64xf32>
    %175 = arith.addf %141, %174 : vector<8x64xf32>
    %176 = vector.extract_strided_slice %24 {offsets = [0, 2], sizes = [8, 1], strides = [1, 1]} : vector<8x3xf32> to vector<8x1xf32>
    %177 = vector.broadcast %176 : vector<8x1xf32> to vector<8x64xf32>
    %178 = arith.mulf %177, %161 : vector<8x64xf32>
    %179 = arith.addf %145, %178 : vector<8x64xf32>
    %180 = tpu.concatenate %175, %0 in 1 : vector<8x64xf32>, vector<8x64xf32> -> vector<8x128xf32>
    %cst_49 = arith.constant dense<0.000000e+00> : vector<8x256xf32>
    %181 = tpu.matmul %180, %17, %cst_49 {dimension_numbers = #tpu.dot_dimension_numbers<[1], [0], [0], [1], [0, 0, 1, 1], [], []>} : vector<8x128xf32>, vector<128x256xf32>, vector<8x256xf32> -> vector<8x256xf32>
    %182 = vector.broadcast %18 : vector<1x256xf32> to vector<8x256xf32>
    %183 = arith.addf %181, %182 : vector<8x256xf32>
    %184 = vector.extract_strided_slice %183 {offsets = [0, 0], sizes = [8, 192], strides = [1, 1]} : vector<8x256xf32> to vector<8x192xf32>
    %185 = arith.negf %184 : vector<8x192xf32>
    %186 = math.exp %185 : vector<8x192xf32>
    %cst_50 = arith.constant 1.000000e+00 : f32
    %187 = vector.broadcast %cst_50 : f32 to vector<8x192xf32>
    %188 = arith.addf %187, %186 : vector<8x192xf32>
    %189 = arith.divf %187, %188 : vector<8x192xf32>
    %190 = vector.extract_strided_slice %183 {offsets = [0, 192], sizes = [8, 64], strides = [1, 1]} : vector<8x256xf32> to vector<8x64xf32>
    %191 = math.tanh %190 : vector<8x64xf32>
    %192 = vector.extract_strided_slice %189 {offsets = [0, 0], sizes = [8, 64], strides = [1, 1]} : vector<8x192xf32> to vector<8x64xf32>
    %193 = vector.extract_strided_slice %189 {offsets = [0, 64], sizes = [8, 64], strides = [1, 1]} : vector<8x192xf32> to vector<8x64xf32>
    %194 = vector.extract_strided_slice %189 {offsets = [0, 128], sizes = [8, 64], strides = [1, 1]} : vector<8x192xf32> to vector<8x64xf32>
    %195 = arith.mulf %193, %179 : vector<8x64xf32>
    %196 = arith.mulf %192, %191 : vector<8x64xf32>
    %197 = arith.addf %195, %196 : vector<8x64xf32>
    %198 = math.tanh %197 : vector<8x64xf32>
    %199 = arith.mulf %194, %198 : vector<8x64xf32>
    %200 = arith.mulf %2, %0 : vector<8x64xf32>
    %201 = arith.mulf %2, %199 : vector<8x64xf32>
    %202 = arith.subf %2, %0 : vector<8x64xf32>
    %203 = math.absf %202 : vector<8x64xf32>
    %204 = arith.subf %2, %199 : vector<8x64xf32>
    %205 = math.absf %204 : vector<8x64xf32>
    %206 = tpu.concatenate %200, %201, %203, %205 in 1 : vector<8x64xf32>, vector<8x64xf32>, vector<8x64xf32>, vector<8x64xf32> -> vector<8x256xf32>
    %207 = arith.mulf %4, %0 : vector<8x64xf32>
    %208 = arith.mulf %4, %199 : vector<8x64xf32>
    %209 = arith.subf %4, %0 : vector<8x64xf32>
    %210 = math.absf %209 : vector<8x64xf32>
    %211 = arith.subf %4, %199 : vector<8x64xf32>
    %212 = math.absf %211 : vector<8x64xf32>
    %213 = tpu.concatenate %207, %208, %210, %212 in 1 : vector<8x64xf32>, vector<8x64xf32>, vector<8x64xf32>, vector<8x64xf32> -> vector<8x256xf32>
    %214 = arith.mulf %6, %0 : vector<8x64xf32>
    %215 = arith.mulf %6, %199 : vector<8x64xf32>
    %216 = arith.subf %6, %0 : vector<8x64xf32>
    %217 = math.absf %216 : vector<8x64xf32>
    %218 = arith.subf %6, %199 : vector<8x64xf32>
    %219 = math.absf %218 : vector<8x64xf32>
    %220 = tpu.concatenate %214, %215, %217, %219 in 1 : vector<8x64xf32>, vector<8x64xf32>, vector<8x64xf32>, vector<8x64xf32> -> vector<8x256xf32>
    %221 = tpu.concatenate %206, %213, %220 in 0 : vector<8x256xf32>, vector<8x256xf32>, vector<8x256xf32> -> vector<24x256xf32>
    %cst_51 = arith.constant dense<0.000000e+00> : vector<24x256xf32>
    %222 = tpu.matmul %221, %19, %cst_51 {dimension_numbers = #tpu.dot_dimension_numbers<[1], [0], [0], [1], [0, 0, 1, 1], [], []>} : vector<24x256xf32>, vector<256x256xf32>, vector<24x256xf32> -> vector<24x256xf32>
    %223 = vector.broadcast %20 : vector<1x256xf32> to vector<24x256xf32>
    %224 = arith.addf %222, %223 : vector<24x256xf32>
    %225 = math.tanh %224 : vector<24x256xf32>
    %226 = vector.broadcast %21 : vector<1x256xf32> to vector<24x256xf32>
    %227 = arith.mulf %225, %226 : vector<24x256xf32>
    %cst_52 = arith.constant dense<0.000000e+00> : vector<24xf32>
    %228 = vector.multi_reduction <add>, %227, %cst_52 [1] : vector<24x256xf32> to vector<24xf32>
    %229 = vector.shape_cast %228 : vector<24xf32> to vector<24x1xf32>
    %230 = vector.broadcast %22 : vector<1x1xf32> to vector<24x1xf32>
    %231 = arith.addf %229, %230 : vector<24x1xf32>
    %232 = vector.extract_strided_slice %231 {offsets = [0, 0], sizes = [8, 1], strides = [1, 1]} : vector<24x1xf32> to vector<8x1xf32>
    %233 = vector.extract_strided_slice %231 {offsets = [8, 0], sizes = [8, 1], strides = [1, 1]} : vector<24x1xf32> to vector<8x1xf32>
    %234 = vector.extract_strided_slice %231 {offsets = [16, 0], sizes = [8, 1], strides = [1, 1]} : vector<24x1xf32> to vector<8x1xf32>
    %235 = tpu.concatenate %232, %233, %234 in 1 : vector<8x1xf32>, vector<8x1xf32>, vector<8x1xf32> -> vector<8x3xf32>
    %cst_53 = arith.constant 0.000000e+00 : f32
    %236 = vector.broadcast %cst_53 : f32 to vector<8x3xf32>
    %237 = arith.cmpf oeq, %23, %236 : vector<8x3xf32>
    %cst_54 = arith.constant 0xCB18967F : f32
    %238 = vector.broadcast %cst_54 : f32 to vector<8x3xf32>
    %239 = arith.select %237, %238, %235 : vector<8x3xi1>, vector<8x3xf32>
    %cst_55 = arith.constant dense<0xFF800000> : vector<8xf32>
    %240 = vector.multi_reduction <maximumf>, %239, %cst_55 [1] : vector<8x3xf32> to vector<8xf32>
    %241 = vector.shape_cast %240 : vector<8xf32> to vector<8x1xf32>
    %242 = vector.broadcast %241 : vector<8x1xf32> to vector<8x3xf32>
    %243 = arith.subf %239, %242 : vector<8x3xf32>
    %244 = math.exp %243 : vector<8x3xf32>
    %cst_56 = arith.constant dense<0.000000e+00> : vector<8xf32>
    %245 = vector.multi_reduction <add>, %244, %cst_56 [1] : vector<8x3xf32> to vector<8xf32>
    %246 = vector.shape_cast %245 : vector<8xf32> to vector<8x1xf32>
    %247 = vector.broadcast %246 : vector<8x1xf32> to vector<8x3xf32>
    %248 = arith.divf %244, %247 : vector<8x3xf32>
    %cst_57 = arith.constant 0.000000e+00 : f32
    %249 = vector.broadcast %cst_57 : f32 to vector<8x64xf32>
    %cst_58 = arith.constant 0.000000e+00 : f32
    %250 = vector.broadcast %cst_58 : f32 to vector<8x64xf32>
    %cst_59 = arith.constant 0.000000e+00 : f32
    %251 = vector.broadcast %cst_59 : f32 to vector<8x64xf32>
    %cst_60 = arith.constant 0.000000e+00 : f32
    %252 = vector.broadcast %cst_60 : f32 to vector<8x64xf32>
    %cst_61 = arith.constant dense<0.000000e+00> : vector<8x256xf32>
    %253 = tpu.matmul %249, %16, %cst_61 {dimension_numbers = #tpu.dot_dimension_numbers<[1], [0], [0], [1], [0, 0, 1, 1], [], []>} : vector<8x64xf32>, vector<64x256xf32>, vector<8x256xf32> -> vector<8x256xf32>
    %254 = arith.addf %13, %253 : vector<8x256xf32>
    %255 = vector.extract_strided_slice %254 {offsets = [0, 0], sizes = [8, 192], strides = [1, 1]} : vector<8x256xf32> to vector<8x192xf32>
    %256 = arith.negf %255 : vector<8x192xf32>
    %257 = math.exp %256 : vector<8x192xf32>
    %cst_62 = arith.constant 1.000000e+00 : f32
    %258 = vector.broadcast %cst_62 : f32 to vector<8x192xf32>
    %259 = arith.addf %258, %257 : vector<8x192xf32>
    %260 = arith.divf %258, %259 : vector<8x192xf32>
    %261 = vector.extract_strided_slice %254 {offsets = [0, 192], sizes = [8, 64], strides = [1, 1]} : vector<8x256xf32> to vector<8x64xf32>
    %262 = math.tanh %261 : vector<8x64xf32>
    %263 = vector.extract_strided_slice %260 {offsets = [0, 0], sizes = [8, 64], strides = [1, 1]} : vector<8x192xf32> to vector<8x64xf32>
    %264 = vector.extract_strided_slice %260 {offsets = [0, 64], sizes = [8, 64], strides = [1, 1]} : vector<8x192xf32> to vector<8x64xf32>
    %265 = vector.extract_strided_slice %260 {offsets = [0, 128], sizes = [8, 64], strides = [1, 1]} : vector<8x192xf32> to vector<8x64xf32>
    %266 = arith.mulf %264, %250 : vector<8x64xf32>
    %267 = arith.mulf %263, %262 : vector<8x64xf32>
    %268 = arith.addf %266, %267 : vector<8x64xf32>
    %269 = math.tanh %268 : vector<8x64xf32>
    %270 = arith.mulf %265, %269 : vector<8x64xf32>
    %271 = vector.extract_strided_slice %248 {offsets = [0, 0], sizes = [8, 1], strides = [1, 1]} : vector<8x3xf32> to vector<8x1xf32>
    %272 = vector.broadcast %271 : vector<8x1xf32> to vector<8x64xf32>
    %273 = arith.mulf %272, %270 : vector<8x64xf32>
    %cst_63 = arith.constant 1.000000e+00 : f32
    %274 = vector.broadcast %cst_63 : f32 to vector<8x1xf32>
    %275 = arith.subf %274, %271 : vector<8x1xf32>
    %276 = vector.broadcast %275 : vector<8x1xf32> to vector<8x64xf32>
    %277 = arith.mulf %276, %249 : vector<8x64xf32>
    %278 = arith.addf %273, %277 : vector<8x64xf32>
    %279 = vector.extract_strided_slice %24 {offsets = [0, 0], sizes = [8, 1], strides = [1, 1]} : vector<8x3xf32> to vector<8x1xf32>
    %280 = vector.broadcast %279 : vector<8x1xf32> to vector<8x64xf32>
    %281 = arith.mulf %280, %278 : vector<8x64xf32>
    %282 = arith.addf %251, %281 : vector<8x64xf32>
    %283 = vector.extract_strided_slice %24 {offsets = [0, 0], sizes = [8, 1], strides = [1, 1]} : vector<8x3xf32> to vector<8x1xf32>
    %284 = vector.broadcast %283 : vector<8x1xf32> to vector<8x64xf32>
    %285 = arith.mulf %284, %268 : vector<8x64xf32>
    %286 = arith.addf %252, %285 : vector<8x64xf32>
    %cst_64 = arith.constant dense<0.000000e+00> : vector<8x256xf32>
    %287 = tpu.matmul %278, %16, %cst_64 {dimension_numbers = #tpu.dot_dimension_numbers<[1], [0], [0], [1], [0, 0, 1, 1], [], []>} : vector<8x64xf32>, vector<64x256xf32>, vector<8x256xf32> -> vector<8x256xf32>
    %288 = arith.addf %14, %287 : vector<8x256xf32>
    %289 = vector.extract_strided_slice %288 {offsets = [0, 0], sizes = [8, 192], strides = [1, 1]} : vector<8x256xf32> to vector<8x192xf32>
    %290 = arith.negf %289 : vector<8x192xf32>
    %291 = math.exp %290 : vector<8x192xf32>
    %cst_65 = arith.constant 1.000000e+00 : f32
    %292 = vector.broadcast %cst_65 : f32 to vector<8x192xf32>
    %293 = arith.addf %292, %291 : vector<8x192xf32>
    %294 = arith.divf %292, %293 : vector<8x192xf32>
    %295 = vector.extract_strided_slice %288 {offsets = [0, 192], sizes = [8, 64], strides = [1, 1]} : vector<8x256xf32> to vector<8x64xf32>
    %296 = math.tanh %295 : vector<8x64xf32>
    %297 = vector.extract_strided_slice %294 {offsets = [0, 0], sizes = [8, 64], strides = [1, 1]} : vector<8x192xf32> to vector<8x64xf32>
    %298 = vector.extract_strided_slice %294 {offsets = [0, 64], sizes = [8, 64], strides = [1, 1]} : vector<8x192xf32> to vector<8x64xf32>
    %299 = vector.extract_strided_slice %294 {offsets = [0, 128], sizes = [8, 64], strides = [1, 1]} : vector<8x192xf32> to vector<8x64xf32>
    %300 = arith.mulf %298, %268 : vector<8x64xf32>
    %301 = arith.mulf %297, %296 : vector<8x64xf32>
    %302 = arith.addf %300, %301 : vector<8x64xf32>
    %303 = math.tanh %302 : vector<8x64xf32>
    %304 = arith.mulf %299, %303 : vector<8x64xf32>
    %305 = vector.extract_strided_slice %248 {offsets = [0, 1], sizes = [8, 1], strides = [1, 1]} : vector<8x3xf32> to vector<8x1xf32>
    %306 = vector.broadcast %305 : vector<8x1xf32> to vector<8x64xf32>
    %307 = arith.mulf %306, %304 : vector<8x64xf32>
    %cst_66 = arith.constant 1.000000e+00 : f32
    %308 = vector.broadcast %cst_66 : f32 to vector<8x1xf32>
    %309 = arith.subf %308, %305 : vector<8x1xf32>
    %310 = vector.broadcast %309 : vector<8x1xf32> to vector<8x64xf32>
    %311 = arith.mulf %310, %278 : vector<8x64xf32>
    %312 = arith.addf %307, %311 : vector<8x64xf32>
    %313 = vector.extract_strided_slice %24 {offsets = [0, 1], sizes = [8, 1], strides = [1, 1]} : vector<8x3xf32> to vector<8x1xf32>
    %314 = vector.broadcast %313 : vector<8x1xf32> to vector<8x64xf32>
    %315 = arith.mulf %314, %312 : vector<8x64xf32>
    %316 = arith.addf %282, %315 : vector<8x64xf32>
    %317 = vector.extract_strided_slice %24 {offsets = [0, 1], sizes = [8, 1], strides = [1, 1]} : vector<8x3xf32> to vector<8x1xf32>
    %318 = vector.broadcast %317 : vector<8x1xf32> to vector<8x64xf32>
    %319 = arith.mulf %318, %302 : vector<8x64xf32>
    %320 = arith.addf %286, %319 : vector<8x64xf32>
    %cst_67 = arith.constant dense<0.000000e+00> : vector<8x256xf32>
    %321 = tpu.matmul %312, %16, %cst_67 {dimension_numbers = #tpu.dot_dimension_numbers<[1], [0], [0], [1], [0, 0, 1, 1], [], []>} : vector<8x64xf32>, vector<64x256xf32>, vector<8x256xf32> -> vector<8x256xf32>
    %322 = arith.addf %15, %321 : vector<8x256xf32>
    %323 = vector.extract_strided_slice %322 {offsets = [0, 0], sizes = [8, 192], strides = [1, 1]} : vector<8x256xf32> to vector<8x192xf32>
    %324 = arith.negf %323 : vector<8x192xf32>
    %325 = math.exp %324 : vector<8x192xf32>
    %cst_68 = arith.constant 1.000000e+00 : f32
    %326 = vector.broadcast %cst_68 : f32 to vector<8x192xf32>
    %327 = arith.addf %326, %325 : vector<8x192xf32>
    %328 = arith.divf %326, %327 : vector<8x192xf32>
    %329 = vector.extract_strided_slice %322 {offsets = [0, 192], sizes = [8, 64], strides = [1, 1]} : vector<8x256xf32> to vector<8x64xf32>
    %330 = math.tanh %329 : vector<8x64xf32>
    %331 = vector.extract_strided_slice %328 {offsets = [0, 0], sizes = [8, 64], strides = [1, 1]} : vector<8x192xf32> to vector<8x64xf32>
    %332 = vector.extract_strided_slice %328 {offsets = [0, 64], sizes = [8, 64], strides = [1, 1]} : vector<8x192xf32> to vector<8x64xf32>
    %333 = vector.extract_strided_slice %328 {offsets = [0, 128], sizes = [8, 64], strides = [1, 1]} : vector<8x192xf32> to vector<8x64xf32>
    %334 = arith.mulf %332, %302 : vector<8x64xf32>
    %335 = arith.mulf %331, %330 : vector<8x64xf32>
    %336 = arith.addf %334, %335 : vector<8x64xf32>
    %337 = math.tanh %336 : vector<8x64xf32>
    %338 = arith.mulf %333, %337 : vector<8x64xf32>
    %339 = vector.extract_strided_slice %248 {offsets = [0, 2], sizes = [8, 1], strides = [1, 1]} : vector<8x3xf32> to vector<8x1xf32>
    %340 = vector.broadcast %339 : vector<8x1xf32> to vector<8x64xf32>
    %341 = arith.mulf %340, %338 : vector<8x64xf32>
    %cst_69 = arith.constant 1.000000e+00 : f32
    %342 = vector.broadcast %cst_69 : f32 to vector<8x1xf32>
    %343 = arith.subf %342, %339 : vector<8x1xf32>
    %344 = vector.broadcast %343 : vector<8x1xf32> to vector<8x64xf32>
    %345 = arith.mulf %344, %312 : vector<8x64xf32>
    %346 = arith.addf %341, %345 : vector<8x64xf32>
    %347 = vector.extract_strided_slice %24 {offsets = [0, 2], sizes = [8, 1], strides = [1, 1]} : vector<8x3xf32> to vector<8x1xf32>
    %348 = vector.broadcast %347 : vector<8x1xf32> to vector<8x64xf32>
    %349 = arith.mulf %348, %346 : vector<8x64xf32>
    %350 = arith.addf %316, %349 : vector<8x64xf32>
    %351 = vector.extract_strided_slice %24 {offsets = [0, 2], sizes = [8, 1], strides = [1, 1]} : vector<8x3xf32> to vector<8x1xf32>
    %352 = vector.broadcast %351 : vector<8x1xf32> to vector<8x64xf32>
    %353 = arith.mulf %352, %336 : vector<8x64xf32>
    %354 = arith.addf %320, %353 : vector<8x64xf32>
    %355 = tpu.concatenate %350, %199 in 1 : vector<8x64xf32>, vector<8x64xf32> -> vector<8x128xf32>
    %cst_70 = arith.constant dense<0.000000e+00> : vector<8x256xf32>
    %356 = tpu.matmul %355, %17, %cst_70 {dimension_numbers = #tpu.dot_dimension_numbers<[1], [0], [0], [1], [0, 0, 1, 1], [], []>} : vector<8x128xf32>, vector<128x256xf32>, vector<8x256xf32> -> vector<8x256xf32>
    %357 = vector.broadcast %18 : vector<1x256xf32> to vector<8x256xf32>
    %358 = arith.addf %356, %357 : vector<8x256xf32>
    %359 = vector.extract_strided_slice %358 {offsets = [0, 0], sizes = [8, 192], strides = [1, 1]} : vector<8x256xf32> to vector<8x192xf32>
    %360 = arith.negf %359 : vector<8x192xf32>
    %361 = math.exp %360 : vector<8x192xf32>
    %cst_71 = arith.constant 1.000000e+00 : f32
    %362 = vector.broadcast %cst_71 : f32 to vector<8x192xf32>
    %363 = arith.addf %362, %361 : vector<8x192xf32>
    %364 = arith.divf %362, %363 : vector<8x192xf32>
    %365 = vector.extract_strided_slice %358 {offsets = [0, 192], sizes = [8, 64], strides = [1, 1]} : vector<8x256xf32> to vector<8x64xf32>
    %366 = math.tanh %365 : vector<8x64xf32>
    %367 = vector.extract_strided_slice %364 {offsets = [0, 0], sizes = [8, 64], strides = [1, 1]} : vector<8x192xf32> to vector<8x64xf32>
    %368 = vector.extract_strided_slice %364 {offsets = [0, 64], sizes = [8, 64], strides = [1, 1]} : vector<8x192xf32> to vector<8x64xf32>
    %369 = vector.extract_strided_slice %364 {offsets = [0, 128], sizes = [8, 64], strides = [1, 1]} : vector<8x192xf32> to vector<8x64xf32>
    %370 = arith.mulf %368, %354 : vector<8x64xf32>
    %371 = arith.mulf %367, %366 : vector<8x64xf32>
    %372 = arith.addf %370, %371 : vector<8x64xf32>
    %373 = math.tanh %372 : vector<8x64xf32>
    %374 = arith.mulf %369, %373 : vector<8x64xf32>
    %c0_72 = arith.constant 0 : index
    %c0_73 = arith.constant 0 : index
    %375 = vector.load %arg4[%c0_72, %c0_73] : memref<8x512xf32, #tpu.memory_space<vmem>>, vector<8x512xf32>
    %c0_74 = arith.constant 0 : index
    %c0_75 = arith.constant 0 : index
    %376 = vector.load %arg5[%c0_74, %c0_75] : memref<8x512xf32, #tpu.memory_space<vmem>>, vector<8x512xf32>
    %c0_76 = arith.constant 0 : index
    %c0_77 = arith.constant 0 : index
    %377 = vector.load %arg6[%c0_76, %c0_77] : memref<8x128xf32, #tpu.memory_space<vmem>>, vector<8x128xf32>
    %378 = tpu.concatenate %374, %375, %376, %377 in 1 : vector<8x64xf32>, vector<8x512xf32>, vector<8x512xf32>, vector<8x128xf32> -> vector<8x1216xf32>
    %c0_78 = arith.constant 0 : index
    %c0_79 = arith.constant 0 : index
    %379 = vector.load %arg19[%c0_78, %c0_79] : memref<1216x64xf32, #tpu.memory_space<vmem>>, vector<1216x64xf32>
    %cst_80 = arith.constant dense<0.000000e+00> : vector<8x64xf32>
    %380 = tpu.matmul %378, %379, %cst_80 {dimension_numbers = #tpu.dot_dimension_numbers<[1], [0], [0], [1], [0, 0, 1, 1], [], []>} : vector<8x1216xf32>, vector<1216x64xf32>, vector<8x64xf32> -> vector<8x64xf32>
    %c0_81 = arith.constant 0 : index
    %c0_82 = arith.constant 0 : index
    %381 = vector.load %arg20[%c0_81, %c0_82] : memref<1x64xf32, #tpu.memory_space<vmem>>, vector<1x64xf32>
    %382 = vector.broadcast %381 : vector<1x64xf32> to vector<8x64xf32>
    %383 = arith.addf %380, %382 : vector<8x64xf32>
    %c0_83 = arith.constant 0 : index
    %c0_84 = arith.constant 0 : index
    %384 = vector.load %arg3[%c0_83, %c0_84] : memref<2x64xf32, #tpu.memory_space<vmem>>, vector<2x64xf32>
    %385 = tpu.transpose %383, [1, 0] : vector<8x64xf32> -> vector<64x8xf32>
    %cst_85 = arith.constant dense<0.000000e+00> : vector<2x8xf32>
    %386 = tpu.matmul %384, %385, %cst_85 {dimension_numbers = #tpu.dot_dimension_numbers<[1], [0], [0], [1], [0, 0, 1, 1], [], []>} : vector<2x64xf32>, vector<64x8xf32>, vector<2x8xf32> -> vector<2x8xf32>
    %c0_86 = arith.constant 0 : index
    %c0_87 = arith.constant 0 : index
    %387 = vector.load %arg9[%c0_86, %c0_87] : memref<2x4xf32, #tpu.memory_space<vmem>>, vector<2x4xf32>
    %388 = vector.extract_strided_slice %386 {offsets = [0, 0], sizes = [1, 4], strides = [1, 1]} : vector<2x8xf32> to vector<1x4xf32>
    %389 = vector.extract_strided_slice %387 {offsets = [0, 0], sizes = [1, 4], strides = [1, 1]} : vector<2x4xf32> to vector<1x4xf32>
    %cst_88 = arith.constant 0.000000e+00 : f32
    %390 = vector.broadcast %cst_88 : f32 to vector<1x4xf32>
    %391 = arith.cmpf oeq, %389, %390 : vector<1x4xf32>
    %cst_89 = arith.constant 0xCB18967F : f32
    %392 = vector.broadcast %cst_89 : f32 to vector<1x4xf32>
    %393 = arith.select %391, %392, %388 : vector<1x4xi1>, vector<1x4xf32>
    %cst_90 = arith.constant dense<0xFF800000> : vector<1xf32>
    %394 = vector.multi_reduction <maximumf>, %393, %cst_90 [1] : vector<1x4xf32> to vector<1xf32>
    %395 = vector.shape_cast %394 : vector<1xf32> to vector<1x1xf32>
    %396 = vector.broadcast %395 : vector<1x1xf32> to vector<1x4xf32>
    %397 = arith.subf %393, %396 : vector<1x4xf32>
    %398 = math.exp %397 : vector<1x4xf32>
    %cst_91 = arith.constant dense<0.000000e+00> : vector<1xf32>
    %399 = vector.multi_reduction <add>, %398, %cst_91 [1] : vector<1x4xf32> to vector<1xf32>
    %400 = vector.shape_cast %399 : vector<1xf32> to vector<1x1xf32>
    %401 = vector.broadcast %400 : vector<1x1xf32> to vector<1x4xf32>
    %402 = arith.divf %398, %401 : vector<1x4xf32>
    %c0_92 = arith.constant 0 : index
    %c0_93 = arith.constant 0 : index
    %403 = vector.load %arg21[%c0_92, %c0_93] : memref<2x4xf32, #tpu.memory_space<vmem>>, vector<1x4xf32>
    tpu.vector_store %arg21[%c0_92, %c0_93], %402 {strides = array<i32>} : memref<2x4xf32, #tpu.memory_space<vmem>>, vector<1x4xf32>,
    %404 = vector.extract_strided_slice %386 {offsets = [1, 4], sizes = [1, 4], strides = [1, 1]} : vector<2x8xf32> to vector<1x4xf32>
    %405 = vector.extract_strided_slice %387 {offsets = [1, 0], sizes = [1, 4], strides = [1, 1]} : vector<2x4xf32> to vector<1x4xf32>
    %cst_94 = arith.constant 0.000000e+00 : f32
    %406 = vector.broadcast %cst_94 : f32 to vector<1x4xf32>
    %407 = arith.cmpf oeq, %405, %406 : vector<1x4xf32>
    %cst_95 = arith.constant 0xCB18967F : f32
    %408 = vector.broadcast %cst_95 : f32 to vector<1x4xf32>
    %409 = arith.select %407, %408, %404 : vector<1x4xi1>, vector<1x4xf32>
    %cst_96 = arith.constant dense<0xFF800000> : vector<1xf32>
    %410 = vector.multi_reduction <maximumf>, %409, %cst_96 [1] : vector<1x4xf32> to vector<1xf32>
    %411 = vector.shape_cast %410 : vector<1xf32> to vector<1x1xf32>
    %412 = vector.broadcast %411 : vector<1x1xf32> to vector<1x4xf32>
    %413 = arith.subf %409, %412 : vector<1x4xf32>
    %414 = math.exp %413 : vector<1x4xf32>
    %cst_97 = arith.constant dense<0.000000e+00> : vector<1xf32>
    %415 = vector.multi_reduction <add>, %414, %cst_97 [1] : vector<1x4xf32> to vector<1xf32>
    %416 = vector.shape_cast %415 : vector<1xf32> to vector<1x1xf32>
    %417 = vector.broadcast %416 : vector<1x1xf32> to vector<1x4xf32>
    %418 = arith.divf %414, %417 : vector<1x4xf32>
    %c1_98 = arith.constant 1 : index
    %c0_99 = arith.constant 0 : index
    %419 = vector.load %arg21[%c1_98, %c0_99] : memref<2x4xf32, #tpu.memory_space<vmem>>, vector<1x4xf32>
    tpu.vector_store %arg21[%c1_98, %c0_99], %418 {strides = array<i32>} : memref<2x4xf32, #tpu.memory_space<vmem>>, vector<1x4xf32>,
    return
  }
  func.func @transform_0(%arg0: i32) -> (i32, i32, i32) {
    %c0_i32 = arith.constant 0 : i32
    %c0_i32_0 = arith.constant 0 : i32
    %c0_i32_1 = arith.constant 0 : i32
    %c0_i32_2 = arith.constant 0 : i32
    return %c0_i32, %c0_i32_0, %c0_i32_1 : i32, i32, i32
  }
  func.func @transform_1(%arg0: i32) -> (i32, i32) {
    %c0_i32 = arith.constant 0 : i32
    %c0_i32_0 = arith.constant 0 : i32
    %c0_i32_1 = arith.constant 0 : i32
    return %c0_i32, %c0_i32_0 : i32, i32
  }
  func.func @transform_2(%arg0: i32) -> (i32, i32) {
    %c0_i32 = arith.constant 0 : i32
    %c0_i32_0 = arith.constant 0 : i32
    %c0_i32_1 = arith.constant 0 : i32
    return %c0_i32, %c0_i32_0 : i32, i32
  }
  func.func @transform_3(%arg0: i32) -> (i32, i32) {
    %c0_i32 = arith.constant 0 : i32
    %c0_i32_0 = arith.constant 0 : i32
    %c0_i32_1 = arith.constant 0 : i32
    return %c0_i32, %c0_i32_0 : i32, i32
  }
  func.func @transform_4(%arg0: i32) -> (i32, i32) {
    %c0_i32 = arith.constant 0 : i32
    %c0_i32_0 = arith.constant 0 : i32
    %c0_i32_1 = arith.constant 0 : i32
    return %c0_i32, %c0_i32_0 : i32, i32
  }
  func.func @transform_5(%arg0: i32) -> (i32, i32) {
    %c0_i32 = arith.constant 0 : i32
    %c0_i32_0 = arith.constant 0 : i32
    %c0_i32_1 = arith.constant 0 : i32
    return %c0_i32, %c0_i32_0 : i32, i32
  }
  func.func @transform_6(%arg0: i32) -> (i32, i32) {
    %c0_i32 = arith.constant 0 : i32
    %c0_i32_0 = arith.constant 0 : i32
    %c0_i32_1 = arith.constant 0 : i32
    return %c0_i32, %c0_i32_0 : i32, i32
  }
  func.func @transform_7(%arg0: i32) -> (i32, i32) {
    %c0_i32 = arith.constant 0 : i32
    %c0_i32_0 = arith.constant 0 : i32
    %c0_i32_1 = arith.constant 0 : i32
    return %c0_i32, %c0_i32_0 : i32, i32
  }
  func.func @transform_8(%arg0: i32) -> (i32, i32) {
    %c0_i32 = arith.constant 0 : i32
    %c0_i32_0 = arith.constant 0 : i32
    %c0_i32_1 = arith.constant 0 : i32
    return %c0_i32, %c0_i32_0 : i32, i32
  }
  func.func @transform_9(%arg0: i32) -> (i32, i32) {
    %c0_i32 = arith.constant 0 : i32
    %c0_i32_0 = arith.constant 0 : i32
    %c0_i32_1 = arith.constant 0 : i32
    return %c0_i32, %c0_i32_0 : i32, i32
  }
  func.func @transform_10(%arg0: i32) -> (i32, i32) {
    %c0_i32 = arith.constant 0 : i32
    %c0_i32_0 = arith.constant 0 : i32
    %c0_i32_1 = arith.constant 0 : i32
    return %c0_i32, %c0_i32_0 : i32, i32
  }
  func.func @transform_11(%arg0: i32) -> (i32, i32) {
    %c0_i32 = arith.constant 0 : i32
    %c0_i32_0 = arith.constant 0 : i32
    %c0_i32_1 = arith.constant 0 : i32
    return %c0_i32, %c0_i32_0 : i32, i32
  }
  func.func @transform_12(%arg0: i32) -> (i32, i32) {
    %c0_i32 = arith.constant 0 : i32
    %c0_i32_0 = arith.constant 0 : i32
    %c0_i32_1 = arith.constant 0 : i32
    return %c0_i32, %c0_i32_0 : i32, i32
  }
  func.func @transform_13(%arg0: i32) -> (i32, i32) {
    %c0_i32 = arith.constant 0 : i32
    %c0_i32_0 = arith.constant 0 : i32
    %c0_i32_1 = arith.constant 0 : i32
    return %c0_i32, %c0_i32_0 : i32, i32
  }
  func.func @transform_14(%arg0: i32) -> (i32, i32) {
    %c0_i32 = arith.constant 0 : i32
    %c0_i32_0 = arith.constant 0 : i32
    %c0_i32_1 = arith.constant 0 : i32
    return %c0_i32, %c0_i32_0 : i32, i32
  }
  func.func @transform_15(%arg0: i32) -> (i32, i32) {
    %c0_i32 = arith.constant 0 : i32
    %c0_i32_0 = arith.constant 0 : i32
    %c0_i32_1 = arith.constant 0 : i32
    return %c0_i32, %c0_i32_0 : i32, i32
  }
  func.func @transform_16(%arg0: i32) -> (i32, i32) {
    %c0_i32 = arith.constant 0 : i32
    %c0_i32_0 = arith.constant 0 : i32
    %c0_i32_1 = arith.constant 0 : i32
    return %c0_i32, %c0_i32_0 : i32, i32
  }
  func.func @transform_17(%arg0: i32) -> (i32, i32) {
    %c0_i32 = arith.constant 0 : i32
    %c0_i32_0 = arith.constant 0 : i32
    %c0_i32_1 = arith.constant 0 : i32
    return %c0_i32, %c0_i32_0 : i32, i32
  }
  func.func @transform_18(%arg0: i32) -> (i32, i32) {
    %c0_i32 = arith.constant 0 : i32
    %c0_i32_0 = arith.constant 0 : i32
    %c0_i32_1 = arith.constant 0 : i32
    return %c0_i32, %c0_i32_0 : i32, i32
  }
  func.func @transform_19(%arg0: i32) -> (i32, i32) {
    %c0_i32 = arith.constant 0 : i32
    %c0_i32_0 = arith.constant 0 : i32
    %c0_i32_1 = arith.constant 0 : i32
    return %c0_i32, %c0_i32_0 : i32, i32
  }
  func.func @transform_20(%arg0: i32) -> (i32, i32) {
    %c0_i32 = arith.constant 0 : i32
    %c0_i32_0 = arith.constant 0 : i32
    %c0_i32_1 = arith.constant 0 : i32
    return %c0_i32, %c0_i32_0 : i32, i32
  }
}

</mosaic_0001>

<llo_original>
// kernel: _lambda_.4
$region0: #{_lambda_.4}
  #allocation0 [shape = 'u32[]', space=smem, size = 0x4, offset = 0x4, fixed_abs, tag = 'smem constant byte address 0x4 - core index']
  #allocation1 [shape = 'u32[144,128]{1,0:T(1,128)}', space=vmem, size = 0x12000, scoped, tag = 'internal scratch']
  %s0 = inlined_call_operand.vmem [shape: f32[8,2,256], index: 0, kind: input, shape index: {}]
  %s1 = inlined_call_operand.vmem [shape: f32[2,8], index: 1, kind: input, shape index: {}]
  %s2 = inlined_call_operand.vmem [shape: f32[64,256], index: 2, kind: input, shape index: {}]
  %s3 = inlined_call_operand.vmem [shape: f32[2,64], index: 3, kind: output, shape index: {}]
  %s4 = sld [smem:[#allocation0]]
  $region22: #{_lambda_.4} parent=0
    _
  %s6 = ssub.s32 1, %s4
  %s7 = scalar_select 0, %s6, %s4
  // Predicated region
  $region2: #{_lambda_.4} parent=0 // pred_check
    _
  $region3: #{_lambda_.4} parent=0 // pred_check_branch
    %9 = sbr.rel (0) target = $region5
  $region4: #{_lambda_.4} parent=0 // pred_region
    _
  $region5: #{_lambda_.4} parent=0 // pred_fallthru
    _
  // Predicated region
  $region6: #{_lambda_.4} parent=0 // pred_check
    _
  $region7: #{_lambda_.4} parent=0 // pred_check_branch
    %11 = sbr.rel (0) target = $region9
  $region8: #{_lambda_.4} parent=0 // pred_region
    _
  $region9: #{_lambda_.4} parent=0 // pred_fallthru
    _
  // Predicated region
  $region10: #{_lambda_.4} parent=0 // pred_check
    _
  $region11: #{_lambda_.4} parent=0 // pred_check_branch
    %13 = sbr.rel (0) target = $region13
  $region12: #{_lambda_.4} parent=0 // pred_region
    _
  $region13: #{_lambda_.4} parent=0 // pred_fallthru
    _
  %v14 = vld [vmem:[%s2] sm:$0xff]
  %v15 = vld [vmem:[%s2 + $0x8] sm:$0xff]
  %v16 = vld [vmem:[%s2 + $0x10] sm:$0xff]
  %v17 = vld [vmem:[%s2 + $0x18] sm:$0xff]
  %v18 = vld [vmem:[%s2 + $0x20] sm:$0xff]
  %v19 = vld [vmem:[%s2 + $0x28] sm:$0xff]
  %v20 = vld [vmem:[%s2 + $0x30] sm:$0xff]
  %v21 = vld [vmem:[%s2 + $0x38] sm:$0xff]
  %v22 = vld [vmem:[%s2 + $0x40] sm:$0xff]
  %v23 = vld [vmem:[%s2 + $0x48] sm:$0xff]
  %v24 = vld [vmem:[%s2 + $0x50] sm:$0xff]
  %v25 = vld [vmem:[%s2 + $0x58] sm:$0xff]
  %v26 = vld [vmem:[%s2 + $0x60] sm:$0xff]
  %v27 = vld [vmem:[%s2 + $0x68] sm:$0xff]
  %v28 = vld [vmem:[%s2 + $0x70] sm:$0xff]
  %v29 = vld [vmem:[%s2 + $0x78] sm:$0xff]
  %v30 = vld [vmem:[%s0] sm:$0xf]
  %vm31 = vcmask 523264
  %v33 = vsel %vm31, 0.0, 0
  %35 = vmatprep.subr.mxu0 0.0
  %36 = vmatpush1.msra.mxu0 0.0
  %37 = vmatprep.subr.mxu0 0.0
  %38 = vmatpush1.msra.mxu0 0.0
  %39 = vmatprep.subr.mxu0 0.0
  %40 = vmatpush1.msra.mxu0 0.0
  %41 = vmatprep.subr.mxu0 0.0
  %42 = vmatpush1.msra.mxu0 0.0
  %43 = vmatprep.subr.mxu0 0.0
  %44 = vmatpush1.msra.mxu0 0.0
  %45 = vmatprep.subr.mxu0 0.0
  %46 = vmatpush1.msra.mxu0 0.0
  %47 = vmatprep.subr.mxu0 0.0
  %48 = vmatpush1.msra.mxu0 0.0
  %49 = vmatprep.subr.mxu0 0.0
  %50 = vmatpush1.msra.mxu0 0.0
  %51 = vmatprep.subr.mxu0 %v29
  %52 = vmatpush1.msra.mxu0 %v28
  %53 = vmatprep.subr.mxu0 %v27
  %54 = vmatpush1.msra.mxu0 %v26
  %55 = vmatprep.subr.mxu0 %v25
  %56 = vmatpush1.msra.mxu0 %v24
  %57 = vmatprep.subr.mxu0 %v23
  %58 = vmatpush1.msra.mxu0 %v22
  %59 = vmatprep.subr.mxu0 %v21
  %60 = vmatpush1.msra.mxu0 %v20
  %61 = vmatprep.subr.mxu0 %v19
  %62 = vmatpush1.msra.mxu0 %v18
  %63 = vmatprep.subr.mxu0 %v17
  %64 = vmatpush1.msra.mxu0 %v16
  %65 = vmatprep.subr.mxu0 %v15
  %66 = vmatpush1.msra.mxu0 %v14
  %67 = vmatprep.subr.mxu0 0.0
  %68 = vmatpush2.msra.mxu0 0.0
  %69 = vmatprep.subr.mxu0 0.0
  %70 = vmatpush2.msra.mxu0 0.0
  %71 = vmatprep.subr.mxu0 0.0
  %72 = vmatpush2.msra.mxu0 0.0
  %73 = vmatprep.subr.mxu0 0.0
  %74 = vmatpush2.msra.mxu0 0.0
  %75 = vmatprep.subr.mxu0 0.0
  %76 = vmatpush2.msra.mxu0 0.0
  %77 = vmatprep.subr.mxu0 0.0
  %78 = vmatpush2.msra.mxu0 0.0
  %79 = vmatprep.subr.mxu0 0.0
  %80 = vmatpush2.msra.mxu0 0.0
  %81 = vmatprep.subr.mxu0 0.0
  %82 = vmatpush2.msra.mxu0 0.0
  %83 = vmatprep.subr.mxu0 0.0
  %84 = vmatpush2.msra.mxu0 0.0
  %85 = vmatprep.subr.mxu0 0.0
  %86 = vmatpush2.msra.mxu0 0.0
  %87 = vmatprep.subr.mxu0 0.0
  %88 = vmatpush2.msra.mxu0 0.0
  %89 = vmatprep.subr.mxu0 0.0
  %90 = vmatpush2.msra.mxu0 0.0
  %91 = vmatprep.subr.mxu0 0.0
  %92 = vmatpush2.msra.mxu0 0.0
  %93 = vmatprep.subr.mxu0 0.0
  %94 = vmatpush2.msra.mxu0 0.0
  %95 = vmatprep.subr.mxu0 0.0
  %96 = vmatpush2.msra.mxu0 0.0
  %97 = vmatprep.subr.mxu0 0.0
  %98 = vmatpush2.msra.mxu0 0.0
  %99 = vmatprep.mubr.f32.mxu0 0.0
  %100 = vmatmul.mubr.f32.gmra.mxu0 %v33
  %v101 = vpop.f32.mrf.mxu0
  %v102 = vadd.f32 0.0, %v101
  %v103 = vpop.f32.mrf.mxu0
  %v104 = vadd.f32 0.0, %v103
  %105 = vdwg.mxu0
  %v108 = vcombine.low %v102, %v104
  %v110 = vunpack.c.l.s4 1983009808
  %v111 = vunpack.c.0.s8 %v110
  %v112 = vlaneseq
  %v113 = vshrl.u32 %v112, 7
  %v114 = vsub.s32 %v111, %v113
  %v115 = vrot.slane %v108, %v114
  %v117 = vadd.f32 %v30, %v115
  %v118 = vxor.u32 %v117, 2147483648
  %v119 = vmul.f32 %v118, 1.442695
  %v120 = vpow.pop %v119
  %v121 = vadd.f32 %v120, 1.0
  %v122 = vrcp.pop %v121
  %v123 = vmul.f32 1.0, %v122
  %125 = vrot.lane.b32.xlu0 %v117, 64
  %v126 = vpop.permute.xlu0 %125
  %v127 = vrot.slane %v126, 2
  %v129 = vtanh.pop %v127
  %v130 = vmul.f32 %v123, 0.0
  %v131 = vmul.f32 %v123, %v129
  %133 = vrot.lane.b32.xlu0 %v131, 64
  %v134 = vpop.permute.xlu0 %133
  %v136 = vadd.f32 %v130, %v134
  %v137 = vtanh.pop %v136
  %v139 = vrot.slane %v123, 2
  %142 = vrot.lane.b32.xlu0 %v137, 64
  %v143 = vpop.permute.xlu0 %142
  %v145 = vmul.f32 %v139, %v143
  %v146 = vld [vmem:[%s1] sm:$0x3]
  %148 = vset.pattern.permute.xlu0 0
  %149 = vperm.xlu0 %148, %v146
  %v150 = vpop.permute.xlu0 %149
  %v152 = vmul.f32 %v150, %v145
  %v153 = vadd.f32 %v152, 0.0
  %s154 = scalar_lea.vmem %s0, 4
  %v155 = vld [vmem:[%s154] sm:$0xf]
  %v157 = vsel %vm31, %v145, 0
  %159 = vmatprep.subr.mxu0 0.0
  %160 = vmatpush1.msra.mxu0 0.0
  %161 = vmatprep.subr.mxu0 0.0
  %162 = vmatpush1.msra.mxu0 0.0
  %163 = vmatprep.subr.mxu0 0.0
  %164 = vmatpush1.msra.mxu0 0.0
  %165 = vmatprep.subr.mxu0 0.0
  %166 = vmatpush1.msra.mxu0 0.0
  %167 = vmatprep.subr.mxu0 0.0
  %168 = vmatpush1.msra.mxu0 0.0
  %169 = vmatprep.subr.mxu0 0.0
  %170 = vmatpush1.msra.mxu0 0.0
  %171 = vmatprep.subr.mxu0 0.0
  %172 = vmatpush1.msra.mxu0 0.0
  %173 = vmatprep.subr.mxu0 0.0
  %174 = vmatpush1.msra.mxu0 0.0
  %175 = vmatprep.subr.mxu0 %v29
  %176 = vmatpush1.msra.mxu0 %v28
  %177 = vmatprep.subr.mxu0 %v27
  %178 = vmatpush1.msra.mxu0 %v26
  %179 = vmatprep.subr.mxu0 %v25
  %180 = vmatpush1.msra.mxu0 %v24
  %181 = vmatprep.subr.mxu0 %v23
  %182 = vmatpush1.msra.mxu0 %v22
  %183 = vmatprep.subr.mxu0 %v21
  %184 = vmatpush1.msra.mxu0 %v20
  %185 = vmatprep.subr.mxu0 %v19
  %186 = vmatpush1.msra.mxu0 %v18
  %187 = vmatprep.subr.mxu0 %v17
  %188 = vmatpush1.msra.mxu0 %v16
  %189 = vmatprep.subr.mxu0 %v15
  %190 = vmatpush1.msra.mxu0 %v14
  %191 = vmatprep.subr.mxu0 0.0
  %192 = vmatpush2.msra.mxu0 0.0
  %193 = vmatprep.subr.mxu0 0.0
  %194 = vmatpush2.msra.mxu0 0.0
  %195 = vmatprep.subr.mxu0 0.0
  %196 = vmatpush2.msra.mxu0 0.0
  %197 = vmatprep.subr.mxu0 0.0
  %198 = vmatpush2.msra.mxu0 0.0
  %199 = vmatprep.subr.mxu0 0.0
  %200 = vmatpush2.msra.mxu0 0.0
  %201 = vmatprep.subr.mxu0 0.0
  %202 = vmatpush2.msra.mxu0 0.0
  %203 = vmatprep.subr.mxu0 0.0
  %204 = vmatpush2.msra.mxu0 0.0
  %205 = vmatprep.subr.mxu0 0.0
  %206 = vmatpush2.msra.mxu0 0.0
  %207 = vmatprep.subr.mxu0 0.0
  %208 = vmatpush2.msra.mxu0 0.0
  %209 = vmatprep.subr.mxu0 0.0
  %210 = vmatpush2.msra.mxu0 0.0
  %211 = vmatprep.subr.mxu0 0.0
  %212 = vmatpush2.msra.mxu0 0.0
  %213 = vmatprep.subr.mxu0 0.0
  %214 = vmatpush2.msra.mxu0 0.0
  %215 = vmatprep.subr.mxu0 0.0
  %216 = vmatpush2.msra.mxu0 0.0
  %217 = vmatprep.subr.mxu0 0.0
  %218 = vmatpush2.msra.mxu0 0.0
  %219 = vmatprep.subr.mxu0 0.0
  %220 = vmatpush2.msra.mxu0 0.0
  %221 = vmatprep.subr.mxu0 0.0
  %222 = vmatpush2.msra.mxu0 0.0
  %223 = vmatprep.mubr.f32.mxu0 0.0
  %224 = vmatmul.mubr.f32.gmra.mxu0 %v157
  %v225 = vpop.f32.mrf.mxu0
  %v226 = vadd.f32 0.0, %v225
  %v227 = vpop.f32.mrf.mxu0
  %v228 = vadd.f32 0.0, %v227
  %229 = vdwg.mxu0
  %v232 = vcombine.low %v226, %v228
  %v234 = vunpack.c.l.s4 1983009808
  %v235 = vunpack.c.0.s8 %v234
  %v236 = vlaneseq
  %v237 = vshrl.u32 %v236, 7
  %v238 = vsub.s32 %v235, %v237
  %v239 = vrot.slane %v232, %v238
  %v241 = vadd.f32 %v155, %v239
  %v242 = vxor.u32 %v241, 2147483648
  %v243 = vmul.f32 %v242, 1.442695
  %v244 = vpow.pop %v243
  %v245 = vadd.f32 %v244, 1.0
  %v246 = vrcp.pop %v245
  %v247 = vmul.f32 1.0, %v246
  %249 = vrot.lane.b32.xlu0 %v241, 64
  %v250 = vpop.permute.xlu0 %249
  %v251 = vrot.slane %v250, 2
  %v253 = vtanh.pop %v251
  %v254 = vmul.f32 %v247, %v136
  %v255 = vmul.f32 %v247, %v253
  %257 = vrot.lane.b32.xlu0 %v255, 64
  %v258 = vpop.permute.xlu0 %257
  %v260 = vadd.f32 %v254, %v258
  %v261 = vtanh.pop %v260
  %v263 = vrot.slane %v247, 2
  %266 = vrot.lane.b32.xlu0 %v261, 64
  %v267 = vpop.permute.xlu0 %266
  %v269 = vmul.f32 %v263, %v267
  %v270 = vld [vmem:[%s1] sm:$0x3]
  %272 = vset.pattern.permute.xlu0 1
  %273 = vperm.xlu0 %272, %v270
  %v274 = vpop.permute.xlu0 %273
  %v276 = vmul.f32 %v274, %v269
  %v277 = vadd.f32 %v153, %v276
  %s278 = scalar_lea.vmem %s0, 8
  %v279 = vld [vmem:[%s278] sm:$0xf]
  %v281 = vsel %vm31, %v269, 0
  %283 = vmatprep.subr.mxu0 0.0
  %284 = vmatpush1.msra.mxu0 0.0
  %285 = vmatprep.subr.mxu0 0.0
  %286 = vmatpush1.msra.mxu0 0.0
  %287 = vmatprep.subr.mxu0 0.0
  %288 = vmatpush1.msra.mxu0 0.0
  %289 = vmatprep.subr.mxu0 0.0
  %290 = vmatpush1.msra.mxu0 0.0
  %291 = vmatprep.subr.mxu0 0.0
  %292 = vmatpush1.msra.mxu0 0.0
  %293 = vmatprep.subr.mxu0 0.0
  %294 = vmatpush1.msra.mxu0 0.0
  %295 = vmatprep.subr.mxu0 0.0
  %296 = vmatpush1.msra.mxu0 0.0
  %297 = vmatprep.subr.mxu0 0.0
  %298 = vmatpush1.msra.mxu0 0.0
  %299 = vmatprep.subr.mxu0 %v29
  %300 = vmatpush1.msra.mxu0 %v28
  %301 = vmatprep.subr.mxu0 %v27
  %302 = vmatpush1.msra.mxu0 %v26
  %303 = vmatprep.subr.mxu0 %v25
  %304 = vmatpush1.msra.mxu0 %v24
  %305 = vmatprep.subr.mxu0 %v23
  %306 = vmatpush1.msra.mxu0 %v22
  %307 = vmatprep.subr.mxu0 %v21
  %308 = vmatpush1.msra.mxu0 %v20
  %309 = vmatprep.subr.mxu0 %v19
  %310 = vmatpush1.msra.mxu0 %v18
  %311 = vmatprep.subr.mxu0 %v17
  %312 = vmatpush1.msra.mxu0 %v16
  %313 = vmatprep.subr.mxu0 %v15
  %314 = vmatpush1.msra.mxu0 %v14
  %315 = vmatprep.subr.mxu0 0.0
  %316 = vmatpush2.msra.mxu0 0.0
  %317 = vmatprep.subr.mxu0 0.0
  %318 = vmatpush2.msra.mxu0 0.0
  %319 = vmatprep.subr.mxu0 0.0
  %320 = vmatpush2.msra.mxu0 0.0
  %321 = vmatprep.subr.mxu0 0.0
  %322 = vmatpush2.msra.mxu0 0.0
  %323 = vmatprep.subr.mxu0 0.0
  %324 = vmatpush2.msra.mxu0 0.0
  %325 = vmatprep.subr.mxu0 0.0
  %326 = vmatpush2.msra.mxu0 0.0
  %327 = vmatprep.subr.mxu0 0.0
  %328 = vmatpush2.msra.mxu0 0.0
  %329 = vmatprep.subr.mxu0 0.0
  %330 = vmatpush2.msra.mxu0 0.0
  %331 = vmatprep.subr.mxu0 0.0
  %332 = vmatpush2.msra.mxu0 0.0
  %333 = vmatprep.subr.mxu0 0.0
  %334 = vmatpush2.msra.mxu0 0.0
  %335 = vmatprep.subr.mxu0 0.0
  %336 = vmatpush2.msra.mxu0 0.0
  %337 = vmatprep.subr.mxu0 0.0
  %338 = vmatpush2.msra.mxu0 0.0
  %339 = vmatprep.subr.mxu0 0.0
  %340 = vmatpush2.msra.mxu0 0.0
  %341 = vmatprep.subr.mxu0 0.0
  %342 = vmatpush2.msra.mxu0 0.0
  %343 = vmatprep.subr.mxu0 0.0
  %344 = vmatpush2.msra.mxu0 0.0
  %345 = vmatprep.subr.mxu0 0.0
  %346 = vmatpush2.msra.mxu0 0.0
  %347 = vmatprep.mubr.f32.mxu0 0.0
  %348 = vmatmul.mubr.f32.gmra.mxu0 %v281
  %v349 = vpop.f32.mrf.mxu0
  %v350 = vadd.f32 0.0, %v349
  %v351 = vpop.f32.mrf.mxu0
  %v352 = vadd.f32 0.0, %v351
  %353 = vdwg.mxu0
  %v356 = vcombine.low %v350, %v352
  %v358 = vunpack.c.l.s4 1983009808
  %v359 = vunpack.c.0.s8 %v358
  %v360 = vlaneseq
  %v361 = vshrl.u32 %v360, 7
  %v362 = vsub.s32 %v359, %v361
  %v363 = vrot.slane %v356, %v362
  %v365 = vadd.f32 %v279, %v363
  %v366 = vxor.u32 %v365, 2147483648
  %v367 = vmul.f32 %v366, 1.442695
  %v368 = vpow.pop %v367
  %v369 = vadd.f32 %v368, 1.0
  %v370 = vrcp.pop %v369
  %v371 = vmul.f32 1.0, %v370
  %373 = vrot.lane.b32.xlu0 %v365, 64
  %v374 = vpop.permute.xlu0 %373
  %v375 = vrot.slane %v374, 2
  %v377 = vtanh.pop %v375
  %v378 = vmul.f32 %v371, %v260
  %v379 = vmul.f32 %v371, %v377
  %381 = vrot.lane.b32.xlu0 %v379, 64
  %v382 = vpop.permute.xlu0 %381
  %v384 = vadd.f32 %v378, %v382
  %v385 = vtanh.pop %v384
  %v387 = vrot.slane %v371, 2
  %390 = vrot.lane.b32.xlu0 %v385, 64
  %v391 = vpop.permute.xlu0 %390
  %v393 = vmul.f32 %v387, %v391
  %v394 = vld [vmem:[%s1] sm:$0x3]
  %396 = vset.pattern.permute.xlu0 2
  %397 = vperm.xlu0 %396, %v394
  %v398 = vpop.permute.xlu0 %397
  %v400 = vmul.f32 %v398, %v393
  %v401 = vadd.f32 %v277, %v400
  %s402 = scalar_lea.vmem %s0, 12
  %v403 = vld [vmem:[%s402] sm:$0xf]
  %v405 = vsel %vm31, %v393, 0
  %407 = vmatprep.subr.mxu0 0.0
  %408 = vmatpush1.msra.mxu0 0.0
  %409 = vmatprep.subr.mxu0 0.0
  %410 = vmatpush1.msra.mxu0 0.0
  %411 = vmatprep.subr.mxu0 0.0
  %412 = vmatpush1.msra.mxu0 0.0
  %413 = vmatprep.subr.mxu0 0.0
  %414 = vmatpush1.msra.mxu0 0.0
  %415 = vmatprep.subr.mxu0 0.0
  %416 = vmatpush1.msra.mxu0 0.0
  %417 = vmatprep.subr.mxu0 0.0
  %418 = vmatpush1.msra.mxu0 0.0
  %419 = vmatprep.subr.mxu0 0.0
  %420 = vmatpush1.msra.mxu0 0.0
  %421 = vmatprep.subr.mxu0 0.0
  %422 = vmatpush1.msra.mxu0 0.0
  %423 = vmatprep.subr.mxu0 %v29
  %424 = vmatpush1.msra.mxu0 %v28
  %425 = vmatprep.subr.mxu0 %v27
  %426 = vmatpush1.msra.mxu0 %v26
  %427 = vmatprep.subr.mxu0 %v25
  %428 = vmatpush1.msra.mxu0 %v24
  %429 = vmatprep.subr.mxu0 %v23
  %430 = vmatpush1.msra.mxu0 %v22
  %431 = vmatprep.subr.mxu0 %v21
  %432 = vmatpush1.msra.mxu0 %v20
  %433 = vmatprep.subr.mxu0 %v19
  %434 = vmatpush1.msra.mxu0 %v18
  %435 = vmatprep.subr.mxu0 %v17
  %436 = vmatpush1.msra.mxu0 %v16
  %437 = vmatprep.subr.mxu0 %v15
  %438 = vmatpush1.msra.mxu0 %v14
  %439 = vmatprep.subr.mxu0 0.0
  %440 = vmatpush2.msra.mxu0 0.0
  %441 = vmatprep.subr.mxu0 0.0
  %442 = vmatpush2.msra.mxu0 0.0
  %443 = vmatprep.subr.mxu0 0.0
  %444 = vmatpush2.msra.mxu0 0.0
  %445 = vmatprep.subr.mxu0 0.0
  %446 = vmatpush2.msra.mxu0 0.0
  %447 = vmatprep.subr.mxu0 0.0
  %448 = vmatpush2.msra.mxu0 0.0
  %449 = vmatprep.subr.mxu0 0.0
  %450 = vmatpush2.msra.mxu0 0.0
  %451 = vmatprep.subr.mxu0 0.0
  %452 = vmatpush2.msra.mxu0 0.0
  %453 = vmatprep.subr.mxu0 0.0
  %454 = vmatpush2.msra.mxu0 0.0
  %455 = vmatprep.subr.mxu0 0.0
  %456 = vmatpush2.msra.mxu0 0.0
  %457 = vmatprep.subr.mxu0 0.0
  %458 = vmatpush2.msra.mxu0 0.0
  %459 = vmatprep.subr.mxu0 0.0
  %460 = vmatpush2.msra.mxu0 0.0
  %461 = vmatprep.subr.mxu0 0.0
  %462 = vmatpush2.msra.mxu0 0.0
  %463 = vmatprep.subr.mxu0 0.0
  %464 = vmatpush2.msra.mxu0 0.0
  %465 = vmatprep.subr.mxu0 0.0
  %466 = vmatpush2.msra.mxu0 0.0
  %467 = vmatprep.subr.mxu0 0.0
  %468 = vmatpush2.msra.mxu0 0.0
  %469 = vmatprep.subr.mxu0 0.0
  %470 = vmatpush2.msra.mxu0 0.0
  %471 = vmatprep.mubr.f32.mxu0 0.0
  %472 = vmatmul.mubr.f32.gmra.mxu0 %v405
  %v473 = vpop.f32.mrf.mxu0
  %v474 = vadd.f32 0.0, %v473
  %v475 = vpop.f32.mrf.mxu0
  %v476 = vadd.f32 0.0, %v475
  %477 = vdwg.mxu0
  %v480 = vcombine.low %v474, %v476
  %v482 = vunpack.c.l.s4 1983009808
  %v483 = vunpack.c.0.s8 %v482
  %v484 = vlaneseq
  %v485 = vshrl.u32 %v484, 7
  %v486 = vsub.s32 %v483, %v485
  %v487 = vrot.slane %v480, %v486
  %v489 = vadd.f32 %v403, %v487
  %v490 = vxor.u32 %v489, 2147483648
  %v491 = vmul.f32 %v490, 1.442695
  %v492 = vpow.pop %v491
  %v493 = vadd.f32 %v492, 1.0
  %v494 = vrcp.pop %v493
  %v495 = vmul.f32 1.0, %v494
  %497 = vrot.lane.b32.xlu0 %v489, 64
  %v498 = vpop.permute.xlu0 %497
  %v499 = vrot.slane %v498, 2
  %v501 = vtanh.pop %v499
  %v502 = vmul.f32 %v495, %v384
  %v503 = vmul.f32 %v495, %v501
  %505 = vrot.lane.b32.xlu0 %v503, 64
  %v506 = vpop.permute.xlu0 %505
  %v508 = vadd.f32 %v502, %v506
  %v509 = vtanh.pop %v508
  %v511 = vrot.slane %v495, 2
  %514 = vrot.lane.b32.xlu0 %v509, 64
  %v515 = vpop.permute.xlu0 %514
  %v517 = vmul.f32 %v511, %v515
  %v518 = vld [vmem:[%s1] sm:$0x3]
  %520 = vset.pattern.permute.xlu0 3
  %521 = vperm.xlu0 %520, %v518
  %v522 = vpop.permute.xlu0 %521
  %v524 = vmul.f32 %v522, %v517
  %v525 = vadd.f32 %v401, %v524
  %s526 = scalar_lea.vmem %s0, 16
  %v527 = vld [vmem:[%s526] sm:$0xf]
  %v529 = vsel %vm31, %v517, 0
  %531 = vmatprep.subr.mxu0 0.0
  %532 = vmatpush1.msra.mxu0 0.0
  %533 = vmatprep.subr.mxu0 0.0
  %534 = vmatpush1.msra.mxu0 0.0
  %535 = vmatprep.subr.mxu0 0.0
  %536 = vmatpush1.msra.mxu0 0.0
  %537 = vmatprep.subr.mxu0 0.0
  %538 = vmatpush1.msra.mxu0 0.0
  %539 = vmatprep.subr.mxu0 0.0
  %540 = vmatpush1.msra.mxu0 0.0
  %541 = vmatprep.subr.mxu0 0.0
  %542 = vmatpush1.msra.mxu0 0.0
  %543 = vmatprep.subr.mxu0 0.0
  %544 = vmatpush1.msra.mxu0 0.0
  %545 = vmatprep.subr.mxu0 0.0
  %546 = vmatpush1.msra.mxu0 0.0
  %547 = vmatprep.subr.mxu0 %v29
  %548 = vmatpush1.msra.mxu0 %v28
  %549 = vmatprep.subr.mxu0 %v27
  %550 = vmatpush1.msra.mxu0 %v26
  %551 = vmatprep.subr.mxu0 %v25
  %552 = vmatpush1.msra.mxu0 %v24
  %553 = vmatprep.subr.mxu0 %v23
  %554 = vmatpush1.msra.mxu0 %v22
  %555 = vmatprep.subr.mxu0 %v21
  %556 = vmatpush1.msra.mxu0 %v20
  %557 = vmatprep.subr.mxu0 %v19
  %558 = vmatpush1.msra.mxu0 %v18
  %559 = vmatprep.subr.mxu0 %v17
  %560 = vmatpush1.msra.mxu0 %v16
  %561 = vmatprep.subr.mxu0 %v15
  %562 = vmatpush1.msra.mxu0 %v14
  %563 = vmatprep.subr.mxu0 0.0
  %564 = vmatpush2.msra.mxu0 0.0
  %565 = vmatprep.subr.mxu0 0.0
  %566 = vmatpush2.msra.mxu0 0.0
  %567 = vmatprep.subr.mxu0 0.0
  %568 = vmatpush2.msra.mxu0 0.0
  %569 = vmatprep.subr.mxu0 0.0
  %570 = vmatpush2.msra.mxu0 0.0
  %571 = vmatprep.subr.mxu0 0.0
  %572 = vmatpush2.msra.mxu0 0.0
  %573 = vmatprep.subr.mxu0 0.0
  %574 = vmatpush2.msra.mxu0 0.0
  %575 = vmatprep.subr.mxu0 0.0
  %576 = vmatpush2.msra.mxu0 0.0
  %577 = vmatprep.subr.mxu0 0.0
  %578 = vmatpush2.msra.mxu0 0.0
  %579 = vmatprep.subr.mxu0 0.0
  %580 = vmatpush2.msra.mxu0 0.0
  %581 = vmatprep.subr.mxu0 0.0
  %582 = vmatpush2.msra.mxu0 0.0
  %583 = vmatprep.subr.mxu0 0.0
  %584 = vmatpush2.msra.mxu0 0.0
  %585 = vmatprep.subr.mxu0 0.0
  %586 = vmatpush2.msra.mxu0 0.0
  %587 = vmatprep.subr.mxu0 0.0
  %588 = vmatpush2.msra.mxu0 0.0
  %589 = vmatprep.subr.mxu0 0.0
  %590 = vmatpush2.msra.mxu0 0.0
  %591 = vmatprep.subr.mxu0 0.0
  %592 = vmatpush2.msra.mxu0 0.0
  %593 = vmatprep.subr.mxu0 0.0
  %594 = vmatpush2.msra.mxu0 0.0
  %595 = vmatprep.mubr.f32.mxu0 0.0
  %596 = vmatmul.mubr.f32.gmra.mxu0 %v529
  %v597 = vpop.f32.mrf.mxu0
  %v598 = vadd.f32 0.0, %v597
  %v599 = vpop.f32.mrf.mxu0
  %v600 = vadd.f32 0.0, %v599
  %601 = vdwg.mxu0
  %v604 = vcombine.low %v598, %v600
  %v606 = vunpack.c.l.s4 1983009808
  %v607 = vunpack.c.0.s8 %v606
  %v608 = vlaneseq
  %v609 = vshrl.u32 %v608, 7
  %v610 = vsub.s32 %v607, %v609
  %v611 = vrot.slane %v604, %v610
  %v613 = vadd.f32 %v527, %v611
  %v614 = vxor.u32 %v613, 2147483648
  %v615 = vmul.f32 %v614, 1.442695
  %v616 = vpow.pop %v615
  %v617 = vadd.f32 %v616, 1.0
  %v618 = vrcp.pop %v617
  %v619 = vmul.f32 1.0, %v618
  %621 = vrot.lane.b32.xlu0 %v613, 64
  %v622 = vpop.permute.xlu0 %621
  %v623 = vrot.slane %v622, 2
  %v625 = vtanh.pop %v623
  %v626 = vmul.f32 %v619, %v508
  %v627 = vmul.f32 %v619, %v625
  %629 = vrot.lane.b32.xlu0 %v627, 64
  %v630 = vpop.permute.xlu0 %629
  %v632 = vadd.f32 %v626, %v630
  %v633 = vtanh.pop %v632
  %v635 = vrot.slane %v619, 2
  %638 = vrot.lane.b32.xlu0 %v633, 64
  %v639 = vpop.permute.xlu0 %638
  %v641 = vmul.f32 %v635, %v639
  %v642 = vld [vmem:[%s1] sm:$0x3]
  %644 = vset.pattern.permute.xlu0 4
  %645 = vperm.xlu0 %644, %v642
  %v646 = vpop.permute.xlu0 %645
  %v648 = vmul.f32 %v646, %v641
  %v649 = vadd.f32 %v525, %v648
  %s650 = scalar_lea.vmem %s0, 20
  %v651 = vld [vmem:[%s650] sm:$0xf]
  %v653 = vsel %vm31, %v641, 0
  %655 = vmatprep.subr.mxu0 0.0
  %656 = vmatpush1.msra.mxu0 0.0
  %657 = vmatprep.subr.mxu0 0.0
  %658 = vmatpush1.msra.mxu0 0.0
  %659 = vmatprep.subr.mxu0 0.0
  %660 = vmatpush1.msra.mxu0 0.0
  %661 = vmatprep.subr.mxu0 0.0
  %662 = vmatpush1.msra.mxu0 0.0
  %663 = vmatprep.subr.mxu0 0.0
  %664 = vmatpush1.msra.mxu0 0.0
  %665 = vmatprep.subr.mxu0 0.0
  %666 = vmatpush1.msra.mxu0 0.0
  %667 = vmatprep.subr.mxu0 0.0
  %668 = vmatpush1.msra.mxu0 0.0
  %669 = vmatprep.subr.mxu0 0.0
  %670 = vmatpush1.msra.mxu0 0.0
  %671 = vmatprep.subr.mxu0 %v29
  %672 = vmatpush1.msra.mxu0 %v28
  %673 = vmatprep.subr.mxu0 %v27
  %674 = vmatpush1.msra.mxu0 %v26
  %675 = vmatprep.subr.mxu0 %v25
  %676 = vmatpush1.msra.mxu0 %v24
  %677 = vmatprep.subr.mxu0 %v23
  %678 = vmatpush1.msra.mxu0 %v22
  %679 = vmatprep.subr.mxu0 %v21
  %680 = vmatpush1.msra.mxu0 %v20
  %681 = vmatprep.subr.mxu0 %v19
  %682 = vmatpush1.msra.mxu0 %v18
  %683 = vmatprep.subr.mxu0 %v17
  %684 = vmatpush1.msra.mxu0 %v16
  %685 = vmatprep.subr.mxu0 %v15
  %686 = vmatpush1.msra.mxu0 %v14
  %687 = vmatprep.subr.mxu0 0.0
  %688 = vmatpush2.msra.mxu0 0.0
  %689 = vmatprep.subr.mxu0 0.0
  %690 = vmatpush2.msra.mxu0 0.0
  %691 = vmatprep.subr.mxu0 0.0
  %692 = vmatpush2.msra.mxu0 0.0
  %693 = vmatprep.subr.mxu0 0.0
  %694 = vmatpush2.msra.mxu0 0.0
  %695 = vmatprep.subr.mxu0 0.0
  %696 = vmatpush2.msra.mxu0 0.0
  %697 = vmatprep.subr.mxu0 0.0
  %698 = vmatpush2.msra.mxu0 0.0
  %699 = vmatprep.subr.mxu0 0.0
  %700 = vmatpush2.msra.mxu0 0.0
  %701 = vmatprep.subr.mxu0 0.0
  %702 = vmatpush2.msra.mxu0 0.0
  %703 = vmatprep.subr.mxu0 0.0
  %704 = vmatpush2.msra.mxu0 0.0
  %705 = vmatprep.subr.mxu0 0.0
  %706 = vmatpush2.msra.mxu0 0.0
  %707 = vmatprep.subr.mxu0 0.0
  %708 = vmatpush2.msra.mxu0 0.0
  %709 = vmatprep.subr.mxu0 0.0
  %710 = vmatpush2.msra.mxu0 0.0
  %711 = vmatprep.subr.mxu0 0.0
  %712 = vmatpush2.msra.mxu0 0.0
  %713 = vmatprep.subr.mxu0 0.0
  %714 = vmatpush2.msra.mxu0 0.0
  %715 = vmatprep.subr.mxu0 0.0
  %716 = vmatpush2.msra.mxu0 0.0
  %717 = vmatprep.subr.mxu0 0.0
  %718 = vmatpush2.msra.mxu0 0.0
  %719 = vmatprep.mubr.f32.mxu0 0.0
  %720 = vmatmul.mubr.f32.gmra.mxu0 %v653
  %v721 = vpop.f32.mrf.mxu0
  %v722 = vadd.f32 0.0, %v721
  %v723 = vpop.f32.mrf.mxu0
  %v724 = vadd.f32 0.0, %v723
  %725 = vdwg.mxu0
  %v728 = vcombine.low %v722, %v724
  %v730 = vunpack.c.l.s4 1983009808
  %v731 = vunpack.c.0.s8 %v730
  %v732 = vlaneseq
  %v733 = vshrl.u32 %v732, 7
  %v734 = vsub.s32 %v731, %v733
  %v735 = vrot.slane %v728, %v734
  %v737 = vadd.f32 %v651, %v735
  %v738 = vxor.u32 %v737, 2147483648
  %v739 = vmul.f32 %v738, 1.442695
  %v740 = vpow.pop %v739
  %v741 = vadd.f32 %v740, 1.0
  %v742 = vrcp.pop %v741
  %v743 = vmul.f32 1.0, %v742
  %745 = vrot.lane.b32.xlu0 %v737, 64
  %v746 = vpop.permute.xlu0 %745
  %v747 = vrot.slane %v746, 2
  %v749 = vtanh.pop %v747
  %v750 = vmul.f32 %v743, %v632
  %v751 = vmul.f32 %v743, %v749
  %753 = vrot.lane.b32.xlu0 %v751, 64
  %v754 = vpop.permute.xlu0 %753
  %v756 = vadd.f32 %v750, %v754
  %v757 = vtanh.pop %v756
  %v759 = vrot.slane %v743, 2
  %762 = vrot.lane.b32.xlu0 %v757, 64
  %v763 = vpop.permute.xlu0 %762
  %v765 = vmul.f32 %v759, %v763
  %v766 = vld [vmem:[%s1] sm:$0x3]
  %768 = vset.pattern.permute.xlu0 5
  %769 = vperm.xlu0 %768, %v766
  %v770 = vpop.permute.xlu0 %769
  %v772 = vmul.f32 %v770, %v765
  %v773 = vadd.f32 %v649, %v772
  %s774 = scalar_lea.vmem %s0, 24
  %v775 = vld [vmem:[%s774] sm:$0xf]
  %v777 = vsel %vm31, %v765, 0
  %779 = vmatprep.subr.mxu0 0.0
  %780 = vmatpush1.msra.mxu0 0.0
  %781 = vmatprep.subr.mxu0 0.0
  %782 = vmatpush1.msra.mxu0 0.0
  %783 = vmatprep.subr.mxu0 0.0
  %784 = vmatpush1.msra.mxu0 0.0
  %785 = vmatprep.subr.mxu0 0.0
  %786 = vmatpush1.msra.mxu0 0.0
  %787 = vmatprep.subr.mxu0 0.0
  %788 = vmatpush1.msra.mxu0 0.0
  %789 = vmatprep.subr.mxu0 0.0
  %790 = vmatpush1.msra.mxu0 0.0
  %791 = vmatprep.subr.mxu0 0.0
  %792 = vmatpush1.msra.mxu0 0.0
  %793 = vmatprep.subr.mxu0 0.0
  %794 = vmatpush1.msra.mxu0 0.0
  %795 = vmatprep.subr.mxu0 %v29
  %796 = vmatpush1.msra.mxu0 %v28
  %797 = vmatprep.subr.mxu0 %v27
  %798 = vmatpush1.msra.mxu0 %v26
  %799 = vmatprep.subr.mxu0 %v25
  %800 = vmatpush1.msra.mxu0 %v24
  %801 = vmatprep.subr.mxu0 %v23
  %802 = vmatpush1.msra.mxu0 %v22
  %803 = vmatprep.subr.mxu0 %v21
  %804 = vmatpush1.msra.mxu0 %v20
  %805 = vmatprep.subr.mxu0 %v19
  %806 = vmatpush1.msra.mxu0 %v18
  %807 = vmatprep.subr.mxu0 %v17
  %808 = vmatpush1.msra.mxu0 %v16
  %809 = vmatprep.subr.mxu0 %v15
  %810 = vmatpush1.msra.mxu0 %v14
  %811 = vmatprep.subr.mxu0 0.0
  %812 = vmatpush2.msra.mxu0 0.0
  %813 = vmatprep.subr.mxu0 0.0
  %814 = vmatpush2.msra.mxu0 0.0
  %815 = vmatprep.subr.mxu0 0.0
  %816 = vmatpush2.msra.mxu0 0.0
  %817 = vmatprep.subr.mxu0 0.0
  %818 = vmatpush2.msra.mxu0 0.0
  %819 = vmatprep.subr.mxu0 0.0
  %820 = vmatpush2.msra.mxu0 0.0
  %821 = vmatprep.subr.mxu0 0.0
  %822 = vmatpush2.msra.mxu0 0.0
  %823 = vmatprep.subr.mxu0 0.0
  %824 = vmatpush2.msra.mxu0 0.0
  %825 = vmatprep.subr.mxu0 0.0
  %826 = vmatpush2.msra.mxu0 0.0
  %827 = vmatprep.subr.mxu0 0.0
  %828 = vmatpush2.msra.mxu0 0.0
  %829 = vmatprep.subr.mxu0 0.0
  %830 = vmatpush2.msra.mxu0 0.0
  %831 = vmatprep.subr.mxu0 0.0
  %832 = vmatpush2.msra.mxu0 0.0
  %833 = vmatprep.subr.mxu0 0.0
  %834 = vmatpush2.msra.mxu0 0.0
  %835 = vmatprep.subr.mxu0 0.0
  %836 = vmatpush2.msra.mxu0 0.0
  %837 = vmatprep.subr.mxu0 0.0
  %838 = vmatpush2.msra.mxu0 0.0
  %839 = vmatprep.subr.mxu0 0.0
  %840 = vmatpush2.msra.mxu0 0.0
  %841 = vmatprep.subr.mxu0 0.0
  %842 = vmatpush2.msra.mxu0 0.0
  %843 = vmatprep.mubr.f32.mxu0 0.0
  %844 = vmatmul.mubr.f32.gmra.mxu0 %v777
  %v845 = vpop.f32.mrf.mxu0
  %v846 = vadd.f32 0.0, %v845
  %v847 = vpop.f32.mrf.mxu0
  %v848 = vadd.f32 0.0, %v847
  %849 = vdwg.mxu0
  %v852 = vcombine.low %v846, %v848
  %v854 = vunpack.c.l.s4 1983009808
  %v855 = vunpack.c.0.s8 %v854
  %v856 = vlaneseq
  %v857 = vshrl.u32 %v856, 7
  %v858 = vsub.s32 %v855, %v857
  %v859 = vrot.slane %v852, %v858
  %v861 = vadd.f32 %v775, %v859
  %v862 = vxor.u32 %v861, 2147483648
  %v863 = vmul.f32 %v862, 1.442695
  %v864 = vpow.pop %v863
  %v865 = vadd.f32 %v864, 1.0
  %v866 = vrcp.pop %v865
  %v867 = vmul.f32 1.0, %v866
  %869 = vrot.lane.b32.xlu0 %v861, 64
  %v870 = vpop.permute.xlu0 %869
  %v871 = vrot.slane %v870, 2
  %v873 = vtanh.pop %v871
  %v874 = vmul.f32 %v867, %v756
  %v875 = vmul.f32 %v867, %v873
  %877 = vrot.lane.b32.xlu0 %v875, 64
  %v878 = vpop.permute.xlu0 %877
  %v880 = vadd.f32 %v874, %v878
  %v881 = vtanh.pop %v880
  %v883 = vrot.slane %v867, 2
  %886 = vrot.lane.b32.xlu0 %v881, 64
  %v887 = vpop.permute.xlu0 %886
  %v889 = vmul.f32 %v883, %v887
  %v890 = vld [vmem:[%s1] sm:$0x3]
  %892 = vset.pattern.permute.xlu0 6
  %893 = vperm.xlu0 %892, %v890
  %v894 = vpop.permute.xlu0 %893
  %v896 = vmul.f32 %v894, %v889
  %v897 = vadd.f32 %v773, %v896
  %s898 = scalar_lea.vmem %s0, 28
  %v899 = vld [vmem:[%s898] sm:$0xf]
  %v901 = vsel %vm31, %v889, 0
  %903 = vmatprep.subr.mxu0 0.0
  %904 = vmatpush1.msra.mxu0 0.0
  %905 = vmatprep.subr.mxu0 0.0
  %906 = vmatpush1.msra.mxu0 0.0
  %907 = vmatprep.subr.mxu0 0.0
  %908 = vmatpush1.msra.mxu0 0.0
  %909 = vmatprep.subr.mxu0 0.0
  %910 = vmatpush1.msra.mxu0 0.0
  %911 = vmatprep.subr.mxu0 0.0
  %912 = vmatpush1.msra.mxu0 0.0
  %913 = vmatprep.subr.mxu0 0.0
  %914 = vmatpush1.msra.mxu0 0.0
  %915 = vmatprep.subr.mxu0 0.0
  %916 = vmatpush1.msra.mxu0 0.0
  %917 = vmatprep.subr.mxu0 0.0
  %918 = vmatpush1.msra.mxu0 0.0
  %919 = vmatprep.subr.mxu0 %v29
  %920 = vmatpush1.msra.mxu0 %v28
  %921 = vmatprep.subr.mxu0 %v27
  %922 = vmatpush1.msra.mxu0 %v26
  %923 = vmatprep.subr.mxu0 %v25
  %924 = vmatpush1.msra.mxu0 %v24
  %925 = vmatprep.subr.mxu0 %v23
  %926 = vmatpush1.msra.mxu0 %v22
  %927 = vmatprep.subr.mxu0 %v21
  %928 = vmatpush1.msra.mxu0 %v20
  %929 = vmatprep.subr.mxu0 %v19
  %930 = vmatpush1.msra.mxu0 %v18
  %931 = vmatprep.subr.mxu0 %v17
  %932 = vmatpush1.msra.mxu0 %v16
  %933 = vmatprep.subr.mxu0 %v15
  %934 = vmatpush1.msra.mxu0 %v14
  %935 = vmatprep.subr.mxu0 0.0
  %936 = vmatpush2.msra.mxu0 0.0
  %937 = vmatprep.subr.mxu0 0.0
  %938 = vmatpush2.msra.mxu0 0.0
  %939 = vmatprep.subr.mxu0 0.0
  %940 = vmatpush2.msra.mxu0 0.0
  %941 = vmatprep.subr.mxu0 0.0
  %942 = vmatpush2.msra.mxu0 0.0
  %943 = vmatprep.subr.mxu0 0.0
  %944 = vmatpush2.msra.mxu0 0.0
  %945 = vmatprep.subr.mxu0 0.0
  %946 = vmatpush2.msra.mxu0 0.0
  %947 = vmatprep.subr.mxu0 0.0
  %948 = vmatpush2.msra.mxu0 0.0
  %949 = vmatprep.subr.mxu0 0.0
  %950 = vmatpush2.msra.mxu0 0.0
  %951 = vmatprep.subr.mxu0 0.0
  %952 = vmatpush2.msra.mxu0 0.0
  %953 = vmatprep.subr.mxu0 0.0
  %954 = vmatpush2.msra.mxu0 0.0
  %955 = vmatprep.subr.mxu0 0.0
  %956 = vmatpush2.msra.mxu0 0.0
  %957 = vmatprep.subr.mxu0 0.0
  %958 = vmatpush2.msra.mxu0 0.0
  %959 = vmatprep.subr.mxu0 0.0
  %960 = vmatpush2.msra.mxu0 0.0
  %961 = vmatprep.subr.mxu0 0.0
  %962 = vmatpush2.msra.mxu0 0.0
  %963 = vmatprep.subr.mxu0 0.0
  %964 = vmatpush2.msra.mxu0 0.0
  %965 = vmatprep.subr.mxu0 0.0
  %966 = vmatpush2.msra.mxu0 0.0
  %967 = vmatprep.mubr.f32.mxu0 0.0
  %968 = vmatmul.mubr.f32.gmra.mxu0 %v901
  %v969 = vpop.f32.mrf.mxu0
  %v970 = vadd.f32 0.0, %v969
  %v971 = vpop.f32.mrf.mxu0
  %v972 = vadd.f32 0.0, %v971
  %973 = vdwg.mxu0
  %v976 = vcombine.low %v970, %v972
  %v978 = vunpack.c.l.s4 1983009808
  %v979 = vunpack.c.0.s8 %v978
  %v980 = vlaneseq
  %v981 = vshrl.u32 %v980, 7
  %v982 = vsub.s32 %v979, %v981
  %v983 = vrot.slane %v976, %v982
  %v985 = vadd.f32 %v899, %v983
  %v986 = vxor.u32 %v985, 2147483648
  %v987 = vmul.f32 %v986, 1.442695
  %v988 = vpow.pop %v987
  %v989 = vadd.f32 %v988, 1.0
  %v990 = vrcp.pop %v989
  %v991 = vmul.f32 1.0, %v990
  %993 = vrot.lane.b32.xlu0 %v985, 64
  %v994 = vpop.permute.xlu0 %993
  %v995 = vrot.slane %v994, 2
  %v997 = vtanh.pop %v995
  %v998 = vmul.f32 %v991, %v880
  %v999 = vmul.f32 %v991, %v997
  %1001 = vrot.lane.b32.xlu0 %v999, 64
  %v1002 = vpop.permute.xlu0 %1001
  %v1004 = vadd.f32 %v998, %v1002
  %v1005 = vtanh.pop %v1004
  %v1007 = vrot.slane %v991, 2
  %1010 = vrot.lane.b32.xlu0 %v1005, 64
  %v1011 = vpop.permute.xlu0 %1010
  %v1013 = vmul.f32 %v1007, %v1011
  %v1014 = vld [vmem:[%s1] sm:$0x3]
  %1016 = vset.pattern.permute.xlu0 7
  %1017 = vperm.xlu0 %1016, %v1014
  %v1018 = vpop.permute.xlu0 %1017
  %v1020 = vmul.f32 %v1018, %v1013
  %v1021 = vadd.f32 %v897, %v1020
  %vm1022 = vcmask 517120
  %v1023 = vsel %vm1022, %v1021, 0.0
  %v1024 = vrot.slane %v1023, 4
  %v1025 = vadd.f32 %v1023, %v1024
  %v1026 = vrot.slane %v1025, 2
  %v1027 = vadd.f32 %v1025, %v1026
  %v1028 = vrot.slane %v1027, 1
  %v1029 = vadd.f32 %v1027, %v1028
  %v1030 = vrcp.pop 2.0
  %v1031 = vmul.f32 %v1029, %v1030
  %v1032 = vsub.f32 %v1021, %v1031
  %v1033 = vmul.f32 %v1032, %v1032
  %v1034 = vsel %vm1022, %v1033, 0.0
  %v1035 = vrot.slane %v1034, 4
  %v1036 = vadd.f32 %v1034, %v1035
  %v1037 = vrot.slane %v1036, 2
  %v1038 = vadd.f32 %v1036, %v1037
  %v1039 = vrot.slane %v1038, 1
  %v1040 = vadd.f32 %v1038, %v1039
  %v1041 = vmul.f32 %v1040, %v1030
  %v1042 = vadd.f32 %v1041, 1e-05
  %v1043 = vrsqrt.pop %v1042
  %v1044 = vmul.f32 %v1032, %v1043
  %1045 = vst.msk [vmem:[%s3] sm:$0x3] %vm1022, %v1044
  // Predicated region
  $region14: #{_lambda_.4} parent=0 // pred_check
    _
  $region15: #{_lambda_.4} parent=0 // pred_check_branch
    %1047 = sbr.rel (0) target = $region17
  $region16: #{_lambda_.4} parent=0 // pred_region
    _
  $region17: #{_lambda_.4} parent=0 // pred_fallthru
    _
  // Predicated region
  $region18: #{_lambda_.4} parent=0 // pred_check
    _
  $region19: #{_lambda_.4} parent=0 // pred_check_branch
    %1049 = sbr.rel (0) target = $region21
  $region20: #{_lambda_.4} parent=0 // pred_region
    _
  $region21: #{_lambda_.4} parent=0 // pred_fallthru
    _

// kernel: _lambda_.5
$region0: #{_lambda_.5}
  #allocation0 [shape = 'u32[]', space=smem, size = 0x4, offset = 0x4, fixed_abs, tag = 'smem constant byte address 0x4 - core index']
  #allocation1 [shape = 'u32[144,128]{1,0:T(1,128)}', space=vmem, size = 0x12000, scoped, tag = 'internal scratch']
  %s0 = inlined_call_operand.vmem [shape: f32[8,24,256], index: 0, kind: input, shape index: {}]
  %s1 = inlined_call_operand.vmem [shape: f32[24,8], index: 1, kind: input, shape index: {}]
  %s2 = inlined_call_operand.vmem [shape: f32[64,256], index: 2, kind: input, shape index: {}]
  %s3 = inlined_call_operand.vmem [shape: f32[24,64], index: 3, kind: output, shape index: {}]
  %s4 = sld [smem:[#allocation0]]
  $region22: #{_lambda_.5} parent=0
    _
  %s6 = ssub.s32 1, %s4
  %s7 = scalar_select 0, %s6, %s4
  // Predicated region
  $region2: #{_lambda_.5} parent=0 // pred_check
    _
  $region3: #{_lambda_.5} parent=0 // pred_check_branch
    %9 = sbr.rel (0) target = $region5
  $region4: #{_lambda_.5} parent=0 // pred_region
    _
  $region5: #{_lambda_.5} parent=0 // pred_fallthru
    _
  // Predicated region
  $region6: #{_lambda_.5} parent=0 // pred_check
    _
  $region7: #{_lambda_.5} parent=0 // pred_check_branch
    %11 = sbr.rel (0) target = $region9
  $region8: #{_lambda_.5} parent=0 // pred_region
    _
  $region9: #{_lambda_.5} parent=0 // pred_fallthru
    _
  // Predicated region
  $region10: #{_lambda_.5} parent=0 // pred_check
    _
  $region11: #{_lambda_.5} parent=0 // pred_check_branch
    %13 = sbr.rel (0) target = $region13
  $region12: #{_lambda_.5} parent=0 // pred_region
    _
  $region13: #{_lambda_.5} parent=0 // pred_fallthru
    _
  %v14 = vld [vmem:[%s2] sm:$0xff]
  %v15 = vld [vmem:[%s2 + $0x8] sm:$0xff]
  %v16 = vld [vmem:[%s2 + $0x10] sm:$0xff]
  %v17 = vld [vmem:[%s2 + $0x18] sm:$0xff]
  %v18 = vld [vmem:[%s2 + $0x20] sm:$0xff]
  %v19 = vld [vmem:[%s2 + $0x28] sm:$0xff]
  %v20 = vld [vmem:[%s2 + $0x30] sm:$0xff]
  %v21 = vld [vmem:[%s2 + $0x38] sm:$0xff]
  %v22 = vld [vmem:[%s2 + $0x40] sm:$0xff]
  %v23 = vld [vmem:[%s2 + $0x48] sm:$0xff]
  %v24 = vld [vmem:[%s2 + $0x50] sm:$0xff]
  %v25 = vld [vmem:[%s2 + $0x58] sm:$0xff]
  %v26 = vld [vmem:[%s2 + $0x60] sm:$0xff]
  %v27 = vld [vmem:[%s2 + $0x68] sm:$0xff]
  %v28 = vld [vmem:[%s2 + $0x70] sm:$0xff]
  %v29 = vld [vmem:[%s2 + $0x78] sm:$0xff]
  %v30 = vld [vmem:[%s0] sm:$0xff]
  %v31 = vld [vmem:[%s0 + $0x8] sm:$0xff]
  %v32 = vld [vmem:[%s0 + $0x10] sm:$0xff]
  %v33 = vld [vmem:[%s0 + $0x18] sm:$0xff]
  %v34 = vld [vmem:[%s0 + $0x20] sm:$0xff]
  %v35 = vld [vmem:[%s0 + $0x28] sm:$0xff]
  %vm36 = vcmask 523264
  %v38 = vsel %vm36, 0.0, 0
  %40 = vmatprep.subr.mxu0 0.0
  %41 = vmatpush1.msra.mxu0 0.0
  %42 = vmatprep.subr.mxu0 0.0
  %43 = vmatpush1.msra.mxu0 0.0
  %44 = vmatprep.subr.mxu0 0.0
  %45 = vmatpush1.msra.mxu0 0.0
  %46 = vmatprep.subr.mxu0 0.0
  %47 = vmatpush1.msra.mxu0 0.0
  %48 = vmatprep.subr.mxu0 0.0
  %49 = vmatpush1.msra.mxu0 0.0
  %50 = vmatprep.subr.mxu0 0.0
  %51 = vmatpush1.msra.mxu0 0.0
  %52 = vmatprep.subr.mxu0 0.0
  %53 = vmatpush1.msra.mxu0 0.0
  %54 = vmatprep.subr.mxu0 0.0
  %55 = vmatpush1.msra.mxu0 0.0
  %56 = vmatprep.subr.mxu0 %v29
  %57 = vmatpush1.msra.mxu0 %v28
  %58 = vmatprep.subr.mxu0 %v27
  %59 = vmatpush1.msra.mxu0 %v26
  %60 = vmatprep.subr.mxu0 %v25
  %61 = vmatpush1.msra.mxu0 %v24
  %62 = vmatprep.subr.mxu0 %v23
  %63 = vmatpush1.msra.mxu0 %v22
  %64 = vmatprep.subr.mxu0 %v21
  %65 = vmatpush1.msra.mxu0 %v20
  %66 = vmatprep.subr.mxu0 %v19
  %67 = vmatpush1.msra.mxu0 %v18
  %68 = vmatprep.subr.mxu0 %v17
  %69 = vmatpush1.msra.mxu0 %v16
  %70 = vmatprep.subr.mxu0 %v15
  %71 = vmatpush1.msra.mxu0 %v14
  %72 = vmatprep.subr.mxu0 0.0
  %73 = vmatpush2.msra.mxu0 0.0
  %74 = vmatprep.subr.mxu0 0.0
  %75 = vmatpush2.msra.mxu0 0.0
  %76 = vmatprep.subr.mxu0 0.0
  %77 = vmatpush2.msra.mxu0 0.0
  %78 = vmatprep.subr.mxu0 0.0
  %79 = vmatpush2.msra.mxu0 0.0
  %80 = vmatprep.subr.mxu0 0.0
  %81 = vmatpush2.msra.mxu0 0.0
  %82 = vmatprep.subr.mxu0 0.0
  %83 = vmatpush2.msra.mxu0 0.0
  %84 = vmatprep.subr.mxu0 0.0
  %85 = vmatpush2.msra.mxu0 0.0
  %86 = vmatprep.subr.mxu0 0.0
  %87 = vmatpush2.msra.mxu0 0.0
  %88 = vmatprep.subr.mxu0 0.0
  %89 = vmatpush2.msra.mxu0 0.0
  %90 = vmatprep.subr.mxu0 0.0
  %91 = vmatpush2.msra.mxu0 0.0
  %92 = vmatprep.subr.mxu0 0.0
  %93 = vmatpush2.msra.mxu0 0.0
  %94 = vmatprep.subr.mxu0 0.0
  %95 = vmatpush2.msra.mxu0 0.0
  %96 = vmatprep.subr.mxu0 0.0
  %97 = vmatpush2.msra.mxu0 0.0
  %98 = vmatprep.subr.mxu0 0.0
  %99 = vmatpush2.msra.mxu0 0.0
  %100 = vmatprep.subr.mxu0 0.0
  %101 = vmatpush2.msra.mxu0 0.0
  %102 = vmatprep.subr.mxu0 0.0
  %103 = vmatpush2.msra.mxu0 0.0
  %104 = vmatprep.mubr.f32.mxu0 0.0
  %105 = vmatmul.mubr.f32.gmra.mxu0 %v38
  %v106 = vpop.f32.mrf.mxu0
  %v107 = vadd.f32 0.0, %v106
  %v108 = vpop.f32.mrf.mxu0
  %v109 = vadd.f32 0.0, %v108
  %110 = vmatprep.mubr.f32.mxu0 0.0
  %111 = vmatmul.mubr.f32.gmra.mxu0 %v38
  %v112 = vpop.f32.mrf.mxu0
  %v113 = vadd.f32 0.0, %v112
  %v114 = vpop.f32.mrf.mxu0
  %v115 = vadd.f32 0.0, %v114
  %116 = vmatprep.mubr.f32.mxu0 0.0
  %117 = vmatmul.mubr.f32.gmra.mxu0 %v38
  %v118 = vpop.f32.mrf.mxu0
  %v119 = vadd.f32 0.0, %v118
  %v120 = vpop.f32.mrf.mxu0
  %v121 = vadd.f32 0.0, %v120
  %122 = vdwg.mxu0
  %v123 = vadd.f32 %v30, %v107
  %v124 = vadd.f32 %v31, %v109
  %v125 = vadd.f32 %v32, %v113
  %v126 = vadd.f32 %v33, %v115
  %v127 = vadd.f32 %v34, %v119
  %v128 = vadd.f32 %v35, %v121
  %v129 = vxor.u32 %v123, 2147483648
  %v130 = vxor.u32 %v124, 2147483648
  %v131 = vxor.u32 %v125, 2147483648
  %v132 = vxor.u32 %v126, 2147483648
  %v133 = vxor.u32 %v127, 2147483648
  %v134 = vxor.u32 %v128, 2147483648
  %v135 = vmul.f32 %v129, 1.442695
  %v136 = vpow.pop %v135
  %v137 = vmul.f32 %v130, 1.442695
  %v138 = vpow.pop %v137
  %v139 = vmul.f32 %v131, 1.442695
  %v140 = vpow.pop %v139
  %v141 = vmul.f32 %v132, 1.442695
  %v142 = vpow.pop %v141
  %v143 = vmul.f32 %v133, 1.442695
  %v144 = vpow.pop %v143
  %v145 = vmul.f32 %v134, 1.442695
  %v146 = vpow.pop %v145
  %v147 = vadd.f32 %v136, 1.0
  %v148 = vadd.f32 %v138, 1.0
  %v149 = vadd.f32 %v140, 1.0
  %v150 = vadd.f32 %v142, 1.0
  %v151 = vadd.f32 %v144, 1.0
  %v152 = vadd.f32 %v146, 1.0
  %v153 = vrcp.pop %v147
  %v154 = vmul.f32 1.0, %v153
  %v155 = vrcp.pop %v148
  %v156 = vmul.f32 1.0, %v155
  %v157 = vrcp.pop %v149
  %v158 = vmul.f32 1.0, %v157
  %v159 = vrcp.pop %v150
  %v160 = vmul.f32 1.0, %v159
  %v161 = vrcp.pop %v151
  %v162 = vmul.f32 1.0, %v161
  %v163 = vrcp.pop %v152
  %v164 = vmul.f32 1.0, %v163
  %v165 = vtanh.pop %v124
  %v166 = vtanh.pop %v126
  %v167 = vtanh.pop %v128
  %v168 = vmul.f32 %v154, 0.0
  %v169 = vmul.f32 %v158, 0.0
  %v170 = vmul.f32 %v162, 0.0
  %174 = vrot.lane.b32.xlu0 %v165, 64
  %v175 = vpop.permute.xlu0 %174
  %176 = vrot.lane.b32.xlu0 %v166, 64
  %v177 = vpop.permute.xlu0 %176
  %178 = vrot.lane.b32.xlu0 %v167, 64
  %v179 = vpop.permute.xlu0 %178
  %v183 = vmul.f32 %v154, %v175
  %v184 = vmul.f32 %v158, %v177
  %v185 = vmul.f32 %v162, %v179
  %189 = vrot.lane.b32.xlu0 %v183, 64
  %v190 = vpop.permute.xlu0 %189
  %191 = vrot.lane.b32.xlu0 %v184, 64
  %v192 = vpop.permute.xlu0 %191
  %193 = vrot.lane.b32.xlu0 %v185, 64
  %v194 = vpop.permute.xlu0 %193
  %v198 = vadd.f32 %v168, %v190
  %v199 = vadd.f32 %v169, %v192
  %v200 = vadd.f32 %v170, %v194
  %v201 = vtanh.pop %v198
  %v202 = vtanh.pop %v199
  %v203 = vtanh.pop %v200
  %207 = vrot.lane.b32.xlu0 %v201, 64
  %v208 = vpop.permute.xlu0 %207
  %209 = vrot.lane.b32.xlu0 %v202, 64
  %v210 = vpop.permute.xlu0 %209
  %211 = vrot.lane.b32.xlu0 %v203, 64
  %v212 = vpop.permute.xlu0 %211
  %v216 = vmul.f32 %v156, %v208
  %v217 = vmul.f32 %v160, %v210
  %v218 = vmul.f32 %v164, %v212
  %v219 = vld [vmem:[%s1] sm:$0xff]
  %v220 = vld [vmem:[%s1 + $0x8] sm:$0xff]
  %v221 = vld [vmem:[%s1 + $0x10] sm:$0xff]
  %223 = vset.pattern.permute.xlu0 0
  %224 = vperm.xlu0 %223, %v219
  %v225 = vpop.permute.xlu0 %224
  %228 = vset.pattern.permute.xlu0 0
  %229 = vperm.xlu0 %228, %v220
  %v230 = vpop.permute.xlu0 %229
  %233 = vset.pattern.permute.xlu0 0
  %234 = vperm.xlu0 %233, %v221
  %v235 = vpop.permute.xlu0 %234
  %v237 = vmul.f32 %v225, %v216
  %v238 = vmul.f32 %v230, %v217
  %v239 = vmul.f32 %v235, %v218
  %v240 = vadd.f32 %v237, 0.0
  %v241 = vadd.f32 %v238, 0.0
  %v242 = vadd.f32 %v239, 0.0
  %s243 = scalar_lea.vmem %s0, 48
  %v244 = vld [vmem:[%s243] sm:$0xff]
  %v245 = vld [vmem:[%s243 + $0x8] sm:$0xff]
  %v246 = vld [vmem:[%s243 + $0x10] sm:$0xff]
  %v247 = vld [vmem:[%s243 + $0x18] sm:$0xff]
  %v248 = vld [vmem:[%s243 + $0x20] sm:$0xff]
  %v249 = vld [vmem:[%s243 + $0x28] sm:$0xff]
  %v251 = vsel %vm36, %v216, 0
  %v254 = vsel %vm36, %v217, 0
  %v257 = vsel %vm36, %v218, 0
  %259 = vmatprep.subr.mxu0 0.0
  %260 = vmatpush1.msra.mxu0 0.0
  %261 = vmatprep.subr.mxu0 0.0
  %262 = vmatpush1.msra.mxu0 0.0
  %263 = vmatprep.subr.mxu0 0.0
  %264 = vmatpush1.msra.mxu0 0.0
  %265 = vmatprep.subr.mxu0 0.0
  %266 = vmatpush1.msra.mxu0 0.0
  %267 = vmatprep.subr.mxu0 0.0
  %268 = vmatpush1.msra.mxu0 0.0
  %269 = vmatprep.subr.mxu0 0.0
  %270 = vmatpush1.msra.mxu0 0.0
  %271 = vmatprep.subr.mxu0 0.0
  %272 = vmatpush1.msra.mxu0 0.0
  %273 = vmatprep.subr.mxu0 0.0
  %274 = vmatpush1.msra.mxu0 0.0
  %275 = vmatprep.subr.mxu0 %v29
  %276 = vmatpush1.msra.mxu0 %v28
  %277 = vmatprep.subr.mxu0 %v27
  %278 = vmatpush1.msra.mxu0 %v26
  %279 = vmatprep.subr.mxu0 %v25
  %280 = vmatpush1.msra.mxu0 %v24
  %281 = vmatprep.subr.mxu0 %v23
  %282 = vmatpush1.msra.mxu0 %v22
  %283 = vmatprep.subr.mxu0 %v21
  %284 = vmatpush1.msra.mxu0 %v20
  %285 = vmatprep.subr.mxu0 %v19
  %286 = vmatpush1.msra.mxu0 %v18
  %287 = vmatprep.subr.mxu0 %v17
  %288 = vmatpush1.msra.mxu0 %v16
  %289 = vmatprep.subr.mxu0 %v15
  %290 = vmatpush1.msra.mxu0 %v14
  %291 = vmatprep.subr.mxu0 0.0
  %292 = vmatpush2.msra.mxu0 0.0
  %293 = vmatprep.subr.mxu0 0.0
  %294 = vmatpush2.msra.mxu0 0.0
  %295 = vmatprep.subr.mxu0 0.0
  %296 = vmatpush2.msra.mxu0 0.0
  %297 = vmatprep.subr.mxu0 0.0
  %298 = vmatpush2.msra.mxu0 0.0
  %299 = vmatprep.subr.mxu0 0.0
  %300 = vmatpush2.msra.mxu0 0.0
  %301 = vmatprep.subr.mxu0 0.0
  %302 = vmatpush2.msra.mxu0 0.0
  %303 = vmatprep.subr.mxu0 0.0
  %304 = vmatpush2.msra.mxu0 0.0
  %305 = vmatprep.subr.mxu0 0.0
  %306 = vmatpush2.msra.mxu0 0.0
  %307 = vmatprep.subr.mxu0 0.0
  %308 = vmatpush2.msra.mxu0 0.0
  %309 = vmatprep.subr.mxu0 0.0
  %310 = vmatpush2.msra.mxu0 0.0
  %311 = vmatprep.subr.mxu0 0.0
  %312 = vmatpush2.msra.mxu0 0.0
  %313 = vmatprep.subr.mxu0 0.0
  %314 = vmatpush2.msra.mxu0 0.0
  %315 = vmatprep.subr.mxu0 0.0
  %316 = vmatpush2.msra.mxu0 0.0
  %317 = vmatprep.subr.mxu0 0.0
  %318 = vmatpush2.msra.mxu0 0.0
  %319 = vmatprep.subr.mxu0 0.0
  %320 = vmatpush2.msra.mxu0 0.0
  %321 = vmatprep.subr.mxu0 0.0
  %322 = vmatpush2.msra.mxu0 0.0
  %323 = vmatprep.mubr.f32.mxu0 0.0
  %324 = vmatmul.mubr.f32.gmra.mxu0 %v251
  %v325 = vpop.f32.mrf.mxu0
  %v326 = vadd.f32 0.0, %v325
  %v327 = vpop.f32.mrf.mxu0
  %v328 = vadd.f32 0.0, %v327
  %329 = vmatprep.mubr.f32.mxu0 0.0
  %330 = vmatmul.mubr.f32.gmra.mxu0 %v254
  %v331 = vpop.f32.mrf.mxu0
  %v332 = vadd.f32 0.0, %v331
  %v333 = vpop.f32.mrf.mxu0
  %v334 = vadd.f32 0.0, %v333
  %335 = vmatprep.mubr.f32.mxu0 0.0
  %336 = vmatmul.mubr.f32.gmra.mxu0 %v257
  %v337 = vpop.f32.mrf.mxu0
  %v338 = vadd.f32 0.0, %v337
  %v339 = vpop.f32.mrf.mxu0
  %v340 = vadd.f32 0.0, %v339
  %341 = vdwg.mxu0
  %v342 = vadd.f32 %v244, %v326
  %v343 = vadd.f32 %v245, %v328
  %v344 = vadd.f32 %v246, %v332
  %v345 = vadd.f32 %v247, %v334
  %v346 = vadd.f32 %v248, %v338
  %v347 = vadd.f32 %v249, %v340
  %v348 = vxor.u32 %v342, 2147483648
  %v349 = vxor.u32 %v343, 2147483648
  %v350 = vxor.u32 %v344, 2147483648
  %v351 = vxor.u32 %v345, 2147483648
  %v352 = vxor.u32 %v346, 2147483648
  %v353 = vxor.u32 %v347, 2147483648
  %v354 = vmul.f32 %v348, 1.442695
  %v355 = vpow.pop %v354
  %v356 = vmul.f32 %v349, 1.442695
  %v357 = vpow.pop %v356
  %v358 = vmul.f32 %v350, 1.442695
  %v359 = vpow.pop %v358
  %v360 = vmul.f32 %v351, 1.442695
  %v361 = vpow.pop %v360
  %v362 = vmul.f32 %v352, 1.442695
  %v363 = vpow.pop %v362
  %v364 = vmul.f32 %v353, 1.442695
  %v365 = vpow.pop %v364
  %v366 = vadd.f32 %v355, 1.0
  %v367 = vadd.f32 %v357, 1.0
  %v368 = vadd.f32 %v359, 1.0
  %v369 = vadd.f32 %v361, 1.0
  %v370 = vadd.f32 %v363, 1.0
  %v371 = vadd.f32 %v365, 1.0
  %v372 = vrcp.pop %v366
  %v373 = vmul.f32 1.0, %v372
  %v374 = vrcp.pop %v367
  %v375 = vmul.f32 1.0, %v374
  %v376 = vrcp.pop %v368
  %v377 = vmul.f32 1.0, %v376
  %v378 = vrcp.pop %v369
  %v379 = vmul.f32 1.0, %v378
  %v380 = vrcp.pop %v370
  %v381 = vmul.f32 1.0, %v380
  %v382 = vrcp.pop %v371
  %v383 = vmul.f32 1.0, %v382
  %v384 = vtanh.pop %v343
  %v385 = vtanh.pop %v345
  %v386 = vtanh.pop %v347
  %v387 = vmul.f32 %v373, %v198
  %v388 = vmul.f32 %v377, %v199
  %v389 = vmul.f32 %v381, %v200
  %393 = vrot.lane.b32.xlu0 %v384, 64
  %v394 = vpop.permute.xlu0 %393
  %395 = vrot.lane.b32.xlu0 %v385, 64
  %v396 = vpop.permute.xlu0 %395
  %397 = vrot.lane.b32.xlu0 %v386, 64
  %v398 = vpop.permute.xlu0 %397
  %v402 = vmul.f32 %v373, %v394
  %v403 = vmul.f32 %v377, %v396
  %v404 = vmul.f32 %v381, %v398
  %408 = vrot.lane.b32.xlu0 %v402, 64
  %v409 = vpop.permute.xlu0 %408
  %410 = vrot.lane.b32.xlu0 %v403, 64
  %v411 = vpop.permute.xlu0 %410
  %412 = vrot.lane.b32.xlu0 %v404, 64
  %v413 = vpop.permute.xlu0 %412
  %v417 = vadd.f32 %v387, %v409
  %v418 = vadd.f32 %v388, %v411
  %v419 = vadd.f32 %v389, %v413
  %v420 = vtanh.pop %v417
  %v421 = vtanh.pop %v418
  %v422 = vtanh.pop %v419
  %426 = vrot.lane.b32.xlu0 %v420, 64
  %v427 = vpop.permute.xlu0 %426
  %428 = vrot.lane.b32.xlu0 %v421, 64
  %v429 = vpop.permute.xlu0 %428
  %430 = vrot.lane.b32.xlu0 %v422, 64
  %v431 = vpop.permute.xlu0 %430
  %v435 = vmul.f32 %v375, %v427
  %v436 = vmul.f32 %v379, %v429
  %v437 = vmul.f32 %v383, %v431
  %438 = vset.pattern.permute.xlu0 1
  %439 = vperm.xlu0 %438, %v219
  %v440 = vpop.permute.xlu0 %439
  %442 = vset.pattern.permute.xlu0 1
  %443 = vperm.xlu0 %442, %v220
  %v444 = vpop.permute.xlu0 %443
  %446 = vset.pattern.permute.xlu0 1
  %447 = vperm.xlu0 %446, %v221
  %v448 = vpop.permute.xlu0 %447
  %v450 = vmul.f32 %v440, %v435
  %v451 = vmul.f32 %v444, %v436
  %v452 = vmul.f32 %v448, %v437
  %v453 = vadd.f32 %v240, %v450
  %v454 = vadd.f32 %v241, %v451
  %v455 = vadd.f32 %v242, %v452
  %s456 = scalar_lea.vmem %s0, 96
  %v457 = vld [vmem:[%s456] sm:$0xff]
  %v458 = vld [vmem:[%s456 + $0x8] sm:$0xff]
  %v459 = vld [vmem:[%s456 + $0x10] sm:$0xff]
  %v460 = vld [vmem:[%s456 + $0x18] sm:$0xff]
  %v461 = vld [vmem:[%s456 + $0x20] sm:$0xff]
  %v462 = vld [vmem:[%s456 + $0x28] sm:$0xff]
  %v464 = vsel %vm36, %v435, 0
  %v467 = vsel %vm36, %v436, 0
  %v470 = vsel %vm36, %v437, 0
  %472 = vmatprep.subr.mxu0 0.0
  %473 = vmatpush1.msra.mxu0 0.0
  %474 = vmatprep.subr.mxu0 0.0
  %475 = vmatpush1.msra.mxu0 0.0
  %476 = vmatprep.subr.mxu0 0.0
  %477 = vmatpush1.msra.mxu0 0.0
  %478 = vmatprep.subr.mxu0 0.0
  %479 = vmatpush1.msra.mxu0 0.0
  %480 = vmatprep.subr.mxu0 0.0
  %481 = vmatpush1.msra.mxu0 0.0
  %482 = vmatprep.subr.mxu0 0.0
  %483 = vmatpush1.msra.mxu0 0.0
  %484 = vmatprep.subr.mxu0 0.0
  %485 = vmatpush1.msra.mxu0 0.0
  %486 = vmatprep.subr.mxu0 0.0
  %487 = vmatpush1.msra.mxu0 0.0
  %488 = vmatprep.subr.mxu0 %v29
  %489 = vmatpush1.msra.mxu0 %v28
  %490 = vmatprep.subr.mxu0 %v27
  %491 = vmatpush1.msra.mxu0 %v26
  %492 = vmatprep.subr.mxu0 %v25
  %493 = vmatpush1.msra.mxu0 %v24
  %494 = vmatprep.subr.mxu0 %v23
  %495 = vmatpush1.msra.mxu0 %v22
  %496 = vmatprep.subr.mxu0 %v21
  %497 = vmatpush1.msra.mxu0 %v20
  %498 = vmatprep.subr.mxu0 %v19
  %499 = vmatpush1.msra.mxu0 %v18
  %500 = vmatprep.subr.mxu0 %v17
  %501 = vmatpush1.msra.mxu0 %v16
  %502 = vmatprep.subr.mxu0 %v15
  %503 = vmatpush1.msra.mxu0 %v14
  %504 = vmatprep.subr.mxu0 0.0
  %505 = vmatpush2.msra.mxu0 0.0
  %506 = vmatprep.subr.mxu0 0.0
  %507 = vmatpush2.msra.mxu0 0.0
  %508 = vmatprep.subr.mxu0 0.0
  %509 = vmatpush2.msra.mxu0 0.0
  %510 = vmatprep.subr.mxu0 0.0
  %511 = vmatpush2.msra.mxu0 0.0
  %512 = vmatprep.subr.mxu0 0.0
  %513 = vmatpush2.msra.mxu0 0.0
  %514 = vmatprep.subr.mxu0 0.0
  %515 = vmatpush2.msra.mxu0 0.0
  %516 = vmatprep.subr.mxu0 0.0
  %517 = vmatpush2.msra.mxu0 0.0
  %518 = vmatprep.subr.mxu0 0.0
  %519 = vmatpush2.msra.mxu0 0.0
  %520 = vmatprep.subr.mxu0 0.0
  %521 = vmatpush2.msra.mxu0 0.0
  %522 = vmatprep.subr.mxu0 0.0
  %523 = vmatpush2.msra.mxu0 0.0
  %524 = vmatprep.subr.mxu0 0.0
  %525 = vmatpush2.msra.mxu0 0.0
  %526 = vmatprep.subr.mxu0 0.0
  %527 = vmatpush2.msra.mxu0 0.0
  %528 = vmatprep.subr.mxu0 0.0
  %529 = vmatpush2.msra.mxu0 0.0
  %530 = vmatprep.subr.mxu0 0.0
  %531 = vmatpush2.msra.mxu0 0.0
  %532 = vmatprep.subr.mxu0 0.0
  %533 = vmatpush2.msra.mxu0 0.0
  %534 = vmatprep.subr.mxu0 0.0
  %535 = vmatpush2.msra.mxu0 0.0
  %536 = vmatprep.mubr.f32.mxu0 0.0
  %537 = vmatmul.mubr.f32.gmra.mxu0 %v464
  %v538 = vpop.f32.mrf.mxu0
  %v539 = vadd.f32 0.0, %v538
  %v540 = vpop.f32.mrf.mxu0
  %v541 = vadd.f32 0.0, %v540
  %542 = vmatprep.mubr.f32.mxu0 0.0
  %543 = vmatmul.mubr.f32.gmra.mxu0 %v467
  %v544 = vpop.f32.mrf.mxu0
  %v545 = vadd.f32 0.0, %v544
  %v546 = vpop.f32.mrf.mxu0
  %v547 = vadd.f32 0.0, %v546
  %548 = vmatprep.mubr.f32.mxu0 0.0
  %549 = vmatmul.mubr.f32.gmra.mxu0 %v470
  %v550 = vpop.f32.mrf.mxu0
  %v551 = vadd.f32 0.0, %v550
  %v552 = vpop.f32.mrf.mxu0
  %v553 = vadd.f32 0.0, %v552
  %554 = vdwg.mxu0
  %v555 = vadd.f32 %v457, %v539
  %v556 = vadd.f32 %v458, %v541
  %v557 = vadd.f32 %v459, %v545
  %v558 = vadd.f32 %v460, %v547
  %v559 = vadd.f32 %v461, %v551
  %v560 = vadd.f32 %v462, %v553
  %v561 = vxor.u32 %v555, 2147483648
  %v562 = vxor.u32 %v556, 2147483648
  %v563 = vxor.u32 %v557, 2147483648
  %v564 = vxor.u32 %v558, 2147483648
  %v565 = vxor.u32 %v559, 2147483648
  %v566 = vxor.u32 %v560, 2147483648
  %v567 = vmul.f32 %v561, 1.442695
  %v568 = vpow.pop %v567
  %v569 = vmul.f32 %v562, 1.442695
  %v570 = vpow.pop %v569
  %v571 = vmul.f32 %v563, 1.442695
  %v572 = vpow.pop %v571
  %v573 = vmul.f32 %v564, 1.442695
  %v574 = vpow.pop %v573
  %v575 = vmul.f32 %v565, 1.442695
  %v576 = vpow.pop %v575
  %v577 = vmul.f32 %v566, 1.442695
  %v578 = vpow.pop %v577
  %v579 = vadd.f32 %v568, 1.0
  %v580 = vadd.f32 %v570, 1.0
  %v581 = vadd.f32 %v572, 1.0
  %v582 = vadd.f32 %v574, 1.0
  %v583 = vadd.f32 %v576, 1.0
  %v584 = vadd.f32 %v578, 1.0
  %v585 = vrcp.pop %v579
  %v586 = vmul.f32 1.0, %v585
  %v587 = vrcp.pop %v580
  %v588 = vmul.f32 1.0, %v587
  %v589 = vrcp.pop %v581
  %v590 = vmul.f32 1.0, %v589
  %v591 = vrcp.pop %v582
  %v592 = vmul.f32 1.0, %v591
  %v593 = vrcp.pop %v583
  %v594 = vmul.f32 1.0, %v593
  %v595 = vrcp.pop %v584
  %v596 = vmul.f32 1.0, %v595
  %v597 = vtanh.pop %v556
  %v598 = vtanh.pop %v558
  %v599 = vtanh.pop %v560
  %v600 = vmul.f32 %v586, %v417
  %v601 = vmul.f32 %v590, %v418
  %v602 = vmul.f32 %v594, %v419
  %606 = vrot.lane.b32.xlu0 %v597, 64
  %v607 = vpop.permute.xlu0 %606
  %608 = vrot.lane.b32.xlu0 %v598, 64
  %v609 = vpop.permute.xlu0 %608
  %610 = vrot.lane.b32.xlu0 %v599, 64
  %v611 = vpop.permute.xlu0 %610
  %v615 = vmul.f32 %v586, %v607
  %v616 = vmul.f32 %v590, %v609
  %v617 = vmul.f32 %v594, %v611
  %621 = vrot.lane.b32.xlu0 %v615, 64
  %v622 = vpop.permute.xlu0 %621
  %623 = vrot.lane.b32.xlu0 %v616, 64
  %v624 = vpop.permute.xlu0 %623
  %625 = vrot.lane.b32.xlu0 %v617, 64
  %v626 = vpop.permute.xlu0 %625
  %v630 = vadd.f32 %v600, %v622
  %v631 = vadd.f32 %v601, %v624
  %v632 = vadd.f32 %v602, %v626
  %v633 = vtanh.pop %v630
  %v634 = vtanh.pop %v631
  %v635 = vtanh.pop %v632
  %639 = vrot.lane.b32.xlu0 %v633, 64
  %v640 = vpop.permute.xlu0 %639
  %641 = vrot.lane.b32.xlu0 %v634, 64
  %v642 = vpop.permute.xlu0 %641
  %643 = vrot.lane.b32.xlu0 %v635, 64
  %v644 = vpop.permute.xlu0 %643
  %v648 = vmul.f32 %v588, %v640
  %v649 = vmul.f32 %v592, %v642
  %v650 = vmul.f32 %v596, %v644
  %651 = vset.pattern.permute.xlu0 2
  %652 = vperm.xlu0 %651, %v219
  %v653 = vpop.permute.xlu0 %652
  %655 = vset.pattern.permute.xlu0 2
  %656 = vperm.xlu0 %655, %v220
  %v657 = vpop.permute.xlu0 %656
  %659 = vset.pattern.permute.xlu0 2
  %660 = vperm.xlu0 %659, %v221
  %v661 = vpop.permute.xlu0 %660
  %v663 = vmul.f32 %v653, %v648
  %v664 = vmul.f32 %v657, %v649
  %v665 = vmul.f32 %v661, %v650
  %v666 = vadd.f32 %v453, %v663
  %v667 = vadd.f32 %v454, %v664
  %v668 = vadd.f32 %v455, %v665
  %s669 = scalar_lea.vmem %s0, 144
  %v670 = vld [vmem:[%s669] sm:$0xff]
  %v671 = vld [vmem:[%s669 + $0x8] sm:$0xff]
  %v672 = vld [vmem:[%s669 + $0x10] sm:$0xff]
  %v673 = vld [vmem:[%s669 + $0x18] sm:$0xff]
  %v674 = vld [vmem:[%s669 + $0x20] sm:$0xff]
  %v675 = vld [vmem:[%s669 + $0x28] sm:$0xff]
  %v677 = vsel %vm36, %v648, 0
  %v680 = vsel %vm36, %v649, 0
  %v683 = vsel %vm36, %v650, 0
  %685 = vmatprep.subr.mxu0 0.0
  %686 = vmatpush1.msra.mxu0 0.0
  %687 = vmatprep.subr.mxu0 0.0
  %688 = vmatpush1.msra.mxu0 0.0
  %689 = vmatprep.subr.mxu0 0.0
  %690 = vmatpush1.msra.mxu0 0.0
  %691 = vmatprep.subr.mxu0 0.0
  %692 = vmatpush1.msra.mxu0 0.0
  %693 = vmatprep.subr.mxu0 0.0
  %694 = vmatpush1.msra.mxu0 0.0
  %695 = vmatprep.subr.mxu0 0.0
  %696 = vmatpush1.msra.mxu0 0.0
  %697 = vmatprep.subr.mxu0 0.0
  %698 = vmatpush1.msra.mxu0 0.0
  %699 = vmatprep.subr.mxu0 0.0
  %700 = vmatpush1.msra.mxu0 0.0
  %701 = vmatprep.subr.mxu0 %v29
  %702 = vmatpush1.msra.mxu0 %v28
  %703 = vmatprep.subr.mxu0 %v27
  %704 = vmatpush1.msra.mxu0 %v26
  %705 = vmatprep.subr.mxu0 %v25
  %706 = vmatpush1.msra.mxu0 %v24
  %707 = vmatprep.subr.mxu0 %v23
  %708 = vmatpush1.msra.mxu0 %v22
  %709 = vmatprep.subr.mxu0 %v21
  %710 = vmatpush1.msra.mxu0 %v20
  %711 = vmatprep.subr.mxu0 %v19
  %712 = vmatpush1.msra.mxu0 %v18
  %713 = vmatprep.subr.mxu0 %v17
  %714 = vmatpush1.msra.mxu0 %v16
  %715 = vmatprep.subr.mxu0 %v15
  %716 = vmatpush1.msra.mxu0 %v14
  %717 = vmatprep.subr.mxu0 0.0
  %718 = vmatpush2.msra.mxu0 0.0
  %719 = vmatprep.subr.mxu0 0.0
  %720 = vmatpush2.msra.mxu0 0.0
  %721 = vmatprep.subr.mxu0 0.0
  %722 = vmatpush2.msra.mxu0 0.0
  %723 = vmatprep.subr.mxu0 0.0
  %724 = vmatpush2.msra.mxu0 0.0
  %725 = vmatprep.subr.mxu0 0.0
  %726 = vmatpush2.msra.mxu0 0.0
  %727 = vmatprep.subr.mxu0 0.0
  %728 = vmatpush2.msra.mxu0 0.0
  %729 = vmatprep.subr.mxu0 0.0
  %730 = vmatpush2.msra.mxu0 0.0
  %731 = vmatprep.subr.mxu0 0.0
  %732 = vmatpush2.msra.mxu0 0.0
  %733 = vmatprep.subr.mxu0 0.0
  %734 = vmatpush2.msra.mxu0 0.0
  %735 = vmatprep.subr.mxu0 0.0
  %736 = vmatpush2.msra.mxu0 0.0
  %737 = vmatprep.subr.mxu0 0.0
  %738 = vmatpush2.msra.mxu0 0.0
  %739 = vmatprep.subr.mxu0 0.0
  %740 = vmatpush2.msra.mxu0 0.0
  %741 = vmatprep.subr.mxu0 0.0
  %742 = vmatpush2.msra.mxu0 0.0
  %743 = vmatprep.subr.mxu0 0.0
  %744 = vmatpush2.msra.mxu0 0.0
  %745 = vmatprep.subr.mxu0 0.0
  %746 = vmatpush2.msra.mxu0 0.0
  %747 = vmatprep.subr.mxu0 0.0
  %748 = vmatpush2.msra.mxu0 0.0
  %749 = vmatprep.mubr.f32.mxu0 0.0
  %750 = vmatmul.mubr.f32.gmra.mxu0 %v677
  %v751 = vpop.f32.mrf.mxu0
  %v752 = vadd.f32 0.0, %v751
  %v753 = vpop.f32.mrf.mxu0
  %v754 = vadd.f32 0.0, %v753
  %755 = vmatprep.mubr.f32.mxu0 0.0
  %756 = vmatmul.mubr.f32.gmra.mxu0 %v680
  %v757 = vpop.f32.mrf.mxu0
  %v758 = vadd.f32 0.0, %v757
  %v759 = vpop.f32.mrf.mxu0
  %v760 = vadd.f32 0.0, %v759
  %761 = vmatprep.mubr.f32.mxu0 0.0
  %762 = vmatmul.mubr.f32.gmra.mxu0 %v683
  %v763 = vpop.f32.mrf.mxu0
  %v764 = vadd.f32 0.0, %v763
  %v765 = vpop.f32.mrf.mxu0
  %v766 = vadd.f32 0.0, %v765
  %767 = vdwg.mxu0
  %v768 = vadd.f32 %v670, %v752
  %v769 = vadd.f32 %v671, %v754
  %v770 = vadd.f32 %v672, %v758
  %v771 = vadd.f32 %v673, %v760
  %v772 = vadd.f32 %v674, %v764
  %v773 = vadd.f32 %v675, %v766
  %v774 = vxor.u32 %v768, 2147483648
  %v775 = vxor.u32 %v769, 2147483648
  %v776 = vxor.u32 %v770, 2147483648
  %v777 = vxor.u32 %v771, 2147483648
  %v778 = vxor.u32 %v772, 2147483648
  %v779 = vxor.u32 %v773, 2147483648
  %v780 = vmul.f32 %v774, 1.442695
  %v781 = vpow.pop %v780
  %v782 = vmul.f32 %v775, 1.442695
  %v783 = vpow.pop %v782
  %v784 = vmul.f32 %v776, 1.442695
  %v785 = vpow.pop %v784
  %v786 = vmul.f32 %v777, 1.442695
  %v787 = vpow.pop %v786
  %v788 = vmul.f32 %v778, 1.442695
  %v789 = vpow.pop %v788
  %v790 = vmul.f32 %v779, 1.442695
  %v791 = vpow.pop %v790
  %v792 = vadd.f32 %v781, 1.0
  %v793 = vadd.f32 %v783, 1.0
  %v794 = vadd.f32 %v785, 1.0
  %v795 = vadd.f32 %v787, 1.0
  %v796 = vadd.f32 %v789, 1.0
  %v797 = vadd.f32 %v791, 1.0
  %v798 = vrcp.pop %v792
  %v799 = vmul.f32 1.0, %v798
  %v800 = vrcp.pop %v793
  %v801 = vmul.f32 1.0, %v800
  %v802 = vrcp.pop %v794
  %v803 = vmul.f32 1.0, %v802
  %v804 = vrcp.pop %v795
  %v805 = vmul.f32 1.0, %v804
  %v806 = vrcp.pop %v796
  %v807 = vmul.f32 1.0, %v806
  %v808 = vrcp.pop %v797
  %v809 = vmul.f32 1.0, %v808
  %v810 = vtanh.pop %v769
  %v811 = vtanh.pop %v771
  %v812 = vtanh.pop %v773
  %v813 = vmul.f32 %v799, %v630
  %v814 = vmul.f32 %v803, %v631
  %v815 = vmul.f32 %v807, %v632
  %819 = vrot.lane.b32.xlu0 %v810, 64
  %v820 = vpop.permute.xlu0 %819
  %821 = vrot.lane.b32.xlu0 %v811, 64
  %v822 = vpop.permute.xlu0 %821
  %823 = vrot.lane.b32.xlu0 %v812, 64
  %v824 = vpop.permute.xlu0 %823
  %v828 = vmul.f32 %v799, %v820
  %v829 = vmul.f32 %v803, %v822
  %v830 = vmul.f32 %v807, %v824
  %834 = vrot.lane.b32.xlu0 %v828, 64
  %v835 = vpop.permute.xlu0 %834
  %836 = vrot.lane.b32.xlu0 %v829, 64
  %v837 = vpop.permute.xlu0 %836
  %838 = vrot.lane.b32.xlu0 %v830, 64
  %v839 = vpop.permute.xlu0 %838
  %v843 = vadd.f32 %v813, %v835
  %v844 = vadd.f32 %v814, %v837
  %v845 = vadd.f32 %v815, %v839
  %v846 = vtanh.pop %v843
  %v847 = vtanh.pop %v844
  %v848 = vtanh.pop %v845
  %852 = vrot.lane.b32.xlu0 %v846, 64
  %v853 = vpop.permute.xlu0 %852
  %854 = vrot.lane.b32.xlu0 %v847, 64
  %v855 = vpop.permute.xlu0 %854
  %856 = vrot.lane.b32.xlu0 %v848, 64
  %v857 = vpop.permute.xlu0 %856
  %v861 = vmul.f32 %v801, %v853
  %v862 = vmul.f32 %v805, %v855
  %v863 = vmul.f32 %v809, %v857
  %864 = vset.pattern.permute.xlu0 3
  %865 = vperm.xlu0 %864, %v219
  %v866 = vpop.permute.xlu0 %865
  %868 = vset.pattern.permute.xlu0 3
  %869 = vperm.xlu0 %868, %v220
  %v870 = vpop.permute.xlu0 %869
  %872 = vset.pattern.permute.xlu0 3
  %873 = vperm.xlu0 %872, %v221
  %v874 = vpop.permute.xlu0 %873
  %v876 = vmul.f32 %v866, %v861
  %v877 = vmul.f32 %v870, %v862
  %v878 = vmul.f32 %v874, %v863
  %v879 = vadd.f32 %v666, %v876
  %v880 = vadd.f32 %v667, %v877
  %v881 = vadd.f32 %v668, %v878
  %s882 = scalar_lea.vmem %s0, 192
  %v883 = vld [vmem:[%s882] sm:$0xff]
  %v884 = vld [vmem:[%s882 + $0x8] sm:$0xff]
  %v885 = vld [vmem:[%s882 + $0x10] sm:$0xff]
  %v886 = vld [vmem:[%s882 + $0x18] sm:$0xff]
  %v887 = vld [vmem:[%s882 + $0x20] sm:$0xff]
  %v888 = vld [vmem:[%s882 + $0x28] sm:$0xff]
  %v890 = vsel %vm36, %v861, 0
  %v893 = vsel %vm36, %v862, 0
  %v896 = vsel %vm36, %v863, 0
  %898 = vmatprep.subr.mxu0 0.0
  %899 = vmatpush1.msra.mxu0 0.0
  %900 = vmatprep.subr.mxu0 0.0
  %901 = vmatpush1.msra.mxu0 0.0
  %902 = vmatprep.subr.mxu0 0.0
  %903 = vmatpush1.msra.mxu0 0.0
  %904 = vmatprep.subr.mxu0 0.0
  %905 = vmatpush1.msra.mxu0 0.0
  %906 = vmatprep.subr.mxu0 0.0
  %907 = vmatpush1.msra.mxu0 0.0
  %908 = vmatprep.subr.mxu0 0.0
  %909 = vmatpush1.msra.mxu0 0.0
  %910 = vmatprep.subr.mxu0 0.0
  %911 = vmatpush1.msra.mxu0 0.0
  %912 = vmatprep.subr.mxu0 0.0
  %913 = vmatpush1.msra.mxu0 0.0
  %914 = vmatprep.subr.mxu0 %v29
  %915 = vmatpush1.msra.mxu0 %v28
  %916 = vmatprep.subr.mxu0 %v27
  %917 = vmatpush1.msra.mxu0 %v26
  %918 = vmatprep.subr.mxu0 %v25
  %919 = vmatpush1.msra.mxu0 %v24
  %920 = vmatprep.subr.mxu0 %v23
  %921 = vmatpush1.msra.mxu0 %v22
  %922 = vmatprep.subr.mxu0 %v21
  %923 = vmatpush1.msra.mxu0 %v20
  %924 = vmatprep.subr.mxu0 %v19
  %925 = vmatpush1.msra.mxu0 %v18
  %926 = vmatprep.subr.mxu0 %v17
  %927 = vmatpush1.msra.mxu0 %v16
  %928 = vmatprep.subr.mxu0 %v15
  %929 = vmatpush1.msra.mxu0 %v14
  %930 = vmatprep.subr.mxu0 0.0
  %931 = vmatpush2.msra.mxu0 0.0
  %932 = vmatprep.subr.mxu0 0.0
  %933 = vmatpush2.msra.mxu0 0.0
  %934 = vmatprep.subr.mxu0 0.0
  %935 = vmatpush2.msra.mxu0 0.0
  %936 = vmatprep.subr.mxu0 0.0
  %937 = vmatpush2.msra.mxu0 0.0
  %938 = vmatprep.subr.mxu0 0.0
  %939 = vmatpush2.msra.mxu0 0.0
  %940 = vmatprep.subr.mxu0 0.0
  %941 = vmatpush2.msra.mxu0 0.0
  %942 = vmatprep.subr.mxu0 0.0
  %943 = vmatpush2.msra.mxu0 0.0
  %944 = vmatprep.subr.mxu0 0.0
  %945 = vmatpush2.msra.mxu0 0.0
  %946 = vmatprep.subr.mxu0 0.0
  %947 = vmatpush2.msra.mxu0 0.0
  %948 = vmatprep.subr.mxu0 0.0
  %949 = vmatpush2.msra.mxu0 0.0
  %950 = vmatprep.subr.mxu0 0.0
  %951 = vmatpush2.msra.mxu0 0.0
  %952 = vmatprep.subr.mxu0 0.0
  %953 = vmatpush2.msra.mxu0 0.0
  %954 = vmatprep.subr.mxu0 0.0
  %955 = vmatpush2.msra.mxu0 0.0
  %956 = vmatprep.subr.mxu0 0.0
  %957 = vmatpush2.msra.mxu0 0.0
  %958 = vmatprep.subr.mxu0 0.0
  %959 = vmatpush2.msra.mxu0 0.0
  %960 = vmatprep.subr.mxu0 0.0
  %961 = vmatpush2.msra.mxu0 0.0
  %962 = vmatprep.mubr.f32.mxu0 0.0
  %963 = vmatmul.mubr.f32.gmra.mxu0 %v890
  %v964 = vpop.f32.mrf.mxu0
  %v965 = vadd.f32 0.0, %v964
  %v966 = vpop.f32.mrf.mxu0
  %v967 = vadd.f32 0.0, %v966
  %968 = vmatprep.mubr.f32.mxu0 0.0
  %969 = vmatmul.mubr.f32.gmra.mxu0 %v893
  %v970 = vpop.f32.mrf.mxu0
  %v971 = vadd.f32 0.0, %v970
  %v972 = vpop.f32.mrf.mxu0
  %v973 = vadd.f32 0.0, %v972
  %974 = vmatprep.mubr.f32.mxu0 0.0
  %975 = vmatmul.mubr.f32.gmra.mxu0 %v896
  %v976 = vpop.f32.mrf.mxu0
  %v977 = vadd.f32 0.0, %v976
  %v978 = vpop.f32.mrf.mxu0
  %v979 = vadd.f32 0.0, %v978
  %980 = vdwg.mxu0
  %v981 = vadd.f32 %v883, %v965
  %v982 = vadd.f32 %v884, %v967
  %v983 = vadd.f32 %v885, %v971
  %v984 = vadd.f32 %v886, %v973
  %v985 = vadd.f32 %v887, %v977
  %v986 = vadd.f32 %v888, %v979
  %v987 = vxor.u32 %v981, 2147483648
  %v988 = vxor.u32 %v982, 2147483648
  %v989 = vxor.u32 %v983, 2147483648
  %v990 = vxor.u32 %v984, 2147483648
  %v991 = vxor.u32 %v985, 2147483648
  %v992 = vxor.u32 %v986, 2147483648
  %v993 = vmul.f32 %v987, 1.442695
  %v994 = vpow.pop %v993
  %v995 = vmul.f32 %v988, 1.442695
  %v996 = vpow.pop %v995
  %v997 = vmul.f32 %v989, 1.442695
  %v998 = vpow.pop %v997
  %v999 = vmul.f32 %v990, 1.442695
  %v1000 = vpow.pop %v999
  %v1001 = vmul.f32 %v991, 1.442695
  %v1002 = vpow.pop %v1001
  %v1003 = vmul.f32 %v992, 1.442695
  %v1004 = vpow.pop %v1003
  %v1005 = vadd.f32 %v994, 1.0
  %v1006 = vadd.f32 %v996, 1.0
  %v1007 = vadd.f32 %v998, 1.0
  %v1008 = vadd.f32 %v1000, 1.0
  %v1009 = vadd.f32 %v1002, 1.0
  %v1010 = vadd.f32 %v1004, 1.0
  %v1011 = vrcp.pop %v1005
  %v1012 = vmul.f32 1.0, %v1011
  %v1013 = vrcp.pop %v1006
  %v1014 = vmul.f32 1.0, %v1013
  %v1015 = vrcp.pop %v1007
  %v1016 = vmul.f32 1.0, %v1015
  %v1017 = vrcp.pop %v1008
  %v1018 = vmul.f32 1.0, %v1017
  %v1019 = vrcp.pop %v1009
  %v1020 = vmul.f32 1.0, %v1019
  %v1021 = vrcp.pop %v1010
  %v1022 = vmul.f32 1.0, %v1021
  %v1023 = vtanh.pop %v982
  %v1024 = vtanh.pop %v984
  %v1025 = vtanh.pop %v986
  %v1026 = vmul.f32 %v1012, %v843
  %v1027 = vmul.f32 %v1016, %v844
  %v1028 = vmul.f32 %v1020, %v845
  %1032 = vrot.lane.b32.xlu0 %v1023, 64
  %v1033 = vpop.permute.xlu0 %1032
  %1034 = vrot.lane.b32.xlu0 %v1024, 64
  %v1035 = vpop.permute.xlu0 %1034
  %1036 = vrot.lane.b32.xlu0 %v1025, 64
  %v1037 = vpop.permute.xlu0 %1036
  %v1041 = vmul.f32 %v1012, %v1033
  %v1042 = vmul.f32 %v1016, %v1035
  %v1043 = vmul.f32 %v1020, %v1037
  %1047 = vrot.lane.b32.xlu0 %v1041, 64
  %v1048 = vpop.permute.xlu0 %1047
  %1049 = vrot.lane.b32.xlu0 %v1042, 64
  %v1050 = vpop.permute.xlu0 %1049
  %1051 = vrot.lane.b32.xlu0 %v1043, 64
  %v1052 = vpop.permute.xlu0 %1051
  %v1056 = vadd.f32 %v1026, %v1048
  %v1057 = vadd.f32 %v1027, %v1050
  %v1058 = vadd.f32 %v1028, %v1052
  %v1059 = vtanh.pop %v1056
  %v1060 = vtanh.pop %v1057
  %v1061 = vtanh.pop %v1058
  %1065 = vrot.lane.b32.xlu0 %v1059, 64
  %v1066 = vpop.permute.xlu0 %1065
  %1067 = vrot.lane.b32.xlu0 %v1060, 64
  %v1068 = vpop.permute.xlu0 %1067
  %1069 = vrot.lane.b32.xlu0 %v1061, 64
  %v1070 = vpop.permute.xlu0 %1069
  %v1074 = vmul.f32 %v1014, %v1066
  %v1075 = vmul.f32 %v1018, %v1068
  %v1076 = vmul.f32 %v1022, %v1070
  %1077 = vset.pattern.permute.xlu0 4
  %1078 = vperm.xlu0 %1077, %v219
  %v1079 = vpop.permute.xlu0 %1078
  %1081 = vset.pattern.permute.xlu0 4
  %1082 = vperm.xlu0 %1081, %v220
  %v1083 = vpop.permute.xlu0 %1082
  %1085 = vset.pattern.permute.xlu0 4
  %1086 = vperm.xlu0 %1085, %v221
  %v1087 = vpop.permute.xlu0 %1086
  %v1089 = vmul.f32 %v1079, %v1074
  %v1090 = vmul.f32 %v1083, %v1075
  %v1091 = vmul.f32 %v1087, %v1076
  %v1092 = vadd.f32 %v879, %v1089
  %v1093 = vadd.f32 %v880, %v1090
  %v1094 = vadd.f32 %v881, %v1091
  %s1095 = scalar_lea.vmem %s0, 240
  %v1096 = vld [vmem:[%s1095] sm:$0xff]
  %v1097 = vld [vmem:[%s1095 + $0x8] sm:$0xff]
  %v1098 = vld [vmem:[%s1095 + $0x10] sm:$0xff]
  %v1099 = vld [vmem:[%s1095 + $0x18] sm:$0xff]
  %v1100 = vld [vmem:[%s1095 + $0x20] sm:$0xff]
  %v1101 = vld [vmem:[%s1095 + $0x28] sm:$0xff]
  %v1103 = vsel %vm36, %v1074, 0
  %v1106 = vsel %vm36, %v1075, 0
  %v1109 = vsel %vm36, %v1076, 0
  %1111 = vmatprep.subr.mxu0 0.0
  %1112 = vmatpush1.msra.mxu0 0.0
  %1113 = vmatprep.subr.mxu0 0.0
  %1114 = vmatpush1.msra.mxu0 0.0
  %1115 = vmatprep.subr.mxu0 0.0
  %1116 = vmatpush1.msra.mxu0 0.0
  %1117 = vmatprep.subr.mxu0 0.0
  %1118 = vmatpush1.msra.mxu0 0.0
  %1119 = vmatprep.subr.mxu0 0.0
  %1120 = vmatpush1.msra.mxu0 0.0
  %1121 = vmatprep.subr.mxu0 0.0
  %1122 = vmatpush1.msra.mxu0 0.0
  %1123 = vmatprep.subr.mxu0 0.0
  %1124 = vmatpush1.msra.mxu0 0.0
  %1125 = vmatprep.subr.mxu0 0.0
  %1126 = vmatpush1.msra.mxu0 0.0
  %1127 = vmatprep.subr.mxu0 %v29
  %1128 = vmatpush1.msra.mxu0 %v28
  %1129 = vmatprep.subr.mxu0 %v27
  %1130 = vmatpush1.msra.mxu0 %v26
  %1131 = vmatprep.subr.mxu0 %v25
  %1132 = vmatpush1.msra.mxu0 %v24
  %1133 = vmatprep.subr.mxu0 %v23
  %1134 = vmatpush1.msra.mxu0 %v22
  %1135 = vmatprep.subr.mxu0 %v21
  %1136 = vmatpush1.msra.mxu0 %v20
  %1137 = vmatprep.subr.mxu0 %v19
  %1138 = vmatpush1.msra.mxu0 %v18
  %1139 = vmatprep.subr.mxu0 %v17
  %1140 = vmatpush1.msra.mxu0 %v16
  %1141 = vmatprep.subr.mxu0 %v15
  %1142 = vmatpush1.msra.mxu0 %v14
  %1143 = vmatprep.subr.mxu0 0.0
  %1144 = vmatpush2.msra.mxu0 0.0
  %1145 = vmatprep.subr.mxu0 0.0
  %1146 = vmatpush2.msra.mxu0 0.0
  %1147 = vmatprep.subr.mxu0 0.0
  %1148 = vmatpush2.msra.mxu0 0.0
  %1149 = vmatprep.subr.mxu0 0.0
  %1150 = vmatpush2.msra.mxu0 0.0
  %1151 = vmatprep.subr.mxu0 0.0
  %1152 = vmatpush2.msra.mxu0 0.0
  %1153 = vmatprep.subr.mxu0 0.0
  %1154 = vmatpush2.msra.mxu0 0.0
  %1155 = vmatprep.subr.mxu0 0.0
  %1156 = vmatpush2.msra.mxu0 0.0
  %1157 = vmatprep.subr.mxu0 0.0
  %1158 = vmatpush2.msra.mxu0 0.0
  %1159 = vmatprep.subr.mxu0 0.0
  %1160 = vmatpush2.msra.mxu0 0.0
  %1161 = vmatprep.subr.mxu0 0.0
  %1162 = vmatpush2.msra.mxu0 0.0
  %1163 = vmatprep.subr.mxu0 0.0
  %1164 = vmatpush2.msra.mxu0 0.0
  %1165 = vmatprep.subr.mxu0 0.0
  %1166 = vmatpush2.msra.mxu0 0.0
  %1167 = vmatprep.subr.mxu0 0.0
  %1168 = vmatpush2.msra.mxu0 0.0
  %1169 = vmatprep.subr.mxu0 0.0
  %1170 = vmatpush2.msra.mxu0 0.0
  %1171 = vmatprep.subr.mxu0 0.0
  %1172 = vmatpush2.msra.mxu0 0.0
  %1173 = vmatprep.subr.mxu0 0.0
  %1174 = vmatpush2.msra.mxu0 0.0
  %1175 = vmatprep.mubr.f32.mxu0 0.0
  %1176 = vmatmul.mubr.f32.gmra.mxu0 %v1103
  %v1177 = vpop.f32.mrf.mxu0
  %v1178 = vadd.f32 0.0, %v1177
  %v1179 = vpop.f32.mrf.mxu0
  %v1180 = vadd.f32 0.0, %v1179
  %1181 = vmatprep.mubr.f32.mxu0 0.0
  %1182 = vmatmul.mubr.f32.gmra.mxu0 %v1106
  %v1183 = vpop.f32.mrf.mxu0
  %v1184 = vadd.f32 0.0, %v1183
  %v1185 = vpop.f32.mrf.mxu0
  %v1186 = vadd.f32 0.0, %v1185
  %1187 = vmatprep.mubr.f32.mxu0 0.0
  %1188 = vmatmul.mubr.f32.gmra.mxu0 %v1109
  %v1189 = vpop.f32.mrf.mxu0
  %v1190 = vadd.f32 0.0, %v1189
  %v1191 = vpop.f32.mrf.mxu0
  %v1192 = vadd.f32 0.0, %v1191
  %1193 = vdwg.mxu0
  %v1194 = vadd.f32 %v1096, %v1178
  %v1195 = vadd.f32 %v1097, %v1180
  %v1196 = vadd.f32 %v1098, %v1184
  %v1197 = vadd.f32 %v1099, %v1186
  %v1198 = vadd.f32 %v1100, %v1190
  %v1199 = vadd.f32 %v1101, %v1192
  %v1200 = vxor.u32 %v1194, 2147483648
  %v1201 = vxor.u32 %v1195, 2147483648
  %v1202 = vxor.u32 %v1196, 2147483648
  %v1203 = vxor.u32 %v1197, 2147483648
  %v1204 = vxor.u32 %v1198, 2147483648
  %v1205 = vxor.u32 %v1199, 2147483648
  %v1206 = vmul.f32 %v1200, 1.442695
  %v1207 = vpow.pop %v1206
  %v1208 = vmul.f32 %v1201, 1.442695
  %v1209 = vpow.pop %v1208
  %v1210 = vmul.f32 %v1202, 1.442695
  %v1211 = vpow.pop %v1210
  %v1212 = vmul.f32 %v1203, 1.442695
  %v1213 = vpow.pop %v1212
  %v1214 = vmul.f32 %v1204, 1.442695
  %v1215 = vpow.pop %v1214
  %v1216 = vmul.f32 %v1205, 1.442695
  %v1217 = vpow.pop %v1216
  %v1218 = vadd.f32 %v1207, 1.0
  %v1219 = vadd.f32 %v1209, 1.0
  %v1220 = vadd.f32 %v1211, 1.0
  %v1221 = vadd.f32 %v1213, 1.0
  %v1222 = vadd.f32 %v1215, 1.0
  %v1223 = vadd.f32 %v1217, 1.0
  %v1224 = vrcp.pop %v1218
  %v1225 = vmul.f32 1.0, %v1224
  %v1226 = vrcp.pop %v1219
  %v1227 = vmul.f32 1.0, %v1226
  %v1228 = vrcp.pop %v1220
  %v1229 = vmul.f32 1.0, %v1228
  %v1230 = vrcp.pop %v1221
  %v1231 = vmul.f32 1.0, %v1230
  %v1232 = vrcp.pop %v1222
  %v1233 = vmul.f32 1.0, %v1232
  %v1234 = vrcp.pop %v1223
  %v1235 = vmul.f32 1.0, %v1234
  %v1236 = vtanh.pop %v1195
  %v1237 = vtanh.pop %v1197
  %v1238 = vtanh.pop %v1199
  %v1239 = vmul.f32 %v1225, %v1056
  %v1240 = vmul.f32 %v1229, %v1057
  %v1241 = vmul.f32 %v1233, %v1058
  %1245 = vrot.lane.b32.xlu0 %v1236, 64
  %v1246 = vpop.permute.xlu0 %1245
  %1247 = vrot.lane.b32.xlu0 %v1237, 64
  %v1248 = vpop.permute.xlu0 %1247
  %1249 = vrot.lane.b32.xlu0 %v1238, 64
  %v1250 = vpop.permute.xlu0 %1249
  %v1254 = vmul.f32 %v1225, %v1246
  %v1255 = vmul.f32 %v1229, %v1248
  %v1256 = vmul.f32 %v1233, %v1250
  %1260 = vrot.lane.b32.xlu0 %v1254, 64
  %v1261 = vpop.permute.xlu0 %1260
  %1262 = vrot.lane.b32.xlu0 %v1255, 64
  %v1263 = vpop.permute.xlu0 %1262
  %1264 = vrot.lane.b32.xlu0 %v1256, 64
  %v1265 = vpop.permute.xlu0 %1264
  %v1269 = vadd.f32 %v1239, %v1261
  %v1270 = vadd.f32 %v1240, %v1263
  %v1271 = vadd.f32 %v1241, %v1265
  %v1272 = vtanh.pop %v1269
  %v1273 = vtanh.pop %v1270
  %v1274 = vtanh.pop %v1271
  %1278 = vrot.lane.b32.xlu0 %v1272, 64
  %v1279 = vpop.permute.xlu0 %1278
  %1280 = vrot.lane.b32.xlu0 %v1273, 64
  %v1281 = vpop.permute.xlu0 %1280
  %1282 = vrot.lane.b32.xlu0 %v1274, 64
  %v1283 = vpop.permute.xlu0 %1282
  %v1287 = vmul.f32 %v1227, %v1279
  %v1288 = vmul.f32 %v1231, %v1281
  %v1289 = vmul.f32 %v1235, %v1283
  %1290 = vset.pattern.permute.xlu0 5
  %1291 = vperm.xlu0 %1290, %v219
  %v1292 = vpop.permute.xlu0 %1291
  %1294 = vset.pattern.permute.xlu0 5
  %1295 = vperm.xlu0 %1294, %v220
  %v1296 = vpop.permute.xlu0 %1295
  %1298 = vset.pattern.permute.xlu0 5
  %1299 = vperm.xlu0 %1298, %v221
  %v1300 = vpop.permute.xlu0 %1299
  %v1302 = vmul.f32 %v1292, %v1287
  %v1303 = vmul.f32 %v1296, %v1288
  %v1304 = vmul.f32 %v1300, %v1289
  %v1305 = vadd.f32 %v1092, %v1302
  %v1306 = vadd.f32 %v1093, %v1303
  %v1307 = vadd.f32 %v1094, %v1304
  %s1308 = scalar_lea.vmem %s0, 288
  %v1309 = vld [vmem:[%s1308] sm:$0xff]
  %v1310 = vld [vmem:[%s1308 + $0x8] sm:$0xff]
  %v1311 = vld [vmem:[%s1308 + $0x10] sm:$0xff]
  %v1312 = vld [vmem:[%s1308 + $0x18] sm:$0xff]
  %v1313 = vld [vmem:[%s1308 + $0x20] sm:$0xff]
  %v1314 = vld [vmem:[%s1308 + $0x28] sm:$0xff]
  %v1316 = vsel %vm36, %v1287, 0
  %v1319 = vsel %vm36, %v1288, 0
  %v1322 = vsel %vm36, %v1289, 0
  %1324 = vmatprep.subr.mxu0 0.0
  %1325 = vmatpush1.msra.mxu0 0.0
  %1326 = vmatprep.subr.mxu0 0.0
  %1327 = vmatpush1.msra.mxu0 0.0
  %1328 = vmatprep.subr.mxu0 0.0
  %1329 = vmatpush1.msra.mxu0 0.0
  %1330 = vmatprep.subr.mxu0 0.0
  %1331 = vmatpush1.msra.mxu0 0.0
  %1332 = vmatprep.subr.mxu0 0.0
  %1333 = vmatpush1.msra.mxu0 0.0
  %1334 = vmatprep.subr.mxu0 0.0
  %1335 = vmatpush1.msra.mxu0 0.0
  %1336 = vmatprep.subr.mxu0 0.0
  %1337 = vmatpush1.msra.mxu0 0.0
  %1338 = vmatprep.subr.mxu0 0.0
  %1339 = vmatpush1.msra.mxu0 0.0
  %1340 = vmatprep.subr.mxu0 %v29
  %1341 = vmatpush1.msra.mxu0 %v28
  %1342 = vmatprep.subr.mxu0 %v27
  %1343 = vmatpush1.msra.mxu0 %v26
  %1344 = vmatprep.subr.mxu0 %v25
  %1345 = vmatpush1.msra.mxu0 %v24
  %1346 = vmatprep.subr.mxu0 %v23
  %1347 = vmatpush1.msra.mxu0 %v22
  %1348 = vmatprep.subr.mxu0 %v21
  %1349 = vmatpush1.msra.mxu0 %v20
  %1350 = vmatprep.subr.mxu0 %v19
  %1351 = vmatpush1.msra.mxu0 %v18
  %1352 = vmatprep.subr.mxu0 %v17
  %1353 = vmatpush1.msra.mxu0 %v16
  %1354 = vmatprep.subr.mxu0 %v15
  %1355 = vmatpush1.msra.mxu0 %v14
  %1356 = vmatprep.subr.mxu0 0.0
  %1357 = vmatpush2.msra.mxu0 0.0
  %1358 = vmatprep.subr.mxu0 0.0
  %1359 = vmatpush2.msra.mxu0 0.0
  %1360 = vmatprep.subr.mxu0 0.0
  %1361 = vmatpush2.msra.mxu0 0.0
  %1362 = vmatprep.subr.mxu0 0.0
  %1363 = vmatpush2.msra.mxu0 0.0
  %1364 = vmatprep.subr.mxu0 0.0
  %1365 = vmatpush2.msra.mxu0 0.0
  %1366 = vmatprep.subr.mxu0 0.0
  %1367 = vmatpush2.msra.mxu0 0.0
  %1368 = vmatprep.subr.mxu0 0.0
  %1369 = vmatpush2.msra.mxu0 0.0
  %1370 = vmatprep.subr.mxu0 0.0
  %1371 = vmatpush2.msra.mxu0 0.0
  %1372 = vmatprep.subr.mxu0 0.0
  %1373 = vmatpush2.msra.mxu0 0.0
  %1374 = vmatprep.subr.mxu0 0.0
  %1375 = vmatpush2.msra.mxu0 0.0
  %1376 = vmatprep.subr.mxu0 0.0
  %1377 = vmatpush2.msra.mxu0 0.0
  %1378 = vmatprep.subr.mxu0 0.0
  %1379 = vmatpush2.msra.mxu0 0.0
  %1380 = vmatprep.subr.mxu0 0.0
  %1381 = vmatpush2.msra.mxu0 0.0
  %1382 = vmatprep.subr.mxu0 0.0
  %1383 = vmatpush2.msra.mxu0 0.0
  %1384 = vmatprep.subr.mxu0 0.0
  %1385 = vmatpush2.msra.mxu0 0.0
  %1386 = vmatprep.subr.mxu0 0.0
  %1387 = vmatpush2.msra.mxu0 0.0
  %1388 = vmatprep.mubr.f32.mxu0 0.0
  %1389 = vmatmul.mubr.f32.gmra.mxu0 %v1316
  %v1390 = vpop.f32.mrf.mxu0
  %v1391 = vadd.f32 0.0, %v1390
  %v1392 = vpop.f32.mrf.mxu0
  %v1393 = vadd.f32 0.0, %v1392
  %1394 = vmatprep.mubr.f32.mxu0 0.0
  %1395 = vmatmul.mubr.f32.gmra.mxu0 %v1319
  %v1396 = vpop.f32.mrf.mxu0
  %v1397 = vadd.f32 0.0, %v1396
  %v1398 = vpop.f32.mrf.mxu0
  %v1399 = vadd.f32 0.0, %v1398
  %1400 = vmatprep.mubr.f32.mxu0 0.0
  %1401 = vmatmul.mubr.f32.gmra.mxu0 %v1322
  %v1402 = vpop.f32.mrf.mxu0
  %v1403 = vadd.f32 0.0, %v1402
  %v1404 = vpop.f32.mrf.mxu0
  %v1405 = vadd.f32 0.0, %v1404
  %1406 = vdwg.mxu0
  %v1407 = vadd.f32 %v1309, %v1391
  %v1408 = vadd.f32 %v1310, %v1393
  %v1409 = vadd.f32 %v1311, %v1397
  %v1410 = vadd.f32 %v1312, %v1399
  %v1411 = vadd.f32 %v1313, %v1403
  %v1412 = vadd.f32 %v1314, %v1405
  %v1413 = vxor.u32 %v1407, 2147483648
  %v1414 = vxor.u32 %v1408, 2147483648
  %v1415 = vxor.u32 %v1409, 2147483648
  %v1416 = vxor.u32 %v1410, 2147483648
  %v1417 = vxor.u32 %v1411, 2147483648
  %v1418 = vxor.u32 %v1412, 2147483648
  %v1419 = vmul.f32 %v1413, 1.442695
  %v1420 = vpow.pop %v1419
  %v1421 = vmul.f32 %v1414, 1.442695
  %v1422 = vpow.pop %v1421
  %v1423 = vmul.f32 %v1415, 1.442695
  %v1424 = vpow.pop %v1423
  %v1425 = vmul.f32 %v1416, 1.442695
  %v1426 = vpow.pop %v1425
  %v1427 = vmul.f32 %v1417, 1.442695
  %v1428 = vpow.pop %v1427
  %v1429 = vmul.f32 %v1418, 1.442695
  %v1430 = vpow.pop %v1429
  %v1431 = vadd.f32 %v1420, 1.0
  %v1432 = vadd.f32 %v1422, 1.0
  %v1433 = vadd.f32 %v1424, 1.0
  %v1434 = vadd.f32 %v1426, 1.0
  %v1435 = vadd.f32 %v1428, 1.0
  %v1436 = vadd.f32 %v1430, 1.0
  %v1437 = vrcp.pop %v1431
  %v1438 = vmul.f32 1.0, %v1437
  %v1439 = vrcp.pop %v1432
  %v1440 = vmul.f32 1.0, %v1439
  %v1441 = vrcp.pop %v1433
  %v1442 = vmul.f32 1.0, %v1441
  %v1443 = vrcp.pop %v1434
  %v1444 = vmul.f32 1.0, %v1443
  %v1445 = vrcp.pop %v1435
  %v1446 = vmul.f32 1.0, %v1445
  %v1447 = vrcp.pop %v1436
  %v1448 = vmul.f32 1.0, %v1447
  %v1449 = vtanh.pop %v1408
  %v1450 = vtanh.pop %v1410
  %v1451 = vtanh.pop %v1412
  %v1452 = vmul.f32 %v1438, %v1269
  %v1453 = vmul.f32 %v1442, %v1270
  %v1454 = vmul.f32 %v1446, %v1271
  %1458 = vrot.lane.b32.xlu0 %v1449, 64
  %v1459 = vpop.permute.xlu0 %1458
  %1460 = vrot.lane.b32.xlu0 %v1450, 64
  %v1461 = vpop.permute.xlu0 %1460
  %1462 = vrot.lane.b32.xlu0 %v1451, 64
  %v1463 = vpop.permute.xlu0 %1462
  %v1467 = vmul.f32 %v1438, %v1459
  %v1468 = vmul.f32 %v1442, %v1461
  %v1469 = vmul.f32 %v1446, %v1463
  %1473 = vrot.lane.b32.xlu0 %v1467, 64
  %v1474 = vpop.permute.xlu0 %1473
  %1475 = vrot.lane.b32.xlu0 %v1468, 64
  %v1476 = vpop.permute.xlu0 %1475
  %1477 = vrot.lane.b32.xlu0 %v1469, 64
  %v1478 = vpop.permute.xlu0 %1477
  %v1482 = vadd.f32 %v1452, %v1474
  %v1483 = vadd.f32 %v1453, %v1476
  %v1484 = vadd.f32 %v1454, %v1478
  %v1485 = vtanh.pop %v1482
  %v1486 = vtanh.pop %v1483
  %v1487 = vtanh.pop %v1484
  %1491 = vrot.lane.b32.xlu0 %v1485, 64
  %v1492 = vpop.permute.xlu0 %1491
  %1493 = vrot.lane.b32.xlu0 %v1486, 64
  %v1494 = vpop.permute.xlu0 %1493
  %1495 = vrot.lane.b32.xlu0 %v1487, 64
  %v1496 = vpop.permute.xlu0 %1495
  %v1500 = vmul.f32 %v1440, %v1492
  %v1501 = vmul.f32 %v1444, %v1494
  %v1502 = vmul.f32 %v1448, %v1496
  %1503 = vset.pattern.permute.xlu0 6
  %1504 = vperm.xlu0 %1503, %v219
  %v1505 = vpop.permute.xlu0 %1504
  %1507 = vset.pattern.permute.xlu0 6
  %1508 = vperm.xlu0 %1507, %v220
  %v1509 = vpop.permute.xlu0 %1508
  %1511 = vset.pattern.permute.xlu0 6
  %1512 = vperm.xlu0 %1511, %v221
  %v1513 = vpop.permute.xlu0 %1512
  %v1515 = vmul.f32 %v1505, %v1500
  %v1516 = vmul.f32 %v1509, %v1501
  %v1517 = vmul.f32 %v1513, %v1502
  %v1518 = vadd.f32 %v1305, %v1515
  %v1519 = vadd.f32 %v1306, %v1516
  %v1520 = vadd.f32 %v1307, %v1517
  %s1521 = scalar_lea.vmem %s0, 336
  %v1522 = vld [vmem:[%s1521] sm:$0xff]
  %v1523 = vld [vmem:[%s1521 + $0x8] sm:$0xff]
  %v1524 = vld [vmem:[%s1521 + $0x10] sm:$0xff]
  %v1525 = vld [vmem:[%s1521 + $0x18] sm:$0xff]
  %v1526 = vld [vmem:[%s1521 + $0x20] sm:$0xff]
  %v1527 = vld [vmem:[%s1521 + $0x28] sm:$0xff]
  %v1529 = vsel %vm36, %v1500, 0
  %v1532 = vsel %vm36, %v1501, 0
  %v1535 = vsel %vm36, %v1502, 0
  %1537 = vmatprep.subr.mxu0 0.0
  %1538 = vmatpush1.msra.mxu0 0.0
  %1539 = vmatprep.subr.mxu0 0.0
  %1540 = vmatpush1.msra.mxu0 0.0
  %1541 = vmatprep.subr.mxu0 0.0
  %1542 = vmatpush1.msra.mxu0 0.0
  %1543 = vmatprep.subr.mxu0 0.0
  %1544 = vmatpush1.msra.mxu0 0.0
  %1545 = vmatprep.subr.mxu0 0.0
  %1546 = vmatpush1.msra.mxu0 0.0
  %1547 = vmatprep.subr.mxu0 0.0
  %1548 = vmatpush1.msra.mxu0 0.0
  %1549 = vmatprep.subr.mxu0 0.0
  %1550 = vmatpush1.msra.mxu0 0.0
  %1551 = vmatprep.subr.mxu0 0.0
  %1552 = vmatpush1.msra.mxu0 0.0
  %1553 = vmatprep.subr.mxu0 %v29
  %1554 = vmatpush1.msra.mxu0 %v28
  %1555 = vmatprep.subr.mxu0 %v27
  %1556 = vmatpush1.msra.mxu0 %v26
  %1557 = vmatprep.subr.mxu0 %v25
  %1558 = vmatpush1.msra.mxu0 %v24
  %1559 = vmatprep.subr.mxu0 %v23
  %1560 = vmatpush1.msra.mxu0 %v22
  %1561 = vmatprep.subr.mxu0 %v21
  %1562 = vmatpush1.msra.mxu0 %v20
  %1563 = vmatprep.subr.mxu0 %v19
  %1564 = vmatpush1.msra.mxu0 %v18
  %1565 = vmatprep.subr.mxu0 %v17
  %1566 = vmatpush1.msra.mxu0 %v16
  %1567 = vmatprep.subr.mxu0 %v15
  %1568 = vmatpush1.msra.mxu0 %v14
  %1569 = vmatprep.subr.mxu0 0.0
  %1570 = vmatpush2.msra.mxu0 0.0
  %1571 = vmatprep.subr.mxu0 0.0
  %1572 = vmatpush2.msra.mxu0 0.0
  %1573 = vmatprep.subr.mxu0 0.0
  %1574 = vmatpush2.msra.mxu0 0.0
  %1575 = vmatprep.subr.mxu0 0.0
  %1576 = vmatpush2.msra.mxu0 0.0
  %1577 = vmatprep.subr.mxu0 0.0
  %1578 = vmatpush2.msra.mxu0 0.0
  %1579 = vmatprep.subr.mxu0 0.0
  %1580 = vmatpush2.msra.mxu0 0.0
  %1581 = vmatprep.subr.mxu0 0.0
  %1582 = vmatpush2.msra.mxu0 0.0
  %1583 = vmatprep.subr.mxu0 0.0
  %1584 = vmatpush2.msra.mxu0 0.0
  %1585 = vmatprep.subr.mxu0 0.0
  %1586 = vmatpush2.msra.mxu0 0.0
  %1587 = vmatprep.subr.mxu0 0.0
  %1588 = vmatpush2.msra.mxu0 0.0
  %1589 = vmatprep.subr.mxu0 0.0
  %1590 = vmatpush2.msra.mxu0 0.0
  %1591 = vmatprep.subr.mxu0 0.0
  %1592 = vmatpush2.msra.mxu0 0.0
  %1593 = vmatprep.subr.mxu0 0.0
  %1594 = vmatpush2.msra.mxu0 0.0
  %1595 = vmatprep.subr.mxu0 0.0
  %1596 = vmatpush2.msra.mxu0 0.0
  %1597 = vmatprep.subr.mxu0 0.0
  %1598 = vmatpush2.msra.mxu0 0.0
  %1599 = vmatprep.subr.mxu0 0.0
  %1600 = vmatpush2.msra.mxu0 0.0
  %1601 = vmatprep.mubr.f32.mxu0 0.0
  %1602 = vmatmul.mubr.f32.gmra.mxu0 %v1529
  %v1603 = vpop.f32.mrf.mxu0
  %v1604 = vadd.f32 0.0, %v1603
  %v1605 = vpop.f32.mrf.mxu0
  %v1606 = vadd.f32 0.0, %v1605
  %1607 = vmatprep.mubr.f32.mxu0 0.0
  %1608 = vmatmul.mubr.f32.gmra.mxu0 %v1532
  %v1609 = vpop.f32.mrf.mxu0
  %v1610 = vadd.f32 0.0, %v1609
  %v1611 = vpop.f32.mrf.mxu0
  %v1612 = vadd.f32 0.0, %v1611
  %1613 = vmatprep.mubr.f32.mxu0 0.0
  %1614 = vmatmul.mubr.f32.gmra.mxu0 %v1535
  %v1615 = vpop.f32.mrf.mxu0
  %v1616 = vadd.f32 0.0, %v1615
  %v1617 = vpop.f32.mrf.mxu0
  %v1618 = vadd.f32 0.0, %v1617
  %1619 = vdwg.mxu0
  %v1620 = vadd.f32 %v1522, %v1604
  %v1621 = vadd.f32 %v1523, %v1606
  %v1622 = vadd.f32 %v1524, %v1610
  %v1623 = vadd.f32 %v1525, %v1612
  %v1624 = vadd.f32 %v1526, %v1616
  %v1625 = vadd.f32 %v1527, %v1618
  %v1626 = vxor.u32 %v1620, 2147483648
  %v1627 = vxor.u32 %v1621, 2147483648
  %v1628 = vxor.u32 %v1622, 2147483648
  %v1629 = vxor.u32 %v1623, 2147483648
  %v1630 = vxor.u32 %v1624, 2147483648
  %v1631 = vxor.u32 %v1625, 2147483648
  %v1632 = vmul.f32 %v1626, 1.442695
  %v1633 = vpow.pop %v1632
  %v1634 = vmul.f32 %v1627, 1.442695
  %v1635 = vpow.pop %v1634
  %v1636 = vmul.f32 %v1628, 1.442695
  %v1637 = vpow.pop %v1636
  %v1638 = vmul.f32 %v1629, 1.442695
  %v1639 = vpow.pop %v1638
  %v1640 = vmul.f32 %v1630, 1.442695
  %v1641 = vpow.pop %v1640
  %v1642 = vmul.f32 %v1631, 1.442695
  %v1643 = vpow.pop %v1642
  %v1644 = vadd.f32 %v1633, 1.0
  %v1645 = vadd.f32 %v1635, 1.0
  %v1646 = vadd.f32 %v1637, 1.0
  %v1647 = vadd.f32 %v1639, 1.0
  %v1648 = vadd.f32 %v1641, 1.0
  %v1649 = vadd.f32 %v1643, 1.0
  %v1650 = vrcp.pop %v1644
  %v1651 = vmul.f32 1.0, %v1650
  %v1652 = vrcp.pop %v1645
  %v1653 = vmul.f32 1.0, %v1652
  %v1654 = vrcp.pop %v1646
  %v1655 = vmul.f32 1.0, %v1654
  %v1656 = vrcp.pop %v1647
  %v1657 = vmul.f32 1.0, %v1656
  %v1658 = vrcp.pop %v1648
  %v1659 = vmul.f32 1.0, %v1658
  %v1660 = vrcp.pop %v1649
  %v1661 = vmul.f32 1.0, %v1660
  %v1662 = vtanh.pop %v1621
  %v1663 = vtanh.pop %v1623
  %v1664 = vtanh.pop %v1625
  %v1665 = vmul.f32 %v1651, %v1482
  %v1666 = vmul.f32 %v1655, %v1483
  %v1667 = vmul.f32 %v1659, %v1484
  %1671 = vrot.lane.b32.xlu0 %v1662, 64
  %v1672 = vpop.permute.xlu0 %1671
  %1673 = vrot.lane.b32.xlu0 %v1663, 64
  %v1674 = vpop.permute.xlu0 %1673
  %1675 = vrot.lane.b32.xlu0 %v1664, 64
  %v1676 = vpop.permute.xlu0 %1675
  %v1680 = vmul.f32 %v1651, %v1672
  %v1681 = vmul.f32 %v1655, %v1674
  %v1682 = vmul.f32 %v1659, %v1676
  %1686 = vrot.lane.b32.xlu0 %v1680, 64
  %v1687 = vpop.permute.xlu0 %1686
  %1688 = vrot.lane.b32.xlu0 %v1681, 64
  %v1689 = vpop.permute.xlu0 %1688
  %1690 = vrot.lane.b32.xlu0 %v1682, 64
  %v1691 = vpop.permute.xlu0 %1690
  %v1695 = vadd.f32 %v1665, %v1687
  %v1696 = vadd.f32 %v1666, %v1689
  %v1697 = vadd.f32 %v1667, %v1691
  %v1698 = vtanh.pop %v1695
  %v1699 = vtanh.pop %v1696
  %v1700 = vtanh.pop %v1697
  %1704 = vrot.lane.b32.xlu0 %v1698, 64
  %v1705 = vpop.permute.xlu0 %1704
  %1706 = vrot.lane.b32.xlu0 %v1699, 64
  %v1707 = vpop.permute.xlu0 %1706
  %1708 = vrot.lane.b32.xlu0 %v1700, 64
  %v1709 = vpop.permute.xlu0 %1708
  %v1713 = vmul.f32 %v1653, %v1705
  %v1714 = vmul.f32 %v1657, %v1707
  %v1715 = vmul.f32 %v1661, %v1709
  %1716 = vset.pattern.permute.xlu0 7
  %1717 = vperm.xlu0 %1716, %v219
  %v1718 = vpop.permute.xlu0 %1717
  %1720 = vset.pattern.permute.xlu0 7
  %1721 = vperm.xlu0 %1720, %v220
  %v1722 = vpop.permute.xlu0 %1721
  %1724 = vset.pattern.permute.xlu0 7
  %1725 = vperm.xlu0 %1724, %v221
  %v1726 = vpop.permute.xlu0 %1725
  %v1728 = vmul.f32 %v1718, %v1713
  %v1729 = vmul.f32 %v1722, %v1714
  %v1730 = vmul.f32 %v1726, %v1715
  %v1731 = vadd.f32 %v1518, %v1728
  %v1732 = vadd.f32 %v1519, %v1729
  %v1733 = vadd.f32 %v1520, %v1730
  %v1734 = vsel %vm36, %v1731, 0.0
  %v1735 = vsel %vm36, %v1732, 0.0
  %v1736 = vadd.f32 %v1734, %v1735
  %v1737 = vsel %vm36, %v1733, 0.0
  %v1738 = vadd.f32 %v1736, %v1737
  %v1739 = vrot.slane %v1738, 4
  %v1740 = vadd.f32 %v1738, %v1739
  %v1741 = vrot.slane %v1740, 2
  %v1742 = vadd.f32 %v1740, %v1741
  %v1743 = vrot.slane %v1742, 1
  %v1744 = vadd.f32 %v1742, %v1743
  %v1745 = vrcp.pop 24.0
  %v1746 = vmul.f32 %v1744, %v1745
  %v1747 = vsub.f32 %v1731, %v1746
  %v1748 = vsub.f32 %v1732, %v1746
  %v1749 = vsub.f32 %v1733, %v1746
  %v1750 = vmul.f32 %v1747, %v1747
  %v1751 = vmul.f32 %v1748, %v1748
  %v1752 = vmul.f32 %v1749, %v1749
  %v1753 = vsel %vm36, %v1750, 0.0
  %v1754 = vsel %vm36, %v1751, 0.0
  %v1755 = vadd.f32 %v1753, %v1754
  %v1756 = vsel %vm36, %v1752, 0.0
  %v1757 = vadd.f32 %v1755, %v1756
  %v1758 = vrot.slane %v1757, 4
  %v1759 = vadd.f32 %v1757, %v1758
  %v1760 = vrot.slane %v1759, 2
  %v1761 = vadd.f32 %v1759, %v1760
  %v1762 = vrot.slane %v1761, 1
  %v1763 = vadd.f32 %v1761, %v1762
  %v1764 = vmul.f32 %v1763, %v1745
  %v1765 = vadd.f32 %v1764, 1e-05
  %v1766 = vrsqrt.pop %v1765
  %v1767 = vmul.f32 %v1747, %v1766
  %v1768 = vmul.f32 %v1748, %v1766
  %v1769 = vmul.f32 %v1749, %v1766
  %1770 = vst.msk [vmem:[%s3] sm:$0xff] %vm36, %v1767
  %1771 = vst.msk [vmem:[%s3 + $0x8] sm:$0xff] %vm36, %v1768
  %1772 = vst.msk [vmem:[%s3 + $0x10] sm:$0xff] %vm36, %v1769
  // Predicated region
  $region14: #{_lambda_.5} parent=0 // pred_check
    _
  $region15: #{_lambda_.5} parent=0 // pred_check_branch
    %1774 = sbr.rel (0) target = $region17
  $region16: #{_lambda_.5} parent=0 // pred_region
    _
  $region17: #{_lambda_.5} parent=0 // pred_fallthru
    _
  // Predicated region
  $region18: #{_lambda_.5} parent=0 // pred_check
    _
  $region19: #{_lambda_.5} parent=0 // pred_check_branch
    %1776 = sbr.rel (0) target = $region21
  $region20: #{_lambda_.5} parent=0 // pred_region
    _
  $region21: #{_lambda_.5} parent=0 // pred_fallthru
    _

// kernel: _lambda_.6
$region0: #{_lambda_.6}
  #allocation0 [shape = 'u32[]', space=smem, size = 0x4, offset = 0x4, fixed_abs, tag = 'smem constant byte address 0x4 - core index']
  #allocation1 [shape = 'u32[144,128]{1,0:T(1,128)}', space=vmem, size = 0x12000, scoped, tag = 'internal scratch']
  #allocation2 [shape = 'f32[1,1]{1,0:T(1,128)S(1)}', space=vmem, size = 0x200, scoped, tag = 'scoped memory for _lambda_.6']
  %s0 = inlined_call_operand.vmem [shape: f32[490,27], index: 0, kind: input, shape index: {}]
  %s1 = inlined_call_operand.vmem [shape: f32[8,490], index: 1, kind: input, shape index: {}]
  %s2 = inlined_call_operand.vmem [shape: f32[2,64], index: 2, kind: input, shape index: {}]
  %s3 = inlined_call_operand.vmem [shape: f32[8,5], index: 3, kind: input, shape index: {}]
  %s4 = inlined_call_operand.vmem [shape: f32[27,512], index: 4, kind: input, shape index: {}]
  %s5 = inlined_call_operand.vmem [shape: f32[1,512], index: 5, kind: input, shape index: {}, may-alias: {5,7,9,13}]
  %s6 = inlined_call_operand.vmem [shape: f32[512,512], index: 6, kind: input, shape index: {}]
  %s7 = inlined_call_operand.vmem [shape: f32[1,512], index: 7, kind: input, shape index: {}, may-alias: {5,7,9,13}]
  %s8 = inlined_call_operand.vmem [shape: f32[64,512], index: 8, kind: input, shape index: {}]
  %s9 = inlined_call_operand.vmem [shape: f32[1,512], index: 9, kind: input, shape index: {}, may-alias: {5,7,9,13}]
  %s10 = inlined_call_operand.vmem [shape: f32[1,512], index: 10, kind: input, shape index: {}]
  %s11 = inlined_call_operand.<no memory space> [shape: f32[1,1], index: 11, kind: input, shape index: {}]
  %s12 = inlined_call_operand.vmem [shape: f32[512,512], index: 12, kind: input, shape index: {}]
  %s13 = inlined_call_operand.vmem [shape: f32[1,512], index: 13, kind: input, shape index: {}, may-alias: {5,7,9,13}]
  %s14 = inlined_call_operand.vmem [shape: f32[5,128], index: 14, kind: input, shape index: {}]
  %s15 = inlined_call_operand.vmem [shape: f32[1,128], index: 15, kind: input, shape index: {}]
  %s16 = inlined_call_operand.vmem [shape: f32[2,512], index: 16, kind: output, shape index: {0}]
  %s17 = inlined_call_operand.vmem [shape: f32[8,512], index: 17, kind: output, shape index: {1}]
  %s18 = inlined_call_operand.vmem [shape: f32[8,128], index: 18, kind: output, shape index: {2}]
  %19 = xla_tuple %s16, %s17, %s18
  %s20 = sld [smem:[#allocation0]]
  $region90: #{_lambda_.6} parent=0
    _
  %s22 = ssub.s32 1, %s20
  %s23 = scalar_select 0, %s22, %s20
  %v24 = vstv %s11
  %25 = vst [vmem:[#allocation2] sm:$0x1] %v24
  // Predicated region
  $region2: #{_lambda_.6} parent=0 // pred_check
    _
  $region3: #{_lambda_.6} parent=0 // pred_check_branch
    %27 = sbr.rel (0) target = $region5
  $region4: #{_lambda_.6} parent=0 // pred_region
    _
  $region5: #{_lambda_.6} parent=0 // pred_fallthru
    _
  // Predicated region
  $region6: #{_lambda_.6} parent=0 // pred_check
    _
  $region7: #{_lambda_.6} parent=0 // pred_check_branch
    %29 = sbr.rel (0) target = $region9
  $region8: #{_lambda_.6} parent=0 // pred_region
    _
  $region9: #{_lambda_.6} parent=0 // pred_fallthru
    _
  // Predicated region
  $region10: #{_lambda_.6} parent=0 // pred_check
    _
  $region11: #{_lambda_.6} parent=0 // pred_check_branch
    %31 = sbr.rel (0) target = $region13
  $region12: #{_lambda_.6} parent=0 // pred_region
    _
  $region13: #{_lambda_.6} parent=0 // pred_fallthru
    _
  // Predicated region
  $region14: #{_lambda_.6} parent=0 // pred_check
    _
  $region15: #{_lambda_.6} parent=0 // pred_check_branch
    %33 = sbr.rel (0) target = $region17
  $region16: #{_lambda_.6} parent=0 // pred_region
    _
  $region17: #{_lambda_.6} parent=0 // pred_fallthru
    _
  // Predicated region
  $region18: #{_lambda_.6} parent=0 // pred_check
    _
  $region19: #{_lambda_.6} parent=0 // pred_check_branch
    %35 = sbr.rel (0) target = $region21
  $region20: #{_lambda_.6} parent=0 // pred_region
    _
  $region21: #{_lambda_.6} parent=0 // pred_fallthru
    _
  // Predicated region
  $region22: #{_lambda_.6} parent=0 // pred_check
    _
  $region23: #{_lambda_.6} parent=0 // pred_check_branch
    %37 = sbr.rel (0) target = $region25
  $region24: #{_lambda_.6} parent=0 // pred_region
    _
  $region25: #{_lambda_.6} parent=0 // pred_fallthru
    _
  // Predicated region
  $region26: #{_lambda_.6} parent=0 // pred_check
    _
  $region27: #{_lambda_.6} parent=0 // pred_check_branch
    %39 = sbr.rel (0) target = $region29
  $region28: #{_lambda_.6} parent=0 // pred_region
    _
  $region29: #{_lambda_.6} parent=0 // pred_fallthru
    _
  // Predicated region
  $region30: #{_lambda_.6} parent=0 // pred_check
    _
  $region31: #{_lambda_.6} parent=0 // pred_check_branch
    %41 = sbr.rel (0) target = $region33
  $region32: #{_lambda_.6} parent=0 // pred_region
    _
  $region33: #{_lambda_.6} parent=0 // pred_fallthru
    _
  // Predicated region
  $region34: #{_lambda_.6} parent=0 // pred_check
    _
  $region35: #{_lambda_.6} parent=0 // pred_check_branch
    %43 = sbr.rel (0) target = $region37
  $region36: #{_lambda_.6} parent=0 // pred_region
    _
  $region37: #{_lambda_.6} parent=0 // pred_fallthru
    _
  // Predicated region
  $region38: #{_lambda_.6} parent=0 // pred_check
    _
  $region39: #{_lambda_.6} parent=0 // pred_check_branch
    %45 = sbr.rel (0) target = $region41
  $region40: #{_lambda_.6} parent=0 // pred_region
    _
  $region41: #{_lambda_.6} parent=0 // pred_fallthru
    _
  // Predicated region
  $region42: #{_lambda_.6} parent=0 // pred_check
    _
  $region43: #{_lambda_.6} parent=0 // pred_check_branch
    %47 = sbr.rel (0) target = $region45
  $region44: #{_lambda_.6} parent=0 // pred_region
    _
  $region45: #{_lambda_.6} parent=0 // pred_fallthru
    _
  // Predicated region
  $region46: #{_lambda_.6} parent=0 // pred_check
    _
  $region47: #{_lambda_.6} parent=0 // pred_check_branch
    %49 = sbr.rel (0) target = $region49
  $region48: #{_lambda_.6} parent=0 // pred_region
    _
  $region49: #{_lambda_.6} parent=0 // pred_fallthru
    _
  // Predicated region
  $region50: #{_lambda_.6} parent=0 // pred_check
    _
  $region51: #{_lambda_.6} parent=0 // pred_check_branch
    %51 = sbr.rel (0) target = $region53
  $region52: #{_lambda_.6} parent=0 // pred_region
    _
  $region53: #{_lambda_.6} parent=0 // pred_fallthru
    _
  // Predicated region
  $region54: #{_lambda_.6} parent=0 // pred_check
    _
  $region55: #{_lambda_.6} parent=0 // pred_check_branch
    %53 = sbr.rel (0) target = $region57
  $region56: #{_lambda_.6} parent=0 // pred_region
    _
  $region57: #{_lambda_.6} parent=0 // pred_fallthru
    _
  // Predicated region
  $region58: #{_lambda_.6} parent=0 // pred_check
    _
  $region59: #{_lambda_.6} parent=0 // pred_check_branch
    %55 = sbr.rel (0) target = $region61
  $region60: #{_lambda_.6} parent=0 // pred_region
    _
  $region61: #{_lambda_.6} parent=0 // pred_fallthru
    _
  // Predicated region
  $region62: #{_lambda_.6} parent=0 // pred_check
    _
  $region63: #{_lambda_.6} parent=0 // pred_check_branch
    %57 = sbr.rel (0) target = $region65
  $region64: #{_lambda_.6} parent=0 // pred_region
    _
  $region65: #{_lambda_.6} parent=0 // pred_fallthru
    _
  %v58 = vld [vmem:[%s0] sm:$0xff]
  %v59 = vld [vmem:[%s0 + $0x8] sm:$0xff]
  %v60 = vld [vmem:[%s0 + $0x10] sm:$0xff]
  %v61 = vld [vmem:[%s0 + $0x18] sm:$0xff]
  %v62 = vld [vmem:[%s0 + $0x20] sm:$0xff]
  %v63 = vld [vmem:[%s0 + $0x28] sm:$0xff]
  %v64 = vld [vmem:[%s0 + $0x30] sm:$0xff]
  %v65 = vld [vmem:[%s0 + $0x38] sm:$0xff]
  %v66 = vld [vmem:[%s0 + $0x40] sm:$0xff]
  %v67 = vld [vmem:[%s0 + $0x48] sm:$0xff]
  %v68 = vld [vmem:[%s0 + $0x50] sm:$0xff]
  %v69 = vld [vmem:[%s0 + $0x58] sm:$0xff]
  %v70 = vld [vmem:[%s0 + $0x60] sm:$0xff]
  %v71 = vld [vmem:[%s0 + $0x68] sm:$0xff]
  %v72 = vld [vmem:[%s0 + $0x70] sm:$0xff]
  %v73 = vld [vmem:[%s0 + $0x78] sm:$0xff]
  %v74 = vld [vmem:[%s0 + $0x80] sm:$0xff]
  %v75 = vld [vmem:[%s0 + $0x88] sm:$0xff]
  %v76 = vld [vmem:[%s0 + $0x90] sm:$0xff]
  %v77 = vld [vmem:[%s0 + $0x98] sm:$0xff]
  %v78 = vld [vmem:[%s0 + $0xa0] sm:$0xff]
  %v79 = vld [vmem:[%s0 + $0xa8] sm:$0xff]
  %v80 = vld [vmem:[%s0 + $0xb0] sm:$0xff]
  %v81 = vld [vmem:[%s0 + $0xb8] sm:$0xff]
  %v82 = vld [vmem:[%s0 + $0xc0] sm:$0xff]
  %v83 = vld [vmem:[%s0 + $0xc8] sm:$0xff]
  %v84 = vld [vmem:[%s0 + $0xd0] sm:$0xff]
  %v85 = vld [vmem:[%s0 + $0xd8] sm:$0xff]
  %v86 = vld [vmem:[%s0 + $0xe0] sm:$0xff]
  %v87 = vld [vmem:[%s0 + $0xe8] sm:$0xff]
  %v88 = vld [vmem:[%s0 + $0xf0] sm:$0xff]
  %v89 = vld [vmem:[%s0 + $0xf8] sm:$0xff]
  %v90 = vld [vmem:[%s0 + $0x100] sm:$0xff]
  %v91 = vld [vmem:[%s0 + $0x108] sm:$0xff]
  %v92 = vld [vmem:[%s0 + $0x110] sm:$0xff]
  %v93 = vld [vmem:[%s0 + $0x118] sm:$0xff]
  %v94 = vld [vmem:[%s0 + $0x120] sm:$0xff]
  %v95 = vld [vmem:[%s0 + $0x128] sm:$0xff]
  %v96 = vld [vmem:[%s0 + $0x130] sm:$0xff]
  %v97 = vld [vmem:[%s0 + $0x138] sm:$0xff]
  %v98 = vld [vmem:[%s0 + $0x140] sm:$0xff]
  %v99 = vld [vmem:[%s0 + $0x148] sm:$0xff]
  %v100 = vld [vmem:[%s0 + $0x150] sm:$0xff]
  %v101 = vld [vmem:[%s0 + $0x158] sm:$0xff]
  %v102 = vld [vmem:[%s0 + $0x160] sm:$0xff]
  %v103 = vld [vmem:[%s0 + $0x168] sm:$0xff]
  %v104 = vld [vmem:[%s0 + $0x170] sm:$0xff]
  %v105 = vld [vmem:[%s0 + $0x178] sm:$0xff]
  %v106 = vld [vmem:[%s0 + $0x180] sm:$0xff]
  %v107 = vld [vmem:[%s0 + $0x188] sm:$0xff]
  %v108 = vld [vmem:[%s0 + $0x190] sm:$0xff]
  %v109 = vld [vmem:[%s0 + $0x198] sm:$0xff]
  %v110 = vld [vmem:[%s0 + $0x1a0] sm:$0xff]
  %v111 = vld [vmem:[%s0 + $0x1a8] sm:$0xff]
  %v112 = vld [vmem:[%s0 + $0x1b0] sm:$0xff]
  %v113 = vld [vmem:[%s0 + $0x1b8] sm:$0xff]
  %v114 = vld [vmem:[%s0 + $0x1c0] sm:$0xff]
  %v115 = vld [vmem:[%s0 + $0x1c8] sm:$0xff]
  %v116 = vld [vmem:[%s0 + $0x1d0] sm:$0xff]
  %v117 = vld [vmem:[%s0 + $0x1d8] sm:$0xff]
  %v118 = vld [vmem:[%s0 + $0x1e0] sm:$0xff]
  %v119 = vld [vmem:[%s0 + $0x1e8] sm:$0x3]
  %v120 = vld [vmem:[%s4] sm:$0xff]
  %v121 = vld [vmem:[%s4 + $0x8] sm:$0xff]
  %v122 = vld [vmem:[%s4 + $0x10] sm:$0xff]
  %v123 = vld [vmem:[%s4 + $0x18] sm:$0xff]
  %v124 = vld [vmem:[%s4 + $0x20] sm:$0xff]
  %v125 = vld [vmem:[%s4 + $0x28] sm:$0xff]
  %v126 = vld [vmem:[%s4 + $0x30] sm:$0xff]
  %v127 = vld [vmem:[%s4 + $0x38] sm:$0xff]
  %v128 = vld [vmem:[%s4 + $0x40] sm:$0xff]
  %v129 = vld [vmem:[%s4 + $0x48] sm:$0xff]
  %v130 = vld [vmem:[%s4 + $0x50] sm:$0xff]
  %v131 = vld [vmem:[%s4 + $0x58] sm:$0xff]
  %v132 = vld [vmem:[%s4 + $0x60] sm:$0x7]
  %v133 = vld [vmem:[%s4 + $0x68] sm:$0x7]
  %v134 = vld [vmem:[%s4 + $0x70] sm:$0x7]
  %v135 = vld [vmem:[%s4 + $0x78] sm:$0x7]
  %v136 = vld [vmem:[%s5] sm:$0xf]
  %v138 = vlaneseq
  %v139 = vshrl.u32 %v138, 7
  %v140 = vsub.s32 0, %v139
  %v141 = vrot.slane %v136, %v140
  %v142 = vlaneseq
  %v143 = vshrl.u32 %v142, 7
  %v144 = vsub.s32 1, %v143
  %v145 = vrot.slane %v136, %v144
  %v146 = vlaneseq
  %v147 = vshrl.u32 %v146, 7
  %v148 = vsub.s32 2, %v147
  %v149 = vrot.slane %v136, %v148
  %v150 = vlaneseq
  %v151 = vshrl.u32 %v150, 7
  %v152 = vsub.s32 3, %v151
  %v153 = vrot.slane %v136, %v152
  %vm158 = vcmask 220160
  %v160 = vsel %vm158, %v58, 0
  %v163 = vsel %vm158, %v59, 0
  %v166 = vsel %vm158, %v60, 0
  %v169 = vsel %vm158, %v61, 0
  %v172 = vsel %vm158, %v62, 0
  %v175 = vsel %vm158, %v63, 0
  %v178 = vsel %vm158, %v64, 0
  %v181 = vsel %vm158, %v65, 0
  %v184 = vsel %vm158, %v66, 0
  %v187 = vsel %vm158, %v67, 0
  %v190 = vsel %vm158, %v68, 0
  %v193 = vsel %vm158, %v69, 0
  %v196 = vsel %vm158, %v70, 0
  %v199 = vsel %vm158, %v71, 0
  %v202 = vsel %vm158, %v72, 0
  %v205 = vsel %vm158, %v73, 0
  %v208 = vsel %vm158, %v74, 0
  %v211 = vsel %vm158, %v75, 0
  %v214 = vsel %vm158, %v76, 0
  %v217 = vsel %vm158, %v77, 0
  %v220 = vsel %vm158, %v78, 0
  %v223 = vsel %vm158, %v79, 0
  %v226 = vsel %vm158, %v80, 0
  %v229 = vsel %vm158, %v81, 0
  %v232 = vsel %vm158, %v82, 0
  %v235 = vsel %vm158, %v83, 0
  %v238 = vsel %vm158, %v84, 0
  %v241 = vsel %vm158, %v85, 0
  %v244 = vsel %vm158, %v86, 0
  %v247 = vsel %vm158, %v87, 0
  %v250 = vsel %vm158, %v88, 0
  %v253 = vsel %vm158, %v89, 0
  %v256 = vsel %vm158, %v90, 0
  %v259 = vsel %vm158, %v91, 0
  %v262 = vsel %vm158, %v92, 0
  %v265 = vsel %vm158, %v93, 0
  %v268 = vsel %vm158, %v94, 0
  %v271 = vsel %vm158, %v95, 0
  %v274 = vsel %vm158, %v96, 0
  %v277 = vsel %vm158, %v97, 0
  %v280 = vsel %vm158, %v98, 0
  %v283 = vsel %vm158, %v99, 0
  %v286 = vsel %vm158, %v100, 0
  %v289 = vsel %vm158, %v101, 0
  %v292 = vsel %vm158, %v102, 0
  %v295 = vsel %vm158, %v103, 0
  %v298 = vsel %vm158, %v104, 0
  %v301 = vsel %vm158, %v105, 0
  %v304 = vsel %vm158, %v106, 0
  %v307 = vsel %vm158, %v107, 0
  %v310 = vsel %vm158, %v108, 0
  %v313 = vsel %vm158, %v109, 0
  %v316 = vsel %vm158, %v110, 0
  %v319 = vsel %vm158, %v111, 0
  %v322 = vsel %vm158, %v112, 0
  %v325 = vsel %vm158, %v113, 0
  %v328 = vsel %vm158, %v114, 0
  %v331 = vsel %vm158, %v115, 0
  %v334 = vsel %vm158, %v116, 0
  %v337 = vsel %vm158, %v117, 0
  %v340 = vsel %vm158, %v118, 0
  %v343 = vsel %vm158, %v119, 0
  %vm345 = vcmask 1042432
  %v347 = vsel %vm345, %v132, 0
  %v350 = vsel %vm345, %v133, 0
  %v353 = vsel %vm345, %v134, 0
  %v356 = vsel %vm345, %v135, 0
  %358 = vmatprep.subr.mxu0 0.0
  %359 = vmatpush1.msra.mxu0 0.0
  %360 = vmatprep.subr.mxu0 0.0
  %361 = vmatpush1.msra.mxu0 0.0
  %362 = vmatprep.subr.mxu0 0.0
  %363 = vmatpush1.msra.mxu0 0.0
  %364 = vmatprep.subr.mxu0 0.0
  %365 = vmatpush1.msra.mxu0 0.0
  %366 = vmatprep.subr.mxu0 0.0
  %367 = vmatpush1.msra.mxu0 0.0
  %368 = vmatprep.subr.mxu0 0.0
  %369 = vmatpush1.msra.mxu0 0.0
  %370 = vmatprep.subr.mxu0 0.0
  %371 = vmatpush1.msra.mxu0 0.0
  %372 = vmatprep.subr.mxu0 0.0
  %373 = vmatpush1.msra.mxu0 0.0
  %374 = vmatprep.subr.mxu0 0.0
  %375 = vmatpush1.msra.mxu0 0.0
  %376 = vmatprep.subr.mxu0 0.0
  %377 = vmatpush1.msra.mxu0 0.0
  %378 = vmatprep.subr.mxu0 0.0
  %379 = vmatpush1.msra.mxu0 0.0
  %380 = vmatprep.subr.mxu0 0.0
  %381 = vmatpush1.msra.mxu0 0.0
  %382 = vmatprep.subr.mxu0 %v350
  %383 = vmatpush1.msra.mxu0 %v347
  %384 = vmatprep.subr.mxu0 %v129
  %385 = vmatpush1.msra.mxu0 %v128
  %386 = vmatprep.subr.mxu0 %v125
  %387 = vmatpush1.msra.mxu0 %v124
  %388 = vmatprep.subr.mxu0 %v121
  %389 = vmatpush1.msra.mxu0 %v120
  %390 = vmatprep.subr.mxu0 0.0
  %391 = vmatpush2.msra.mxu0 0.0
  %392 = vmatprep.subr.mxu0 0.0
  %393 = vmatpush2.msra.mxu0 0.0
  %394 = vmatprep.subr.mxu0 0.0
  %395 = vmatpush2.msra.mxu0 0.0
  %396 = vmatprep.subr.mxu0 0.0
  %397 = vmatpush2.msra.mxu0 0.0
  %398 = vmatprep.subr.mxu0 0.0
  %399 = vmatpush2.msra.mxu0 0.0
  %400 = vmatprep.subr.mxu0 0.0
  %401 = vmatpush2.msra.mxu0 0.0
  %402 = vmatprep.subr.mxu0 0.0
  %403 = vmatpush2.msra.mxu0 0.0
  %404 = vmatprep.subr.mxu0 0.0
  %405 = vmatpush2.msra.mxu0 0.0
  %406 = vmatprep.subr.mxu0 0.0
  %407 = vmatpush2.msra.mxu0 0.0
  %408 = vmatprep.subr.mxu0 0.0
  %409 = vmatpush2.msra.mxu0 0.0
  %410 = vmatprep.subr.mxu0 0.0
  %411 = vmatpush2.msra.mxu0 0.0
  %412 = vmatprep.subr.mxu0 0.0
  %413 = vmatpush2.msra.mxu0 0.0
  %414 = vmatprep.subr.mxu0 0.0
  %415 = vmatpush2.msra.mxu0 0.0
  %416 = vmatprep.subr.mxu0 0.0
  %417 = vmatpush2.msra.mxu0 0.0
  %418 = vmatprep.subr.mxu0 0.0
  %419 = vmatpush2.msra.mxu0 0.0
  %420 = vmatprep.subr.mxu0 0.0
  %421 = vmatpush2.msra.mxu0 0.0
  %422 = vmatprep.mubr.f32.mxu0 0.0
  %423 = vmatmul.mubr.f32.gmra.mxu0 %v160
  %v424 = vpop.f32.mrf.mxu0
  %v425 = vadd.f32 %v141, %v424
  %v426 = vpop.f32.mrf.mxu0
  %v427 = vadd.f32 %v145, %v426
  %428 = vmatprep.mubr.f32.mxu0 0.0
  %429 = vmatmul.mubr.f32.gmra.mxu0 %v163
  %v430 = vpop.f32.mrf.mxu0
  %v431 = vadd.f32 %v141, %v430
  %v432 = vpop.f32.mrf.mxu0
  %v433 = vadd.f32 %v145, %v432
  %434 = vmatprep.mubr.f32.mxu0 0.0
  %435 = vmatmul.mubr.f32.gmra.mxu0 %v166
  %v436 = vpop.f32.mrf.mxu0
  %v437 = vadd.f32 %v141, %v436
  %v438 = vpop.f32.mrf.mxu0
  %v439 = vadd.f32 %v145, %v438
  %440 = vmatprep.mubr.f32.mxu0 0.0
  %441 = vmatmul.mubr.f32.gmra.mxu0 %v169
  %v442 = vpop.f32.mrf.mxu0
  %v443 = vadd.f32 %v141, %v442
  %v444 = vpop.f32.mrf.mxu0
  %v445 = vadd.f32 %v145, %v444
  %446 = vmatprep.mubr.f32.mxu0 0.0
  %447 = vmatmul.mubr.f32.gmra.mxu0 %v172
  %v448 = vpop.f32.mrf.mxu0
  %v449 = vadd.f32 %v141, %v448
  %v450 = vpop.f32.mrf.mxu0
  %v451 = vadd.f32 %v145, %v450
  %452 = vmatprep.mubr.f32.mxu0 0.0
  %453 = vmatmul.mubr.f32.gmra.mxu0 %v175
  %v454 = vpop.f32.mrf.mxu0
  %v455 = vadd.f32 %v141, %v454
  %v456 = vpop.f32.mrf.mxu0
  %v457 = vadd.f32 %v145, %v456
  %458 = vmatprep.mubr.f32.mxu0 0.0
  %459 = vmatmul.mubr.f32.gmra.mxu0 %v178
  %v460 = vpop.f32.mrf.mxu0
  %v461 = vadd.f32 %v141, %v460
  %v462 = vpop.f32.mrf.mxu0
  %v463 = vadd.f32 %v145, %v462
  %464 = vmatprep.mubr.f32.mxu0 0.0
  %465 = vmatmul.mubr.f32.gmra.mxu0 %v181
  %v466 = vpop.f32.mrf.mxu0
  %v467 = vadd.f32 %v141, %v466
  %v468 = vpop.f32.mrf.mxu0
  %v469 = vadd.f32 %v145, %v468
  %470 = vmatprep.mubr.f32.mxu0 0.0
  %471 = vmatmul.mubr.f32.gmra.mxu0 %v184
  %v472 = vpop.f32.mrf.mxu0
  %v473 = vadd.f32 %v141, %v472
  %v474 = vpop.f32.mrf.mxu0
  %v475 = vadd.f32 %v145, %v474
  %476 = vmatprep.mubr.f32.mxu0 0.0
  %477 = vmatmul.mubr.f32.gmra.mxu0 %v187
  %v478 = vpop.f32.mrf.mxu0
  %v479 = vadd.f32 %v141, %v478
  %v480 = vpop.f32.mrf.mxu0
  %v481 = vadd.f32 %v145, %v480
  %482 = vmatprep.mubr.f32.mxu0 0.0
  %483 = vmatmul.mubr.f32.gmra.mxu0 %v190
  %v484 = vpop.f32.mrf.mxu0
  %v485 = vadd.f32 %v141, %v484
  %v486 = vpop.f32.mrf.mxu0
  %v487 = vadd.f32 %v145, %v486
  %488 = vmatprep.mubr.f32.mxu0 0.0
  %489 = vmatmul.mubr.f32.gmra.mxu0 %v193
  %v490 = vpop.f32.mrf.mxu0
  %v491 = vadd.f32 %v141, %v490
  %v492 = vpop.f32.mrf.mxu0
  %v493 = vadd.f32 %v145, %v492
  %494 = vmatprep.mubr.f32.mxu0 0.0
  %495 = vmatmul.mubr.f32.gmra.mxu0 %v196
  %v496 = vpop.f32.mrf.mxu0
  %v497 = vadd.f32 %v141, %v496
  %v498 = vpop.f32.mrf.mxu0
  %v499 = vadd.f32 %v145, %v498
  %500 = vmatprep.mubr.f32.mxu0 0.0
  %501 = vmatmul.mubr.f32.gmra.mxu0 %v199
  %v502 = vpop.f32.mrf.mxu0
  %v503 = vadd.f32 %v141, %v502
  %v504 = vpop.f32.mrf.mxu0
  %v505 = vadd.f32 %v145, %v504
  %506 = vmatprep.mubr.f32.mxu0 0.0
  %507 = vmatmul.mubr.f32.gmra.mxu0 %v202
  %v508 = vpop.f32.mrf.mxu0
  %v509 = vadd.f32 %v141, %v508
  %v510 = vpop.f32.mrf.mxu0
  %v511 = vadd.f32 %v145, %v510
  %512 = vmatprep.mubr.f32.mxu0 0.0
  %513 = vmatmul.mubr.f32.gmra.mxu0 %v205
  %v514 = vpop.f32.mrf.mxu0
  %v515 = vadd.f32 %v141, %v514
  %v516 = vpop.f32.mrf.mxu0
  %v517 = vadd.f32 %v145, %v516
  %518 = vmatprep.mubr.f32.mxu0 0.0
  %519 = vmatmul.mubr.f32.gmra.mxu0 %v208
  %v520 = vpop.f32.mrf.mxu0
  %v521 = vadd.f32 %v141, %v520
  %v522 = vpop.f32.mrf.mxu0
  %v523 = vadd.f32 %v145, %v522
  %524 = vmatprep.mubr.f32.mxu0 0.0
  %525 = vmatmul.mubr.f32.gmra.mxu0 %v211
  %v526 = vpop.f32.mrf.mxu0
  %v527 = vadd.f32 %v141, %v526
  %v528 = vpop.f32.mrf.mxu0
  %v529 = vadd.f32 %v145, %v528
  %530 = vmatprep.mubr.f32.mxu0 0.0
  %531 = vmatmul.mubr.f32.gmra.mxu0 %v214
  %v532 = vpop.f32.mrf.mxu0
  %v533 = vadd.f32 %v141, %v532
  %v534 = vpop.f32.mrf.mxu0
  %v535 = vadd.f32 %v145, %v534
  %536 = vmatprep.mubr.f32.mxu0 0.0
  %537 = vmatmul.mubr.f32.gmra.mxu0 %v217
  %v538 = vpop.f32.mrf.mxu0
  %v539 = vadd.f32 %v141, %v538
  %v540 = vpop.f32.mrf.mxu0
  %v541 = vadd.f32 %v145, %v540
  %542 = vmatprep.mubr.f32.mxu0 0.0
  %543 = vmatmul.mubr.f32.gmra.mxu0 %v220
  %v544 = vpop.f32.mrf.mxu0
  %v545 = vadd.f32 %v141, %v544
  %v546 = vpop.f32.mrf.mxu0
  %v547 = vadd.f32 %v145, %v546
  %548 = vmatprep.mubr.f32.mxu0 0.0
  %549 = vmatmul.mubr.f32.gmra.mxu0 %v223
  %v550 = vpop.f32.mrf.mxu0
  %v551 = vadd.f32 %v141, %v550
  %v552 = vpop.f32.mrf.mxu0
  %v553 = vadd.f32 %v145, %v552
  %554 = vmatprep.mubr.f32.mxu0 0.0
  %555 = vmatmul.mubr.f32.gmra.mxu0 %v226
  %v556 = vpop.f32.mrf.mxu0
  %v557 = vadd.f32 %v141, %v556
  %v558 = vpop.f32.mrf.mxu0
  %v559 = vadd.f32 %v145, %v558
  %560 = vmatprep.mubr.f32.mxu0 0.0
  %561 = vmatmul.mubr.f32.gmra.mxu0 %v229
  %v562 = vpop.f32.mrf.mxu0
  %v563 = vadd.f32 %v141, %v562
  %v564 = vpop.f32.mrf.mxu0
  %v565 = vadd.f32 %v145, %v564
  %566 = vmatprep.mubr.f32.mxu0 0.0
  %567 = vmatmul.mubr.f32.gmra.mxu0 %v232
  %v568 = vpop.f32.mrf.mxu0
  %v569 = vadd.f32 %v141, %v568
  %v570 = vpop.f32.mrf.mxu0
  %v571 = vadd.f32 %v145, %v570
  %572 = vmatprep.mubr.f32.mxu0 0.0
  %573 = vmatmul.mubr.f32.gmra.mxu0 %v235
  %v574 = vpop.f32.mrf.mxu0
  %v575 = vadd.f32 %v141, %v574
  %v576 = vpop.f32.mrf.mxu0
  %v577 = vadd.f32 %v145, %v576
  %578 = vmatprep.mubr.f32.mxu0 0.0
  %579 = vmatmul.mubr.f32.gmra.mxu0 %v238
  %v580 = vpop.f32.mrf.mxu0
  %v581 = vadd.f32 %v141, %v580
  %v582 = vpop.f32.mrf.mxu0
  %v583 = vadd.f32 %v145, %v582
  %584 = vmatprep.mubr.f32.mxu0 0.0
  %585 = vmatmul.mubr.f32.gmra.mxu0 %v241
  %v586 = vpop.f32.mrf.mxu0
  %v587 = vadd.f32 %v141, %v586
  %v588 = vpop.f32.mrf.mxu0
  %v589 = vadd.f32 %v145, %v588
  %590 = vmatprep.mubr.f32.mxu0 0.0
  %591 = vmatmul.mubr.f32.gmra.mxu0 %v244
  %v592 = vpop.f32.mrf.mxu0
  %v593 = vadd.f32 %v141, %v592
  %v594 = vpop.f32.mrf.mxu0
  %v595 = vadd.f32 %v145, %v594
  %596 = vmatprep.mubr.f32.mxu0 0.0
  %597 = vmatmul.mubr.f32.gmra.mxu0 %v247
  %v598 = vpop.f32.mrf.mxu0
  %v599 = vadd.f32 %v141, %v598
  %v600 = vpop.f32.mrf.mxu0
  %v601 = vadd.f32 %v145, %v600
  %602 = vmatprep.mubr.f32.mxu0 0.0
  %603 = vmatmul.mubr.f32.gmra.mxu0 %v250
  %v604 = vpop.f32.mrf.mxu0
  %v605 = vadd.f32 %v141, %v604
  %v606 = vpop.f32.mrf.mxu0
  %v607 = vadd.f32 %v145, %v606
  %608 = vmatprep.mubr.f32.mxu0 0.0
  %609 = vmatmul.mubr.f32.gmra.mxu0 %v253
  %v610 = vpop.f32.mrf.mxu0
  %v611 = vadd.f32 %v141, %v610
  %v612 = vpop.f32.mrf.mxu0
  %v613 = vadd.f32 %v145, %v612
  %614 = vmatprep.mubr.f32.mxu0 0.0
  %615 = vmatmul.mubr.f32.gmra.mxu0 %v256
  %v616 = vpop.f32.mrf.mxu0
  %v617 = vadd.f32 %v141, %v616
  %v618 = vpop.f32.mrf.mxu0
  %v619 = vadd.f32 %v145, %v618
  %620 = vmatprep.mubr.f32.mxu0 0.0
  %621 = vmatmul.mubr.f32.gmra.mxu0 %v259
  %v622 = vpop.f32.mrf.mxu0
  %v623 = vadd.f32 %v141, %v622
  %v624 = vpop.f32.mrf.mxu0
  %v625 = vadd.f32 %v145, %v624
  %626 = vmatprep.mubr.f32.mxu0 0.0
  %627 = vmatmul.mubr.f32.gmra.mxu0 %v262
  %v628 = vpop.f32.mrf.mxu0
  %v629 = vadd.f32 %v141, %v628
  %v630 = vpop.f32.mrf.mxu0
  %v631 = vadd.f32 %v145, %v630
  %632 = vmatprep.mubr.f32.mxu0 0.0
  %633 = vmatmul.mubr.f32.gmra.mxu0 %v265
  %v634 = vpop.f32.mrf.mxu0
  %v635 = vadd.f32 %v141, %v634
  %v636 = vpop.f32.mrf.mxu0
  %v637 = vadd.f32 %v145, %v636
  %638 = vmatprep.mubr.f32.mxu0 0.0
  %639 = vmatmul.mubr.f32.gmra.mxu0 %v268
  %v640 = vpop.f32.mrf.mxu0
  %v641 = vadd.f32 %v141, %v640
  %v642 = vpop.f32.mrf.mxu0
  %v643 = vadd.f32 %v145, %v642
  %644 = vmatprep.mubr.f32.mxu0 0.0
  %645 = vmatmul.mubr.f32.gmra.mxu0 %v271
  %v646 = vpop.f32.mrf.mxu0
  %v647 = vadd.f32 %v141, %v646
  %v648 = vpop.f32.mrf.mxu0
  %v649 = vadd.f32 %v145, %v648
  %650 = vmatprep.mubr.f32.mxu0 0.0
  %651 = vmatmul.mubr.f32.gmra.mxu0 %v274
  %v652 = vpop.f32.mrf.mxu0
  %v653 = vadd.f32 %v141, %v652
  %v654 = vpop.f32.mrf.mxu0
  %v655 = vadd.f32 %v145, %v654
  %656 = vmatprep.mubr.f32.mxu0 0.0
  %657 = vmatmul.mubr.f32.gmra.mxu0 %v277
  %v658 = vpop.f32.mrf.mxu0
  %v659 = vadd.f32 %v141, %v658
  %v660 = vpop.f32.mrf.mxu0
  %v661 = vadd.f32 %v145, %v660
  %662 = vmatprep.mubr.f32.mxu0 0.0
  %663 = vmatmul.mubr.f32.gmra.mxu0 %v280
  %v664 = vpop.f32.mrf.mxu0
  %v665 = vadd.f32 %v141, %v664
  %v666 = vpop.f32.mrf.mxu0
  %v667 = vadd.f32 %v145, %v666
  %668 = vmatprep.mubr.f32.mxu0 0.0
  %669 = vmatmul.mubr.f32.gmra.mxu0 %v283
  %v670 = vpop.f32.mrf.mxu0
  %v671 = vadd.f32 %v141, %v670
  %v672 = vpop.f32.mrf.mxu0
  %v673 = vadd.f32 %v145, %v672
  %674 = vmatprep.mubr.f32.mxu0 0.0
  %675 = vmatmul.mubr.f32.gmra.mxu0 %v286
  %v676 = vpop.f32.mrf.mxu0
  %v677 = vadd.f32 %v141, %v676
  %v678 = vpop.f32.mrf.mxu0
  %v679 = vadd.f32 %v145, %v678
  %680 = vmatprep.mubr.f32.mxu0 0.0
  %681 = vmatmul.mubr.f32.gmra.mxu0 %v289
  %v682 = vpop.f32.mrf.mxu0
  %v683 = vadd.f32 %v141, %v682
  %v684 = vpop.f32.mrf.mxu0
  %v685 = vadd.f32 %v145, %v684
  %686 = vmatprep.mubr.f32.mxu0 0.0
  %687 = vmatmul.mubr.f32.gmra.mxu0 %v292
  %v688 = vpop.f32.mrf.mxu0
  %v689 = vadd.f32 %v141, %v688
  %v690 = vpop.f32.mrf.mxu0
  %v691 = vadd.f32 %v145, %v690
  %692 = vmatprep.mubr.f32.mxu0 0.0
  %693 = vmatmul.mubr.f32.gmra.mxu0 %v295
  %v694 = vpop.f32.mrf.mxu0
  %v695 = vadd.f32 %v141, %v694
  %v696 = vpop.f32.mrf.mxu0
  %v697 = vadd.f32 %v145, %v696
  %698 = vmatprep.mubr.f32.mxu0 0.0
  %699 = vmatmul.mubr.f32.gmra.mxu0 %v298
  %v700 = vpop.f32.mrf.mxu0
  %v701 = vadd.f32 %v141, %v700
  %v702 = vpop.f32.mrf.mxu0
  %v703 = vadd.f32 %v145, %v702
  %704 = vmatprep.mubr.f32.mxu0 0.0
  %705 = vmatmul.mubr.f32.gmra.mxu0 %v301
  %v706 = vpop.f32.mrf.mxu0
  %v707 = vadd.f32 %v141, %v706
  %v708 = vpop.f32.mrf.mxu0
  %v709 = vadd.f32 %v145, %v708
  %710 = vmatprep.mubr.f32.mxu0 0.0
  %711 = vmatmul.mubr.f32.gmra.mxu0 %v304
  %v712 = vpop.f32.mrf.mxu0
  %v713 = vadd.f32 %v141, %v712
  %v714 = vpop.f32.mrf.mxu0
  %v715 = vadd.f32 %v145, %v714
  %716 = vmatprep.mubr.f32.mxu0 0.0
  %717 = vmatmul.mubr.f32.gmra.mxu0 %v307
  %v718 = vpop.f32.mrf.mxu0
  %v719 = vadd.f32 %v141, %v718
  %v720 = vpop.f32.mrf.mxu0
  %v721 = vadd.f32 %v145, %v720
  %722 = vmatprep.mubr.f32.mxu0 0.0
  %723 = vmatmul.mubr.f32.gmra.mxu0 %v310
  %v724 = vpop.f32.mrf.mxu0
  %v725 = vadd.f32 %v141, %v724
  %v726 = vpop.f32.mrf.mxu0
  %v727 = vadd.f32 %v145, %v726
  %728 = vmatprep.mubr.f32.mxu0 0.0
  %729 = vmatmul.mubr.f32.gmra.mxu0 %v313
  %v730 = vpop.f32.mrf.mxu0
  %v731 = vadd.f32 %v141, %v730
  %v732 = vpop.f32.mrf.mxu0
  %v733 = vadd.f32 %v145, %v732
  %734 = vmatprep.mubr.f32.mxu0 0.0
  %735 = vmatmul.mubr.f32.gmra.mxu0 %v316
  %v736 = vpop.f32.mrf.mxu0
  %v737 = vadd.f32 %v141, %v736
  %v738 = vpop.f32.mrf.mxu0
  %v739 = vadd.f32 %v145, %v738
  %740 = vmatprep.mubr.f32.mxu0 0.0
  %741 = vmatmul.mubr.f32.gmra.mxu0 %v319
  %v742 = vpop.f32.mrf.mxu0
  %v743 = vadd.f32 %v141, %v742
  %v744 = vpop.f32.mrf.mxu0
  %v745 = vadd.f32 %v145, %v744
  %746 = vmatprep.mubr.f32.mxu0 0.0
  %747 = vmatmul.mubr.f32.gmra.mxu0 %v322
  %v748 = vpop.f32.mrf.mxu0
  %v749 = vadd.f32 %v141, %v748
  %v750 = vpop.f32.mrf.mxu0
  %v751 = vadd.f32 %v145, %v750
  %752 = vmatprep.mubr.f32.mxu0 0.0
  %753 = vmatmul.mubr.f32.gmra.mxu0 %v325
  %v754 = vpop.f32.mrf.mxu0
  %v755 = vadd.f32 %v141, %v754
  %v756 = vpop.f32.mrf.mxu0
  %v757 = vadd.f32 %v145, %v756
  %758 = vmatprep.mubr.f32.mxu0 0.0
  %759 = vmatmul.mubr.f32.gmra.mxu0 %v328
  %v760 = vpop.f32.mrf.mxu0
  %v761 = vadd.f32 %v141, %v760
  %v762 = vpop.f32.mrf.mxu0
  %v763 = vadd.f32 %v145, %v762
  %764 = vmatprep.mubr.f32.mxu0 0.0
  %765 = vmatmul.mubr.f32.gmra.mxu0 %v331
  %v766 = vpop.f32.mrf.mxu0
  %v767 = vadd.f32 %v141, %v766
  %v768 = vpop.f32.mrf.mxu0
  %v769 = vadd.f32 %v145, %v768
  %770 = vmatprep.mubr.f32.mxu0 0.0
  %771 = vmatmul.mubr.f32.gmra.mxu0 %v334
  %v772 = vpop.f32.mrf.mxu0
  %v773 = vadd.f32 %v141, %v772
  %v774 = vpop.f32.mrf.mxu0
  %v775 = vadd.f32 %v145, %v774
  %776 = vmatprep.mubr.f32.mxu0 0.0
  %777 = vmatmul.mubr.f32.gmra.mxu0 %v337
  %v778 = vpop.f32.mrf.mxu0
  %v779 = vadd.f32 %v141, %v778
  %v780 = vpop.f32.mrf.mxu0
  %v781 = vadd.f32 %v145, %v780
  %782 = vmatprep.mubr.f32.mxu0 0.0
  %783 = vmatmul.mubr.f32.gmra.mxu0 %v340
  %v784 = vpop.f32.mrf.mxu0
  %v785 = vadd.f32 %v141, %v784
  %v786 = vpop.f32.mrf.mxu0
  %v787 = vadd.f32 %v145, %v786
  %788 = vmatprep.mubr.f32.mxu0 0.0
  %789 = vmatmul.mubr.f32.gmra.mxu0 %v343
  %v790 = vpop.f32.mrf.mxu0
  %v791 = vadd.f32 %v141, %v790
  %v792 = vpop.f32.mrf.mxu0
  %v793 = vadd.f32 %v145, %v792
  %794 = vdwg.mxu0
  %795 = vmatprep.subr.mxu0 0.0
  %796 = vmatpush1.msra.mxu0 0.0
  %797 = vmatprep.subr.mxu0 0.0
  %798 = vmatpush1.msra.mxu0 0.0
  %799 = vmatprep.subr.mxu0 0.0
  %800 = vmatpush1.msra.mxu0 0.0
  %801 = vmatprep.subr.mxu0 0.0
  %802 = vmatpush1.msra.mxu0 0.0
  %803 = vmatprep.subr.mxu0 0.0
  %804 = vmatpush1.msra.mxu0 0.0
  %805 = vmatprep.subr.mxu0 0.0
  %806 = vmatpush1.msra.mxu0 0.0
  %807 = vmatprep.subr.mxu0 0.0
  %808 = vmatpush1.msra.mxu0 0.0
  %809 = vmatprep.subr.mxu0 0.0
  %810 = vmatpush1.msra.mxu0 0.0
  %811 = vmatprep.subr.mxu0 0.0
  %812 = vmatpush1.msra.mxu0 0.0
  %813 = vmatprep.subr.mxu0 0.0
  %814 = vmatpush1.msra.mxu0 0.0
  %815 = vmatprep.subr.mxu0 0.0
  %816 = vmatpush1.msra.mxu0 0.0
  %817 = vmatprep.subr.mxu0 0.0
  %818 = vmatpush1.msra.mxu0 0.0
  %819 = vmatprep.subr.mxu0 %v356
  %820 = vmatpush1.msra.mxu0 %v353
  %821 = vmatprep.subr.mxu0 %v131
  %822 = vmatpush1.msra.mxu0 %v130
  %823 = vmatprep.subr.mxu0 %v127
  %824 = vmatpush1.msra.mxu0 %v126
  %825 = vmatprep.subr.mxu0 %v123
  %826 = vmatpush1.msra.mxu0 %v122
  %827 = vmatprep.subr.mxu0 0.0
  %828 = vmatpush2.msra.mxu0 0.0
  %829 = vmatprep.subr.mxu0 0.0
  %830 = vmatpush2.msra.mxu0 0.0
  %831 = vmatprep.subr.mxu0 0.0
  %832 = vmatpush2.msra.mxu0 0.0
  %833 = vmatprep.subr.mxu0 0.0
  %834 = vmatpush2.msra.mxu0 0.0
  %835 = vmatprep.subr.mxu0 0.0
  %836 = vmatpush2.msra.mxu0 0.0
  %837 = vmatprep.subr.mxu0 0.0
  %838 = vmatpush2.msra.mxu0 0.0
  %839 = vmatprep.subr.mxu0 0.0
  %840 = vmatpush2.msra.mxu0 0.0
  %841 = vmatprep.subr.mxu0 0.0
  %842 = vmatpush2.msra.mxu0 0.0
  %843 = vmatprep.subr.mxu0 0.0
  %844 = vmatpush2.msra.mxu0 0.0
  %845 = vmatprep.subr.mxu0 0.0
  %846 = vmatpush2.msra.mxu0 0.0
  %847 = vmatprep.subr.mxu0 0.0
  %848 = vmatpush2.msra.mxu0 0.0
  %849 = vmatprep.subr.mxu0 0.0
  %850 = vmatpush2.msra.mxu0 0.0
  %851 = vmatprep.subr.mxu0 0.0
  %852 = vmatpush2.msra.mxu0 0.0
  %853 = vmatprep.subr.mxu0 0.0
  %854 = vmatpush2.msra.mxu0 0.0
  %855 = vmatprep.subr.mxu0 0.0
  %856 = vmatpush2.msra.mxu0 0.0
  %857 = vmatprep.subr.mxu0 0.0
  %858 = vmatpush2.msra.mxu0 0.0
  %859 = vmatprep.mubr.f32.mxu0 0.0
  %860 = vmatmul.mubr.f32.gmra.mxu0 %v160
  %v861 = vpop.f32.mrf.mxu0
  %v862 = vadd.f32 %v149, %v861
  %v863 = vpop.f32.mrf.mxu0
  %v864 = vadd.f32 %v153, %v863
  %865 = vmatprep.mubr.f32.mxu0 0.0
  %866 = vmatmul.mubr.f32.gmra.mxu0 %v163
  %v867 = vpop.f32.mrf.mxu0
  %v868 = vadd.f32 %v149, %v867
  %v869 = vpop.f32.mrf.mxu0
  %v870 = vadd.f32 %v153, %v869
  %871 = vmatprep.mubr.f32.mxu0 0.0
  %872 = vmatmul.mubr.f32.gmra.mxu0 %v166
  %v873 = vpop.f32.mrf.mxu0
  %v874 = vadd.f32 %v149, %v873
  %v875 = vpop.f32.mrf.mxu0
  %v876 = vadd.f32 %v153, %v875
  %877 = vmatprep.mubr.f32.mxu0 0.0
  %878 = vmatmul.mubr.f32.gmra.mxu0 %v169
  %v879 = vpop.f32.mrf.mxu0
  %v880 = vadd.f32 %v149, %v879
  %v881 = vpop.f32.mrf.mxu0
  %v882 = vadd.f32 %v153, %v881
  %883 = vmatprep.mubr.f32.mxu0 0.0
  %884 = vmatmul.mubr.f32.gmra.mxu0 %v172
  %v885 = vpop.f32.mrf.mxu0
  %v886 = vadd.f32 %v149, %v885
  %v887 = vpop.f32.mrf.mxu0
  %v888 = vadd.f32 %v153, %v887
  %889 = vmatprep.mubr.f32.mxu0 0.0
  %890 = vmatmul.mubr.f32.gmra.mxu0 %v175
  %v891 = vpop.f32.mrf.mxu0
  %v892 = vadd.f32 %v149, %v891
  %v893 = vpop.f32.mrf.mxu0
  %v894 = vadd.f32 %v153, %v893
  %895 = vmatprep.mubr.f32.mxu0 0.0
  %896 = vmatmul.mubr.f32.gmra.mxu0 %v178
  %v897 = vpop.f32.mrf.mxu0
  %v898 = vadd.f32 %v149, %v897
  %v899 = vpop.f32.mrf.mxu0
  %v900 = vadd.f32 %v153, %v899
  %901 = vmatprep.mubr.f32.mxu0 0.0
  %902 = vmatmul.mubr.f32.gmra.mxu0 %v181
  %v903 = vpop.f32.mrf.mxu0
  %v904 = vadd.f32 %v149, %v903
  %v905 = vpop.f32.mrf.mxu0
  %v906 = vadd.f32 %v153, %v905
  %907 = vmatprep.mubr.f32.mxu0 0.0
  %908 = vmatmul.mubr.f32.gmra.mxu0 %v184
  %v909 = vpop.f32.mrf.mxu0
  %v910 = vadd.f32 %v149, %v909
  %v911 = vpop.f32.mrf.mxu0
  %v912 = vadd.f32 %v153, %v911
  %913 = vmatprep.mubr.f32.mxu0 0.0
  %914 = vmatmul.mubr.f32.gmra.mxu0 %v187
  %v915 = vpop.f32.mrf.mxu0
  %v916 = vadd.f32 %v149, %v915
  %v917 = vpop.f32.mrf.mxu0
  %v918 = vadd.f32 %v153, %v917
  %919 = vmatprep.mubr.f32.mxu0 0.0
  %920 = vmatmul.mubr.f32.gmra.mxu0 %v190
  %v921 = vpop.f32.mrf.mxu0
  %v922 = vadd.f32 %v149, %v921
  %v923 = vpop.f32.mrf.mxu0
  %v924 = vadd.f32 %v153, %v923
  %925 = vmatprep.mubr.f32.mxu0 0.0
  %926 = vmatmul.mubr.f32.gmra.mxu0 %v193
  %v927 = vpop.f32.mrf.mxu0
  %v928 = vadd.f32 %v149, %v927
  %v929 = vpop.f32.mrf.mxu0
  %v930 = vadd.f32 %v153, %v929
  %931 = vmatprep.mubr.f32.mxu0 0.0
  %932 = vmatmul.mubr.f32.gmra.mxu0 %v196
  %v933 = vpop.f32.mrf.mxu0
  %v934 = vadd.f32 %v149, %v933
  %v935 = vpop.f32.mrf.mxu0
  %v936 = vadd.f32 %v153, %v935
  %937 = vmatprep.mubr.f32.mxu0 0.0
  %938 = vmatmul.mubr.f32.gmra.mxu0 %v199
  %v939 = vpop.f32.mrf.mxu0
  %v940 = vadd.f32 %v149, %v939
  %v941 = vpop.f32.mrf.mxu0
  %v942 = vadd.f32 %v153, %v941
  %943 = vmatprep.mubr.f32.mxu0 0.0
  %944 = vmatmul.mubr.f32.gmra.mxu0 %v202
  %v945 = vpop.f32.mrf.mxu0
  %v946 = vadd.f32 %v149, %v945
  %v947 = vpop.f32.mrf.mxu0
  %v948 = vadd.f32 %v153, %v947
  %949 = vmatprep.mubr.f32.mxu0 0.0
  %950 = vmatmul.mubr.f32.gmra.mxu0 %v205
  %v951 = vpop.f32.mrf.mxu0
  %v952 = vadd.f32 %v149, %v951
  %v953 = vpop.f32.mrf.mxu0
  %v954 = vadd.f32 %v153, %v953
  %955 = vmatprep.mubr.f32.mxu0 0.0
  %956 = vmatmul.mubr.f32.gmra.mxu0 %v208
  %v957 = vpop.f32.mrf.mxu0
  %v958 = vadd.f32 %v149, %v957
  %v959 = vpop.f32.mrf.mxu0
  %v960 = vadd.f32 %v153, %v959
  %961 = vmatprep.mubr.f32.mxu0 0.0
  %962 = vmatmul.mubr.f32.gmra.mxu0 %v211
  %v963 = vpop.f32.mrf.mxu0
  %v964 = vadd.f32 %v149, %v963
  %v965 = vpop.f32.mrf.mxu0
  %v966 = vadd.f32 %v153, %v965
  %967 = vmatprep.mubr.f32.mxu0 0.0
  %968 = vmatmul.mubr.f32.gmra.mxu0 %v214
  %v969 = vpop.f32.mrf.mxu0
  %v970 = vadd.f32 %v149, %v969
  %v971 = vpop.f32.mrf.mxu0
  %v972 = vadd.f32 %v153, %v971
  %973 = vmatprep.mubr.f32.mxu0 0.0
  %974 = vmatmul.mubr.f32.gmra.mxu0 %v217
  %v975 = vpop.f32.mrf.mxu0
  %v976 = vadd.f32 %v149, %v975
  %v977 = vpop.f32.mrf.mxu0
  %v978 = vadd.f32 %v153, %v977
  %979 = vmatprep.mubr.f32.mxu0 0.0
  %980 = vmatmul.mubr.f32.gmra.mxu0 %v220
  %v981 = vpop.f32.mrf.mxu0
  %v982 = vadd.f32 %v149, %v981
  %v983 = vpop.f32.mrf.mxu0
  %v984 = vadd.f32 %v153, %v983
  %985 = vmatprep.mubr.f32.mxu0 0.0
  %986 = vmatmul.mubr.f32.gmra.mxu0 %v223
  %v987 = vpop.f32.mrf.mxu0
  %v988 = vadd.f32 %v149, %v987
  %v989 = vpop.f32.mrf.mxu0
  %v990 = vadd.f32 %v153, %v989
  %991 = vmatprep.mubr.f32.mxu0 0.0
  %992 = vmatmul.mubr.f32.gmra.mxu0 %v226
  %v993 = vpop.f32.mrf.mxu0
  %v994 = vadd.f32 %v149, %v993
  %v995 = vpop.f32.mrf.mxu0
  %v996 = vadd.f32 %v153, %v995
  %997 = vmatprep.mubr.f32.mxu0 0.0
  %998 = vmatmul.mubr.f32.gmra.mxu0 %v229
  %v999 = vpop.f32.mrf.mxu0
  %v1000 = vadd.f32 %v149, %v999
  %v1001 = vpop.f32.mrf.mxu0
  %v1002 = vadd.f32 %v153, %v1001
  %1003 = vmatprep.mubr.f32.mxu0 0.0
  %1004 = vmatmul.mubr.f32.gmra.mxu0 %v232
  %v1005 = vpop.f32.mrf.mxu0
  %v1006 = vadd.f32 %v149, %v1005
  %v1007 = vpop.f32.mrf.mxu0
  %v1008 = vadd.f32 %v153, %v1007
  %1009 = vmatprep.mubr.f32.mxu0 0.0
  %1010 = vmatmul.mubr.f32.gmra.mxu0 %v235
  %v1011 = vpop.f32.mrf.mxu0
  %v1012 = vadd.f32 %v149, %v1011
  %v1013 = vpop.f32.mrf.mxu0
  %v1014 = vadd.f32 %v153, %v1013
  %1015 = vmatprep.mubr.f32.mxu0 0.0
  %1016 = vmatmul.mubr.f32.gmra.mxu0 %v238
  %v1017 = vpop.f32.mrf.mxu0
  %v1018 = vadd.f32 %v149, %v1017
  %v1019 = vpop.f32.mrf.mxu0
  %v1020 = vadd.f32 %v153, %v1019
  %1021 = vmatprep.mubr.f32.mxu0 0.0
  %1022 = vmatmul.mubr.f32.gmra.mxu0 %v241
  %v1023 = vpop.f32.mrf.mxu0
  %v1024 = vadd.f32 %v149, %v1023
  %v1025 = vpop.f32.mrf.mxu0
  %v1026 = vadd.f32 %v153, %v1025
  %1027 = vmatprep.mubr.f32.mxu0 0.0
  %1028 = vmatmul.mubr.f32.gmra.mxu0 %v244
  %v1029 = vpop.f32.mrf.mxu0
  %v1030 = vadd.f32 %v149, %v1029
  %v1031 = vpop.f32.mrf.mxu0
  %v1032 = vadd.f32 %v153, %v1031
  %1033 = vmatprep.mubr.f32.mxu0 0.0
  %1034 = vmatmul.mubr.f32.gmra.mxu0 %v247
  %v1035 = vpop.f32.mrf.mxu0
  %v1036 = vadd.f32 %v149, %v1035
  %v1037 = vpop.f32.mrf.mxu0
  %v1038 = vadd.f32 %v153, %v1037
  %1039 = vmatprep.mubr.f32.mxu0 0.0
  %1040 = vmatmul.mubr.f32.gmra.mxu0 %v250
  %v1041 = vpop.f32.mrf.mxu0
  %v1042 = vadd.f32 %v149, %v1041
  %v1043 = vpop.f32.mrf.mxu0
  %v1044 = vadd.f32 %v153, %v1043
  %1045 = vmatprep.mubr.f32.mxu0 0.0
  %1046 = vmatmul.mubr.f32.gmra.mxu0 %v253
  %v1047 = vpop.f32.mrf.mxu0
  %v1048 = vadd.f32 %v149, %v1047
  %v1049 = vpop.f32.mrf.mxu0
  %v1050 = vadd.f32 %v153, %v1049
  %1051 = vmatprep.mubr.f32.mxu0 0.0
  %1052 = vmatmul.mubr.f32.gmra.mxu0 %v256
  %v1053 = vpop.f32.mrf.mxu0
  %v1054 = vadd.f32 %v149, %v1053
  %v1055 = vpop.f32.mrf.mxu0
  %v1056 = vadd.f32 %v153, %v1055
  %1057 = vmatprep.mubr.f32.mxu0 0.0
  %1058 = vmatmul.mubr.f32.gmra.mxu0 %v259
  %v1059 = vpop.f32.mrf.mxu0
  %v1060 = vadd.f32 %v149, %v1059
  %v1061 = vpop.f32.mrf.mxu0
  %v1062 = vadd.f32 %v153, %v1061
  %1063 = vmatprep.mubr.f32.mxu0 0.0
  %1064 = vmatmul.mubr.f32.gmra.mxu0 %v262
  %v1065 = vpop.f32.mrf.mxu0
  %v1066 = vadd.f32 %v149, %v1065
  %v1067 = vpop.f32.mrf.mxu0
  %v1068 = vadd.f32 %v153, %v1067
  %1069 = vmatprep.mubr.f32.mxu0 0.0
  %1070 = vmatmul.mubr.f32.gmra.mxu0 %v265
  %v1071 = vpop.f32.mrf.mxu0
  %v1072 = vadd.f32 %v149, %v1071
  %v1073 = vpop.f32.mrf.mxu0
  %v1074 = vadd.f32 %v153, %v1073
  %1075 = vmatprep.mubr.f32.mxu0 0.0
  %1076 = vmatmul.mubr.f32.gmra.mxu0 %v268
  %v1077 = vpop.f32.mrf.mxu0
  %v1078 = vadd.f32 %v149, %v1077
  %v1079 = vpop.f32.mrf.mxu0
  %v1080 = vadd.f32 %v153, %v1079
  %1081 = vmatprep.mubr.f32.mxu0 0.0
  %1082 = vmatmul.mubr.f32.gmra.mxu0 %v271
  %v1083 = vpop.f32.mrf.mxu0
  %v1084 = vadd.f32 %v149, %v1083
  %v1085 = vpop.f32.mrf.mxu0
  %v1086 = vadd.f32 %v153, %v1085
  %1087 = vmatprep.mubr.f32.mxu0 0.0
  %1088 = vmatmul.mubr.f32.gmra.mxu0 %v274
  %v1089 = vpop.f32.mrf.mxu0
  %v1090 = vadd.f32 %v149, %v1089
  %v1091 = vpop.f32.mrf.mxu0
  %v1092 = vadd.f32 %v153, %v1091
  %1093 = vmatprep.mubr.f32.mxu0 0.0
  %1094 = vmatmul.mubr.f32.gmra.mxu0 %v277
  %v1095 = vpop.f32.mrf.mxu0
  %v1096 = vadd.f32 %v149, %v1095
  %v1097 = vpop.f32.mrf.mxu0
  %v1098 = vadd.f32 %v153, %v1097
  %1099 = vmatprep.mubr.f32.mxu0 0.0
  %1100 = vmatmul.mubr.f32.gmra.mxu0 %v280
  %v1101 = vpop.f32.mrf.mxu0
  %v1102 = vadd.f32 %v149, %v1101
  %v1103 = vpop.f32.mrf.mxu0
  %v1104 = vadd.f32 %v153, %v1103
  %1105 = vmatprep.mubr.f32.mxu0 0.0
  %1106 = vmatmul.mubr.f32.gmra.mxu0 %v283
  %v1107 = vpop.f32.mrf.mxu0
  %v1108 = vadd.f32 %v149, %v1107
  %v1109 = vpop.f32.mrf.mxu0
  %v1110 = vadd.f32 %v153, %v1109
  %1111 = vmatprep.mubr.f32.mxu0 0.0
  %1112 = vmatmul.mubr.f32.gmra.mxu0 %v286
  %v1113 = vpop.f32.mrf.mxu0
  %v1114 = vadd.f32 %v149, %v1113
  %v1115 = vpop.f32.mrf.mxu0
  %v1116 = vadd.f32 %v153, %v1115
  %1117 = vmatprep.mubr.f32.mxu0 0.0
  %1118 = vmatmul.mubr.f32.gmra.mxu0 %v289
  %v1119 = vpop.f32.mrf.mxu0
  %v1120 = vadd.f32 %v149, %v1119
  %v1121 = vpop.f32.mrf.mxu0
  %v1122 = vadd.f32 %v153, %v1121
  %1123 = vmatprep.mubr.f32.mxu0 0.0
  %1124 = vmatmul.mubr.f32.gmra.mxu0 %v292
  %v1125 = vpop.f32.mrf.mxu0
  %v1126 = vadd.f32 %v149, %v1125
  %v1127 = vpop.f32.mrf.mxu0
  %v1128 = vadd.f32 %v153, %v1127
  %1129 = vmatprep.mubr.f32.mxu0 0.0
  %1130 = vmatmul.mubr.f32.gmra.mxu0 %v295
  %v1131 = vpop.f32.mrf.mxu0
  %v1132 = vadd.f32 %v149, %v1131
  %v1133 = vpop.f32.mrf.mxu0
  %v1134 = vadd.f32 %v153, %v1133
  %1135 = vmatprep.mubr.f32.mxu0 0.0
  %1136 = vmatmul.mubr.f32.gmra.mxu0 %v298
  %v1137 = vpop.f32.mrf.mxu0
  %v1138 = vadd.f32 %v149, %v1137
  %v1139 = vpop.f32.mrf.mxu0
  %v1140 = vadd.f32 %v153, %v1139
  %1141 = vmatprep.mubr.f32.mxu0 0.0
  %1142 = vmatmul.mubr.f32.gmra.mxu0 %v301
  %v1143 = vpop.f32.mrf.mxu0
  %v1144 = vadd.f32 %v149, %v1143
  %v1145 = vpop.f32.mrf.mxu0
  %v1146 = vadd.f32 %v153, %v1145
  %1147 = vmatprep.mubr.f32.mxu0 0.0
  %1148 = vmatmul.mubr.f32.gmra.mxu0 %v304
  %v1149 = vpop.f32.mrf.mxu0
  %v1150 = vadd.f32 %v149, %v1149
  %v1151 = vpop.f32.mrf.mxu0
  %v1152 = vadd.f32 %v153, %v1151
  %1153 = vmatprep.mubr.f32.mxu0 0.0
  %1154 = vmatmul.mubr.f32.gmra.mxu0 %v307
  %v1155 = vpop.f32.mrf.mxu0
  %v1156 = vadd.f32 %v149, %v1155
  %v1157 = vpop.f32.mrf.mxu0
  %v1158 = vadd.f32 %v153, %v1157
  %1159 = vmatprep.mubr.f32.mxu0 0.0
  %1160 = vmatmul.mubr.f32.gmra.mxu0 %v310
  %v1161 = vpop.f32.mrf.mxu0
  %v1162 = vadd.f32 %v149, %v1161
  %v1163 = vpop.f32.mrf.mxu0
  %v1164 = vadd.f32 %v153, %v1163
  %1165 = vmatprep.mubr.f32.mxu0 0.0
  %1166 = vmatmul.mubr.f32.gmra.mxu0 %v313
  %v1167 = vpop.f32.mrf.mxu0
  %v1168 = vadd.f32 %v149, %v1167
  %v1169 = vpop.f32.mrf.mxu0
  %v1170 = vadd.f32 %v153, %v1169
  %1171 = vmatprep.mubr.f32.mxu0 0.0
  %1172 = vmatmul.mubr.f32.gmra.mxu0 %v316
  %v1173 = vpop.f32.mrf.mxu0
  %v1174 = vadd.f32 %v149, %v1173
  %v1175 = vpop.f32.mrf.mxu0
  %v1176 = vadd.f32 %v153, %v1175
  %1177 = vmatprep.mubr.f32.mxu0 0.0
  %1178 = vmatmul.mubr.f32.gmra.mxu0 %v319
  %v1179 = vpop.f32.mrf.mxu0
  %v1180 = vadd.f32 %v149, %v1179
  %v1181 = vpop.f32.mrf.mxu0
  %v1182 = vadd.f32 %v153, %v1181
  %1183 = vmatprep.mubr.f32.mxu0 0.0
  %1184 = vmatmul.mubr.f32.gmra.mxu0 %v322
  %v1185 = vpop.f32.mrf.mxu0
  %v1186 = vadd.f32 %v149, %v1185
  %v1187 = vpop.f32.mrf.mxu0
  %v1188 = vadd.f32 %v153, %v1187
  %1189 = vmatprep.mubr.f32.mxu0 0.0
  %1190 = vmatmul.mubr.f32.gmra.mxu0 %v325
  %v1191 = vpop.f32.mrf.mxu0
  %v1192 = vadd.f32 %v149, %v1191
  %v1193 = vpop.f32.mrf.mxu0
  %v1194 = vadd.f32 %v153, %v1193
  %1195 = vmatprep.mubr.f32.mxu0 0.0
  %1196 = vmatmul.mubr.f32.gmra.mxu0 %v328
  %v1197 = vpop.f32.mrf.mxu0
  %v1198 = vadd.f32 %v149, %v1197
  %v1199 = vpop.f32.mrf.mxu0
  %v1200 = vadd.f32 %v153, %v1199
  %1201 = vmatprep.mubr.f32.mxu0 0.0
  %1202 = vmatmul.mubr.f32.gmra.mxu0 %v331
  %v1203 = vpop.f32.mrf.mxu0
  %v1204 = vadd.f32 %v149, %v1203
  %v1205 = vpop.f32.mrf.mxu0
  %v1206 = vadd.f32 %v153, %v1205
  %1207 = vmatprep.mubr.f32.mxu0 0.0
  %1208 = vmatmul.mubr.f32.gmra.mxu0 %v334
  %v1209 = vpop.f32.mrf.mxu0
  %v1210 = vadd.f32 %v149, %v1209
  %v1211 = vpop.f32.mrf.mxu0
  %v1212 = vadd.f32 %v153, %v1211
  %1213 = vmatprep.mubr.f32.mxu0 0.0
  %1214 = vmatmul.mubr.f32.gmra.mxu0 %v337
  %v1215 = vpop.f32.mrf.mxu0
  %v1216 = vadd.f32 %v149, %v1215
  %v1217 = vpop.f32.mrf.mxu0
  %v1218 = vadd.f32 %v153, %v1217
  %1219 = vmatprep.mubr.f32.mxu0 0.0
  %1220 = vmatmul.mubr.f32.gmra.mxu0 %v340
  %v1221 = vpop.f32.mrf.mxu0
  %v1222 = vadd.f32 %v149, %v1221
  %v1223 = vpop.f32.mrf.mxu0
  %v1224 = vadd.f32 %v153, %v1223
  %1225 = vmatprep.mubr.f32.mxu0 0.0
  %1226 = vmatmul.mubr.f32.gmra.mxu0 %v343
  %v1227 = vpop.f32.mrf.mxu0
  %v1228 = vadd.f32 %v149, %v1227
  %v1229 = vpop.f32.mrf.mxu0
  %v1230 = vadd.f32 %v153, %v1229
  %1231 = vdwg.mxu0
  %v1232 = vmax.f32 %v425, 0.0
  %v1233 = vmax.f32 %v427, 0.0
  %v1234 = vmax.f32 %v862, 0.0
  %v1235 = vmax.f32 %v864, 0.0
  %v1236 = vmax.f32 %v431, 0.0
  %v1237 = vmax.f32 %v433, 0.0
  %v1238 = vmax.f32 %v868, 0.0
  %v1239 = vmax.f32 %v870, 0.0
  %v1240 = vmax.f32 %v437, 0.0
  %v1241 = vmax.f32 %v439, 0.0
  %v1242 = vmax.f32 %v874, 0.0
  %v1243 = vmax.f32 %v876, 0.0
  %v1244 = vmax.f32 %v443, 0.0
  %v1245 = vmax.f32 %v445, 0.0
  %v1246 = vmax.f32 %v880, 0.0
  %v1247 = vmax.f32 %v882, 0.0
  %v1248 = vmax.f32 %v449, 0.0
  %v1249 = vmax.f32 %v451, 0.0
  %v1250 = vmax.f32 %v886, 0.0
  %v1251 = vmax.f32 %v888, 0.0
  %v1252 = vmax.f32 %v455, 0.0
  %v1253 = vmax.f32 %v457, 0.0
  %v1254 = vmax.f32 %v892, 0.0
  %v1255 = vmax.f32 %v894, 0.0
  %v1256 = vmax.f32 %v461, 0.0
  %v1257 = vmax.f32 %v463, 0.0
  %v1258 = vmax.f32 %v898, 0.0
  %v1259 = vmax.f32 %v900, 0.0
  %v1260 = vmax.f32 %v467, 0.0
  %v1261 = vmax.f32 %v469, 0.0
  %v1262 = vmax.f32 %v904, 0.0
  %v1263 = vmax.f32 %v906, 0.0
  %v1264 = vmax.f32 %v473, 0.0
  %v1265 = vmax.f32 %v475, 0.0
  %v1266 = vmax.f32 %v910, 0.0
  %v1267 = vmax.f32 %v912, 0.0
  %v1268 = vmax.f32 %v479, 0.0
  %v1269 = vmax.f32 %v481, 0.0
  %v1270 = vmax.f32 %v916, 0.0
  %v1271 = vmax.f32 %v918, 0.0
  %v1272 = vmax.f32 %v485, 0.0
  %v1273 = vmax.f32 %v487, 0.0
  %v1274 = vmax.f32 %v922, 0.0
  %v1275 = vmax.f32 %v924, 0.0
  %v1276 = vmax.f32 %v491, 0.0
  %v1277 = vmax.f32 %v493, 0.0
  %v1278 = vmax.f32 %v928, 0.0
  %v1279 = vmax.f32 %v930, 0.0
  %v1280 = vmax.f32 %v497, 0.0
  %v1281 = vmax.f32 %v499, 0.0
  %v1282 = vmax.f32 %v934, 0.0
  %v1283 = vmax.f32 %v936, 0.0
  %v1284 = vmax.f32 %v503, 0.0
  %v1285 = vmax.f32 %v505, 0.0
  %v1286 = vmax.f32 %v940, 0.0
  %v1287 = vmax.f32 %v942, 0.0
  %v1288 = vmax.f32 %v509, 0.0
  %v1289 = vmax.f32 %v511, 0.0
  %v1290 = vmax.f32 %v946, 0.0
  %v1291 = vmax.f32 %v948, 0.0
  %v1292 = vmax.f32 %v515, 0.0
  %v1293 = vmax.f32 %v517, 0.0
  %v1294 = vmax.f32 %v952, 0.0
  %v1295 = vmax.f32 %v954, 0.0
  %v1296 = vmax.f32 %v521, 0.0
  %v1297 = vmax.f32 %v523, 0.0
  %v1298 = vmax.f32 %v958, 0.0
  %v1299 = vmax.f32 %v960, 0.0
  %v1300 = vmax.f32 %v527, 0.0
  %v1301 = vmax.f32 %v529, 0.0
  %v1302 = vmax.f32 %v964, 0.0
  %v1303 = vmax.f32 %v966, 0.0
  %v1304 = vmax.f32 %v533, 0.0
  %v1305 = vmax.f32 %v535, 0.0
  %v1306 = vmax.f32 %v970, 0.0
  %v1307 = vmax.f32 %v972, 0.0
  %v1308 = vmax.f32 %v539, 0.0
  %v1309 = vmax.f32 %v541, 0.0
  %v1310 = vmax.f32 %v976, 0.0
  %v1311 = vmax.f32 %v978, 0.0
  %v1312 = vmax.f32 %v545, 0.0
  %v1313 = vmax.f32 %v547, 0.0
  %v1314 = vmax.f32 %v982, 0.0
  %v1315 = vmax.f32 %v984, 0.0
  %v1316 = vmax.f32 %v551, 0.0
  %v1317 = vmax.f32 %v553, 0.0
  %v1318 = vmax.f32 %v988, 0.0
  %v1319 = vmax.f32 %v990, 0.0
  %v1320 = vmax.f32 %v557, 0.0
  %v1321 = vmax.f32 %v559, 0.0
  %v1322 = vmax.f32 %v994, 0.0
  %v1323 = vmax.f32 %v996, 0.0
  %v1324 = vmax.f32 %v563, 0.0
  %v1325 = vmax.f32 %v565, 0.0
  %v1326 = vmax.f32 %v1000, 0.0
  %v1327 = vmax.f32 %v1002, 0.0
  %v1328 = vmax.f32 %v569, 0.0
  %v1329 = vmax.f32 %v571, 0.0
  %v1330 = vmax.f32 %v1006, 0.0
  %v1331 = vmax.f32 %v1008, 0.0
  %v1332 = vmax.f32 %v575, 0.0
  %v1333 = vmax.f32 %v577, 0.0
  %v1334 = vmax.f32 %v1012, 0.0
  %v1335 = vmax.f32 %v1014, 0.0
  %v1336 = vmax.f32 %v581, 0.0
  %v1337 = vmax.f32 %v583, 0.0
  %v1338 = vmax.f32 %v1018, 0.0
  %v1339 = vmax.f32 %v1020, 0.0
  %v1340 = vmax.f32 %v587, 0.0
  %v1341 = vmax.f32 %v589, 0.0
  %v1342 = vmax.f32 %v1024, 0.0
  %v1343 = vmax.f32 %v1026, 0.0
  %v1344 = vmax.f32 %v593, 0.0
  %v1345 = vmax.f32 %v595, 0.0
  %v1346 = vmax.f32 %v1030, 0.0
  %v1347 = vmax.f32 %v1032, 0.0
  %v1348 = vmax.f32 %v599, 0.0
  %v1349 = vmax.f32 %v601, 0.0
  %v1350 = vmax.f32 %v1036, 0.0
  %v1351 = vmax.f32 %v1038, 0.0
  %v1352 = vmax.f32 %v605, 0.0
  %v1353 = vmax.f32 %v607, 0.0
  %v1354 = vmax.f32 %v1042, 0.0
  %v1355 = vmax.f32 %v1044, 0.0
  %v1356 = vmax.f32 %v611, 0.0
  %v1357 = vmax.f32 %v613, 0.0
  %v1358 = vmax.f32 %v1048, 0.0
  %v1359 = vmax.f32 %v1050, 0.0
  %v1360 = vmax.f32 %v617, 0.0
  %v1361 = vmax.f32 %v619, 0.0
  %v1362 = vmax.f32 %v1054, 0.0
  %v1363 = vmax.f32 %v1056, 0.0
  %v1364 = vmax.f32 %v623, 0.0
  %v1365 = vmax.f32 %v625, 0.0
  %v1366 = vmax.f32 %v1060, 0.0
  %v1367 = vmax.f32 %v1062, 0.0
  %v1368 = vmax.f32 %v629, 0.0
  %v1369 = vmax.f32 %v631, 0.0
  %v1370 = vmax.f32 %v1066, 0.0
  %v1371 = vmax.f32 %v1068, 0.0
  %v1372 = vmax.f32 %v635, 0.0
  %v1373 = vmax.f32 %v637, 0.0
  %v1374 = vmax.f32 %v1072, 0.0
  %v1375 = vmax.f32 %v1074, 0.0
  %v1376 = vmax.f32 %v641, 0.0
  %v1377 = vmax.f32 %v643, 0.0
  %v1378 = vmax.f32 %v1078, 0.0
  %v1379 = vmax.f32 %v1080, 0.0
  %v1380 = vmax.f32 %v647, 0.0
  %v1381 = vmax.f32 %v649, 0.0
  %v1382 = vmax.f32 %v1084, 0.0
  %v1383 = vmax.f32 %v1086, 0.0
  %v1384 = vmax.f32 %v653, 0.0
  %v1385 = vmax.f32 %v655, 0.0
  %v1386 = vmax.f32 %v1090, 0.0
  %v1387 = vmax.f32 %v1092, 0.0
  %v1388 = vmax.f32 %v659, 0.0
  %v1389 = vmax.f32 %v661, 0.0
  %v1390 = vmax.f32 %v1096, 0.0
  %v1391 = vmax.f32 %v1098, 0.0
  %v1392 = vmax.f32 %v665, 0.0
  %v1393 = vmax.f32 %v667, 0.0
  %v1394 = vmax.f32 %v1102, 0.0
  %v1395 = vmax.f32 %v1104, 0.0
  %v1396 = vmax.f32 %v671, 0.0
  %v1397 = vmax.f32 %v673, 0.0
  %v1398 = vmax.f32 %v1108, 0.0
  %v1399 = vmax.f32 %v1110, 0.0
  %v1400 = vmax.f32 %v677, 0.0
  %v1401 = vmax.f32 %v679, 0.0
  %v1402 = vmax.f32 %v1114, 0.0
  %v1403 = vmax.f32 %v1116, 0.0
  %v1404 = vmax.f32 %v683, 0.0
  %v1405 = vmax.f32 %v685, 0.0
  %v1406 = vmax.f32 %v1120, 0.0
  %v1407 = vmax.f32 %v1122, 0.0
  %v1408 = vmax.f32 %v689, 0.0
  %v1409 = vmax.f32 %v691, 0.0
  %v1410 = vmax.f32 %v1126, 0.0
  %v1411 = vmax.f32 %v1128, 0.0
  %v1412 = vmax.f32 %v695, 0.0
  %v1413 = vmax.f32 %v697, 0.0
  %v1414 = vmax.f32 %v1132, 0.0
  %v1415 = vmax.f32 %v1134, 0.0
  %v1416 = vmax.f32 %v701, 0.0
  %v1417 = vmax.f32 %v703, 0.0
  %v1418 = vmax.f32 %v1138, 0.0
  %v1419 = vmax.f32 %v1140, 0.0
  %v1420 = vmax.f32 %v707, 0.0
  %v1421 = vmax.f32 %v709, 0.0
  %v1422 = vmax.f32 %v1144, 0.0
  %v1423 = vmax.f32 %v1146, 0.0
  %v1424 = vmax.f32 %v713, 0.0
  %v1425 = vmax.f32 %v715, 0.0
  %v1426 = vmax.f32 %v1150, 0.0
  %v1427 = vmax.f32 %v1152, 0.0
  %v1428 = vmax.f32 %v719, 0.0
  %v1429 = vmax.f32 %v721, 0.0
  %v1430 = vmax.f32 %v1156, 0.0
  %v1431 = vmax.f32 %v1158, 0.0
  %v1432 = vmax.f32 %v725, 0.0
  %v1433 = vmax.f32 %v727, 0.0
  %v1434 = vmax.f32 %v1162, 0.0
  %v1435 = vmax.f32 %v1164, 0.0
  %v1436 = vmax.f32 %v731, 0.0
  %v1437 = vmax.f32 %v733, 0.0
  %v1438 = vmax.f32 %v1168, 0.0
  %v1439 = vmax.f32 %v1170, 0.0
  %v1440 = vmax.f32 %v737, 0.0
  %v1441 = vmax.f32 %v739, 0.0
  %v1442 = vmax.f32 %v1174, 0.0
  %v1443 = vmax.f32 %v1176, 0.0
  %v1444 = vmax.f32 %v743, 0.0
  %v1445 = vmax.f32 %v745, 0.0
  %v1446 = vmax.f32 %v1180, 0.0
  %v1447 = vmax.f32 %v1182, 0.0
  %v1448 = vmax.f32 %v749, 0.0
  %v1449 = vmax.f32 %v751, 0.0
  %v1450 = vmax.f32 %v1186, 0.0
  %v1451 = vmax.f32 %v1188, 0.0
  %v1452 = vmax.f32 %v755, 0.0
  %v1453 = vmax.f32 %v757, 0.0
  %v1454 = vmax.f32 %v1192, 0.0
  %v1455 = vmax.f32 %v1194, 0.0
  %v1456 = vmax.f32 %v761, 0.0
  %v1457 = vmax.f32 %v763, 0.0
  %v1458 = vmax.f32 %v1198, 0.0
  %v1459 = vmax.f32 %v1200, 0.0
  %v1460 = vmax.f32 %v767, 0.0
  %v1461 = vmax.f32 %v769, 0.0
  %v1462 = vmax.f32 %v1204, 0.0
  %v1463 = vmax.f32 %v1206, 0.0
  %v1464 = vmax.f32 %v773, 0.0
  %v1465 = vmax.f32 %v775, 0.0
  %v1466 = vmax.f32 %v1210, 0.0
  %v1467 = vmax.f32 %v1212, 0.0
  %v1468 = vmax.f32 %v779, 0.0
  %v1469 = vmax.f32 %v781, 0.0
  %v1470 = vmax.f32 %v1216, 0.0
  %v1471 = vmax.f32 %v1218, 0.0
  %v1472 = vmax.f32 %v785, 0.0
  %v1473 = vmax.f32 %v787, 0.0
  %v1474 = vmax.f32 %v1222, 0.0
  %v1475 = vmax.f32 %v1224, 0.0
  %v1476 = vmax.f32 %v791, 0.0
  %v1477 = vmax.f32 %v793, 0.0
  %v1478 = vmax.f32 %v1228, 0.0
  %v1479 = vmax.f32 %v1230, 0.0
  %v1480 = vld [vmem:[%s2] sm:$0x3]
  %v1481 = vld [vmem:[%s8] sm:$0xff]
  %v1482 = vld [vmem:[%s8 + $0x8] sm:$0xff]
  %v1483 = vld [vmem:[%s8 + $0x10] sm:$0xff]
  %v1484 = vld [vmem:[%s8 + $0x18] sm:$0xff]
  %v1485 = vld [vmem:[%s8 + $0x20] sm:$0xff]
  %v1486 = vld [vmem:[%s8 + $0x28] sm:$0xff]
  %v1487 = vld [vmem:[%s8 + $0x30] sm:$0xff]
  %v1488 = vld [vmem:[%s8 + $0x38] sm:$0xff]
  %v1489 = vld [vmem:[%s8 + $0x40] sm:$0xff]
  %v1490 = vld [vmem:[%s8 + $0x48] sm:$0xff]
  %v1491 = vld [vmem:[%s8 + $0x50] sm:$0xff]
  %v1492 = vld [vmem:[%s8 + $0x58] sm:$0xff]
  %v1493 = vld [vmem:[%s8 + $0x60] sm:$0xff]
  %v1494 = vld [vmem:[%s8 + $0x68] sm:$0xff]
  %v1495 = vld [vmem:[%s8 + $0x70] sm:$0xff]
  %v1496 = vld [vmem:[%s8 + $0x78] sm:$0xff]
  %v1497 = vld [vmem:[%s8 + $0x80] sm:$0xff]
  %v1498 = vld [vmem:[%s8 + $0x88] sm:$0xff]
  %v1499 = vld [vmem:[%s8 + $0x90] sm:$0xff]
  %v1500 = vld [vmem:[%s8 + $0x98] sm:$0xff]
  %v1501 = vld [vmem:[%s8 + $0xa0] sm:$0xff]
  %v1502 = vld [vmem:[%s8 + $0xa8] sm:$0xff]
  %v1503 = vld [vmem:[%s8 + $0xb0] sm:$0xff]
  %v1504 = vld [vmem:[%s8 + $0xb8] sm:$0xff]
  %v1505 = vld [vmem:[%s8 + $0xc0] sm:$0xff]
  %v1506 = vld [vmem:[%s8 + $0xc8] sm:$0xff]
  %v1507 = vld [vmem:[%s8 + $0xd0] sm:$0xff]
  %v1508 = vld [vmem:[%s8 + $0xd8] sm:$0xff]
  %v1509 = vld [vmem:[%s8 + $0xe0] sm:$0xff]
  %v1510 = vld [vmem:[%s8 + $0xe8] sm:$0xff]
  %v1511 = vld [vmem:[%s8 + $0xf0] sm:$0xff]
  %v1512 = vld [vmem:[%s8 + $0xf8] sm:$0xff]
  %v1513 = vld [vmem:[%s9] sm:$0xf]
  %v1515 = vlaneseq
  %v1516 = vshrl.u32 %v1515, 7
  %v1517 = vsub.s32 0, %v1516
  %v1518 = vrot.slane %v1513, %v1517
  %v1519 = vlaneseq
  %v1520 = vshrl.u32 %v1519, 7
  %v1521 = vsub.s32 1, %v1520
  %v1522 = vrot.slane %v1513, %v1521
  %v1523 = vlaneseq
  %v1524 = vshrl.u32 %v1523, 7
  %v1525 = vsub.s32 2, %v1524
  %v1526 = vrot.slane %v1513, %v1525
  %v1527 = vlaneseq
  %v1528 = vshrl.u32 %v1527, 7
  %v1529 = vsub.s32 3, %v1528
  %v1530 = vrot.slane %v1513, %v1529
  %vm1535 = vcmask 523264
  %v1537 = vsel %vm1535, %v1480, 0
  %1539 = vmatprep.subr.mxu0 0.0
  %1540 = vmatpush1.msra.mxu0 0.0
  %1541 = vmatprep.subr.mxu0 0.0
  %1542 = vmatpush1.msra.mxu0 0.0
  %1543 = vmatprep.subr.mxu0 0.0
  %1544 = vmatpush1.msra.mxu0 0.0
  %1545 = vmatprep.subr.mxu0 0.0
  %1546 = vmatpush1.msra.mxu0 0.0
  %1547 = vmatprep.subr.mxu0 0.0
  %1548 = vmatpush1.msra.mxu0 0.0
  %1549 = vmatprep.subr.mxu0 0.0
  %1550 = vmatpush1.msra.mxu0 0.0
  %1551 = vmatprep.subr.mxu0 0.0
  %1552 = vmatpush1.msra.mxu0 0.0
  %1553 = vmatprep.subr.mxu0 0.0
  %1554 = vmatpush1.msra.mxu0 0.0
  %1555 = vmatprep.subr.mxu0 %v1510
  %1556 = vmatpush1.msra.mxu0 %v1509
  %1557 = vmatprep.subr.mxu0 %v1506
  %1558 = vmatpush1.msra.mxu0 %v1505
  %1559 = vmatprep.subr.mxu0 %v1502
  %1560 = vmatpush1.msra.mxu0 %v1501
  %1561 = vmatprep.subr.mxu0 %v1498
  %1562 = vmatpush1.msra.mxu0 %v1497
  %1563 = vmatprep.subr.mxu0 %v1494
  %1564 = vmatpush1.msra.mxu0 %v1493
  %1565 = vmatprep.subr.mxu0 %v1490
  %1566 = vmatpush1.msra.mxu0 %v1489
  %1567 = vmatprep.subr.mxu0 %v1486
  %1568 = vmatpush1.msra.mxu0 %v1485
  %1569 = vmatprep.subr.mxu0 %v1482
  %1570 = vmatpush1.msra.mxu0 %v1481
  %1571 = vmatprep.subr.mxu0 0.0
  %1572 = vmatpush2.msra.mxu0 0.0
  %1573 = vmatprep.subr.mxu0 0.0
  %1574 = vmatpush2.msra.mxu0 0.0
  %1575 = vmatprep.subr.mxu0 0.0
  %1576 = vmatpush2.msra.mxu0 0.0
  %1577 = vmatprep.subr.mxu0 0.0
  %1578 = vmatpush2.msra.mxu0 0.0
  %1579 = vmatprep.subr.mxu0 0.0
  %1580 = vmatpush2.msra.mxu0 0.0
  %1581 = vmatprep.subr.mxu0 0.0
  %1582 = vmatpush2.msra.mxu0 0.0
  %1583 = vmatprep.subr.mxu0 0.0
  %1584 = vmatpush2.msra.mxu0 0.0
  %1585 = vmatprep.subr.mxu0 0.0
  %1586 = vmatpush2.msra.mxu0 0.0
  %1587 = vmatprep.subr.mxu0 0.0
  %1588 = vmatpush2.msra.mxu0 0.0
  %1589 = vmatprep.subr.mxu0 0.0
  %1590 = vmatpush2.msra.mxu0 0.0
  %1591 = vmatprep.subr.mxu0 0.0
  %1592 = vmatpush2.msra.mxu0 0.0
  %1593 = vmatprep.subr.mxu0 0.0
  %1594 = vmatpush2.msra.mxu0 0.0
  %1595 = vmatprep.subr.mxu0 0.0
  %1596 = vmatpush2.msra.mxu0 0.0
  %1597 = vmatprep.subr.mxu0 0.0
  %1598 = vmatpush2.msra.mxu0 0.0
  %1599 = vmatprep.subr.mxu0 0.0
  %1600 = vmatpush2.msra.mxu0 0.0
  %1601 = vmatprep.subr.mxu0 0.0
  %1602 = vmatpush2.msra.mxu0 0.0
  %1603 = vmatprep.mubr.f32.mxu0 0.0
  %1604 = vmatmul.mubr.f32.gmra.mxu0 %v1537
  %v1605 = vpop.f32.mrf.mxu0
  %v1606 = vadd.f32 %v1518, %v1605
  %v1607 = vpop.f32.mrf.mxu0
  %v1608 = vadd.f32 %v1522, %v1607
  %1609 = vdwg.mxu0
  %1610 = vmatprep.subr.mxu0 0.0
  %1611 = vmatpush1.msra.mxu0 0.0
  %1612 = vmatprep.subr.mxu0 0.0
  %1613 = vmatpush1.msra.mxu0 0.0
  %1614 = vmatprep.subr.mxu0 0.0
  %1615 = vmatpush1.msra.mxu0 0.0
  %1616 = vmatprep.subr.mxu0 0.0
  %1617 = vmatpush1.msra.mxu0 0.0
  %1618 = vmatprep.subr.mxu0 0.0
  %1619 = vmatpush1.msra.mxu0 0.0
  %1620 = vmatprep.subr.mxu0 0.0
  %1621 = vmatpush1.msra.mxu0 0.0
  %1622 = vmatprep.subr.mxu0 0.0
  %1623 = vmatpush1.msra.mxu0 0.0
  %1624 = vmatprep.subr.mxu0 0.0
  %1625 = vmatpush1.msra.mxu0 0.0
  %1626 = vmatprep.subr.mxu0 %v1512
  %1627 = vmatpush1.msra.mxu0 %v1511
  %1628 = vmatprep.subr.mxu0 %v1508
  %1629 = vmatpush1.msra.mxu0 %v1507
  %1630 = vmatprep.subr.mxu0 %v1504
  %1631 = vmatpush1.msra.mxu0 %v1503
  %1632 = vmatprep.subr.mxu0 %v1500
  %1633 = vmatpush1.msra.mxu0 %v1499
  %1634 = vmatprep.subr.mxu0 %v1496
  %1635 = vmatpush1.msra.mxu0 %v1495
  %1636 = vmatprep.subr.mxu0 %v1492
  %1637 = vmatpush1.msra.mxu0 %v1491
  %1638 = vmatprep.subr.mxu0 %v1488
  %1639 = vmatpush1.msra.mxu0 %v1487
  %1640 = vmatprep.subr.mxu0 %v1484
  %1641 = vmatpush1.msra.mxu0 %v1483
  %1642 = vmatprep.subr.mxu0 0.0
  %1643 = vmatpush2.msra.mxu0 0.0
  %1644 = vmatprep.subr.mxu0 0.0
  %1645 = vmatpush2.msra.mxu0 0.0
  %1646 = vmatprep.subr.mxu0 0.0
  %1647 = vmatpush2.msra.mxu0 0.0
  %1648 = vmatprep.subr.mxu0 0.0
  %1649 = vmatpush2.msra.mxu0 0.0
  %1650 = vmatprep.subr.mxu0 0.0
  %1651 = vmatpush2.msra.mxu0 0.0
  %1652 = vmatprep.subr.mxu0 0.0
  %1653 = vmatpush2.msra.mxu0 0.0
  %1654 = vmatprep.subr.mxu0 0.0
  %1655 = vmatpush2.msra.mxu0 0.0
  %1656 = vmatprep.subr.mxu0 0.0
  %1657 = vmatpush2.msra.mxu0 0.0
  %1658 = vmatprep.subr.mxu0 0.0
  %1659 = vmatpush2.msra.mxu0 0.0
  %1660 = vmatprep.subr.mxu0 0.0
  %1661 = vmatpush2.msra.mxu0 0.0
  %1662 = vmatprep.subr.mxu0 0.0
  %1663 = vmatpush2.msra.mxu0 0.0
  %1664 = vmatprep.subr.mxu0 0.0
  %1665 = vmatpush2.msra.mxu0 0.0
  %1666 = vmatprep.subr.mxu0 0.0
  %1667 = vmatpush2.msra.mxu0 0.0
  %1668 = vmatprep.subr.mxu0 0.0
  %1669 = vmatpush2.msra.mxu0 0.0
  %1670 = vmatprep.subr.mxu0 0.0
  %1671 = vmatpush2.msra.mxu0 0.0
  %1672 = vmatprep.subr.mxu0 0.0
  %1673 = vmatpush2.msra.mxu0 0.0
  %1674 = vmatprep.mubr.f32.mxu0 0.0
  %1675 = vmatmul.mubr.f32.gmra.mxu0 %v1537
  %v1676 = vpop.f32.mrf.mxu0
  %v1677 = vadd.f32 %v1526, %v1676
  %v1678 = vpop.f32.mrf.mxu0
  %v1679 = vadd.f32 %v1530, %v1678
  %1680 = vdwg.mxu0
  %v1681 = vld [vmem:[%s6] sm:$0xff]
  %v1682 = vld [vmem:[%s6 + $0x8] sm:$0xff]
  %v1683 = vld [vmem:[%s6 + $0x10] sm:$0xff]
  %v1684 = vld [vmem:[%s6 + $0x18] sm:$0xff]
  %v1685 = vld [vmem:[%s6 + $0x20] sm:$0xff]
  %v1686 = vld [vmem:[%s6 + $0x28] sm:$0xff]
  %v1687 = vld [vmem:[%s6 + $0x30] sm:$0xff]
  %v1688 = vld [vmem:[%s6 + $0x38] sm:$0xff]
  %v1689 = vld [vmem:[%s6 + $0x40] sm:$0xff]
  %v1690 = vld [vmem:[%s6 + $0x48] sm:$0xff]
  %v1691 = vld [vmem:[%s6 + $0x50] sm:$0xff]
  %v1692 = vld [vmem:[%s6 + $0x58] sm:$0xff]
  %v1693 = vld [vmem:[%s6 + $0x60] sm:$0xff]
  %v1694 = vld [vmem:[%s6 + $0x68] sm:$0xff]
  %v1695 = vld [vmem:[%s6 + $0x70] sm:$0xff]
  %v1696 = vld [vmem:[%s6 + $0x78] sm:$0xff]
  %v1697 = vld [vmem:[%s6 + $0x80] sm:$0xff]
  %v1698 = vld [vmem:[%s6 + $0x88] sm:$0xff]
  %v1699 = vld [vmem:[%s6 + $0x90] sm:$0xff]
  %v1700 = vld [vmem:[%s6 + $0x98] sm:$0xff]
  %v1701 = vld [vmem:[%s6 + $0xa0] sm:$0xff]
  %v1702 = vld [vmem:[%s6 + $0xa8] sm:$0xff]
  %v1703 = vld [vmem:[%s6 + $0xb0] sm:$0xff]
  %v1704 = vld [vmem:[%s6 + $0xb8] sm:$0xff]
  %v1705 = vld [vmem:[%s6 + $0xc0] sm:$0xff]
  %v1706 = vld [vmem:[%s6 + $0xc8] sm:$0xff]
  %v1707 = vld [vmem:[%s6 + $0xd0] sm:$0xff]
  %v1708 = vld [vmem:[%s6 + $0xd8] sm:$0xff]
  %v1709 = vld [vmem:[%s6 + $0xe0] sm:$0xff]
  %v1710 = vld [vmem:[%s6 + $0xe8] sm:$0xff]
  %v1711 = vld [vmem:[%s6 + $0xf0] sm:$0xff]
  %v1712 = vld [vmem:[%s6 + $0xf8] sm:$0xff]
  %v1713 = vld [vmem:[%s6 + $0x100] sm:$0xff]
  %v1714 = vld [vmem:[%s6 + $0x108] sm:$0xff]
  %v1715 = vld [vmem:[%s6 + $0x110] sm:$0xff]
  %v1716 = vld [vmem:[%s6 + $0x118] sm:$0xff]
  %v1717 = vld [vmem:[%s6 + $0x120] sm:$0xff]
  %v1718 = vld [vmem:[%s6 + $0x128] sm:$0xff]
  %v1719 = vld [vmem:[%s6 + $0x130] sm:$0xff]
  %v1720 = vld [vmem:[%s6 + $0x138] sm:$0xff]
  %v1721 = vld [vmem:[%s6 + $0x140] sm:$0xff]
  %v1722 = vld [vmem:[%s6 + $0x148] sm:$0xff]
  %v1723 = vld [vmem:[%s6 + $0x150] sm:$0xff]
  %v1724 = vld [vmem:[%s6 + $0x158] sm:$0xff]
  %v1725 = vld [vmem:[%s6 + $0x160] sm:$0xff]
  %v1726 = vld [vmem:[%s6 + $0x168] sm:$0xff]
  %v1727 = vld [vmem:[%s6 + $0x170] sm:$0xff]
  %v1728 = vld [vmem:[%s6 + $0x178] sm:$0xff]
  %v1729 = vld [vmem:[%s6 + $0x180] sm:$0xff]
  %v1730 = vld [vmem:[%s6 + $0x188] sm:$0xff]
  %v1731 = vld [vmem:[%s6 + $0x190] sm:$0xff]
  %v1732 = vld [vmem:[%s6 + $0x198] sm:$0xff]
  %v1733 = vld [vmem:[%s6 + $0x1a0] sm:$0xff]
  %v1734 = vld [vmem:[%s6 + $0x1a8] sm:$0xff]
  %v1735 = vld [vmem:[%s6 + $0x1b0] sm:$0xff]
  %v1736 = vld [vmem:[%s6 + $0x1b8] sm:$0xff]
  %v1737 = vld [vmem:[%s6 + $0x1c0] sm:$0xff]
  %v1738 = vld [vmem:[%s6 + $0x1c8] sm:$0xff]
  %v1739 = vld [vmem:[%s6 + $0x1d0] sm:$0xff]
  %v1740 = vld [vmem:[%s6 + $0x1d8] sm:$0xff]
  %v1741 = vld [vmem:[%s6 + $0x1e0] sm:$0xff]
  %v1742 = vld [vmem:[%s6 + $0x1e8] sm:$0xff]
  %v1743 = vld [vmem:[%s6 + $0x1f0] sm:$0xff]
  %v1744 = vld [vmem:[%s6 + $0x1f8] sm:$0xff]
  %v1745 = vld [vmem:[%s6 + $0x200] sm:$0xff]
  %v1746 = vld [vmem:[%s6 + $0x208] sm:$0xff]
  %v1747 = vld [vmem:[%s6 + $0x210] sm:$0xff]
  %v1748 = vld [vmem:[%s6 + $0x218] sm:$0xff]
  %v1749 = vld [vmem:[%s6 + $0x220] sm:$0xff]
  %v1750 = vld [vmem:[%s6 + $0x228] sm:$0xff]
  %v1751 = vld [vmem:[%s6 + $0x230] sm:$0xff]
  %v1752 = vld [vmem:[%s6 + $0x238] sm:$0xff]
  %v1753 = vld [vmem:[%s6 + $0x240] sm:$0xff]
  %v1754 = vld [vmem:[%s6 + $0x248] sm:$0xff]
  %v1755 = vld [vmem:[%s6 + $0x250] sm:$0xff]
  %v1756 = vld [vmem:[%s6 + $0x258] sm:$0xff]
  %v1757 = vld [vmem:[%s6 + $0x260] sm:$0xff]
  %v1758 = vld [vmem:[%s6 + $0x268] sm:$0xff]
  %v1759 = vld [vmem:[%s6 + $0x270] sm:$0xff]
  %v1760 = vld [vmem:[%s6 + $0x278] sm:$0xff]
  %v1761 = vld [vmem:[%s6 + $0x280] sm:$0xff]
  %v1762 = vld [vmem:[%s6 + $0x288] sm:$0xff]
  %v1763 = vld [vmem:[%s6 + $0x290] sm:$0xff]
  %v1764 = vld [vmem:[%s6 + $0x298] sm:$0xff]
  %v1765 = vld [vmem:[%s6 + $0x2a0] sm:$0xff]
  %v1766 = vld [vmem:[%s6 + $0x2a8] sm:$0xff]
  %v1767 = vld [vmem:[%s6 + $0x2b0] sm:$0xff]
  %v1768 = vld [vmem:[%s6 + $0x2b8] sm:$0xff]
  %v1769 = vld [vmem:[%s6 + $0x2c0] sm:$0xff]
  %v1770 = vld [vmem:[%s6 + $0x2c8] sm:$0xff]
  %v1771 = vld [vmem:[%s6 + $0x2d0] sm:$0xff]
  %v1772 = vld [vmem:[%s6 + $0x2d8] sm:$0xff]
  %v1773 = vld [vmem:[%s6 + $0x2e0] sm:$0xff]
  %v1774 = vld [vmem:[%s6 + $0x2e8] sm:$0xff]
  %v1775 = vld [vmem:[%s6 + $0x2f0] sm:$0xff]
  %v1776 = vld [vmem:[%s6 + $0x2f8] sm:$0xff]
  %v1777 = vld [vmem:[%s6 + $0x300] sm:$0xff]
  %v1778 = vld [vmem:[%s6 + $0x308] sm:$0xff]
  %v1779 = vld [vmem:[%s6 + $0x310] sm:$0xff]
  %v1780 = vld [vmem:[%s6 + $0x318] sm:$0xff]
  %v1781 = vld [vmem:[%s6 + $0x320] sm:$0xff]
  %v1782 = vld [vmem:[%s6 + $0x328] sm:$0xff]
  %v1783 = vld [vmem:[%s6 + $0x330] sm:$0xff]
  %v1784 = vld [vmem:[%s6 + $0x338] sm:$0xff]
  %v1785 = vld [vmem:[%s6 + $0x340] sm:$0xff]
  %v1786 = vld [vmem:[%s6 + $0x348] sm:$0xff]
  %v1787 = vld [vmem:[%s6 + $0x350] sm:$0xff]
  %v1788 = vld [vmem:[%s6 + $0x358] sm:$0xff]
  %v1789 = vld [vmem:[%s6 + $0x360] sm:$0xff]
  %v1790 = vld [vmem:[%s6 + $0x368] sm:$0xff]
  %v1791 = vld [vmem:[%s6 + $0x370] sm:$0xff]
  %v1792 = vld [vmem:[%s6 + $0x378] sm:$0xff]
  %v1793 = vld [vmem:[%s6 + $0x380] sm:$0xff]
  %v1794 = vld [vmem:[%s6 + $0x388] sm:$0xff]
  %v1795 = vld [vmem:[%s6 + $0x390] sm:$0xff]
  %v1796 = vld [vmem:[%s6 + $0x398] sm:$0xff]
  %v1797 = vld [vmem:[%s6 + $0x3a0] sm:$0xff]
  %v1798 = vld [vmem:[%s6 + $0x3a8] sm:$0xff]
  %v1799 = vld [vmem:[%s6 + $0x3b0] sm:$0xff]
  %v1800 = vld [vmem:[%s6 + $0x3b8] sm:$0xff]
  %v1801 = vld [vmem:[%s6 + $0x3c0] sm:$0xff]
  %v1802 = vld [vmem:[%s6 + $0x3c8] sm:$0xff]
  %v1803 = vld [vmem:[%s6 + $0x3d0] sm:$0xff]
  %v1804 = vld [vmem:[%s6 + $0x3d8] sm:$0xff]
  %v1805 = vld [vmem:[%s6 + $0x3e0] sm:$0xff]
  %v1806 = vld [vmem:[%s6 + $0x3e8] sm:$0xff]
  %v1807 = vld [vmem:[%s6 + $0x3f0] sm:$0xff]
  %v1808 = vld [vmem:[%s6 + $0x3f8] sm:$0xff]
  %v1809 = vld [vmem:[%s6 + $0x400] sm:$0xff]
  %v1810 = vld [vmem:[%s6 + $0x408] sm:$0xff]
  %v1811 = vld [vmem:[%s6 + $0x410] sm:$0xff]
  %v1812 = vld [vmem:[%s6 + $0x418] sm:$0xff]
  %v1813 = vld [vmem:[%s6 + $0x420] sm:$0xff]
  %v1814 = vld [vmem:[%s6 + $0x428] sm:$0xff]
  %v1815 = vld [vmem:[%s6 + $0x430] sm:$0xff]
  %v1816 = vld [vmem:[%s6 + $0x438] sm:$0xff]
  %v1817 = vld [vmem:[%s6 + $0x440] sm:$0xff]
  %v1818 = vld [vmem:[%s6 + $0x448] sm:$0xff]
  %v1819 = vld [vmem:[%s6 + $0x450] sm:$0xff]
  %v1820 = vld [vmem:[%s6 + $0x458] sm:$0xff]
  %v1821 = vld [vmem:[%s6 + $0x460] sm:$0xff]
  %v1822 = vld [vmem:[%s6 + $0x468] sm:$0xff]
  %v1823 = vld [vmem:[%s6 + $0x470] sm:$0xff]
  %v1824 = vld [vmem:[%s6 + $0x478] sm:$0xff]
  %v1825 = vld [vmem:[%s6 + $0x480] sm:$0xff]
  %v1826 = vld [vmem:[%s6 + $0x488] sm:$0xff]
  %v1827 = vld [vmem:[%s6 + $0x490] sm:$0xff]
  %v1828 = vld [vmem:[%s6 + $0x498] sm:$0xff]
  %v1829 = vld [vmem:[%s6 + $0x4a0] sm:$0xff]
  %v1830 = vld [vmem:[%s6 + $0x4a8] sm:$0xff]
  %v1831 = vld [vmem:[%s6 + $0x4b0] sm:$0xff]
  %v1832 = vld [vmem:[%s6 + $0x4b8] sm:$0xff]
  %v1833 = vld [vmem:[%s6 + $0x4c0] sm:$0xff]
  %v1834 = vld [vmem:[%s6 + $0x4c8] sm:$0xff]
  %v1835 = vld [vmem:[%s6 + $0x4d0] sm:$0xff]
  %v1836 = vld [vmem:[%s6 + $0x4d8] sm:$0xff]
  %v1837 = vld [vmem:[%s6 + $0x4e0] sm:$0xff]
  %v1838 = vld [vmem:[%s6 + $0x4e8] sm:$0xff]
  %v1839 = vld [vmem:[%s6 + $0x4f0] sm:$0xff]
  %v1840 = vld [vmem:[%s6 + $0x4f8] sm:$0xff]
  %v1841 = vld [vmem:[%s6 + $0x500] sm:$0xff]
  %v1842 = vld [vmem:[%s6 + $0x508] sm:$0xff]
  %v1843 = vld [vmem:[%s6 + $0x510] sm:$0xff]
  %v1844 = vld [vmem:[%s6 + $0x518] sm:$0xff]
  %v1845 = vld [vmem:[%s6 + $0x520] sm:$0xff]
  %v1846 = vld [vmem:[%s6 + $0x528] sm:$0xff]
  %v1847 = vld [vmem:[%s6 + $0x530] sm:$0xff]
  %v1848 = vld [vmem:[%s6 + $0x538] sm:$0xff]
  %v1849 = vld [vmem:[%s6 + $0x540] sm:$0xff]
  %v1850 = vld [vmem:[%s6 + $0x548] sm:$0xff]
  %v1851 = vld [vmem:[%s6 + $0x550] sm:$0xff]
  %v1852 = vld [vmem:[%s6 + $0x558] sm:$0xff]
  %v1853 = vld [vmem:[%s6 + $0x560] sm:$0xff]
  %v1854 = vld [vmem:[%s6 + $0x568] sm:$0xff]
  %v1855 = vld [vmem:[%s6 + $0x570] sm:$0xff]
  %v1856 = vld [vmem:[%s6 + $0x578] sm:$0xff]
  %v1857 = vld [vmem:[%s6 + $0x580] sm:$0xff]
  %v1858 = vld [vmem:[%s6 + $0x588] sm:$0xff]
  %v1859 = vld [vmem:[%s6 + $0x590] sm:$0xff]
  %v1860 = vld [vmem:[%s6 + $0x598] sm:$0xff]
  %v1861 = vld [vmem:[%s6 + $0x5a0] sm:$0xff]
  %v1862 = vld [vmem:[%s6 + $0x5a8] sm:$0xff]
  %v1863 = vld [vmem:[%s6 + $0x5b0] sm:$0xff]
  %v1864 = vld [vmem:[%s6 + $0x5b8] sm:$0xff]
  %v1865 = vld [vmem:[%s6 + $0x5c0] sm:$0xff]
  %v1866 = vld [vmem:[%s6 + $0x5c8] sm:$0xff]
  %v1867 = vld [vmem:[%s6 + $0x5d0] sm:$0xff]
  %v1868 = vld [vmem:[%s6 + $0x5d8] sm:$0xff]
  %v1869 = vld [vmem:[%s6 + $0x5e0] sm:$0xff]
  %v1870 = vld [vmem:[%s6 + $0x5e8] sm:$0xff]
  %v1871 = vld [vmem:[%s6 + $0x5f0] sm:$0xff]
  %v1872 = vld [vmem:[%s6 + $0x5f8] sm:$0xff]
  %v1873 = vld [vmem:[%s6 + $0x600] sm:$0xff]
  %v1874 = vld [vmem:[%s6 + $0x608] sm:$0xff]
  %v1875 = vld [vmem:[%s6 + $0x610] sm:$0xff]
  %v1876 = vld [vmem:[%s6 + $0x618] sm:$0xff]
  %v1877 = vld [vmem:[%s6 + $0x620] sm:$0xff]
  %v1878 = vld [vmem:[%s6 + $0x628] sm:$0xff]
  %v1879 = vld [vmem:[%s6 + $0x630] sm:$0xff]
  %v1880 = vld [vmem:[%s6 + $0x638] sm:$0xff]
  %v1881 = vld [vmem:[%s6 + $0x640] sm:$0xff]
  %v1882 = vld [vmem:[%s6 + $0x648] sm:$0xff]
  %v1883 = vld [vmem:[%s6 + $0x650] sm:$0xff]
  %v1884 = vld [vmem:[%s6 + $0x658] sm:$0xff]
  %v1885 = vld [vmem:[%s6 + $0x660] sm:$0xff]
  %v1886 = vld [vmem:[%s6 + $0x668] sm:$0xff]
  %v1887 = vld [vmem:[%s6 + $0x670] sm:$0xff]
  %v1888 = vld [vmem:[%s6 + $0x678] sm:$0xff]
  %v1889 = vld [vmem:[%s6 + $0x680] sm:$0xff]
  %v1890 = vld [vmem:[%s6 + $0x688] sm:$0xff]
  %v1891 = vld [vmem:[%s6 + $0x690] sm:$0xff]
  %v1892 = vld [vmem:[%s6 + $0x698] sm:$0xff]
  %v1893 = vld [vmem:[%s6 + $0x6a0] sm:$0xff]
  %v1894 = vld [vmem:[%s6 + $0x6a8] sm:$0xff]
  %v1895 = vld [vmem:[%s6 + $0x6b0] sm:$0xff]
  %v1896 = vld [vmem:[%s6 + $0x6b8] sm:$0xff]
  %v1897 = vld [vmem:[%s6 + $0x6c0] sm:$0xff]
  %v1898 = vld [vmem:[%s6 + $0x6c8] sm:$0xff]
  %v1899 = vld [vmem:[%s6 + $0x6d0] sm:$0xff]
  %v1900 = vld [vmem:[%s6 + $0x6d8] sm:$0xff]
  %v1901 = vld [vmem:[%s6 + $0x6e0] sm:$0xff]
  %v1902 = vld [vmem:[%s6 + $0x6e8] sm:$0xff]
  %v1903 = vld [vmem:[%s6 + $0x6f0] sm:$0xff]
  %v1904 = vld [vmem:[%s6 + $0x6f8] sm:$0xff]
  %v1905 = vld [vmem:[%s6 + $0x700] sm:$0xff]
  %v1906 = vld [vmem:[%s6 + $0x708] sm:$0xff]
  %v1907 = vld [vmem:[%s6 + $0x710] sm:$0xff]
  %v1908 = vld [vmem:[%s6 + $0x718] sm:$0xff]
  %v1909 = vld [vmem:[%s6 + $0x720] sm:$0xff]
  %v1910 = vld [vmem:[%s6 + $0x728] sm:$0xff]
  %v1911 = vld [vmem:[%s6 + $0x730] sm:$0xff]
  %v1912 = vld [vmem:[%s6 + $0x738] sm:$0xff]
  %v1913 = vld [vmem:[%s6 + $0x740] sm:$0xff]
  %v1914 = vld [vmem:[%s6 + $0x748] sm:$0xff]
  %v1915 = vld [vmem:[%s6 + $0x750] sm:$0xff]
  %v1916 = vld [vmem:[%s6 + $0x758] sm:$0xff]
  %v1917 = vld [vmem:[%s6 + $0x760] sm:$0xff]
  %v1918 = vld [vmem:[%s6 + $0x768] sm:$0xff]
  %v1919 = vld [vmem:[%s6 + $0x770] sm:$0xff]
  %v1920 = vld [vmem:[%s6 + $0x778] sm:$0xff]
  %v1921 = vld [vmem:[%s6 + $0x780] sm:$0xff]
  %v1922 = vld [vmem:[%s6 + $0x788] sm:$0xff]
  %v1923 = vld [vmem:[%s6 + $0x790] sm:$0xff]
  %v1924 = vld [vmem:[%s6 + $0x798] sm:$0xff]
  %v1925 = vld [vmem:[%s6 + $0x7a0] sm:$0xff]
  %v1926 = vld [vmem:[%s6 + $0x7a8] sm:$0xff]
  %v1927 = vld [vmem:[%s6 + $0x7b0] sm:$0xff]
  %v1928 = vld [vmem:[%s6 + $0x7b8] sm:$0xff]
  %v1929 = vld [vmem:[%s6 + $0x7c0] sm:$0xff]
  %v1930 = vld [vmem:[%s6 + $0x7c8] sm:$0xff]
  %v1931 = vld [vmem:[%s6 + $0x7d0] sm:$0xff]
  %v1932 = vld [vmem:[%s6 + $0x7d8] sm:$0xff]
  %v1933 = vld [vmem:[%s6 + $0x7e0] sm:$0xff]
  %v1934 = vld [vmem:[%s6 + $0x7e8] sm:$0xff]
  %v1935 = vld [vmem:[%s6 + $0x7f0] sm:$0xff]
  %v1936 = vld [vmem:[%s6 + $0x7f8] sm:$0xff]
  %v1937 = vld [vmem:[%s7] sm:$0xf]
  %v1939 = vlaneseq
  %v1940 = vshrl.u32 %v1939, 7
  %v1941 = vsub.s32 0, %v1940
  %v1942 = vrot.slane %v1937, %v1941
  %v1943 = vlaneseq
  %v1944 = vshrl.u32 %v1943, 7
  %v1945 = vsub.s32 1, %v1944
  %v1946 = vrot.slane %v1937, %v1945
  %v1947 = vlaneseq
  %v1948 = vshrl.u32 %v1947, 7
  %v1949 = vsub.s32 2, %v1948
  %v1950 = vrot.slane %v1937, %v1949
  %v1951 = vlaneseq
  %v1952 = vshrl.u32 %v1951, 7
  %v1953 = vsub.s32 3, %v1952
  %v1954 = vrot.slane %v1937, %v1953
  %1959 = vmatprep.subr.mxu0 %v1742
  %1960 = vmatpush1.msra.mxu0 %v1741
  %1961 = vmatprep.subr.mxu0 %v1738
  %1962 = vmatpush1.msra.mxu0 %v1737
  %1963 = vmatprep.subr.mxu0 %v1734
  %1964 = vmatpush1.msra.mxu0 %v1733
  %1965 = vmatprep.subr.mxu0 %v1730
  %1966 = vmatpush1.msra.mxu0 %v1729
  %1967 = vmatprep.subr.mxu0 %v1726
  %1968 = vmatpush1.msra.mxu0 %v1725
  %1969 = vmatprep.subr.mxu0 %v1722
  %1970 = vmatpush1.msra.mxu0 %v1721
  %1971 = vmatprep.subr.mxu0 %v1718
  %1972 = vmatpush1.msra.mxu0 %v1717
  %1973 = vmatprep.subr.mxu0 %v1714
  %1974 = vmatpush1.msra.mxu0 %v1713
  %1975 = vmatprep.subr.mxu0 %v1710
  %1976 = vmatpush1.msra.mxu0 %v1709
  %1977 = vmatprep.subr.mxu0 %v1706
  %1978 = vmatpush1.msra.mxu0 %v1705
  %1979 = vmatprep.subr.mxu0 %v1702
  %1980 = vmatpush1.msra.mxu0 %v1701
  %1981 = vmatprep.subr.mxu0 %v1698
  %1982 = vmatpush1.msra.mxu0 %v1697
  %1983 = vmatprep.subr.mxu0 %v1694
  %1984 = vmatpush1.msra.mxu0 %v1693
  %1985 = vmatprep.subr.mxu0 %v1690
  %1986 = vmatpush1.msra.mxu0 %v1689
  %1987 = vmatprep.subr.mxu0 %v1686
  %1988 = vmatpush1.msra.mxu0 %v1685
  %1989 = vmatprep.subr.mxu0 %v1682
  %1990 = vmatpush1.msra.mxu0 %v1681
  %1991 = vmatprep.subr.mxu0 %v1806
  %1992 = vmatpush2.msra.mxu0 %v1805
  %1993 = vmatprep.subr.mxu0 %v1802
  %1994 = vmatpush2.msra.mxu0 %v1801
  %1995 = vmatprep.subr.mxu0 %v1798
  %1996 = vmatpush2.msra.mxu0 %v1797
  %1997 = vmatprep.subr.mxu0 %v1794
  %1998 = vmatpush2.msra.mxu0 %v1793
  %1999 = vmatprep.subr.mxu0 %v1790
  %2000 = vmatpush2.msra.mxu0 %v1789
  %2001 = vmatprep.subr.mxu0 %v1786
  %2002 = vmatpush2.msra.mxu0 %v1785
  %2003 = vmatprep.subr.mxu0 %v1782
  %2004 = vmatpush2.msra.mxu0 %v1781
  %2005 = vmatprep.subr.mxu0 %v1778
  %2006 = vmatpush2.msra.mxu0 %v1777
  %2007 = vmatprep.subr.mxu0 %v1774
  %2008 = vmatpush2.msra.mxu0 %v1773
  %2009 = vmatprep.subr.mxu0 %v1770
  %2010 = vmatpush2.msra.mxu0 %v1769
  %2011 = vmatprep.subr.mxu0 %v1766
  %2012 = vmatpush2.msra.mxu0 %v1765
  %2013 = vmatprep.subr.mxu0 %v1762
  %2014 = vmatpush2.msra.mxu0 %v1761
  %2015 = vmatprep.subr.mxu0 %v1758
  %2016 = vmatpush2.msra.mxu0 %v1757
  %2017 = vmatprep.subr.mxu0 %v1754
  %2018 = vmatpush2.msra.mxu0 %v1753
  %2019 = vmatprep.subr.mxu0 %v1750
  %2020 = vmatpush2.msra.mxu0 %v1749
  %2021 = vmatprep.subr.mxu0 %v1746
  %2022 = vmatpush2.msra.mxu0 %v1745
  %2023 = vmatprep.mubr.f32.mxu0 %v1233
  %2024 = vmatmul.mubr.f32.gmra.mxu0 %v1232
  %v2025 = vpop.f32.mrf.mxu0
  %v2026 = vadd.f32 %v1942, %v2025
  %v2027 = vpop.f32.mrf.mxu0
  %v2028 = vadd.f32 %v1946, %v2027
  %2029 = vmatprep.mubr.f32.mxu0 %v1237
  %2030 = vmatmul.mubr.f32.gmra.mxu0 %v1236
  %v2031 = vpop.f32.mrf.mxu0
  %v2032 = vadd.f32 %v1942, %v2031
  %v2033 = vpop.f32.mrf.mxu0
  %v2034 = vadd.f32 %v1946, %v2033
  %2035 = vmatprep.mubr.f32.mxu0 %v1241
  %2036 = vmatmul.mubr.f32.gmra.mxu0 %v1240
  %v2037 = vpop.f32.mrf.mxu0
  %v2038 = vadd.f32 %v1942, %v2037
  %v2039 = vpop.f32.mrf.mxu0
  %v2040 = vadd.f32 %v1946, %v2039
  %2041 = vmatprep.mubr.f32.mxu0 %v1245
  %2042 = vmatmul.mubr.f32.gmra.mxu0 %v1244
  %v2043 = vpop.f32.mrf.mxu0
  %v2044 = vadd.f32 %v1942, %v2043
  %v2045 = vpop.f32.mrf.mxu0
  %v2046 = vadd.f32 %v1946, %v2045
  %2047 = vmatprep.mubr.f32.mxu0 %v1249
  %2048 = vmatmul.mubr.f32.gmra.mxu0 %v1248
  %v2049 = vpop.f32.mrf.mxu0
  %v2050 = vadd.f32 %v1942, %v2049
  %v2051 = vpop.f32.mrf.mxu0
  %v2052 = vadd.f32 %v1946, %v2051
  %2053 = vmatprep.mubr.f32.mxu0 %v1253
  %2054 = vmatmul.mubr.f32.gmra.mxu0 %v1252
  %v2055 = vpop.f32.mrf.mxu0
  %v2056 = vadd.f32 %v1942, %v2055
  %v2057 = vpop.f32.mrf.mxu0
  %v2058 = vadd.f32 %v1946, %v2057
  %2059 = vmatprep.mubr.f32.mxu0 %v1257
  %2060 = vmatmul.mubr.f32.gmra.mxu0 %v1256
  %v2061 = vpop.f32.mrf.mxu0
  %v2062 = vadd.f32 %v1942, %v2061
  %v2063 = vpop.f32.mrf.mxu0
  %v2064 = vadd.f32 %v1946, %v2063
  %2065 = vmatprep.mubr.f32.mxu0 %v1261
  %2066 = vmatmul.mubr.f32.gmra.mxu0 %v1260
  %v2067 = vpop.f32.mrf.mxu0
  %v2068 = vadd.f32 %v1942, %v2067
  %v2069 = vpop.f32.mrf.mxu0
  %v2070 = vadd.f32 %v1946, %v2069
  %2071 = vmatprep.mubr.f32.mxu0 %v1265
  %2072 = vmatmul.mubr.f32.gmra.mxu0 %v1264
  %v2073 = vpop.f32.mrf.mxu0
  %v2074 = vadd.f32 %v1942, %v2073
  %v2075 = vpop.f32.mrf.mxu0
  %v2076 = vadd.f32 %v1946, %v2075
  %2077 = vmatprep.mubr.f32.mxu0 %v1269
  %2078 = vmatmul.mubr.f32.gmra.mxu0 %v1268
  %v2079 = vpop.f32.mrf.mxu0
  %v2080 = vadd.f32 %v1942, %v2079
  %v2081 = vpop.f32.mrf.mxu0
  %v2082 = vadd.f32 %v1946, %v2081
  %2083 = vmatprep.mubr.f32.mxu0 %v1273
  %2084 = vmatmul.mubr.f32.gmra.mxu0 %v1272
  %v2085 = vpop.f32.mrf.mxu0
  %v2086 = vadd.f32 %v1942, %v2085
  %v2087 = vpop.f32.mrf.mxu0
  %v2088 = vadd.f32 %v1946, %v2087
  %2089 = vmatprep.mubr.f32.mxu0 %v1277
  %2090 = vmatmul.mubr.f32.gmra.mxu0 %v1276
  %v2091 = vpop.f32.mrf.mxu0
  %v2092 = vadd.f32 %v1942, %v2091
  %v2093 = vpop.f32.mrf.mxu0
  %v2094 = vadd.f32 %v1946, %v2093
  %2095 = vmatprep.mubr.f32.mxu0 %v1281
  %2096 = vmatmul.mubr.f32.gmra.mxu0 %v1280
  %v2097 = vpop.f32.mrf.mxu0
  %v2098 = vadd.f32 %v1942, %v2097
  %v2099 = vpop.f32.mrf.mxu0
  %v2100 = vadd.f32 %v1946, %v2099
  %2101 = vdwg.mxu0
  %2102 = vmatprep.subr.mxu0 %v1870
  %2103 = vmatpush1.msra.mxu0 %v1869
  %2104 = vmatprep.subr.mxu0 %v1866
  %2105 = vmatpush1.msra.mxu0 %v1865
  %2106 = vmatprep.subr.mxu0 %v1862
  %2107 = vmatpush1.msra.mxu0 %v1861
  %2108 = vmatprep.subr.mxu0 %v1858
  %2109 = vmatpush1.msra.mxu0 %v1857
  %2110 = vmatprep.subr.mxu0 %v1854
  %2111 = vmatpush1.msra.mxu0 %v1853
  %2112 = vmatprep.subr.mxu0 %v1850
  %2113 = vmatpush1.msra.mxu0 %v1849
  %2114 = vmatprep.subr.mxu0 %v1846
  %2115 = vmatpush1.msra.mxu0 %v1845
  %2116 = vmatprep.subr.mxu0 %v1842
  %2117 = vmatpush1.msra.mxu0 %v1841
  %2118 = vmatprep.subr.mxu0 %v1838
  %2119 = vmatpush1.msra.mxu0 %v1837
  %2120 = vmatprep.subr.mxu0 %v1834
  %2121 = vmatpush1.msra.mxu0 %v1833
  %2122 = vmatprep.subr.mxu0 %v1830
  %2123 = vmatpush1.msra.mxu0 %v1829
  %2124 = vmatprep.subr.mxu0 %v1826
  %2125 = vmatpush1.msra.mxu0 %v1825
  %2126 = vmatprep.subr.mxu0 %v1822
  %2127 = vmatpush1.msra.mxu0 %v1821
  %2128 = vmatprep.subr.mxu0 %v1818
  %2129 = vmatpush1.msra.mxu0 %v1817
  %2130 = vmatprep.subr.mxu0 %v1814
  %2131 = vmatpush1.msra.mxu0 %v1813
  %2132 = vmatprep.subr.mxu0 %v1810
  %2133 = vmatpush1.msra.mxu0 %v1809
  %2134 = vmatprep.subr.mxu0 %v1934
  %2135 = vmatpush2.msra.mxu0 %v1933
  %2136 = vmatprep.subr.mxu0 %v1930
  %2137 = vmatpush2.msra.mxu0 %v1929
  %2138 = vmatprep.subr.mxu0 %v1926
  %2139 = vmatpush2.msra.mxu0 %v1925
  %2140 = vmatprep.subr.mxu0 %v1922
  %2141 = vmatpush2.msra.mxu0 %v1921
  %2142 = vmatprep.subr.mxu0 %v1918
  %2143 = vmatpush2.msra.mxu0 %v1917
  %2144 = vmatprep.subr.mxu0 %v1914
  %2145 = vmatpush2.msra.mxu0 %v1913
  %2146 = vmatprep.subr.mxu0 %v1910
  %2147 = vmatpush2.msra.mxu0 %v1909
  %2148 = vmatprep.subr.mxu0 %v1906
  %2149 = vmatpush2.msra.mxu0 %v1905
  %2150 = vmatprep.subr.mxu0 %v1902
  %2151 = vmatpush2.msra.mxu0 %v1901
  %2152 = vmatprep.subr.mxu0 %v1898
  %2153 = vmatpush2.msra.mxu0 %v1897
  %2154 = vmatprep.subr.mxu0 %v1894
  %2155 = vmatpush2.msra.mxu0 %v1893
  %2156 = vmatprep.subr.mxu0 %v1890
  %2157 = vmatpush2.msra.mxu0 %v1889
  %2158 = vmatprep.subr.mxu0 %v1886
  %2159 = vmatpush2.msra.mxu0 %v1885
  %2160 = vmatprep.subr.mxu0 %v1882
  %2161 = vmatpush2.msra.mxu0 %v1881
  %2162 = vmatprep.subr.mxu0 %v1878
  %2163 = vmatpush2.msra.mxu0 %v1877
  %2164 = vmatprep.subr.mxu0 %v1874
  %2165 = vmatpush2.msra.mxu0 %v1873
  %2166 = vmatprep.mubr.f32.mxu0 %v1235
  %2167 = vmatmul.mubr.f32.gmra.mxu0 %v1234
  %v2168 = vpop.f32.mrf.mxu0
  %v2169 = vadd.f32 %v2026, %v2168
  %v2170 = vpop.f32.mrf.mxu0
  %v2171 = vadd.f32 %v2028, %v2170
  %2172 = vmatprep.mubr.f32.mxu0 %v1239
  %2173 = vmatmul.mubr.f32.gmra.mxu0 %v1238
  %v2174 = vpop.f32.mrf.mxu0
  %v2175 = vadd.f32 %v2032, %v2174
  %v2176 = vpop.f32.mrf.mxu0
  %v2177 = vadd.f32 %v2034, %v2176
  %2178 = vmatprep.mubr.f32.mxu0 %v1243
  %2179 = vmatmul.mubr.f32.gmra.mxu0 %v1242
  %v2180 = vpop.f32.mrf.mxu0
  %v2181 = vadd.f32 %v2038, %v2180
  %v2182 = vpop.f32.mrf.mxu0
  %v2183 = vadd.f32 %v2040, %v2182
  %2184 = vmatprep.mubr.f32.mxu0 %v1247
  %2185 = vmatmul.mubr.f32.gmra.mxu0 %v1246
  %v2186 = vpop.f32.mrf.mxu0
  %v2187 = vadd.f32 %v2044, %v2186
  %v2188 = vpop.f32.mrf.mxu0
  %v2189 = vadd.f32 %v2046, %v2188
  %2190 = vmatprep.mubr.f32.mxu0 %v1251
  %2191 = vmatmul.mubr.f32.gmra.mxu0 %v1250
  %v2192 = vpop.f32.mrf.mxu0
  %v2193 = vadd.f32 %v2050, %v2192
  %v2194 = vpop.f32.mrf.mxu0
  %v2195 = vadd.f32 %v2052, %v2194
  %2196 = vmatprep.mubr.f32.mxu0 %v1255
  %2197 = vmatmul.mubr.f32.gmra.mxu0 %v1254
  %v2198 = vpop.f32.mrf.mxu0
  %v2199 = vadd.f32 %v2056, %v2198
  %v2200 = vpop.f32.mrf.mxu0
  %v2201 = vadd.f32 %v2058, %v2200
  %2202 = vmatprep.mubr.f32.mxu0 %v1259
  %2203 = vmatmul.mubr.f32.gmra.mxu0 %v1258
  %v2204 = vpop.f32.mrf.mxu0
  %v2205 = vadd.f32 %v2062, %v2204
  %v2206 = vpop.f32.mrf.mxu0
  %v2207 = vadd.f32 %v2064, %v2206
  %2208 = vmatprep.mubr.f32.mxu0 %v1263
  %2209 = vmatmul.mubr.f32.gmra.mxu0 %v1262
  %v2210 = vpop.f32.mrf.mxu0
  %v2211 = vadd.f32 %v2068, %v2210
  %v2212 = vpop.f32.mrf.mxu0
  %v2213 = vadd.f32 %v2070, %v2212
  %2214 = vmatprep.mubr.f32.mxu0 %v1267
  %2215 = vmatmul.mubr.f32.gmra.mxu0 %v1266
  %v2216 = vpop.f32.mrf.mxu0
  %v2217 = vadd.f32 %v2074, %v2216
  %v2218 = vpop.f32.mrf.mxu0
  %v2219 = vadd.f32 %v2076, %v2218
  %2220 = vmatprep.mubr.f32.mxu0 %v1271
  %2221 = vmatmul.mubr.f32.gmra.mxu0 %v1270
  %v2222 = vpop.f32.mrf.mxu0
  %v2223 = vadd.f32 %v2080, %v2222
  %v2224 = vpop.f32.mrf.mxu0
  %v2225 = vadd.f32 %v2082, %v2224
  %2226 = vmatprep.mubr.f32.mxu0 %v1275
  %2227 = vmatmul.mubr.f32.gmra.mxu0 %v1274
  %v2228 = vpop.f32.mrf.mxu0
  %v2229 = vadd.f32 %v2086, %v2228
  %v2230 = vpop.f32.mrf.mxu0
  %v2231 = vadd.f32 %v2088, %v2230
  %2232 = vmatprep.mubr.f32.mxu0 %v1279
  %2233 = vmatmul.mubr.f32.gmra.mxu0 %v1278
  %v2234 = vpop.f32.mrf.mxu0
  %v2235 = vadd.f32 %v2092, %v2234
  %v2236 = vpop.f32.mrf.mxu0
  %v2237 = vadd.f32 %v2094, %v2236
  %2238 = vmatprep.mubr.f32.mxu0 %v1283
  %2239 = vmatmul.mubr.f32.gmra.mxu0 %v1282
  %v2240 = vpop.f32.mrf.mxu0
  %v2241 = vadd.f32 %v2098, %v2240
  %v2242 = vpop.f32.mrf.mxu0
  %v2243 = vadd.f32 %v2100, %v2242
  %2244 = vdwg.mxu0
  %2245 = vmatprep.subr.mxu0 %v1744
  %2246 = vmatpush1.msra.mxu0 %v1743
  %2247 = vmatprep.subr.mxu0 %v1740
  %2248 = vmatpush1.msra.mxu0 %v1739
  %2249 = vmatprep.subr.mxu0 %v1736
  %2250 = vmatpush1.msra.mxu0 %v1735
  %2251 = vmatprep.subr.mxu0 %v1732
  %2252 = vmatpush1.msra.mxu0 %v1731
  %2253 = vmatprep.subr.mxu0 %v1728
  %2254 = vmatpush1.msra.mxu0 %v1727
  %2255 = vmatprep.subr.mxu0 %v1724
  %2256 = vmatpush1.msra.mxu0 %v1723
  %2257 = vmatprep.subr.mxu0 %v1720
  %2258 = vmatpush1.msra.mxu0 %v1719
  %2259 = vmatprep.subr.mxu0 %v1716
  %2260 = vmatpush1.msra.mxu0 %v1715
  %2261 = vmatprep.subr.mxu0 %v1712
  %2262 = vmatpush1.msra.mxu0 %v1711
  %2263 = vmatprep.subr.mxu0 %v1708
  %2264 = vmatpush1.msra.mxu0 %v1707
  %2265 = vmatprep.subr.mxu0 %v1704
  %2266 = vmatpush1.msra.mxu0 %v1703
  %2267 = vmatprep.subr.mxu0 %v1700
  %2268 = vmatpush1.msra.mxu0 %v1699
  %2269 = vmatprep.subr.mxu0 %v1696
  %2270 = vmatpush1.msra.mxu0 %v1695
  %2271 = vmatprep.subr.mxu0 %v1692
  %2272 = vmatpush1.msra.mxu0 %v1691
  %2273 = vmatprep.subr.mxu0 %v1688
  %2274 = vmatpush1.msra.mxu0 %v1687
  %2275 = vmatprep.subr.mxu0 %v1684
  %2276 = vmatpush1.msra.mxu0 %v1683
  %2277 = vmatprep.subr.mxu0 %v1808
  %2278 = vmatpush2.msra.mxu0 %v1807
  %2279 = vmatprep.subr.mxu0 %v1804
  %2280 = vmatpush2.msra.mxu0 %v1803
  %2281 = vmatprep.subr.mxu0 %v1800
  %2282 = vmatpush2.msra.mxu0 %v1799
  %2283 = vmatprep.subr.mxu0 %v1796
  %2284 = vmatpush2.msra.mxu0 %v1795
  %2285 = vmatprep.subr.mxu0 %v1792
  %2286 = vmatpush2.msra.mxu0 %v1791
  %2287 = vmatprep.subr.mxu0 %v1788
  %2288 = vmatpush2.msra.mxu0 %v1787
  %2289 = vmatprep.subr.mxu0 %v1784
  %2290 = vmatpush2.msra.mxu0 %v1783
  %2291 = vmatprep.subr.mxu0 %v1780
  %2292 = vmatpush2.msra.mxu0 %v1779
  %2293 = vmatprep.subr.mxu0 %v1776
  %2294 = vmatpush2.msra.mxu0 %v1775
  %2295 = vmatprep.subr.mxu0 %v1772
  %2296 = vmatpush2.msra.mxu0 %v1771
  %2297 = vmatprep.subr.mxu0 %v1768
  %2298 = vmatpush2.msra.mxu0 %v1767
  %2299 = vmatprep.subr.mxu0 %v1764
  %2300 = vmatpush2.msra.mxu0 %v1763
  %2301 = vmatprep.subr.mxu0 %v1760
  %2302 = vmatpush2.msra.mxu0 %v1759
  %2303 = vmatprep.subr.mxu0 %v1756
  %2304 = vmatpush2.msra.mxu0 %v1755
  %2305 = vmatprep.subr.mxu0 %v1752
  %2306 = vmatpush2.msra.mxu0 %v1751
  %2307 = vmatprep.subr.mxu0 %v1748
  %2308 = vmatpush2.msra.mxu0 %v1747
  %2309 = vmatprep.mubr.f32.mxu0 %v1233
  %2310 = vmatmul.mubr.f32.gmra.mxu0 %v1232
  %v2311 = vpop.f32.mrf.mxu0
  %v2312 = vadd.f32 %v1950, %v2311
  %v2313 = vpop.f32.mrf.mxu0
  %v2314 = vadd.f32 %v1954, %v2313
  %2315 = vmatprep.mubr.f32.mxu0 %v1237
  %2316 = vmatmul.mubr.f32.gmra.mxu0 %v1236
  %v2317 = vpop.f32.mrf.mxu0
  %v2318 = vadd.f32 %v1950, %v2317
  %v2319 = vpop.f32.mrf.mxu0
  %v2320 = vadd.f32 %v1954, %v2319
  %2321 = vmatprep.mubr.f32.mxu0 %v1241
  %2322 = vmatmul.mubr.f32.gmra.mxu0 %v1240
  %v2323 = vpop.f32.mrf.mxu0
  %v2324 = vadd.f32 %v1950, %v2323
  %v2325 = vpop.f32.mrf.mxu0
  %v2326 = vadd.f32 %v1954, %v2325
  %2327 = vmatprep.mubr.f32.mxu0 %v1245
  %2328 = vmatmul.mubr.f32.gmra.mxu0 %v1244
  %v2329 = vpop.f32.mrf.mxu0
  %v2330 = vadd.f32 %v1950, %v2329
  %v2331 = vpop.f32.mrf.mxu0
  %v2332 = vadd.f32 %v1954, %v2331
  %2333 = vmatprep.mubr.f32.mxu0 %v1249
  %2334 = vmatmul.mubr.f32.gmra.mxu0 %v1248
  %v2335 = vpop.f32.mrf.mxu0
  %v2336 = vadd.f32 %v1950, %v2335
  %v2337 = vpop.f32.mrf.mxu0
  %v2338 = vadd.f32 %v1954, %v2337
  %2339 = vmatprep.mubr.f32.mxu0 %v1253
  %2340 = vmatmul.mubr.f32.gmra.mxu0 %v1252
  %v2341 = vpop.f32.mrf.mxu0
  %v2342 = vadd.f32 %v1950, %v2341
  %v2343 = vpop.f32.mrf.mxu0
  %v2344 = vadd.f32 %v1954, %v2343
  %2345 = vmatprep.mubr.f32.mxu0 %v1257
  %2346 = vmatmul.mubr.f32.gmra.mxu0 %v1256
  %v2347 = vpop.f32.mrf.mxu0
  %v2348 = vadd.f32 %v1950, %v2347
  %v2349 = vpop.f32.mrf.mxu0
  %v2350 = vadd.f32 %v1954, %v2349
  %2351 = vmatprep.mubr.f32.mxu0 %v1261
  %2352 = vmatmul.mubr.f32.gmra.mxu0 %v1260
  %v2353 = vpop.f32.mrf.mxu0
  %v2354 = vadd.f32 %v1950, %v2353
  %v2355 = vpop.f32.mrf.mxu0
  %v2356 = vadd.f32 %v1954, %v2355
  %2357 = vmatprep.mubr.f32.mxu0 %v1265
  %2358 = vmatmul.mubr.f32.gmra.mxu0 %v1264
  %v2359 = vpop.f32.mrf.mxu0
  %v2360 = vadd.f32 %v1950, %v2359
  %v2361 = vpop.f32.mrf.mxu0
  %v2362 = vadd.f32 %v1954, %v2361
  %2363 = vmatprep.mubr.f32.mxu0 %v1269
  %2364 = vmatmul.mubr.f32.gmra.mxu0 %v1268
  %v2365 = vpop.f32.mrf.mxu0
  %v2366 = vadd.f32 %v1950, %v2365
  %v2367 = vpop.f32.mrf.mxu0
  %v2368 = vadd.f32 %v1954, %v2367
  %2369 = vmatprep.mubr.f32.mxu0 %v1273
  %2370 = vmatmul.mubr.f32.gmra.mxu0 %v1272
  %v2371 = vpop.f32.mrf.mxu0
  %v2372 = vadd.f32 %v1950, %v2371
  %v2373 = vpop.f32.mrf.mxu0
  %v2374 = vadd.f32 %v1954, %v2373
  %2375 = vmatprep.mubr.f32.mxu0 %v1277
  %2376 = vmatmul.mubr.f32.gmra.mxu0 %v1276
  %v2377 = vpop.f32.mrf.mxu0
  %v2378 = vadd.f32 %v1950, %v2377
  %v2379 = vpop.f32.mrf.mxu0
  %v2380 = vadd.f32 %v1954, %v2379
  %2381 = vmatprep.mubr.f32.mxu0 %v1281
  %2382 = vmatmul.mubr.f32.gmra.mxu0 %v1280
  %v2383 = vpop.f32.mrf.mxu0
  %v2384 = vadd.f32 %v1950, %v2383
  %v2385 = vpop.f32.mrf.mxu0
  %v2386 = vadd.f32 %v1954, %v2385
  %2387 = vdwg.mxu0
  %2388 = vmatprep.subr.mxu0 %v1872
  %2389 = vmatpush1.msra.mxu0 %v1871
  %2390 = vmatprep.subr.mxu0 %v1868
  %2391 = vmatpush1.msra.mxu0 %v1867
  %2392 = vmatprep.subr.mxu0 %v1864
  %2393 = vmatpush1.msra.mxu0 %v1863
  %2394 = vmatprep.subr.mxu0 %v1860
  %2395 = vmatpush1.msra.mxu0 %v1859
  %2396 = vmatprep.subr.mxu0 %v1856
  %2397 = vmatpush1.msra.mxu0 %v1855
  %2398 = vmatprep.subr.mxu0 %v1852
  %2399 = vmatpush1.msra.mxu0 %v1851
  %2400 = vmatprep.subr.mxu0 %v1848
  %2401 = vmatpush1.msra.mxu0 %v1847
  %2402 = vmatprep.subr.mxu0 %v1844
  %2403 = vmatpush1.msra.mxu0 %v1843
  %2404 = vmatprep.subr.mxu0 %v1840
  %2405 = vmatpush1.msra.mxu0 %v1839
  %2406 = vmatprep.subr.mxu0 %v1836
  %2407 = vmatpush1.msra.mxu0 %v1835
  %2408 = vmatprep.subr.mxu0 %v1832
  %2409 = vmatpush1.msra.mxu0 %v1831
  %2410 = vmatprep.subr.mxu0 %v1828
  %2411 = vmatpush1.msra.mxu0 %v1827
  %2412 = vmatprep.subr.mxu0 %v1824
  %2413 = vmatpush1.msra.mxu0 %v1823
  %2414 = vmatprep.subr.mxu0 %v1820
  %2415 = vmatpush1.msra.mxu0 %v1819
  %2416 = vmatprep.subr.mxu0 %v1816
  %2417 = vmatpush1.msra.mxu0 %v1815
  %2418 = vmatprep.subr.mxu0 %v1812
  %2419 = vmatpush1.msra.mxu0 %v1811
  %2420 = vmatprep.subr.mxu0 %v1936
  %2421 = vmatpush2.msra.mxu0 %v1935
  %2422 = vmatprep.subr.mxu0 %v1932
  %2423 = vmatpush2.msra.mxu0 %v1931
  %2424 = vmatprep.subr.mxu0 %v1928
  %2425 = vmatpush2.msra.mxu0 %v1927
  %2426 = vmatprep.subr.mxu0 %v1924
  %2427 = vmatpush2.msra.mxu0 %v1923
  %2428 = vmatprep.subr.mxu0 %v1920
  %2429 = vmatpush2.msra.mxu0 %v1919
  %2430 = vmatprep.subr.mxu0 %v1916
  %2431 = vmatpush2.msra.mxu0 %v1915
  %2432 = vmatprep.subr.mxu0 %v1912
  %2433 = vmatpush2.msra.mxu0 %v1911
  %2434 = vmatprep.subr.mxu0 %v1908
  %2435 = vmatpush2.msra.mxu0 %v1907
  %2436 = vmatprep.subr.mxu0 %v1904
  %2437 = vmatpush2.msra.mxu0 %v1903
  %2438 = vmatprep.subr.mxu0 %v1900
  %2439 = vmatpush2.msra.mxu0 %v1899
  %2440 = vmatprep.subr.mxu0 %v1896
  %2441 = vmatpush2.msra.mxu0 %v1895
  %2442 = vmatprep.subr.mxu0 %v1892
  %2443 = vmatpush2.msra.mxu0 %v1891
  %2444 = vmatprep.subr.mxu0 %v1888
  %2445 = vmatpush2.msra.mxu0 %v1887
  %2446 = vmatprep.subr.mxu0 %v1884
  %2447 = vmatpush2.msra.mxu0 %v1883
  %2448 = vmatprep.subr.mxu0 %v1880
  %2449 = vmatpush2.msra.mxu0 %v1879
  %2450 = vmatprep.subr.mxu0 %v1876
  %2451 = vmatpush2.msra.mxu0 %v1875
  %2452 = vmatprep.mubr.f32.mxu0 %v1235
  %2453 = vmatmul.mubr.f32.gmra.mxu0 %v1234
  %v2454 = vpop.f32.mrf.mxu0
  %v2455 = vadd.f32 %v2312, %v2454
  %v2456 = vpop.f32.mrf.mxu0
  %v2457 = vadd.f32 %v2314, %v2456
  %2458 = vmatprep.mubr.f32.mxu0 %v1239
  %2459 = vmatmul.mubr.f32.gmra.mxu0 %v1238
  %v2460 = vpop.f32.mrf.mxu0
  %v2461 = vadd.f32 %v2318, %v2460
  %v2462 = vpop.f32.mrf.mxu0
  %v2463 = vadd.f32 %v2320, %v2462
  %2464 = vmatprep.mubr.f32.mxu0 %v1243
  %2465 = vmatmul.mubr.f32.gmra.mxu0 %v1242
  %v2466 = vpop.f32.mrf.mxu0
  %v2467 = vadd.f32 %v2324, %v2466
  %v2468 = vpop.f32.mrf.mxu0
  %v2469 = vadd.f32 %v2326, %v2468
  %2470 = vmatprep.mubr.f32.mxu0 %v1247
  %2471 = vmatmul.mubr.f32.gmra.mxu0 %v1246
  %v2472 = vpop.f32.mrf.mxu0
  %v2473 = vadd.f32 %v2330, %v2472
  %v2474 = vpop.f32.mrf.mxu0
  %v2475 = vadd.f32 %v2332, %v2474
  %2476 = vmatprep.mubr.f32.mxu0 %v1251
  %2477 = vmatmul.mubr.f32.gmra.mxu0 %v1250
  %v2478 = vpop.f32.mrf.mxu0
  %v2479 = vadd.f32 %v2336, %v2478
  %v2480 = vpop.f32.mrf.mxu0
  %v2481 = vadd.f32 %v2338, %v2480
  %2482 = vmatprep.mubr.f32.mxu0 %v1255
  %2483 = vmatmul.mubr.f32.gmra.mxu0 %v1254
  %v2484 = vpop.f32.mrf.mxu0
  %v2485 = vadd.f32 %v2342, %v2484
  %v2486 = vpop.f32.mrf.mxu0
  %v2487 = vadd.f32 %v2344, %v2486
  %2488 = vmatprep.mubr.f32.mxu0 %v1259
  %2489 = vmatmul.mubr.f32.gmra.mxu0 %v1258
  %v2490 = vpop.f32.mrf.mxu0
  %v2491 = vadd.f32 %v2348, %v2490
  %v2492 = vpop.f32.mrf.mxu0
  %v2493 = vadd.f32 %v2350, %v2492
  %2494 = vmatprep.mubr.f32.mxu0 %v1263
  %2495 = vmatmul.mubr.f32.gmra.mxu0 %v1262
  %v2496 = vpop.f32.mrf.mxu0
  %v2497 = vadd.f32 %v2354, %v2496
  %v2498 = vpop.f32.mrf.mxu0
  %v2499 = vadd.f32 %v2356, %v2498
  %2500 = vmatprep.mubr.f32.mxu0 %v1267
  %2501 = vmatmul.mubr.f32.gmra.mxu0 %v1266
  %v2502 = vpop.f32.mrf.mxu0
  %v2503 = vadd.f32 %v2360, %v2502
  %v2504 = vpop.f32.mrf.mxu0
  %v2505 = vadd.f32 %v2362, %v2504
  %2506 = vmatprep.mubr.f32.mxu0 %v1271
  %2507 = vmatmul.mubr.f32.gmra.mxu0 %v1270
  %v2508 = vpop.f32.mrf.mxu0
  %v2509 = vadd.f32 %v2366, %v2508
  %v2510 = vpop.f32.mrf.mxu0
  %v2511 = vadd.f32 %v2368, %v2510
  %2512 = vmatprep.mubr.f32.mxu0 %v1275
  %2513 = vmatmul.mubr.f32.gmra.mxu0 %v1274
  %v2514 = vpop.f32.mrf.mxu0
  %v2515 = vadd.f32 %v2372, %v2514
  %v2516 = vpop.f32.mrf.mxu0
  %v2517 = vadd.f32 %v2374, %v2516
  %2518 = vmatprep.mubr.f32.mxu0 %v1279
  %2519 = vmatmul.mubr.f32.gmra.mxu0 %v1278
  %v2520 = vpop.f32.mrf.mxu0
  %v2521 = vadd.f32 %v2378, %v2520
  %v2522 = vpop.f32.mrf.mxu0
  %v2523 = vadd.f32 %v2380, %v2522
  %2524 = vmatprep.mubr.f32.mxu0 %v1283
  %2525 = vmatmul.mubr.f32.gmra.mxu0 %v1282
  %v2526 = vpop.f32.mrf.mxu0
  %v2527 = vadd.f32 %v2384, %v2526
  %v2528 = vpop.f32.mrf.mxu0
  %v2529 = vadd.f32 %v2386, %v2528
  %2530 = vdwg.mxu0
  %v2531 = vld [vmem:[%s10] sm:$0xf]
  %v2532 = vlaneseq
  %v2533 = vshrl.u32 %v2532, 7
  %v2534 = vsub.s32 0, %v2533
  %v2535 = vrot.slane %v1606, %v2534
  %v2536 = vlaneseq
  %v2537 = vshrl.u32 %v2536, 7
  %v2538 = vsub.s32 0, %v2537
  %v2539 = vrot.slane %v1608, %v2538
  %v2540 = vlaneseq
  %v2541 = vshrl.u32 %v2540, 7
  %v2542 = vsub.s32 0, %v2541
  %v2543 = vrot.slane %v1677, %v2542
  %v2544 = vlaneseq
  %v2545 = vshrl.u32 %v2544, 7
  %v2546 = vsub.s32 0, %v2545
  %v2547 = vrot.slane %v1679, %v2546
  %v2548 = vadd.f32 %v2169, %v2535
  %v2549 = vadd.f32 %v2171, %v2539
  %v2550 = vadd.f32 %v2455, %v2543
  %v2551 = vadd.f32 %v2457, %v2547
  %v2552 = vadd.f32 %v2175, %v2535
  %v2553 = vadd.f32 %v2177, %v2539
  %v2554 = vadd.f32 %v2461, %v2543
  %v2555 = vadd.f32 %v2463, %v2547
  %v2556 = vadd.f32 %v2181, %v2535
  %v2557 = vadd.f32 %v2183, %v2539
  %v2558 = vadd.f32 %v2467, %v2543
  %v2559 = vadd.f32 %v2469, %v2547
  %v2560 = vadd.f32 %v2187, %v2535
  %v2561 = vadd.f32 %v2189, %v2539
  %v2562 = vadd.f32 %v2473, %v2543
  %v2563 = vadd.f32 %v2475, %v2547
  %v2564 = vadd.f32 %v2193, %v2535
  %v2565 = vadd.f32 %v2195, %v2539
  %v2566 = vadd.f32 %v2479, %v2543
  %v2567 = vadd.f32 %v2481, %v2547
  %v2568 = vadd.f32 %v2199, %v2535
  %v2569 = vadd.f32 %v2201, %v2539
  %v2570 = vadd.f32 %v2485, %v2543
  %v2571 = vadd.f32 %v2487, %v2547
  %v2572 = vadd.f32 %v2205, %v2535
  %v2573 = vadd.f32 %v2207, %v2539
  %v2574 = vadd.f32 %v2491, %v2543
  %v2575 = vadd.f32 %v2493, %v2547
  %v2576 = vtanh.pop %v2548
  %v2577 = vtanh.pop %v2549
  %v2578 = vtanh.pop %v2550
  %v2579 = vtanh.pop %v2551
  %v2580 = vtanh.pop %v2552
  %v2581 = vtanh.pop %v2553
  %v2582 = vtanh.pop %v2554
  %v2583 = vtanh.pop %v2555
  %v2584 = vtanh.pop %v2556
  %v2585 = vtanh.pop %v2557
  %v2586 = vtanh.pop %v2558
  %v2587 = vtanh.pop %v2559
  %v2588 = vtanh.pop %v2560
  %v2589 = vtanh.pop %v2561
  %v2590 = vtanh.pop %v2562
  %v2591 = vtanh.pop %v2563
  %v2592 = vtanh.pop %v2564
  %v2593 = vtanh.pop %v2565
  %v2594 = vtanh.pop %v2566
  %v2595 = vtanh.pop %v2567
  %v2596 = vtanh.pop %v2568
  %v2597 = vtanh.pop %v2569
  %v2598 = vtanh.pop %v2570
  %v2599 = vtanh.pop %v2571
  %v2600 = vtanh.pop %v2572
  %v2601 = vtanh.pop %v2573
  %v2602 = vtanh.pop %v2574
  %v2603 = vtanh.pop %v2575
  %v2605 = vlaneseq
  %v2606 = vshrl.u32 %v2605, 7
  %v2607 = vsub.s32 0, %v2606
  %v2608 = vrot.slane %v2531, %v2607
  %v2609 = vlaneseq
  %v2610 = vshrl.u32 %v2609, 7
  %v2611 = vsub.s32 1, %v2610
  %v2612 = vrot.slane %v2531, %v2611
  %v2613 = vlaneseq
  %v2614 = vshrl.u32 %v2613, 7
  %v2615 = vsub.s32 2, %v2614
  %v2616 = vrot.slane %v2531, %v2615
  %v2617 = vlaneseq
  %v2618 = vshrl.u32 %v2617, 7
  %v2619 = vsub.s32 3, %v2618
  %v2620 = vrot.slane %v2531, %v2619
  %v2625 = vmul.f32 %v2576, %v2608
  %v2626 = vmul.f32 %v2577, %v2612
  %v2627 = vmul.f32 %v2578, %v2616
  %v2628 = vmul.f32 %v2579, %v2620
  %v2629 = vmul.f32 %v2580, %v2608
  %v2630 = vmul.f32 %v2581, %v2612
  %v2631 = vmul.f32 %v2582, %v2616
  %v2632 = vmul.f32 %v2583, %v2620
  %v2633 = vmul.f32 %v2584, %v2608
  %v2634 = vmul.f32 %v2585, %v2612
  %v2635 = vmul.f32 %v2586, %v2616
  %v2636 = vmul.f32 %v2587, %v2620
  %v2637 = vmul.f32 %v2588, %v2608
  %v2638 = vmul.f32 %v2589, %v2612
  %v2639 = vmul.f32 %v2590, %v2616
  %v2640 = vmul.f32 %v2591, %v2620
  %v2641 = vmul.f32 %v2592, %v2608
  %v2642 = vmul.f32 %v2593, %v2612
  %v2643 = vmul.f32 %v2594, %v2616
  %v2644 = vmul.f32 %v2595, %v2620
  %v2645 = vmul.f32 %v2596, %v2608
  %v2646 = vmul.f32 %v2597, %v2612
  %v2647 = vmul.f32 %v2598, %v2616
  %v2648 = vmul.f32 %v2599, %v2620
  %v2649 = vmul.f32 %v2600, %v2608
  %v2650 = vmul.f32 %v2601, %v2612
  %v2651 = vmul.f32 %v2602, %v2616
  %v2652 = vmul.f32 %v2603, %v2620
  %v2653 = vadd.f32 %v2625, %v2626
  %v2654 = vadd.f32 %v2653, %v2627
  %v2655 = vadd.f32 %v2654, %v2628
  %2656 = vadd.xlane.f32.xlu0 %v2655
  %v2657 = vpop.xlane.xlu0 %2656
  %v2658 = vadd.f32 %v2629, %v2630
  %v2659 = vadd.f32 %v2658, %v2631
  %v2660 = vadd.f32 %v2659, %v2632
  %2661 = vadd.xlane.f32.xlu0 %v2660
  %v2662 = vpop.xlane.xlu0 %2661
  %v2663 = vadd.f32 %v2633, %v2634
  %v2664 = vadd.f32 %v2663, %v2635
  %v2665 = vadd.f32 %v2664, %v2636
  %2666 = vadd.xlane.f32.xlu0 %v2665
  %v2667 = vpop.xlane.xlu0 %2666
  %v2668 = vadd.f32 %v2637, %v2638
  %v2669 = vadd.f32 %v2668, %v2639
  %v2670 = vadd.f32 %v2669, %v2640
  %2671 = vadd.xlane.f32.xlu0 %v2670
  %v2672 = vpop.xlane.xlu0 %2671
  %v2673 = vadd.f32 %v2641, %v2642
  %v2674 = vadd.f32 %v2673, %v2643
  %v2675 = vadd.f32 %v2674, %v2644
  %2676 = vadd.xlane.f32.xlu0 %v2675
  %v2677 = vpop.xlane.xlu0 %2676
  %v2678 = vadd.f32 %v2645, %v2646
  %v2679 = vadd.f32 %v2678, %v2647
  %v2680 = vadd.f32 %v2679, %v2648
  %2681 = vadd.xlane.f32.xlu0 %v2680
  %v2682 = vpop.xlane.xlu0 %2681
  %vm2683 = vcmask 1040384
  %v2684 = vsel %vm2683, %v2649, 0.0
  %v2685 = vsel %vm2683, %v2650, 0.0
  %v2686 = vadd.f32 %v2684, %v2685
  %v2687 = vsel %vm2683, %v2651, 0.0
  %v2688 = vadd.f32 %v2686, %v2687
  %v2689 = vsel %vm2683, %v2652, 0.0
  %v2690 = vadd.f32 %v2688, %v2689
  %2691 = vadd.xlane.f32.xlu0 %v2690
  %v2692 = vpop.xlane.xlu0 %2691
  %v2693 = vld [vmem:[#allocation2] sm:$0x1]
  %v2695 = vlaneseq
  %v2696 = vshrl.u32 %v2695, 7
  %v2697 = vsub.s32 0, %v2696
  %v2698 = vrot.slane %v2693, %v2697
  %v2700 = vadd.f32 %v2657, %v2698
  %v2701 = vadd.f32 %v2662, %v2698
  %v2702 = vadd.f32 %v2667, %v2698
  %v2703 = vadd.f32 %v2672, %v2698
  %v2704 = vadd.f32 %v2677, %v2698
  %v2705 = vadd.f32 %v2682, %v2698
  %v2706 = vadd.f32 %v2692, %v2698
  %vm2707 = vcmask 7168
  %v2708 = vsel %vm2707, %v2700, -inf
  %v2709 = vsel %vm2707, %v2701, -inf
  %v2710 = vsel %vm2707, %v2702, -inf
  %v2711 = vsel %vm2707, %v2703, -inf
  %v2712 = vsel %vm2707, %v2704, -inf
  %v2713 = vmax.f32 %v2708, %v2712
  %v2714 = vsel %vm2707, %v2705, -inf
  %v2715 = vmax.f32 %v2709, %v2714
  %vm2716 = vcmask 0
  %v2717 = vsel %vm2716, %v2706, -inf
  %v2718 = vmax.f32 %v2710, %v2717
  %v2719 = vmax.f32 %v2713, %v2715
  %v2720 = vmax.f32 %v2718, %v2711
  %v2721 = vmax.f32 %v2719, %v2720
  %v2722 = vrot.slane %v2721, 4
  %v2723 = vmax.f32 %v2721, %v2722
  %v2724 = vrot.slane %v2723, 2
  %v2725 = vmax.f32 %v2723, %v2724
  %v2726 = vrot.slane %v2725, 1
  %v2727 = vmax.f32 %v2725, %v2726
  %v2728 = vsub.f32 %v2700, %v2727
  %v2729 = vsub.f32 %v2701, %v2727
  %v2730 = vsub.f32 %v2702, %v2727
  %v2731 = vsub.f32 %v2703, %v2727
  %v2732 = vsub.f32 %v2704, %v2727
  %v2733 = vsub.f32 %v2705, %v2727
  %v2734 = vsub.f32 %v2706, %v2727
  %v2735 = vmul.f32 %v2728, 1.442695
  %v2736 = vpow.pop %v2735
  %v2737 = vmul.f32 %v2729, 1.442695
  %v2738 = vpow.pop %v2737
  %v2739 = vmul.f32 %v2730, 1.442695
  %v2740 = vpow.pop %v2739
  %v2741 = vmul.f32 %v2731, 1.442695
  %v2742 = vpow.pop %v2741
  %v2743 = vmul.f32 %v2732, 1.442695
  %v2744 = vpow.pop %v2743
  %v2745 = vmul.f32 %v2733, 1.442695
  %v2746 = vpow.pop %v2745
  %v2747 = vmul.f32 %v2734, 1.442695
  %v2748 = vpow.pop %v2747
  %v2749 = vsel %vm2707, %v2736, 0.0
  %v2750 = vsel %vm2707, %v2738, 0.0
  %v2751 = vadd.f32 %v2749, %v2750
  %v2752 = vsel %vm2707, %v2740, 0.0
  %v2753 = vadd.f32 %v2751, %v2752
  %v2754 = vsel %vm2707, %v2742, 0.0
  %v2755 = vadd.f32 %v2753, %v2754
  %v2756 = vsel %vm2707, %v2744, 0.0
  %v2757 = vadd.f32 %v2755, %v2756
  %v2758 = vsel %vm2707, %v2746, 0.0
  %v2759 = vadd.f32 %v2757, %v2758
  %v2760 = vsel %vm2716, %v2748, 0.0
  %v2761 = vadd.f32 %v2759, %v2760
  %v2762 = vrot.slane %v2761, 4
  %v2763 = vadd.f32 %v2761, %v2762
  %v2764 = vrot.slane %v2763, 2
  %v2765 = vadd.f32 %v2763, %v2764
  %v2766 = vrot.slane %v2765, 1
  %v2767 = vadd.f32 %v2765, %v2766
  %v2768 = vrcp.pop %v2767
  %v2769 = vmul.f32 %v2736, %v2768
  %v2770 = vmul.f32 %v2738, %v2768
  %v2771 = vmul.f32 %v2740, %v2768
  %v2772 = vmul.f32 %v2742, %v2768
  %v2773 = vmul.f32 %v2744, %v2768
  %v2774 = vmul.f32 %v2746, %v2768
  %v2775 = vmul.f32 %v2748, %v2768
  %2777 = vset.pattern.permute.xlu0 0
  %2778 = vperm.xlu0 %2777, %v2769
  %v2779 = vpop.permute.xlu0 %2778
  %2782 = vset.pattern.permute.xlu0 0
  %2783 = vperm.xlu0 %2782, %v2770
  %v2784 = vpop.permute.xlu0 %2783
  %2787 = vset.pattern.permute.xlu0 0
  %2788 = vperm.xlu0 %2787, %v2771
  %v2789 = vpop.permute.xlu0 %2788
  %2792 = vset.pattern.permute.xlu0 0
  %2793 = vperm.xlu0 %2792, %v2772
  %v2794 = vpop.permute.xlu0 %2793
  %2797 = vset.pattern.permute.xlu0 0
  %2798 = vperm.xlu0 %2797, %v2773
  %v2799 = vpop.permute.xlu0 %2798
  %2802 = vset.pattern.permute.xlu0 0
  %2803 = vperm.xlu0 %2802, %v2774
  %v2804 = vpop.permute.xlu0 %2803
  %2807 = vset.pattern.permute.xlu0 0
  %2808 = vperm.xlu0 %2807, %v2775
  %v2809 = vpop.permute.xlu0 %2808
  %v2811 = vmul.f32 %v1232, %v2779
  %v2812 = vmul.f32 %v1233, %v2779
  %v2813 = vmul.f32 %v1234, %v2779
  %v2814 = vmul.f32 %v1235, %v2779
  %v2815 = vmul.f32 %v1236, %v2784
  %v2816 = vmul.f32 %v1237, %v2784
  %v2817 = vmul.f32 %v1238, %v2784
  %v2818 = vmul.f32 %v1239, %v2784
  %v2819 = vmul.f32 %v1240, %v2789
  %v2820 = vmul.f32 %v1241, %v2789
  %v2821 = vmul.f32 %v1242, %v2789
  %v2822 = vmul.f32 %v1243, %v2789
  %v2823 = vmul.f32 %v1244, %v2794
  %v2824 = vmul.f32 %v1245, %v2794
  %v2825 = vmul.f32 %v1246, %v2794
  %v2826 = vmul.f32 %v1247, %v2794
  %v2827 = vmul.f32 %v1248, %v2799
  %v2828 = vmul.f32 %v1249, %v2799
  %v2829 = vmul.f32 %v1250, %v2799
  %v2830 = vmul.f32 %v1251, %v2799
  %v2831 = vmul.f32 %v1252, %v2804
  %v2832 = vmul.f32 %v1253, %v2804
  %v2833 = vmul.f32 %v1254, %v2804
  %v2834 = vmul.f32 %v1255, %v2804
  %v2835 = vmul.f32 %v1256, %v2809
  %v2836 = vmul.f32 %v1257, %v2809
  %v2837 = vmul.f32 %v1258, %v2809
  %v2838 = vmul.f32 %v1259, %v2809
  %v2839 = vadd.f32 %v2811, %v2815
  %v2840 = vadd.f32 %v2839, %v2819
  %v2841 = vadd.f32 %v2840, %v2823
  %v2842 = vadd.f32 %v2841, %v2827
  %v2843 = vadd.f32 %v2842, %v2831
  %v2844 = vsel %vm2683, %v2835, 0.0
  %v2845 = vadd.f32 %v2843, %v2844
  %v2846 = vrot.slane %v2845, 4
  %v2847 = vadd.f32 %v2845, %v2846
  %v2848 = vrot.slane %v2847, 2
  %v2849 = vadd.f32 %v2847, %v2848
  %v2850 = vrot.slane %v2849, 1
  %v2851 = vadd.f32 %v2849, %v2850
  %v2852 = vadd.f32 %v2812, %v2816
  %v2853 = vadd.f32 %v2852, %v2820
  %v2854 = vadd.f32 %v2853, %v2824
  %v2855 = vadd.f32 %v2854, %v2828
  %v2856 = vadd.f32 %v2855, %v2832
  %v2857 = vsel %vm2683, %v2836, 0.0
  %v2858 = vadd.f32 %v2856, %v2857
  %v2859 = vrot.slane %v2858, 4
  %v2860 = vadd.f32 %v2858, %v2859
  %v2861 = vrot.slane %v2860, 2
  %v2862 = vadd.f32 %v2860, %v2861
  %v2863 = vrot.slane %v2862, 1
  %v2864 = vadd.f32 %v2862, %v2863
  %v2865 = vadd.f32 %v2813, %v2817
  %v2866 = vadd.f32 %v2865, %v2821
  %v2867 = vadd.f32 %v2866, %v2825
  %v2868 = vadd.f32 %v2867, %v2829
  %v2869 = vadd.f32 %v2868, %v2833
  %v2870 = vsel %vm2683, %v2837, 0.0
  %v2871 = vadd.f32 %v2869, %v2870
  %v2872 = vrot.slane %v2871, 4
  %v2873 = vadd.f32 %v2871, %v2872
  %v2874 = vrot.slane %v2873, 2
  %v2875 = vadd.f32 %v2873, %v2874
  %v2876 = vrot.slane %v2875, 1
  %v2877 = vadd.f32 %v2875, %v2876
  %v2878 = vadd.f32 %v2814, %v2818
  %v2879 = vadd.f32 %v2878, %v2822
  %v2880 = vadd.f32 %v2879, %v2826
  %v2881 = vadd.f32 %v2880, %v2830
  %v2882 = vadd.f32 %v2881, %v2834
  %v2883 = vsel %vm2683, %v2838, 0.0
  %v2884 = vadd.f32 %v2882, %v2883
  %v2885 = vrot.slane %v2884, 4
  %v2886 = vadd.f32 %v2884, %v2885
  %v2887 = vrot.slane %v2886, 2
  %v2888 = vadd.f32 %v2886, %v2887
  %v2889 = vrot.slane %v2888, 1
  %v2890 = vadd.f32 %v2888, %v2889
  %v2895 = vcombine.low %v2851, %v2864
  %v2896 = vcombine.low %v2877, %v2890
  %v2898 = vunpack.c.l.s4 1966171168
  %v2899 = vunpack.c.0.s8 %v2898
  %v2900 = vlaneseq
  %v2901 = vshrl.u32 %v2900, 7
  %v2902 = vsub.s32 %v2899, %v2901
  %v2903 = vrot.slane %v2895, %v2902
  %v2905 = vunpack.c.l.s4 1966171168
  %v2906 = vunpack.c.0.s8 %v2905
  %v2907 = vlaneseq
  %v2908 = vshrl.u32 %v2907, 7
  %v2909 = vsub.s32 %v2906, %v2908
  %v2910 = vrot.slane %v2896, %v2909
  %v2911 = vcombine.low %v2903, %v2910
  %v2913 = vunpack.c.l.s4 1966171168
  %v2914 = vunpack.c.0.s8 %v2913
  %v2915 = vlaneseq
  %v2916 = vshrl.u32 %v2915, 7
  %v2917 = vsub.s32 %v2914, %v2916
  %v2918 = vrot.slane %v2911, %v2917
  %v2920 = vlaneseq
  %vm2921 = vcmp.ge.s32.totalorder %v2920, 0
  %vm2922 = vcmp.lt.s32.totalorder %v2920, 512
  %vm2923 = vmand %vm2921, %vm2922
  %2924 = vst.msk [vmem:[%s16] ss:$2 sm:$0xf] %vm2923, %v2918
  %v2925 = vlaneseq
  %v2926 = vshrl.u32 %v2925, 7
  %v2927 = vsub.s32 1, %v2926
  %v2928 = vrot.slane %v1606, %v2927
  %v2929 = vlaneseq
  %v2930 = vshrl.u32 %v2929, 7
  %v2931 = vsub.s32 1, %v2930
  %v2932 = vrot.slane %v1608, %v2931
  %v2933 = vlaneseq
  %v2934 = vshrl.u32 %v2933, 7
  %v2935 = vsub.s32 1, %v2934
  %v2936 = vrot.slane %v1677, %v2935
  %v2937 = vlaneseq
  %v2938 = vshrl.u32 %v2937, 7
  %v2939 = vsub.s32 1, %v2938
  %v2940 = vrot.slane %v1679, %v2939
  %v2941 = vadd.f32 %v2205, %v2928
  %v2942 = vadd.f32 %v2207, %v2932
  %v2943 = vadd.f32 %v2491, %v2936
  %v2944 = vadd.f32 %v2493, %v2940
  %v2945 = vadd.f32 %v2211, %v2928
  %v2946 = vadd.f32 %v2213, %v2932
  %v2947 = vadd.f32 %v2497, %v2936
  %v2948 = vadd.f32 %v2499, %v2940
  %v2949 = vadd.f32 %v2217, %v2928
  %v2950 = vadd.f32 %v2219, %v2932
  %v2951 = vadd.f32 %v2503, %v2936
  %v2952 = vadd.f32 %v2505, %v2940
  %v2953 = vadd.f32 %v2223, %v2928
  %v2954 = vadd.f32 %v2225, %v2932
  %v2955 = vadd.f32 %v2509, %v2936
  %v2956 = vadd.f32 %v2511, %v2940
  %v2957 = vadd.f32 %v2229, %v2928
  %v2958 = vadd.f32 %v2231, %v2932
  %v2959 = vadd.f32 %v2515, %v2936
  %v2960 = vadd.f32 %v2517, %v2940
  %v2961 = vadd.f32 %v2235, %v2928
  %v2962 = vadd.f32 %v2237, %v2932
  %v2963 = vadd.f32 %v2521, %v2936
  %v2964 = vadd.f32 %v2523, %v2940
  %v2965 = vadd.f32 %v2241, %v2928
  %v2966 = vadd.f32 %v2243, %v2932
  %v2967 = vadd.f32 %v2527, %v2936
  %v2968 = vadd.f32 %v2529, %v2940
  %v2969 = vtanh.pop %v2941
  %v2970 = vtanh.pop %v2942
  %v2971 = vtanh.pop %v2943
  %v2972 = vtanh.pop %v2944
  %v2973 = vtanh.pop %v2945
  %v2974 = vtanh.pop %v2946
  %v2975 = vtanh.pop %v2947
  %v2976 = vtanh.pop %v2948
  %v2977 = vtanh.pop %v2949
  %v2978 = vtanh.pop %v2950
  %v2979 = vtanh.pop %v2951
  %v2980 = vtanh.pop %v2952
  %v2981 = vtanh.pop %v2953
  %v2982 = vtanh.pop %v2954
  %v2983 = vtanh.pop %v2955
  %v2984 = vtanh.pop %v2956
  %v2985 = vtanh.pop %v2957
  %v2986 = vtanh.pop %v2958
  %v2987 = vtanh.pop %v2959
  %v2988 = vtanh.pop %v2960
  %v2989 = vtanh.pop %v2961
  %v2990 = vtanh.pop %v2962
  %v2991 = vtanh.pop %v2963
  %v2992 = vtanh.pop %v2964
  %v2993 = vtanh.pop %v2965
  %v2994 = vtanh.pop %v2966
  %v2995 = vtanh.pop %v2967
  %v2996 = vtanh.pop %v2968
  %v2997 = vmul.f32 %v2969, %v2608
  %v2998 = vmul.f32 %v2970, %v2612
  %v2999 = vmul.f32 %v2971, %v2616
  %v3000 = vmul.f32 %v2972, %v2620
  %v3001 = vmul.f32 %v2973, %v2608
  %v3002 = vmul.f32 %v2974, %v2612
  %v3003 = vmul.f32 %v2975, %v2616
  %v3004 = vmul.f32 %v2976, %v2620
  %v3005 = vmul.f32 %v2977, %v2608
  %v3006 = vmul.f32 %v2978, %v2612
  %v3007 = vmul.f32 %v2979, %v2616
  %v3008 = vmul.f32 %v2980, %v2620
  %v3009 = vmul.f32 %v2981, %v2608
  %v3010 = vmul.f32 %v2982, %v2612
  %v3011 = vmul.f32 %v2983, %v2616
  %v3012 = vmul.f32 %v2984, %v2620
  %v3013 = vmul.f32 %v2985, %v2608
  %v3014 = vmul.f32 %v2986, %v2612
  %v3015 = vmul.f32 %v2987, %v2616
  %v3016 = vmul.f32 %v2988, %v2620
  %v3017 = vmul.f32 %v2989, %v2608
  %v3018 = vmul.f32 %v2990, %v2612
  %v3019 = vmul.f32 %v2991, %v2616
  %v3020 = vmul.f32 %v2992, %v2620
  %v3021 = vmul.f32 %v2993, %v2608
  %v3022 = vmul.f32 %v2994, %v2612
  %v3023 = vmul.f32 %v2995, %v2616
  %v3024 = vmul.f32 %v2996, %v2620
  %vm3025 = vcmask 1047553
  %v3026 = vsel %vm3025, %v2997, 0.0
  %v3027 = vsel %vm3025, %v2998, 0.0
  %v3028 = vadd.f32 %v3026, %v3027
  %v3029 = vsel %vm3025, %v2999, 0.0
  %v3030 = vadd.f32 %v3028, %v3029
  %v3031 = vsel %vm3025, %v3000, 0.0
  %v3032 = vadd.f32 %v3030, %v3031
  %3033 = vadd.xlane.f32.xlu0 %v3032
  %v3034 = vpop.xlane.xlu0 %3033
  %v3035 = vadd.f32 %v3001, %v3002
  %v3036 = vadd.f32 %v3035, %v3003
  %v3037 = vadd.f32 %v3036, %v3004
  %3038 = vadd.xlane.f32.xlu0 %v3037
  %v3039 = vpop.xlane.xlu0 %3038
  %v3040 = vadd.f32 %v3005, %v3006
  %v3041 = vadd.f32 %v3040, %v3007
  %v3042 = vadd.f32 %v3041, %v3008
  %3043 = vadd.xlane.f32.xlu0 %v3042
  %v3044 = vpop.xlane.xlu0 %3043
  %v3045 = vadd.f32 %v3009, %v3010
  %v3046 = vadd.f32 %v3045, %v3011
  %v3047 = vadd.f32 %v3046, %v3012
  %3048 = vadd.xlane.f32.xlu0 %v3047
  %v3049 = vpop.xlane.xlu0 %3048
  %v3050 = vadd.f32 %v3013, %v3014
  %v3051 = vadd.f32 %v3050, %v3015
  %v3052 = vadd.f32 %v3051, %v3016
  %3053 = vadd.xlane.f32.xlu0 %v3052
  %v3054 = vpop.xlane.xlu0 %3053
  %v3055 = vadd.f32 %v3017, %v3018
  %v3056 = vadd.f32 %v3055, %v3019
  %v3057 = vadd.f32 %v3056, %v3020
  %3058 = vadd.xlane.f32.xlu0 %v3057
  %v3059 = vpop.xlane.xlu0 %3058
  %vm3060 = vcmask 1041408
  %v3061 = vsel %vm3060, %v3021, 0.0
  %v3062 = vsel %vm3060, %v3022, 0.0
  %v3063 = vadd.f32 %v3061, %v3062
  %v3064 = vsel %vm3060, %v3023, 0.0
  %v3065 = vadd.f32 %v3063, %v3064
  %v3066 = vsel %vm3060, %v3024, 0.0
  %v3067 = vadd.f32 %v3065, %v3066
  %3068 = vadd.xlane.f32.xlu0 %v3067
  %v3069 = vpop.xlane.xlu0 %3068
  %v3070 = vld [vmem:[#allocation2] sm:$0x1]
  %v3072 = vlaneseq
  %v3073 = vshrl.u32 %v3072, 7
  %v3074 = vsub.s32 0, %v3073
  %v3075 = vrot.slane %v3070, %v3074
  %v3077 = vadd.f32 %v3034, %v3075
  %v3078 = vadd.f32 %v3039, %v3075
  %v3079 = vadd.f32 %v3044, %v3075
  %v3080 = vadd.f32 %v3049, %v3075
  %v3081 = vadd.f32 %v3054, %v3075
  %v3082 = vadd.f32 %v3059, %v3075
  %v3083 = vadd.f32 %v3069, %v3075
  %vm3084 = vcmask 7169
  %v3085 = vsel %vm3084, %v3077, -inf
  %v3086 = vsel %vm2707, %v3078, -inf
  %v3087 = vsel %vm2707, %v3079, -inf
  %v3088 = vsel %vm2707, %v3080, -inf
  %v3089 = vsel %vm2707, %v3081, -inf
  %v3090 = vmax.f32 %v3085, %v3089
  %v3091 = vsel %vm2707, %v3082, -inf
  %v3092 = vmax.f32 %v3086, %v3091
  %vm3093 = vcmask 1024
  %v3094 = vsel %vm3093, %v3083, -inf
  %v3095 = vmax.f32 %v3087, %v3094
  %v3096 = vmax.f32 %v3090, %v3092
  %v3097 = vmax.f32 %v3095, %v3088
  %v3098 = vmax.f32 %v3096, %v3097
  %v3099 = vrot.slane %v3098, 4
  %v3100 = vmax.f32 %v3098, %v3099
  %v3101 = vrot.slane %v3100, 2
  %v3102 = vmax.f32 %v3100, %v3101
  %v3103 = vrot.slane %v3102, 1
  %v3104 = vmax.f32 %v3102, %v3103
  %v3105 = vsub.f32 %v3077, %v3104
  %v3106 = vsub.f32 %v3078, %v3104
  %v3107 = vsub.f32 %v3079, %v3104
  %v3108 = vsub.f32 %v3080, %v3104
  %v3109 = vsub.f32 %v3081, %v3104
  %v3110 = vsub.f32 %v3082, %v3104
  %v3111 = vsub.f32 %v3083, %v3104
  %v3112 = vmul.f32 %v3105, 1.442695
  %v3113 = vpow.pop %v3112
  %v3114 = vmul.f32 %v3106, 1.442695
  %v3115 = vpow.pop %v3114
  %v3116 = vmul.f32 %v3107, 1.442695
  %v3117 = vpow.pop %v3116
  %v3118 = vmul.f32 %v3108, 1.442695
  %v3119 = vpow.pop %v3118
  %v3120 = vmul.f32 %v3109, 1.442695
  %v3121 = vpow.pop %v3120
  %v3122 = vmul.f32 %v3110, 1.442695
  %v3123 = vpow.pop %v3122
  %v3124 = vmul.f32 %v3111, 1.442695
  %v3125 = vpow.pop %v3124
  %vm3133 = vcmask 1046528
  %v3134 = vrot.slane %v3113, 1
  %v3135 = vrot.slane %v3115, 1
  %v3136 = vsel %vm3133, %v3134, %v3135
  %v3137 = vrot.slane %v3117, 1
  %v3138 = vsel %vm3133, %v3135, %v3137
  %v3139 = vrot.slane %v3119, 1
  %v3140 = vsel %vm3133, %v3137, %v3139
  %v3141 = vrot.slane %v3121, 1
  %v3142 = vsel %vm3133, %v3139, %v3141
  %v3143 = vrot.slane %v3123, 1
  %v3144 = vsel %vm3133, %v3141, %v3143
  %v3145 = vrot.slane %v3125, 1
  %v3146 = vsel %vm3133, %v3143, %v3145
  %v3154 = vsel %vm2707, %v3136, 0.0
  %v3155 = vsel %vm2707, %v3138, 0.0
  %v3156 = vadd.f32 %v3154, %v3155
  %v3157 = vsel %vm2707, %v3140, 0.0
  %v3158 = vadd.f32 %v3156, %v3157
  %v3159 = vsel %vm2707, %v3142, 0.0
  %v3160 = vadd.f32 %v3158, %v3159
  %v3161 = vsel %vm2707, %v3144, 0.0
  %v3162 = vadd.f32 %v3160, %v3161
  %v3163 = vsel %vm2707, %v3146, 0.0
  %v3164 = vadd.f32 %v3162, %v3163
  %v3165 = vsel %vm2716, %v3145, 0.0
  %v3166 = vadd.f32 %v3164, %v3165
  %v3167 = vrot.slane %v3166, 4
  %v3168 = vadd.f32 %v3166, %v3167
  %v3169 = vrot.slane %v3168, 2
  %v3170 = vadd.f32 %v3168, %v3169
  %v3171 = vrot.slane %v3170, 1
  %v3172 = vadd.f32 %v3170, %v3171
  %v3173 = vrcp.pop %v3172
  %v3174 = vmul.f32 %v3113, %v3173
  %v3175 = vmul.f32 %v3115, %v3173
  %v3176 = vmul.f32 %v3117, %v3173
  %v3177 = vmul.f32 %v3119, %v3173
  %v3178 = vmul.f32 %v3121, %v3173
  %v3179 = vmul.f32 %v3123, %v3173
  %v3180 = vmul.f32 %v3125, %v3173
  %3182 = vset.pattern.permute.xlu0 0
  %3183 = vperm.xlu0 %3182, %v3174
  %v3184 = vpop.permute.xlu0 %3183
  %3187 = vset.pattern.permute.xlu0 0
  %3188 = vperm.xlu0 %3187, %v3175
  %v3189 = vpop.permute.xlu0 %3188
  %3192 = vset.pattern.permute.xlu0 0
  %3193 = vperm.xlu0 %3192, %v3176
  %v3194 = vpop.permute.xlu0 %3193
  %3197 = vset.pattern.permute.xlu0 0
  %3198 = vperm.xlu0 %3197, %v3177
  %v3199 = vpop.permute.xlu0 %3198
  %3202 = vset.pattern.permute.xlu0 0
  %3203 = vperm.xlu0 %3202, %v3178
  %v3204 = vpop.permute.xlu0 %3203
  %3207 = vset.pattern.permute.xlu0 0
  %3208 = vperm.xlu0 %3207, %v3179
  %v3209 = vpop.permute.xlu0 %3208
  %3212 = vset.pattern.permute.xlu0 0
  %3213 = vperm.xlu0 %3212, %v3180
  %v3214 = vpop.permute.xlu0 %3213
  %v3216 = vmul.f32 %v1256, %v3184
  %v3217 = vmul.f32 %v1257, %v3184
  %v3218 = vmul.f32 %v1258, %v3184
  %v3219 = vmul.f32 %v1259, %v3184
  %v3220 = vmul.f32 %v1260, %v3189
  %v3221 = vmul.f32 %v1261, %v3189
  %v3222 = vmul.f32 %v1262, %v3189
  %v3223 = vmul.f32 %v1263, %v3189
  %v3224 = vmul.f32 %v1264, %v3194
  %v3225 = vmul.f32 %v1265, %v3194
  %v3226 = vmul.f32 %v1266, %v3194
  %v3227 = vmul.f32 %v1267, %v3194
  %v3228 = vmul.f32 %v1268, %v3199
  %v3229 = vmul.f32 %v1269, %v3199
  %v3230 = vmul.f32 %v1270, %v3199
  %v3231 = vmul.f32 %v1271, %v3199
  %v3232 = vmul.f32 %v1272, %v3204
  %v3233 = vmul.f32 %v1273, %v3204
  %v3234 = vmul.f32 %v1274, %v3204
  %v3235 = vmul.f32 %v1275, %v3204
  %v3236 = vmul.f32 %v1276, %v3209
  %v3237 = vmul.f32 %v1277, %v3209
  %v3238 = vmul.f32 %v1278, %v3209
  %v3239 = vmul.f32 %v1279, %v3209
  %v3240 = vmul.f32 %v1280, %v3214
  %v3241 = vmul.f32 %v1281, %v3214
  %v3242 = vmul.f32 %v1282, %v3214
  %v3243 = vmul.f32 %v1283, %v3214
  %v3272 = vrot.slane %v3216, 1
  %v3273 = vrot.slane %v3220, 1
  %v3274 = vsel %vm3133, %v3272, %v3273
  %v3275 = vrot.slane %v3217, 1
  %v3276 = vrot.slane %v3221, 1
  %v3277 = vsel %vm3133, %v3275, %v3276
  %v3278 = vrot.slane %v3218, 1
  %v3279 = vrot.slane %v3222, 1
  %v3280 = vsel %vm3133, %v3278, %v3279
  %v3281 = vrot.slane %v3219, 1
  %v3282 = vrot.slane %v3223, 1
  %v3283 = vsel %vm3133, %v3281, %v3282
  %v3284 = vrot.slane %v3224, 1
  %v3285 = vsel %vm3133, %v3273, %v3284
  %v3286 = vrot.slane %v3225, 1
  %v3287 = vsel %vm3133, %v3276, %v3286
  %v3288 = vrot.slane %v3226, 1
  %v3289 = vsel %vm3133, %v3279, %v3288
  %v3290 = vrot.slane %v3227, 1
  %v3291 = vsel %vm3133, %v3282, %v3290
  %v3292 = vrot.slane %v3228, 1
  %v3293 = vsel %vm3133, %v3284, %v3292
  %v3294 = vrot.slane %v3229, 1
  %v3295 = vsel %vm3133, %v3286, %v3294
  %v3296 = vrot.slane %v3230, 1
  %v3297 = vsel %vm3133, %v3288, %v3296
  %v3298 = vrot.slane %v3231, 1
  %v3299 = vsel %vm3133, %v3290, %v3298
  %v3300 = vrot.slane %v3232, 1
  %v3301 = vsel %vm3133, %v3292, %v3300
  %v3302 = vrot.slane %v3233, 1
  %v3303 = vsel %vm3133, %v3294, %v3302
  %v3304 = vrot.slane %v3234, 1
  %v3305 = vsel %vm3133, %v3296, %v3304
  %v3306 = vrot.slane %v3235, 1
  %v3307 = vsel %vm3133, %v3298, %v3306
  %v3308 = vrot.slane %v3236, 1
  %v3309 = vsel %vm3133, %v3300, %v3308
  %v3310 = vrot.slane %v3237, 1
  %v3311 = vsel %vm3133, %v3302, %v3310
  %v3312 = vrot.slane %v3238, 1
  %v3313 = vsel %vm3133, %v3304, %v3312
  %v3314 = vrot.slane %v3239, 1
  %v3315 = vsel %vm3133, %v3306, %v3314
  %v3316 = vrot.slane %v3240, 1
  %v3317 = vsel %vm3133, %v3308, %v3316
  %v3318 = vrot.slane %v3241, 1
  %v3319 = vsel %vm3133, %v3310, %v3318
  %v3320 = vrot.slane %v3242, 1
  %v3321 = vsel %vm3133, %v3312, %v3320
  %v3322 = vrot.slane %v3243, 1
  %v3323 = vsel %vm3133, %v3314, %v3322
  %v3352 = vadd.f32 %v3274, %v3285
  %v3353 = vadd.f32 %v3352, %v3293
  %v3354 = vadd.f32 %v3353, %v3301
  %v3355 = vadd.f32 %v3354, %v3309
  %v3356 = vadd.f32 %v3355, %v3317
  %v3357 = vsel %vm2683, %v3316, 0.0
  %v3358 = vadd.f32 %v3356, %v3357
  %v3359 = vrot.slane %v3358, 4
  %v3360 = vadd.f32 %v3358, %v3359
  %v3361 = vrot.slane %v3360, 2
  %v3362 = vadd.f32 %v3360, %v3361
  %v3363 = vrot.slane %v3362, 1
  %v3364 = vadd.f32 %v3362, %v3363
  %v3365 = vadd.f32 %v3277, %v3287
  %v3366 = vadd.f32 %v3365, %v3295
  %v3367 = vadd.f32 %v3366, %v3303
  %v3368 = vadd.f32 %v3367, %v3311
  %v3369 = vadd.f32 %v3368, %v3319
  %v3370 = vsel %vm2683, %v3318, 0.0
  %v3371 = vadd.f32 %v3369, %v3370
  %v3372 = vrot.slane %v3371, 4
  %v3373 = vadd.f32 %v3371, %v3372
  %v3374 = vrot.slane %v3373, 2
  %v3375 = vadd.f32 %v3373, %v3374
  %v3376 = vrot.slane %v3375, 1
  %v3377 = vadd.f32 %v3375, %v3376
  %v3378 = vadd.f32 %v3280, %v3289
  %v3379 = vadd.f32 %v3378, %v3297
  %v3380 = vadd.f32 %v3379, %v3305
  %v3381 = vadd.f32 %v3380, %v3313
  %v3382 = vadd.f32 %v3381, %v3321
  %v3383 = vsel %vm2683, %v3320, 0.0
  %v3384 = vadd.f32 %v3382, %v3383
  %v3385 = vrot.slane %v3384, 4
  %v3386 = vadd.f32 %v3384, %v3385
  %v3387 = vrot.slane %v3386, 2
  %v3388 = vadd.f32 %v3386, %v3387
  %v3389 = vrot.slane %v3388, 1
  %v3390 = vadd.f32 %v3388, %v3389
  %v3391 = vadd.f32 %v3283, %v3291
  %v3392 = vadd.f32 %v3391, %v3299
  %v3393 = vadd.f32 %v3392, %v3307
  %v3394 = vadd.f32 %v3393, %v3315
  %v3395 = vadd.f32 %v3394, %v3323
  %v3396 = vsel %vm2683, %v3322, 0.0
  %v3397 = vadd.f32 %v3395, %v3396
  %v3398 = vrot.slane %v3397, 4
  %v3399 = vadd.f32 %v3397, %v3398
  %v3400 = vrot.slane %v3399, 2
  %v3401 = vadd.f32 %v3399, %v3400
  %v3402 = vrot.slane %v3401, 1
  %v3403 = vadd.f32 %v3401, %v3402
  %v3408 = vcombine.low %v3364, %v3377
  %v3409 = vcombine.low %v3390, %v3403
  %v3411 = vunpack.c.l.s4 1966171168
  %v3412 = vunpack.c.0.s8 %v3411
  %v3413 = vlaneseq
  %v3414 = vshrl.u32 %v3413, 7
  %v3415 = vsub.s32 %v3412, %v3414
  %v3416 = vrot.slane %v3408, %v3415
  %v3418 = vunpack.c.l.s4 1966171168
  %v3419 = vunpack.c.0.s8 %v3418
  %v3420 = vlaneseq
  %v3421 = vshrl.u32 %v3420, 7
  %v3422 = vsub.s32 %v3419, %v3421
  %v3423 = vrot.slane %v3409, %v3422
  %v3424 = vcombine.low %v3416, %v3423
  %v3426 = vunpack.c.l.s4 1966171168
  %v3427 = vunpack.c.0.s8 %v3426
  %v3428 = vlaneseq
  %v3429 = vshrl.u32 %v3428, 7
  %v3430 = vsub.s32 %v3427, %v3429
  %v3431 = vrot.slane %v3424, %v3430
  %s3433 = scalar_lea.vmem %s16, 1
  %3434 = vst.msk [vmem:[%s3433] ss:$2 sm:$0xf] %vm2923, %v3431
  %v3435 = vld [vmem:[%s1] sm:$0xff]
  %v3436 = vld [vmem:[%s1 + $0x8] sm:$0xff]
  %v3437 = vld [vmem:[%s1 + $0x10] sm:$0xff]
  %v3438 = vld [vmem:[%s1 + $0x18] sm:$0xff]
  %vm3439 = vcmask 867328
  %v3441 = vsel %vm3439, %v3438, 0
  %v3444 = vsel %vm3060, %v1476, 0
  %v3447 = vsel %vm3060, %v1477, 0
  %v3450 = vsel %vm3060, %v1478, 0
  %v3453 = vsel %vm3060, %v1479, 0
  %3455 = vmatprep.subr.mxu0 %v1293
  %3456 = vmatpush1.msra.mxu0 %v1292
  %3457 = vmatprep.subr.mxu0 %v1289
  %3458 = vmatpush1.msra.mxu0 %v1288
  %3459 = vmatprep.subr.mxu0 %v1285
  %3460 = vmatpush1.msra.mxu0 %v1284
  %3461 = vmatprep.subr.mxu0 %v1281
  %3462 = vmatpush1.msra.mxu0 %v1280
  %3463 = vmatprep.subr.mxu0 %v1277
  %3464 = vmatpush1.msra.mxu0 %v1276
  %3465 = vmatprep.subr.mxu0 %v1273
  %3466 = vmatpush1.msra.mxu0 %v1272
  %3467 = vmatprep.subr.mxu0 %v1269
  %3468 = vmatpush1.msra.mxu0 %v1268
  %3469 = vmatprep.subr.mxu0 %v1265
  %3470 = vmatpush1.msra.mxu0 %v1264
  %3471 = vmatprep.subr.mxu0 %v1261
  %3472 = vmatpush1.msra.mxu0 %v1260
  %3473 = vmatprep.subr.mxu0 %v1257
  %3474 = vmatpush1.msra.mxu0 %v1256
  %3475 = vmatprep.subr.mxu0 %v1253
  %3476 = vmatpush1.msra.mxu0 %v1252
  %3477 = vmatprep.subr.mxu0 %v1249
  %3478 = vmatpush1.msra.mxu0 %v1248
  %3479 = vmatprep.subr.mxu0 %v1245
  %3480 = vmatpush1.msra.mxu0 %v1244
  %3481 = vmatprep.subr.mxu0 %v1241
  %3482 = vmatpush1.msra.mxu0 %v1240
  %3483 = vmatprep.subr.mxu0 %v1237
  %3484 = vmatpush1.msra.mxu0 %v1236
  %3485 = vmatprep.subr.mxu0 %v1233
  %3486 = vmatpush1.msra.mxu0 %v1232
  %3487 = vmatprep.subr.mxu0 %v1357
  %3488 = vmatpush2.msra.mxu0 %v1356
  %3489 = vmatprep.subr.mxu0 %v1353
  %3490 = vmatpush2.msra.mxu0 %v1352
  %3491 = vmatprep.subr.mxu0 %v1349
  %3492 = vmatpush2.msra.mxu0 %v1348
  %3493 = vmatprep.subr.mxu0 %v1345
  %3494 = vmatpush2.msra.mxu0 %v1344
  %3495 = vmatprep.subr.mxu0 %v1341
  %3496 = vmatpush2.msra.mxu0 %v1340
  %3497 = vmatprep.subr.mxu0 %v1337
  %3498 = vmatpush2.msra.mxu0 %v1336
  %3499 = vmatprep.subr.mxu0 %v1333
  %3500 = vmatpush2.msra.mxu0 %v1332
  %3501 = vmatprep.subr.mxu0 %v1329
  %3502 = vmatpush2.msra.mxu0 %v1328
  %3503 = vmatprep.subr.mxu0 %v1325
  %3504 = vmatpush2.msra.mxu0 %v1324
  %3505 = vmatprep.subr.mxu0 %v1321
  %3506 = vmatpush2.msra.mxu0 %v1320
  %3507 = vmatprep.subr.mxu0 %v1317
  %3508 = vmatpush2.msra.mxu0 %v1316
  %3509 = vmatprep.subr.mxu0 %v1313
  %3510 = vmatpush2.msra.mxu0 %v1312
  %3511 = vmatprep.subr.mxu0 %v1309
  %3512 = vmatpush2.msra.mxu0 %v1308
  %3513 = vmatprep.subr.mxu0 %v1305
  %3514 = vmatpush2.msra.mxu0 %v1304
  %3515 = vmatprep.subr.mxu0 %v1301
  %3516 = vmatpush2.msra.mxu0 %v1300
  %3517 = vmatprep.subr.mxu0 %v1297
  %3518 = vmatpush2.msra.mxu0 %v1296
  %3519 = vmatprep.mubr.f32.mxu0 %v3436
  %3520 = vmatmul.mubr.f32.gmra.mxu0 %v3435
  %v3521 = vpop.f32.mrf.mxu0
  %v3522 = vadd.f32 0.0, %v3521
  %v3523 = vpop.f32.mrf.mxu0
  %v3524 = vadd.f32 0.0, %v3523
  %3525 = vdwg.mxu0
  %3526 = vmatprep.subr.mxu0 %v1421
  %3527 = vmatpush1.msra.mxu0 %v1420
  %3528 = vmatprep.subr.mxu0 %v1417
  %3529 = vmatpush1.msra.mxu0 %v1416
  %3530 = vmatprep.subr.mxu0 %v1413
  %3531 = vmatpush1.msra.mxu0 %v1412
  %3532 = vmatprep.subr.mxu0 %v1409
  %3533 = vmatpush1.msra.mxu0 %v1408
  %3534 = vmatprep.subr.mxu0 %v1405
  %3535 = vmatpush1.msra.mxu0 %v1404
  %3536 = vmatprep.subr.mxu0 %v1401
  %3537 = vmatpush1.msra.mxu0 %v1400
  %3538 = vmatprep.subr.mxu0 %v1397
  %3539 = vmatpush1.msra.mxu0 %v1396
  %3540 = vmatprep.subr.mxu0 %v1393
  %3541 = vmatpush1.msra.mxu0 %v1392
  %3542 = vmatprep.subr.mxu0 %v1389
  %3543 = vmatpush1.msra.mxu0 %v1388
  %3544 = vmatprep.subr.mxu0 %v1385
  %3545 = vmatpush1.msra.mxu0 %v1384
  %3546 = vmatprep.subr.mxu0 %v1381
  %3547 = vmatpush1.msra.mxu0 %v1380
  %3548 = vmatprep.subr.mxu0 %v1377
  %3549 = vmatpush1.msra.mxu0 %v1376
  %3550 = vmatprep.subr.mxu0 %v1373
  %3551 = vmatpush1.msra.mxu0 %v1372
  %3552 = vmatprep.subr.mxu0 %v1369
  %3553 = vmatpush1.msra.mxu0 %v1368
  %3554 = vmatprep.subr.mxu0 %v1365
  %3555 = vmatpush1.msra.mxu0 %v1364
  %3556 = vmatprep.subr.mxu0 %v1361
  %3557 = vmatpush1.msra.mxu0 %v1360
  %3558 = vmatprep.subr.mxu0 0.0
  %3559 = vmatpush2.msra.mxu0 0.0
  %3560 = vmatprep.subr.mxu0 0.0
  %3561 = vmatpush2.msra.mxu0 0.0
  %3562 = vmatprep.subr.mxu0 %v3447
  %3563 = vmatpush2.msra.mxu0 %v3444
  %3564 = vmatprep.subr.mxu0 %v1473
  %3565 = vmatpush2.msra.mxu0 %v1472
  %3566 = vmatprep.subr.mxu0 %v1469
  %3567 = vmatpush2.msra.mxu0 %v1468
  %3568 = vmatprep.subr.mxu0 %v1465
  %3569 = vmatpush2.msra.mxu0 %v1464
  %3570 = vmatprep.subr.mxu0 %v1461
  %3571 = vmatpush2.msra.mxu0 %v1460
  %3572 = vmatprep.subr.mxu0 %v1457
  %3573 = vmatpush2.msra.mxu0 %v1456
  %3574 = vmatprep.subr.mxu0 %v1453
  %3575 = vmatpush2.msra.mxu0 %v1452
  %3576 = vmatprep.subr.mxu0 %v1449
  %3577 = vmatpush2.msra.mxu0 %v1448
  %3578 = vmatprep.subr.mxu0 %v1445
  %3579 = vmatpush2.msra.mxu0 %v1444
  %3580 = vmatprep.subr.mxu0 %v1441
  %3581 = vmatpush2.msra.mxu0 %v1440
  %3582 = vmatprep.subr.mxu0 %v1437
  %3583 = vmatpush2.msra.mxu0 %v1436
  %3584 = vmatprep.subr.mxu0 %v1433
  %3585 = vmatpush2.msra.mxu0 %v1432
  %3586 = vmatprep.subr.mxu0 %v1429
  %3587 = vmatpush2.msra.mxu0 %v1428
  %3588 = vmatprep.subr.mxu0 %v1425
  %3589 = vmatpush2.msra.mxu0 %v1424
  %3590 = vmatprep.mubr.f32.mxu0 %v3441
  %3591 = vmatmul.mubr.f32.gmra.mxu0 %v3437
  %v3592 = vpop.f32.mrf.mxu0
  %v3593 = vadd.f32 %v3522, %v3592
  %v3594 = vpop.f32.mrf.mxu0
  %v3595 = vadd.f32 %v3524, %v3594
  %3596 = vdwg.mxu0
  %3597 = vmatprep.subr.mxu0 %v1295
  %3598 = vmatpush1.msra.mxu0 %v1294
  %3599 = vmatprep.subr.mxu0 %v1291
  %3600 = vmatpush1.msra.mxu0 %v1290
  %3601 = vmatprep.subr.mxu0 %v1287
  %3602 = vmatpush1.msra.mxu0 %v1286
  %3603 = vmatprep.subr.mxu0 %v1283
  %3604 = vmatpush1.msra.mxu0 %v1282
  %3605 = vmatprep.subr.mxu0 %v1279
  %3606 = vmatpush1.msra.mxu0 %v1278
  %3607 = vmatprep.subr.mxu0 %v1275
  %3608 = vmatpush1.msra.mxu0 %v1274
  %3609 = vmatprep.subr.mxu0 %v1271
  %3610 = vmatpush1.msra.mxu0 %v1270
  %3611 = vmatprep.subr.mxu0 %v1267
  %3612 = vmatpush1.msra.mxu0 %v1266
  %3613 = vmatprep.subr.mxu0 %v1263
  %3614 = vmatpush1.msra.mxu0 %v1262
  %3615 = vmatprep.subr.mxu0 %v1259
  %3616 = vmatpush1.msra.mxu0 %v1258
  %3617 = vmatprep.subr.mxu0 %v1255
  %3618 = vmatpush1.msra.mxu0 %v1254
  %3619 = vmatprep.subr.mxu0 %v1251
  %3620 = vmatpush1.msra.mxu0 %v1250
  %3621 = vmatprep.subr.mxu0 %v1247
  %3622 = vmatpush1.msra.mxu0 %v1246
  %3623 = vmatprep.subr.mxu0 %v1243
  %3624 = vmatpush1.msra.mxu0 %v1242
  %3625 = vmatprep.subr.mxu0 %v1239
  %3626 = vmatpush1.msra.mxu0 %v1238
  %3627 = vmatprep.subr.mxu0 %v1235
  %3628 = vmatpush1.msra.mxu0 %v1234
  %3629 = vmatprep.subr.mxu0 %v1359
  %3630 = vmatpush2.msra.mxu0 %v1358
  %3631 = vmatprep.subr.mxu0 %v1355
  %3632 = vmatpush2.msra.mxu0 %v1354
  %3633 = vmatprep.subr.mxu0 %v1351
  %3634 = vmatpush2.msra.mxu0 %v1350
  %3635 = vmatprep.subr.mxu0 %v1347
  %3636 = vmatpush2.msra.mxu0 %v1346
  %3637 = vmatprep.subr.mxu0 %v1343
  %3638 = vmatpush2.msra.mxu0 %v1342
  %3639 = vmatprep.subr.mxu0 %v1339
  %3640 = vmatpush2.msra.mxu0 %v1338
  %3641 = vmatprep.subr.mxu0 %v1335
  %3642 = vmatpush2.msra.mxu0 %v1334
  %3643 = vmatprep.subr.mxu0 %v1331
  %3644 = vmatpush2.msra.mxu0 %v1330
  %3645 = vmatprep.subr.mxu0 %v1327
  %3646 = vmatpush2.msra.mxu0 %v1326
  %3647 = vmatprep.subr.mxu0 %v1323
  %3648 = vmatpush2.msra.mxu0 %v1322
  %3649 = vmatprep.subr.mxu0 %v1319
  %3650 = vmatpush2.msra.mxu0 %v1318
  %3651 = vmatprep.subr.mxu0 %v1315
  %3652 = vmatpush2.msra.mxu0 %v1314
  %3653 = vmatprep.subr.mxu0 %v1311
  %3654 = vmatpush2.msra.mxu0 %v1310
  %3655 = vmatprep.subr.mxu0 %v1307
  %3656 = vmatpush2.msra.mxu0 %v1306
  %3657 = vmatprep.subr.mxu0 %v1303
  %3658 = vmatpush2.msra.mxu0 %v1302
  %3659 = vmatprep.subr.mxu0 %v1299
  %3660 = vmatpush2.msra.mxu0 %v1298
  %3661 = vmatprep.mubr.f32.mxu0 %v3436
  %3662 = vmatmul.mubr.f32.gmra.mxu0 %v3435
  %v3663 = vpop.f32.mrf.mxu0
  %v3664 = vadd.f32 0.0, %v3663
  %v3665 = vpop.f32.mrf.mxu0
  %v3666 = vadd.f32 0.0, %v3665
  %3667 = vdwg.mxu0
  %3668 = vmatprep.subr.mxu0 %v1423
  %3669 = vmatpush1.msra.mxu0 %v1422
  %3670 = vmatprep.subr.mxu0 %v1419
  %3671 = vmatpush1.msra.mxu0 %v1418
  %3672 = vmatprep.subr.mxu0 %v1415
  %3673 = vmatpush1.msra.mxu0 %v1414
  %3674 = vmatprep.subr.mxu0 %v1411
  %3675 = vmatpush1.msra.mxu0 %v1410
  %3676 = vmatprep.subr.mxu0 %v1407
  %3677 = vmatpush1.msra.mxu0 %v1406
  %3678 = vmatprep.subr.mxu0 %v1403
  %3679 = vmatpush1.msra.mxu0 %v1402
  %3680 = vmatprep.subr.mxu0 %v1399
  %3681 = vmatpush1.msra.mxu0 %v1398
  %3682 = vmatprep.subr.mxu0 %v1395
  %3683 = vmatpush1.msra.mxu0 %v1394
  %3684 = vmatprep.subr.mxu0 %v1391
  %3685 = vmatpush1.msra.mxu0 %v1390
  %3686 = vmatprep.subr.mxu0 %v1387
  %3687 = vmatpush1.msra.mxu0 %v1386
  %3688 = vmatprep.subr.mxu0 %v1383
  %3689 = vmatpush1.msra.mxu0 %v1382
  %3690 = vmatprep.subr.mxu0 %v1379
  %3691 = vmatpush1.msra.mxu0 %v1378
  %3692 = vmatprep.subr.mxu0 %v1375
  %3693 = vmatpush1.msra.mxu0 %v1374
  %3694 = vmatprep.subr.mxu0 %v1371
  %3695 = vmatpush1.msra.mxu0 %v1370
  %3696 = vmatprep.subr.mxu0 %v1367
  %3697 = vmatpush1.msra.mxu0 %v1366
  %3698 = vmatprep.subr.mxu0 %v1363
  %3699 = vmatpush1.msra.mxu0 %v1362
  %3700 = vmatprep.subr.mxu0 0.0
  %3701 = vmatpush2.msra.mxu0 0.0
  %3702 = vmatprep.subr.mxu0 0.0
  %3703 = vmatpush2.msra.mxu0 0.0
  %3704 = vmatprep.subr.mxu0 %v3453
  %3705 = vmatpush2.msra.mxu0 %v3450
  %3706 = vmatprep.subr.mxu0 %v1475
  %3707 = vmatpush2.msra.mxu0 %v1474
  %3708 = vmatprep.subr.mxu0 %v1471
  %3709 = vmatpush2.msra.mxu0 %v1470
  %3710 = vmatprep.subr.mxu0 %v1467
  %3711 = vmatpush2.msra.mxu0 %v1466
  %3712 = vmatprep.subr.mxu0 %v1463
  %3713 = vmatpush2.msra.mxu0 %v1462
  %3714 = vmatprep.subr.mxu0 %v1459
  %3715 = vmatpush2.msra.mxu0 %v1458
  %3716 = vmatprep.subr.mxu0 %v1455
  %3717 = vmatpush2.msra.mxu0 %v1454
  %3718 = vmatprep.subr.mxu0 %v1451
  %3719 = vmatpush2.msra.mxu0 %v1450
  %3720 = vmatprep.subr.mxu0 %v1447
  %3721 = vmatpush2.msra.mxu0 %v1446
  %3722 = vmatprep.subr.mxu0 %v1443
  %3723 = vmatpush2.msra.mxu0 %v1442
  %3724 = vmatprep.subr.mxu0 %v1439
  %3725 = vmatpush2.msra.mxu0 %v1438
  %3726 = vmatprep.subr.mxu0 %v1435
  %3727 = vmatpush2.msra.mxu0 %v1434
  %3728 = vmatprep.subr.mxu0 %v1431
  %3729 = vmatpush2.msra.mxu0 %v1430
  %3730 = vmatprep.subr.mxu0 %v1427
  %3731 = vmatpush2.msra.mxu0 %v1426
  %3732 = vmatprep.mubr.f32.mxu0 %v3441
  %3733 = vmatmul.mubr.f32.gmra.mxu0 %v3437
  %v3734 = vpop.f32.mrf.mxu0
  %v3735 = vadd.f32 %v3664, %v3734
  %v3736 = vpop.f32.mrf.mxu0
  %v3737 = vadd.f32 %v3666, %v3736
  %3738 = vdwg.mxu0
  %v3739 = vld [vmem:[%s12] sm:$0xff]
  %v3740 = vld [vmem:[%s12 + $0x8] sm:$0xff]
  %v3741 = vld [vmem:[%s12 + $0x10] sm:$0xff]
  %v3742 = vld [vmem:[%s12 + $0x18] sm:$0xff]
  %v3743 = vld [vmem:[%s12 + $0x20] sm:$0xff]
  %v3744 = vld [vmem:[%s12 + $0x28] sm:$0xff]
  %v3745 = vld [vmem:[%s12 + $0x30] sm:$0xff]
  %v3746 = vld [vmem:[%s12 + $0x38] sm:$0xff]
  %v3747 = vld [vmem:[%s12 + $0x40] sm:$0xff]
  %v3748 = vld [vmem:[%s12 + $0x48] sm:$0xff]
  %v3749 = vld [vmem:[%s12 + $0x50] sm:$0xff]
  %v3750 = vld [vmem:[%s12 + $0x58] sm:$0xff]
  %v3751 = vld [vmem:[%s12 + $0x60] sm:$0xff]
  %v3752 = vld [vmem:[%s12 + $0x68] sm:$0xff]
  %v3753 = vld [vmem:[%s12 + $0x70] sm:$0xff]
  %v3754 = vld [vmem:[%s12 + $0x78] sm:$0xff]
  %v3755 = vld [vmem:[%s12 + $0x80] sm:$0xff]
  %v3756 = vld [vmem:[%s12 + $0x88] sm:$0xff]
  %v3757 = vld [vmem:[%s12 + $0x90] sm:$0xff]
  %v3758 = vld [vmem:[%s12 + $0x98] sm:$0xff]
  %v3759 = vld [vmem:[%s12 + $0xa0] sm:$0xff]
  %v3760 = vld [vmem:[%s12 + $0xa8] sm:$0xff]
  %v3761 = vld [vmem:[%s12 + $0xb0] sm:$0xff]
  %v3762 = vld [vmem:[%s12 + $0xb8] sm:$0xff]
  %v3763 = vld [vmem:[%s12 + $0xc0] sm:$0xff]
  %v3764 = vld [vmem:[%s12 + $0xc8] sm:$0xff]
  %v3765 = vld [vmem:[%s12 + $0xd0] sm:$0xff]
  %v3766 = vld [vmem:[%s12 + $0xd8] sm:$0xff]
  %v3767 = vld [vmem:[%s12 + $0xe0] sm:$0xff]
  %v3768 = vld [vmem:[%s12 + $0xe8] sm:$0xff]
  %v3769 = vld [vmem:[%s12 + $0xf0] sm:$0xff]
  %v3770 = vld [vmem:[%s12 + $0xf8] sm:$0xff]
  %v3771 = vld [vmem:[%s12 + $0x100] sm:$0xff]
  %v3772 = vld [vmem:[%s12 + $0x108] sm:$0xff]
  %v3773 = vld [vmem:[%s12 + $0x110] sm:$0xff]
  %v3774 = vld [vmem:[%s12 + $0x118] sm:$0xff]
  %v3775 = vld [vmem:[%s12 + $0x120] sm:$0xff]
  %v3776 = vld [vmem:[%s12 + $0x128] sm:$0xff]
  %v3777 = vld [vmem:[%s12 + $0x130] sm:$0xff]
  %v3778 = vld [vmem:[%s12 + $0x138] sm:$0xff]
  %v3779 = vld [vmem:[%s12 + $0x140] sm:$0xff]
  %v3780 = vld [vmem:[%s12 + $0x148] sm:$0xff]
  %v3781 = vld [vmem:[%s12 + $0x150] sm:$0xff]
  %v3782 = vld [vmem:[%s12 + $0x158] sm:$0xff]
  %v3783 = vld [vmem:[%s12 + $0x160] sm:$0xff]
  %v3784 = vld [vmem:[%s12 + $0x168] sm:$0xff]
  %v3785 = vld [vmem:[%s12 + $0x170] sm:$0xff]
  %v3786 = vld [vmem:[%s12 + $0x178] sm:$0xff]
  %v3787 = vld [vmem:[%s12 + $0x180] sm:$0xff]
  %v3788 = vld [vmem:[%s12 + $0x188] sm:$0xff]
  %v3789 = vld [vmem:[%s12 + $0x190] sm:$0xff]
  %v3790 = vld [vmem:[%s12 + $0x198] sm:$0xff]
  %v3791 = vld [vmem:[%s12 + $0x1a0] sm:$0xff]
  %v3792 = vld [vmem:[%s12 + $0x1a8] sm:$0xff]
  %v3793 = vld [vmem:[%s12 + $0x1b0] sm:$0xff]
  %v3794 = vld [vmem:[%s12 + $0x1b8] sm:$0xff]
  %v3795 = vld [vmem:[%s12 + $0x1c0] sm:$0xff]
  %v3796 = vld [vmem:[%s12 + $0x1c8] sm:$0xff]
  %v3797 = vld [vmem:[%s12 + $0x1d0] sm:$0xff]
  %v3798 = vld [vmem:[%s12 + $0x1d8] sm:$0xff]
  %v3799 = vld [vmem:[%s12 + $0x1e0] sm:$0xff]
  %v3800 = vld [vmem:[%s12 + $0x1e8] sm:$0xff]
  %v3801 = vld [vmem:[%s12 + $0x1f0] sm:$0xff]
  %v3802 = vld [vmem:[%s12 + $0x1f8] sm:$0xff]
  %v3803 = vld [vmem:[%s12 + $0x200] sm:$0xff]
  %v3804 = vld [vmem:[%s12 + $0x208] sm:$0xff]
  %v3805 = vld [vmem:[%s12 + $0x210] sm:$0xff]
  %v3806 = vld [vmem:[%s12 + $0x218] sm:$0xff]
  %v3807 = vld [vmem:[%s12 + $0x220] sm:$0xff]
  %v3808 = vld [vmem:[%s12 + $0x228] sm:$0xff]
  %v3809 = vld [vmem:[%s12 + $0x230] sm:$0xff]
  %v3810 = vld [vmem:[%s12 + $0x238] sm:$0xff]
  %v3811 = vld [vmem:[%s12 + $0x240] sm:$0xff]
  %v3812 = vld [vmem:[%s12 + $0x248] sm:$0xff]
  %v3813 = vld [vmem:[%s12 + $0x250] sm:$0xff]
  %v3814 = vld [vmem:[%s12 + $0x258] sm:$0xff]
  %v3815 = vld [vmem:[%s12 + $0x260] sm:$0xff]
  %v3816 = vld [vmem:[%s12 + $0x268] sm:$0xff]
  %v3817 = vld [vmem:[%s12 + $0x270] sm:$0xff]
  %v3818 = vld [vmem:[%s12 + $0x278] sm:$0xff]
  %v3819 = vld [vmem:[%s12 + $0x280] sm:$0xff]
  %v3820 = vld [vmem:[%s12 + $0x288] sm:$0xff]
  %v3821 = vld [vmem:[%s12 + $0x290] sm:$0xff]
  %v3822 = vld [vmem:[%s12 + $0x298] sm:$0xff]
  %v3823 = vld [vmem:[%s12 + $0x2a0] sm:$0xff]
  %v3824 = vld [vmem:[%s12 + $0x2a8] sm:$0xff]
  %v3825 = vld [vmem:[%s12 + $0x2b0] sm:$0xff]
  %v3826 = vld [vmem:[%s12 + $0x2b8] sm:$0xff]
  %v3827 = vld [vmem:[%s12 + $0x2c0] sm:$0xff]
  %v3828 = vld [vmem:[%s12 + $0x2c8] sm:$0xff]
  %v3829 = vld [vmem:[%s12 + $0x2d0] sm:$0xff]
  %v3830 = vld [vmem:[%s12 + $0x2d8] sm:$0xff]
  %v3831 = vld [vmem:[%s12 + $0x2e0] sm:$0xff]
  %v3832 = vld [vmem:[%s12 + $0x2e8] sm:$0xff]
  %v3833 = vld [vmem:[%s12 + $0x2f0] sm:$0xff]
  %v3834 = vld [vmem:[%s12 + $0x2f8] sm:$0xff]
  %v3835 = vld [vmem:[%s12 + $0x300] sm:$0xff]
  %v3836 = vld [vmem:[%s12 + $0x308] sm:$0xff]
  %v3837 = vld [vmem:[%s12 + $0x310] sm:$0xff]
  %v3838 = vld [vmem:[%s12 + $0x318] sm:$0xff]
  %v3839 = vld [vmem:[%s12 + $0x320] sm:$0xff]
  %v3840 = vld [vmem:[%s12 + $0x328] sm:$0xff]
  %v3841 = vld [vmem:[%s12 + $0x330] sm:$0xff]
  %v3842 = vld [vmem:[%s12 + $0x338] sm:$0xff]
  %v3843 = vld [vmem:[%s12 + $0x340] sm:$0xff]
  %v3844 = vld [vmem:[%s12 + $0x348] sm:$0xff]
  %v3845 = vld [vmem:[%s12 + $0x350] sm:$0xff]
  %v3846 = vld [vmem:[%s12 + $0x358] sm:$0xff]
  %v3847 = vld [vmem:[%s12 + $0x360] sm:$0xff]
  %v3848 = vld [vmem:[%s12 + $0x368] sm:$0xff]
  %v3849 = vld [vmem:[%s12 + $0x370] sm:$0xff]
  %v3850 = vld [vmem:[%s12 + $0x378] sm:$0xff]
  %v3851 = vld [vmem:[%s12 + $0x380] sm:$0xff]
  %v3852 = vld [vmem:[%s12 + $0x388] sm:$0xff]
  %v3853 = vld [vmem:[%s12 + $0x390] sm:$0xff]
  %v3854 = vld [vmem:[%s12 + $0x398] sm:$0xff]
  %v3855 = vld [vmem:[%s12 + $0x3a0] sm:$0xff]
  %v3856 = vld [vmem:[%s12 + $0x3a8] sm:$0xff]
  %v3857 = vld [vmem:[%s12 + $0x3b0] sm:$0xff]
  %v3858 = vld [vmem:[%s12 + $0x3b8] sm:$0xff]
  %v3859 = vld [vmem:[%s12 + $0x3c0] sm:$0xff]
  %v3860 = vld [vmem:[%s12 + $0x3c8] sm:$0xff]
  %v3861 = vld [vmem:[%s12 + $0x3d0] sm:$0xff]
  %v3862 = vld [vmem:[%s12 + $0x3d8] sm:$0xff]
  %v3863 = vld [vmem:[%s12 + $0x3e0] sm:$0xff]
  %v3864 = vld [vmem:[%s12 + $0x3e8] sm:$0xff]
  %v3865 = vld [vmem:[%s12 + $0x3f0] sm:$0xff]
  %v3866 = vld [vmem:[%s12 + $0x3f8] sm:$0xff]
  %v3867 = vld [vmem:[%s12 + $0x400] sm:$0xff]
  %v3868 = vld [vmem:[%s12 + $0x408] sm:$0xff]
  %v3869 = vld [vmem:[%s12 + $0x410] sm:$0xff]
  %v3870 = vld [vmem:[%s12 + $0x418] sm:$0xff]
  %v3871 = vld [vmem:[%s12 + $0x420] sm:$0xff]
  %v3872 = vld [vmem:[%s12 + $0x428] sm:$0xff]
  %v3873 = vld [vmem:[%s12 + $0x430] sm:$0xff]
  %v3874 = vld [vmem:[%s12 + $0x438] sm:$0xff]
  %v3875 = vld [vmem:[%s12 + $0x440] sm:$0xff]
  %v3876 = vld [vmem:[%s12 + $0x448] sm:$0xff]
  %v3877 = vld [vmem:[%s12 + $0x450] sm:$0xff]
  %v3878 = vld [vmem:[%s12 + $0x458] sm:$0xff]
  %v3879 = vld [vmem:[%s12 + $0x460] sm:$0xff]
  %v3880 = vld [vmem:[%s12 + $0x468] sm:$0xff]
  %v3881 = vld [vmem:[%s12 + $0x470] sm:$0xff]
  %v3882 = vld [vmem:[%s12 + $0x478] sm:$0xff]
  %v3883 = vld [vmem:[%s12 + $0x480] sm:$0xff]
  %v3884 = vld [vmem:[%s12 + $0x488] sm:$0xff]
  %v3885 = vld [vmem:[%s12 + $0x490] sm:$0xff]
  %v3886 = vld [vmem:[%s12 + $0x498] sm:$0xff]
  %v3887 = vld [vmem:[%s12 + $0x4a0] sm:$0xff]
  %v3888 = vld [vmem:[%s12 + $0x4a8] sm:$0xff]
  %v3889 = vld [vmem:[%s12 + $0x4b0] sm:$0xff]
  %v3890 = vld [vmem:[%s12 + $0x4b8] sm:$0xff]
  %v3891 = vld [vmem:[%s12 + $0x4c0] sm:$0xff]
  %v3892 = vld [vmem:[%s12 + $0x4c8] sm:$0xff]
  %v3893 = vld [vmem:[%s12 + $0x4d0] sm:$0xff]
  %v3894 = vld [vmem:[%s12 + $0x4d8] sm:$0xff]
  %v3895 = vld [vmem:[%s12 + $0x4e0] sm:$0xff]
  %v3896 = vld [vmem:[%s12 + $0x4e8] sm:$0xff]
  %v3897 = vld [vmem:[%s12 + $0x4f0] sm:$0xff]
  %v3898 = vld [vmem:[%s12 + $0x4f8] sm:$0xff]
  %v3899 = vld [vmem:[%s12 + $0x500] sm:$0xff]
  %v3900 = vld [vmem:[%s12 + $0x508] sm:$0xff]
  %v3901 = vld [vmem:[%s12 + $0x510] sm:$0xff]
  %v3902 = vld [vmem:[%s12 + $0x518] sm:$0xff]
  %v3903 = vld [vmem:[%s12 + $0x520] sm:$0xff]
  %v3904 = vld [vmem:[%s12 + $0x528] sm:$0xff]
  %v3905 = vld [vmem:[%s12 + $0x530] sm:$0xff]
  %v3906 = vld [vmem:[%s12 + $0x538] sm:$0xff]
  %v3907 = vld [vmem:[%s12 + $0x540] sm:$0xff]
  %v3908 = vld [vmem:[%s12 + $0x548] sm:$0xff]
  %v3909 = vld [vmem:[%s12 + $0x550] sm:$0xff]
  %v3910 = vld [vmem:[%s12 + $0x558] sm:$0xff]
  %v3911 = vld [vmem:[%s12 + $0x560] sm:$0xff]
  %v3912 = vld [vmem:[%s12 + $0x568] sm:$0xff]
  %v3913 = vld [vmem:[%s12 + $0x570] sm:$0xff]
  %v3914 = vld [vmem:[%s12 + $0x578] sm:$0xff]
  %v3915 = vld [vmem:[%s12 + $0x580] sm:$0xff]
  %v3916 = vld [vmem:[%s12 + $0x588] sm:$0xff]
  %v3917 = vld [vmem:[%s12 + $0x590] sm:$0xff]
  %v3918 = vld [vmem:[%s12 + $0x598] sm:$0xff]
  %v3919 = vld [vmem:[%s12 + $0x5a0] sm:$0xff]
  %v3920 = vld [vmem:[%s12 + $0x5a8] sm:$0xff]
  %v3921 = vld [vmem:[%s12 + $0x5b0] sm:$0xff]
  %v3922 = vld [vmem:[%s12 + $0x5b8] sm:$0xff]
  %v3923 = vld [vmem:[%s12 + $0x5c0] sm:$0xff]
  %v3924 = vld [vmem:[%s12 + $0x5c8] sm:$0xff]
  %v3925 = vld [vmem:[%s12 + $0x5d0] sm:$0xff]
  %v3926 = vld [vmem:[%s12 + $0x5d8] sm:$0xff]
  %v3927 = vld [vmem:[%s12 + $0x5e0] sm:$0xff]
  %v3928 = vld [vmem:[%s12 + $0x5e8] sm:$0xff]
  %v3929 = vld [vmem:[%s12 + $0x5f0] sm:$0xff]
  %v3930 = vld [vmem:[%s12 + $0x5f8] sm:$0xff]
  %v3931 = vld [vmem:[%s12 + $0x600] sm:$0xff]
  %v3932 = vld [vmem:[%s12 + $0x608] sm:$0xff]
  %v3933 = vld [vmem:[%s12 + $0x610] sm:$0xff]
  %v3934 = vld [vmem:[%s12 + $0x618] sm:$0xff]
  %v3935 = vld [vmem:[%s12 + $0x620] sm:$0xff]
  %v3936 = vld [vmem:[%s12 + $0x628] sm:$0xff]
  %v3937 = vld [vmem:[%s12 + $0x630] sm:$0xff]
  %v3938 = vld [vmem:[%s12 + $0x638] sm:$0xff]
  %v3939 = vld [vmem:[%s12 + $0x640] sm:$0xff]
  %v3940 = vld [vmem:[%s12 + $0x648] sm:$0xff]
  %v3941 = vld [vmem:[%s12 + $0x650] sm:$0xff]
  %v3942 = vld [vmem:[%s12 + $0x658] sm:$0xff]
  %v3943 = vld [vmem:[%s12 + $0x660] sm:$0xff]
  %v3944 = vld [vmem:[%s12 + $0x668] sm:$0xff]
  %v3945 = vld [vmem:[%s12 + $0x670] sm:$0xff]
  %v3946 = vld [vmem:[%s12 + $0x678] sm:$0xff]
  %v3947 = vld [vmem:[%s12 + $0x680] sm:$0xff]
  %v3948 = vld [vmem:[%s12 + $0x688] sm:$0xff]
  %v3949 = vld [vmem:[%s12 + $0x690] sm:$0xff]
  %v3950 = vld [vmem:[%s12 + $0x698] sm:$0xff]
  %v3951 = vld [vmem:[%s12 + $0x6a0] sm:$0xff]
  %v3952 = vld [vmem:[%s12 + $0x6a8] sm:$0xff]
  %v3953 = vld [vmem:[%s12 + $0x6b0] sm:$0xff]
  %v3954 = vld [vmem:[%s12 + $0x6b8] sm:$0xff]
  %v3955 = vld [vmem:[%s12 + $0x6c0] sm:$0xff]
  %v3956 = vld [vmem:[%s12 + $0x6c8] sm:$0xff]
  %v3957 = vld [vmem:[%s12 + $0x6d0] sm:$0xff]
  %v3958 = vld [vmem:[%s12 + $0x6d8] sm:$0xff]
  %v3959 = vld [vmem:[%s12 + $0x6e0] sm:$0xff]
  %v3960 = vld [vmem:[%s12 + $0x6e8] sm:$0xff]
  %v3961 = vld [vmem:[%s12 + $0x6f0] sm:$0xff]
  %v3962 = vld [vmem:[%s12 + $0x6f8] sm:$0xff]
  %v3963 = vld [vmem:[%s12 + $0x700] sm:$0xff]
  %v3964 = vld [vmem:[%s12 + $0x708] sm:$0xff]
  %v3965 = vld [vmem:[%s12 + $0x710] sm:$0xff]
  %v3966 = vld [vmem:[%s12 + $0x718] sm:$0xff]
  %v3967 = vld [vmem:[%s12 + $0x720] sm:$0xff]
  %v3968 = vld [vmem:[%s12 + $0x728] sm:$0xff]
  %v3969 = vld [vmem:[%s12 + $0x730] sm:$0xff]
  %v3970 = vld [vmem:[%s12 + $0x738] sm:$0xff]
  %v3971 = vld [vmem:[%s12 + $0x740] sm:$0xff]
  %v3972 = vld [vmem:[%s12 + $0x748] sm:$0xff]
  %v3973 = vld [vmem:[%s12 + $0x750] sm:$0xff]
  %v3974 = vld [vmem:[%s12 + $0x758] sm:$0xff]
  %v3975 = vld [vmem:[%s12 + $0x760] sm:$0xff]
  %v3976 = vld [vmem:[%s12 + $0x768] sm:$0xff]
  %v3977 = vld [vmem:[%s12 + $0x770] sm:$0xff]
  %v3978 = vld [vmem:[%s12 + $0x778] sm:$0xff]
  %v3979 = vld [vmem:[%s12 + $0x780] sm:$0xff]
  %v3980 = vld [vmem:[%s12 + $0x788] sm:$0xff]
  %v3981 = vld [vmem:[%s12 + $0x790] sm:$0xff]
  %v3982 = vld [vmem:[%s12 + $0x798] sm:$0xff]
  %v3983 = vld [vmem:[%s12 + $0x7a0] sm:$0xff]
  %v3984 = vld [vmem:[%s12 + $0x7a8] sm:$0xff]
  %v3985 = vld [vmem:[%s12 + $0x7b0] sm:$0xff]
  %v3986 = vld [vmem:[%s12 + $0x7b8] sm:$0xff]
  %v3987 = vld [vmem:[%s12 + $0x7c0] sm:$0xff]
  %v3988 = vld [vmem:[%s12 + $0x7c8] sm:$0xff]
  %v3989 = vld [vmem:[%s12 + $0x7d0] sm:$0xff]
  %v3990 = vld [vmem:[%s12 + $0x7d8] sm:$0xff]
  %v3991 = vld [vmem:[%s12 + $0x7e0] sm:$0xff]
  %v3992 = vld [vmem:[%s12 + $0x7e8] sm:$0xff]
  %v3993 = vld [vmem:[%s12 + $0x7f0] sm:$0xff]
  %v3994 = vld [vmem:[%s12 + $0x7f8] sm:$0xff]
  %v3995 = vld [vmem:[%s13] sm:$0xf]
  %v3997 = vlaneseq
  %v3998 = vshrl.u32 %v3997, 7
  %v3999 = vsub.s32 0, %v3998
  %v4000 = vrot.slane %v3995, %v3999
  %v4001 = vlaneseq
  %v4002 = vshrl.u32 %v4001, 7
  %v4003 = vsub.s32 1, %v4002
  %v4004 = vrot.slane %v3995, %v4003
  %v4005 = vlaneseq
  %v4006 = vshrl.u32 %v4005, 7
  %v4007 = vsub.s32 2, %v4006
  %v4008 = vrot.slane %v3995, %v4007
  %v4009 = vlaneseq
  %v4010 = vshrl.u32 %v4009, 7
  %v4011 = vsub.s32 3, %v4010
  %v4012 = vrot.slane %v3995, %v4011
  %4017 = vmatprep.subr.mxu0 %v3800
  %4018 = vmatpush1.msra.mxu0 %v3799
  %4019 = vmatprep.subr.mxu0 %v3796
  %4020 = vmatpush1.msra.mxu0 %v3795
  %4021 = vmatprep.subr.mxu0 %v3792
  %4022 = vmatpush1.msra.mxu0 %v3791
  %4023 = vmatprep.subr.mxu0 %v3788
  %4024 = vmatpush1.msra.mxu0 %v3787
  %4025 = vmatprep.subr.mxu0 %v3784
  %4026 = vmatpush1.msra.mxu0 %v3783
  %4027 = vmatprep.subr.mxu0 %v3780
  %4028 = vmatpush1.msra.mxu0 %v3779
  %4029 = vmatprep.subr.mxu0 %v3776
  %4030 = vmatpush1.msra.mxu0 %v3775
  %4031 = vmatprep.subr.mxu0 %v3772
  %4032 = vmatpush1.msra.mxu0 %v3771
  %4033 = vmatprep.subr.mxu0 %v3768
  %4034 = vmatpush1.msra.mxu0 %v3767
  %4035 = vmatprep.subr.mxu0 %v3764
  %4036 = vmatpush1.msra.mxu0 %v3763
  %4037 = vmatprep.subr.mxu0 %v3760
  %4038 = vmatpush1.msra.mxu0 %v3759
  %4039 = vmatprep.subr.mxu0 %v3756
  %4040 = vmatpush1.msra.mxu0 %v3755
  %4041 = vmatprep.subr.mxu0 %v3752
  %4042 = vmatpush1.msra.mxu0 %v3751
  %4043 = vmatprep.subr.mxu0 %v3748
  %4044 = vmatpush1.msra.mxu0 %v3747
  %4045 = vmatprep.subr.mxu0 %v3744
  %4046 = vmatpush1.msra.mxu0 %v3743
  %4047 = vmatprep.subr.mxu0 %v3740
  %4048 = vmatpush1.msra.mxu0 %v3739
  %4049 = vmatprep.subr.mxu0 %v3864
  %4050 = vmatpush2.msra.mxu0 %v3863
  %4051 = vmatprep.subr.mxu0 %v3860
  %4052 = vmatpush2.msra.mxu0 %v3859
  %4053 = vmatprep.subr.mxu0 %v3856
  %4054 = vmatpush2.msra.mxu0 %v3855
  %4055 = vmatprep.subr.mxu0 %v3852
  %4056 = vmatpush2.msra.mxu0 %v3851
  %4057 = vmatprep.subr.mxu0 %v3848
  %4058 = vmatpush2.msra.mxu0 %v3847
  %4059 = vmatprep.subr.mxu0 %v3844
  %4060 = vmatpush2.msra.mxu0 %v3843
  %4061 = vmatprep.subr.mxu0 %v3840
  %4062 = vmatpush2.msra.mxu0 %v3839
  %4063 = vmatprep.subr.mxu0 %v3836
  %4064 = vmatpush2.msra.mxu0 %v3835
  %4065 = vmatprep.subr.mxu0 %v3832
  %4066 = vmatpush2.msra.mxu0 %v3831
  %4067 = vmatprep.subr.mxu0 %v3828
  %4068 = vmatpush2.msra.mxu0 %v3827
  %4069 = vmatprep.subr.mxu0 %v3824
  %4070 = vmatpush2.msra.mxu0 %v3823
  %4071 = vmatprep.subr.mxu0 %v3820
  %4072 = vmatpush2.msra.mxu0 %v3819
  %4073 = vmatprep.subr.mxu0 %v3816
  %4074 = vmatpush2.msra.mxu0 %v3815
  %4075 = vmatprep.subr.mxu0 %v3812
  %4076 = vmatpush2.msra.mxu0 %v3811
  %4077 = vmatprep.subr.mxu0 %v3808
  %4078 = vmatpush2.msra.mxu0 %v3807
  %4079 = vmatprep.subr.mxu0 %v3804
  %4080 = vmatpush2.msra.mxu0 %v3803
  %4081 = vmatprep.mubr.f32.mxu0 %v3595
  %4082 = vmatmul.mubr.f32.gmra.mxu0 %v3593
  %v4083 = vpop.f32.mrf.mxu0
  %v4084 = vadd.f32 %v4000, %v4083
  %v4085 = vpop.f32.mrf.mxu0
  %v4086 = vadd.f32 %v4004, %v4085
  %4087 = vdwg.mxu0
  %4088 = vmatprep.subr.mxu0 %v3928
  %4089 = vmatpush1.msra.mxu0 %v3927
  %4090 = vmatprep.subr.mxu0 %v3924
  %4091 = vmatpush1.msra.mxu0 %v3923
  %4092 = vmatprep.subr.mxu0 %v3920
  %4093 = vmatpush1.msra.mxu0 %v3919
  %4094 = vmatprep.subr.mxu0 %v3916
  %4095 = vmatpush1.msra.mxu0 %v3915
  %4096 = vmatprep.subr.mxu0 %v3912
  %4097 = vmatpush1.msra.mxu0 %v3911
  %4098 = vmatprep.subr.mxu0 %v3908
  %4099 = vmatpush1.msra.mxu0 %v3907
  %4100 = vmatprep.subr.mxu0 %v3904
  %4101 = vmatpush1.msra.mxu0 %v3903
  %4102 = vmatprep.subr.mxu0 %v3900
  %4103 = vmatpush1.msra.mxu0 %v3899
  %4104 = vmatprep.subr.mxu0 %v3896
  %4105 = vmatpush1.msra.mxu0 %v3895
  %4106 = vmatprep.subr.mxu0 %v3892
  %4107 = vmatpush1.msra.mxu0 %v3891
  %4108 = vmatprep.subr.mxu0 %v3888
  %4109 = vmatpush1.msra.mxu0 %v3887
  %4110 = vmatprep.subr.mxu0 %v3884
  %4111 = vmatpush1.msra.mxu0 %v3883
  %4112 = vmatprep.subr.mxu0 %v3880
  %4113 = vmatpush1.msra.mxu0 %v3879
  %4114 = vmatprep.subr.mxu0 %v3876
  %4115 = vmatpush1.msra.mxu0 %v3875
  %4116 = vmatprep.subr.mxu0 %v3872
  %4117 = vmatpush1.msra.mxu0 %v3871
  %4118 = vmatprep.subr.mxu0 %v3868
  %4119 = vmatpush1.msra.mxu0 %v3867
  %4120 = vmatprep.subr.mxu0 %v3992
  %4121 = vmatpush2.msra.mxu0 %v3991
  %4122 = vmatprep.subr.mxu0 %v3988
  %4123 = vmatpush2.msra.mxu0 %v3987
  %4124 = vmatprep.subr.mxu0 %v3984
  %4125 = vmatpush2.msra.mxu0 %v3983
  %4126 = vmatprep.subr.mxu0 %v3980
  %4127 = vmatpush2.msra.mxu0 %v3979
  %4128 = vmatprep.subr.mxu0 %v3976
  %4129 = vmatpush2.msra.mxu0 %v3975
  %4130 = vmatprep.subr.mxu0 %v3972
  %4131 = vmatpush2.msra.mxu0 %v3971
  %4132 = vmatprep.subr.mxu0 %v3968
  %4133 = vmatpush2.msra.mxu0 %v3967
  %4134 = vmatprep.subr.mxu0 %v3964
  %4135 = vmatpush2.msra.mxu0 %v3963
  %4136 = vmatprep.subr.mxu0 %v3960
  %4137 = vmatpush2.msra.mxu0 %v3959
  %4138 = vmatprep.subr.mxu0 %v3956
  %4139 = vmatpush2.msra.mxu0 %v3955
  %4140 = vmatprep.subr.mxu0 %v3952
  %4141 = vmatpush2.msra.mxu0 %v3951
  %4142 = vmatprep.subr.mxu0 %v3948
  %4143 = vmatpush2.msra.mxu0 %v3947
  %4144 = vmatprep.subr.mxu0 %v3944
  %4145 = vmatpush2.msra.mxu0 %v3943
  %4146 = vmatprep.subr.mxu0 %v3940
  %4147 = vmatpush2.msra.mxu0 %v3939
  %4148 = vmatprep.subr.mxu0 %v3936
  %4149 = vmatpush2.msra.mxu0 %v3935
  %4150 = vmatprep.subr.mxu0 %v3932
  %4151 = vmatpush2.msra.mxu0 %v3931
  %4152 = vmatprep.mubr.f32.mxu0 %v3737
  %4153 = vmatmul.mubr.f32.gmra.mxu0 %v3735
  %v4154 = vpop.f32.mrf.mxu0
  %v4155 = vadd.f32 %v4084, %v4154
  %v4156 = vpop.f32.mrf.mxu0
  %v4157 = vadd.f32 %v4086, %v4156
  %4158 = vdwg.mxu0
  %4159 = vmatprep.subr.mxu0 %v3802
  %4160 = vmatpush1.msra.mxu0 %v3801
  %4161 = vmatprep.subr.mxu0 %v3798
  %4162 = vmatpush1.msra.mxu0 %v3797
  %4163 = vmatprep.subr.mxu0 %v3794
  %4164 = vmatpush1.msra.mxu0 %v3793
  %4165 = vmatprep.subr.mxu0 %v3790
  %4166 = vmatpush1.msra.mxu0 %v3789
  %4167 = vmatprep.subr.mxu0 %v3786
  %4168 = vmatpush1.msra.mxu0 %v3785
  %4169 = vmatprep.subr.mxu0 %v3782
  %4170 = vmatpush1.msra.mxu0 %v3781
  %4171 = vmatprep.subr.mxu0 %v3778
  %4172 = vmatpush1.msra.mxu0 %v3777
  %4173 = vmatprep.subr.mxu0 %v3774
  %4174 = vmatpush1.msra.mxu0 %v3773
  %4175 = vmatprep.subr.mxu0 %v3770
  %4176 = vmatpush1.msra.mxu0 %v3769
  %4177 = vmatprep.subr.mxu0 %v3766
  %4178 = vmatpush1.msra.mxu0 %v3765
  %4179 = vmatprep.subr.mxu0 %v3762
  %4180 = vmatpush1.msra.mxu0 %v3761
  %4181 = vmatprep.subr.mxu0 %v3758
  %4182 = vmatpush1.msra.mxu0 %v3757
  %4183 = vmatprep.subr.mxu0 %v3754
  %4184 = vmatpush1.msra.mxu0 %v3753
  %4185 = vmatprep.subr.mxu0 %v3750
  %4186 = vmatpush1.msra.mxu0 %v3749
  %4187 = vmatprep.subr.mxu0 %v3746
  %4188 = vmatpush1.msra.mxu0 %v3745
  %4189 = vmatprep.subr.mxu0 %v3742
  %4190 = vmatpush1.msra.mxu0 %v3741
  %4191 = vmatprep.subr.mxu0 %v3866
  %4192 = vmatpush2.msra.mxu0 %v3865
  %4193 = vmatprep.subr.mxu0 %v3862
  %4194 = vmatpush2.msra.mxu0 %v3861
  %4195 = vmatprep.subr.mxu0 %v3858
  %4196 = vmatpush2.msra.mxu0 %v3857
  %4197 = vmatprep.subr.mxu0 %v3854
  %4198 = vmatpush2.msra.mxu0 %v3853
  %4199 = vmatprep.subr.mxu0 %v3850
  %4200 = vmatpush2.msra.mxu0 %v3849
  %4201 = vmatprep.subr.mxu0 %v3846
  %4202 = vmatpush2.msra.mxu0 %v3845
  %4203 = vmatprep.subr.mxu0 %v3842
  %4204 = vmatpush2.msra.mxu0 %v3841
  %4205 = vmatprep.subr.mxu0 %v3838
  %4206 = vmatpush2.msra.mxu0 %v3837
  %4207 = vmatprep.subr.mxu0 %v3834
  %4208 = vmatpush2.msra.mxu0 %v3833
  %4209 = vmatprep.subr.mxu0 %v3830
  %4210 = vmatpush2.msra.mxu0 %v3829
  %4211 = vmatprep.subr.mxu0 %v3826
  %4212 = vmatpush2.msra.mxu0 %v3825
  %4213 = vmatprep.subr.mxu0 %v3822
  %4214 = vmatpush2.msra.mxu0 %v3821
  %4215 = vmatprep.subr.mxu0 %v3818
  %4216 = vmatpush2.msra.mxu0 %v3817
  %4217 = vmatprep.subr.mxu0 %v3814
  %4218 = vmatpush2.msra.mxu0 %v3813
  %4219 = vmatprep.subr.mxu0 %v3810
  %4220 = vmatpush2.msra.mxu0 %v3809
  %4221 = vmatprep.subr.mxu0 %v3806
  %4222 = vmatpush2.msra.mxu0 %v3805
  %4223 = vmatprep.mubr.f32.mxu0 %v3595
  %4224 = vmatmul.mubr.f32.gmra.mxu0 %v3593
  %v4225 = vpop.f32.mrf.mxu0
  %v4226 = vadd.f32 %v4008, %v4225
  %v4227 = vpop.f32.mrf.mxu0
  %v4228 = vadd.f32 %v4012, %v4227
  %4229 = vdwg.mxu0
  %4230 = vmatprep.subr.mxu0 %v3930
  %4231 = vmatpush1.msra.mxu0 %v3929
  %4232 = vmatprep.subr.mxu0 %v3926
  %4233 = vmatpush1.msra.mxu0 %v3925
  %4234 = vmatprep.subr.mxu0 %v3922
  %4235 = vmatpush1.msra.mxu0 %v3921
  %4236 = vmatprep.subr.mxu0 %v3918
  %4237 = vmatpush1.msra.mxu0 %v3917
  %4238 = vmatprep.subr.mxu0 %v3914
  %4239 = vmatpush1.msra.mxu0 %v3913
  %4240 = vmatprep.subr.mxu0 %v3910
  %4241 = vmatpush1.msra.mxu0 %v3909
  %4242 = vmatprep.subr.mxu0 %v3906
  %4243 = vmatpush1.msra.mxu0 %v3905
  %4244 = vmatprep.subr.mxu0 %v3902
  %4245 = vmatpush1.msra.mxu0 %v3901
  %4246 = vmatprep.subr.mxu0 %v3898
  %4247 = vmatpush1.msra.mxu0 %v3897
  %4248 = vmatprep.subr.mxu0 %v3894
  %4249 = vmatpush1.msra.mxu0 %v3893
  %4250 = vmatprep.subr.mxu0 %v3890
  %4251 = vmatpush1.msra.mxu0 %v3889
  %4252 = vmatprep.subr.mxu0 %v3886
  %4253 = vmatpush1.msra.mxu0 %v3885
  %4254 = vmatprep.subr.mxu0 %v3882
  %4255 = vmatpush1.msra.mxu0 %v3881
  %4256 = vmatprep.subr.mxu0 %v3878
  %4257 = vmatpush1.msra.mxu0 %v3877
  %4258 = vmatprep.subr.mxu0 %v3874
  %4259 = vmatpush1.msra.mxu0 %v3873
  %4260 = vmatprep.subr.mxu0 %v3870
  %4261 = vmatpush1.msra.mxu0 %v3869
  %4262 = vmatprep.subr.mxu0 %v3994
  %4263 = vmatpush2.msra.mxu0 %v3993
  %4264 = vmatprep.subr.mxu0 %v3990
  %4265 = vmatpush2.msra.mxu0 %v3989
  %4266 = vmatprep.subr.mxu0 %v3986
  %4267 = vmatpush2.msra.mxu0 %v3985
  %4268 = vmatprep.subr.mxu0 %v3982
  %4269 = vmatpush2.msra.mxu0 %v3981
  %4270 = vmatprep.subr.mxu0 %v3978
  %4271 = vmatpush2.msra.mxu0 %v3977
  %4272 = vmatprep.subr.mxu0 %v3974
  %4273 = vmatpush2.msra.mxu0 %v3973
  %4274 = vmatprep.subr.mxu0 %v3970
  %4275 = vmatpush2.msra.mxu0 %v3969
  %4276 = vmatprep.subr.mxu0 %v3966
  %4277 = vmatpush2.msra.mxu0 %v3965
  %4278 = vmatprep.subr.mxu0 %v3962
  %4279 = vmatpush2.msra.mxu0 %v3961
  %4280 = vmatprep.subr.mxu0 %v3958
  %4281 = vmatpush2.msra.mxu0 %v3957
  %4282 = vmatprep.subr.mxu0 %v3954
  %4283 = vmatpush2.msra.mxu0 %v3953
  %4284 = vmatprep.subr.mxu0 %v3950
  %4285 = vmatpush2.msra.mxu0 %v3949
  %4286 = vmatprep.subr.mxu0 %v3946
  %4287 = vmatpush2.msra.mxu0 %v3945
  %4288 = vmatprep.subr.mxu0 %v3942
  %4289 = vmatpush2.msra.mxu0 %v3941
  %4290 = vmatprep.subr.mxu0 %v3938
  %4291 = vmatpush2.msra.mxu0 %v3937
  %4292 = vmatprep.subr.mxu0 %v3934
  %4293 = vmatpush2.msra.mxu0 %v3933
  %4294 = vmatprep.mubr.f32.mxu0 %v3737
  %4295 = vmatmul.mubr.f32.gmra.mxu0 %v3735
  %v4296 = vpop.f32.mrf.mxu0
  %v4297 = vadd.f32 %v4226, %v4296
  %v4298 = vpop.f32.mrf.mxu0
  %v4299 = vadd.f32 %v4228, %v4298
  %4300 = vdwg.mxu0
  %v4301 = vrot.slane %v4155, 4
  %v4302 = vadd.f32 %v4155, %v4301
  %v4303 = vrot.slane %v4302, 2
  %v4304 = vadd.f32 %v4302, %v4303
  %v4305 = vrot.slane %v4304, 1
  %v4306 = vadd.f32 %v4304, %v4305
  %v4307 = vrot.slane %v4157, 4
  %v4308 = vadd.f32 %v4157, %v4307
  %v4309 = vrot.slane %v4308, 2
  %v4310 = vadd.f32 %v4308, %v4309
  %v4311 = vrot.slane %v4310, 1
  %v4312 = vadd.f32 %v4310, %v4311
  %v4313 = vrot.slane %v4297, 4
  %v4314 = vadd.f32 %v4297, %v4313
  %v4315 = vrot.slane %v4314, 2
  %v4316 = vadd.f32 %v4314, %v4315
  %v4317 = vrot.slane %v4316, 1
  %v4318 = vadd.f32 %v4316, %v4317
  %v4319 = vrot.slane %v4299, 4
  %v4320 = vadd.f32 %v4299, %v4319
  %v4321 = vrot.slane %v4320, 2
  %v4322 = vadd.f32 %v4320, %v4321
  %v4323 = vrot.slane %v4322, 1
  %v4324 = vadd.f32 %v4322, %v4323
  %v4325 = vrcp.pop 8.0
  %v4326 = vmul.f32 %v4306, %v4325
  %v4327 = vmul.f32 %v4312, %v4325
  %v4328 = vmul.f32 %v4318, %v4325
  %v4329 = vmul.f32 %v4324, %v4325
  %v4330 = vsub.f32 %v4155, %v4326
  %v4331 = vsub.f32 %v4157, %v4327
  %v4332 = vsub.f32 %v4297, %v4328
  %v4333 = vsub.f32 %v4299, %v4329
  %v4334 = vmul.f32 %v4330, %v4330
  %v4335 = vmul.f32 %v4331, %v4331
  %v4336 = vmul.f32 %v4332, %v4332
  %v4337 = vmul.f32 %v4333, %v4333
  %v4338 = vrot.slane %v4334, 4
  %v4339 = vadd.f32 %v4334, %v4338
  %v4340 = vrot.slane %v4339, 2
  %v4341 = vadd.f32 %v4339, %v4340
  %v4342 = vrot.slane %v4341, 1
  %v4343 = vadd.f32 %v4341, %v4342
  %v4344 = vrot.slane %v4335, 4
  %v4345 = vadd.f32 %v4335, %v4344
  %v4346 = vrot.slane %v4345, 2
  %v4347 = vadd.f32 %v4345, %v4346
  %v4348 = vrot.slane %v4347, 1
  %v4349 = vadd.f32 %v4347, %v4348
  %v4350 = vrot.slane %v4336, 4
  %v4351 = vadd.f32 %v4336, %v4350
  %v4352 = vrot.slane %v4351, 2
  %v4353 = vadd.f32 %v4351, %v4352
  %v4354 = vrot.slane %v4353, 1
  %v4355 = vadd.f32 %v4353, %v4354
  %v4356 = vrot.slane %v4337, 4
  %v4357 = vadd.f32 %v4337, %v4356
  %v4358 = vrot.slane %v4357, 2
  %v4359 = vadd.f32 %v4357, %v4358
  %v4360 = vrot.slane %v4359, 1
  %v4361 = vadd.f32 %v4359, %v4360
  %v4362 = vmul.f32 %v4343, %v4325
  %v4363 = vmul.f32 %v4349, %v4325
  %v4364 = vmul.f32 %v4355, %v4325
  %v4365 = vmul.f32 %v4361, %v4325
  %v4366 = vadd.f32 %v4362, 1e-05
  %v4367 = vadd.f32 %v4363, 1e-05
  %v4368 = vadd.f32 %v4364, 1e-05
  %v4369 = vadd.f32 %v4365, 1e-05
  %v4370 = vrsqrt.pop %v4366
  %v4371 = vrsqrt.pop %v4367
  %v4372 = vrsqrt.pop %v4368
  %v4373 = vrsqrt.pop %v4369
  %v4374 = vmul.f32 %v4330, %v4370
  %v4375 = vmul.f32 %v4331, %v4371
  %v4376 = vmul.f32 %v4332, %v4372
  %v4377 = vmul.f32 %v4333, %v4373
  %v4378 = vmax.f32 %v4374, 0.0
  %v4379 = vmax.f32 %v4375, 0.0
  %v4380 = vmax.f32 %v4376, 0.0
  %v4381 = vmax.f32 %v4377, 0.0
  %4382 = vst [vmem:[%s17] sm:$0xff] %v4378
  %4383 = vst [vmem:[%s17 + $0x8] sm:$0xff] %v4379
  %4384 = vst [vmem:[%s17 + $0x10] sm:$0xff] %v4380
  %4385 = vst [vmem:[%s17 + $0x18] sm:$0xff] %v4381
  %v4386 = vld [vmem:[%s3] sm:$0xff]
  %v4387 = vld [vmem:[%s14] sm:$0x1f]
  %v4388 = vld [vmem:[%s15] sm:$0x1]
  %v4390 = vlaneseq
  %v4391 = vshrl.u32 %v4390, 7
  %v4392 = vsub.s32 0, %v4391
  %v4393 = vrot.slane %v4388, %v4392
  %vm4395 = vcmask 39936
  %v4397 = vsel %vm4395, %v4386, 0
  %vm4399 = vcmask 1044480
  %v4401 = vsel %vm4399, %v4387, 0
  %4403 = vmatprep.subr.mxu0 0.0
  %4404 = vmatpush1.msra.mxu0 0.0
  %4405 = vmatprep.subr.mxu0 0.0
  %4406 = vmatpush1.msra.mxu0 0.0
  %4407 = vmatprep.subr.mxu0 0.0
  %4408 = vmatpush1.msra.mxu0 0.0
  %4409 = vmatprep.subr.mxu0 0.0
  %4410 = vmatpush1.msra.mxu0 0.0
  %4411 = vmatprep.subr.mxu0 0.0
  %4412 = vmatpush1.msra.mxu0 0.0
  %4413 = vmatprep.subr.mxu0 0.0
  %4414 = vmatpush1.msra.mxu0 0.0
  %4415 = vmatprep.subr.mxu0 0.0
  %4416 = vmatpush1.msra.mxu0 0.0
  %4417 = vmatprep.subr.mxu0 0.0
  %4418 = vmatpush1.msra.mxu0 0.0
  %4419 = vmatprep.subr.mxu0 0.0
  %4420 = vmatpush1.msra.mxu0 0.0
  %4421 = vmatprep.subr.mxu0 0.0
  %4422 = vmatpush1.msra.mxu0 0.0
  %4423 = vmatprep.subr.mxu0 0.0
  %4424 = vmatpush1.msra.mxu0 0.0
  %4425 = vmatprep.subr.mxu0 0.0
  %4426 = vmatpush1.msra.mxu0 0.0
  %4427 = vmatprep.subr.mxu0 0.0
  %4428 = vmatpush1.msra.mxu0 0.0
  %4429 = vmatprep.subr.mxu0 0.0
  %4430 = vmatpush1.msra.mxu0 0.0
  %4431 = vmatprep.subr.mxu0 0.0
  %4432 = vmatpush1.msra.mxu0 0.0
  %4433 = vmatprep.subr.mxu0 0.0
  %4434 = vmatpush1.msra.mxu0 %v4401
  %4435 = vmatprep.subr.mxu0 0.0
  %4436 = vmatpush2.msra.mxu0 0.0
  %4437 = vmatprep.subr.mxu0 0.0
  %4438 = vmatpush2.msra.mxu0 0.0
  %4439 = vmatprep.subr.mxu0 0.0
  %4440 = vmatpush2.msra.mxu0 0.0
  %4441 = vmatprep.subr.mxu0 0.0
  %4442 = vmatpush2.msra.mxu0 0.0
  %4443 = vmatprep.subr.mxu0 0.0
  %4444 = vmatpush2.msra.mxu0 0.0
  %4445 = vmatprep.subr.mxu0 0.0
  %4446 = vmatpush2.msra.mxu0 0.0
  %4447 = vmatprep.subr.mxu0 0.0
  %4448 = vmatpush2.msra.mxu0 0.0
  %4449 = vmatprep.subr.mxu0 0.0
  %4450 = vmatpush2.msra.mxu0 0.0
  %4451 = vmatprep.subr.mxu0 0.0
  %4452 = vmatpush2.msra.mxu0 0.0
  %4453 = vmatprep.subr.mxu0 0.0
  %4454 = vmatpush2.msra.mxu0 0.0
  %4455 = vmatprep.subr.mxu0 0.0
  %4456 = vmatpush2.msra.mxu0 0.0
  %4457 = vmatprep.subr.mxu0 0.0
  %4458 = vmatpush2.msra.mxu0 0.0
  %4459 = vmatprep.subr.mxu0 0.0
  %4460 = vmatpush2.msra.mxu0 0.0
  %4461 = vmatprep.subr.mxu0 0.0
  %4462 = vmatpush2.msra.mxu0 0.0
  %4463 = vmatprep.subr.mxu0 0.0
  %4464 = vmatpush2.msra.mxu0 0.0
  %4465 = vmatprep.subr.mxu0 0.0
  %4466 = vmatpush2.msra.mxu0 0.0
  %4467 = vmatprep.mubr.f32.mxu0 0.0
  %4468 = vmatmul.mubr.f32.gmra.mxu0 %v4397
  %v4469 = vpop.f32.mrf.mxu0
  %v4470 = vadd.f32 %v4393, %v4469
  %v4471 = vpop.f32.mrf.mxu0
  %4472 = vdwg.mxu0
  %v4473 = vrot.slane %v4470, 4
  %v4474 = vadd.f32 %v4470, %v4473
  %v4475 = vrot.slane %v4474, 2
  %v4476 = vadd.f32 %v4474, %v4475
  %v4477 = vrot.slane %v4476, 1
  %v4478 = vadd.f32 %v4476, %v4477
  %v4479 = vmul.f32 %v4478, %v4325
  %v4480 = vsub.f32 %v4470, %v4479
  %v4481 = vmul.f32 %v4480, %v4480
  %v4482 = vrot.slane %v4481, 4
  %v4483 = vadd.f32 %v4481, %v4482
  %v4484 = vrot.slane %v4483, 2
  %v4485 = vadd.f32 %v4483, %v4484
  %v4486 = vrot.slane %v4485, 1
  %v4487 = vadd.f32 %v4485, %v4486
  %v4488 = vmul.f32 %v4487, %v4325
  %v4489 = vadd.f32 %v4488, 1e-05
  %v4490 = vrsqrt.pop %v4489
  %v4491 = vmul.f32 %v4480, %v4490
  %v4492 = vmax.f32 %v4491, 0.0
  %4493 = vst [vmem:[%s18] sm:$0xff] %v4492
  // Predicated region
  $region66: #{_lambda_.6} parent=0 // pred_check
    _
  $region67: #{_lambda_.6} parent=0 // pred_check_branch
    %4495 = sbr.rel (0) target = $region69
  $region68: #{_lambda_.6} parent=0 // pred_region
    _
  $region69: #{_lambda_.6} parent=0 // pred_fallthru
    _
  // Predicated region
  $region70: #{_lambda_.6} parent=0 // pred_check
    _
  $region71: #{_lambda_.6} parent=0 // pred_check_branch
    %4497 = sbr.rel (0) target = $region73
  $region72: #{_lambda_.6} parent=0 // pred_region
    _
  $region73: #{_lambda_.6} parent=0 // pred_fallthru
    _
  // Predicated region
  $region74: #{_lambda_.6} parent=0 // pred_check
    _
  $region75: #{_lambda_.6} parent=0 // pred_check_branch
    %4499 = sbr.rel (0) target = $region77
  $region76: #{_lambda_.6} parent=0 // pred_region
    _
  $region77: #{_lambda_.6} parent=0 // pred_fallthru
    _
  // Predicated region
  $region78: #{_lambda_.6} parent=0 // pred_check
    _
  $region79: #{_lambda_.6} parent=0 // pred_check_branch
    %4501 = sbr.rel (0) target = $region81
  $region80: #{_lambda_.6} parent=0 // pred_region
    _
  $region81: #{_lambda_.6} parent=0 // pred_fallthru
    _
  // Predicated region
  $region82: #{_lambda_.6} parent=0 // pred_check
    _
  $region83: #{_lambda_.6} parent=0 // pred_check_branch
    %4503 = sbr.rel (0) target = $region85
  $region84: #{_lambda_.6} parent=0 // pred_region
    _
  $region85: #{_lambda_.6} parent=0 // pred_fallthru
    _
  // Predicated region
  $region86: #{_lambda_.6} parent=0 // pred_check
    _
  $region87: #{_lambda_.6} parent=0 // pred_check_branch
    %4505 = sbr.rel (0) target = $region89
  $region88: #{_lambda_.6} parent=0 // pred_region
    _
  $region89: #{_lambda_.6} parent=0 // pred_fallthru
    _

// kernel: _lambda_.7
$region0: #{_lambda_.7}
  #allocation0 [shape = 'u32[]', space=smem, size = 0x4, offset = 0x4, fixed_abs, tag = 'smem constant byte address 0x4 - core index']
  #allocation1 [shape = 'u32[144,128]{1,0:T(1,128)}', space=vmem, size = 0x12000, scoped, tag = 'internal scratch']
  #allocation2 [shape = 'f32[1,1]{1,0:T(1,128)S(1)}', space=vmem, size = 0x200, scoped, tag = 'scoped memory for _lambda_.7']
  %s0 = inlined_call_operand.vmem [shape: f32[3,8,64], index: 0, kind: input, shape index: {}]
  %s1 = inlined_call_operand.vmem [shape: f32[8,64], index: 1, kind: input, shape index: {}]
  %s2 = inlined_call_operand.vmem [shape: f32[2,64], index: 2, kind: input, shape index: {}]
  %s3 = inlined_call_operand.vmem [shape: f32[8,512], index: 3, kind: input, shape index: {}]
  %s4 = inlined_call_operand.vmem [shape: f32[8,512], index: 4, kind: input, shape index: {}]
  %s5 = inlined_call_operand.vmem [shape: f32[8,128], index: 5, kind: input, shape index: {}]
  %s6 = inlined_call_operand.vmem [shape: f32[8,3], index: 6, kind: input, shape index: {}]
  %s7 = inlined_call_operand.vmem [shape: f32[8,3], index: 7, kind: input, shape index: {}]
  %s8 = inlined_call_operand.vmem [shape: f32[2,4], index: 8, kind: input, shape index: {}]
  %s9 = inlined_call_operand.vmem [shape: f32[256,256], index: 9, kind: input, shape index: {}]
  %s10 = inlined_call_operand.vmem [shape: f32[1,256], index: 10, kind: input, shape index: {}]
  %s11 = inlined_call_operand.vmem [shape: f32[1,256], index: 11, kind: input, shape index: {}]
  %s12 = inlined_call_operand.<no memory space> [shape: f32[1,1], index: 12, kind: input, shape index: {}]
  %s13 = inlined_call_operand.vmem [shape: f32[64,256], index: 13, kind: input, shape index: {}]
  %s14 = inlined_call_operand.vmem [shape: f32[64,256], index: 14, kind: input, shape index: {}]
  %s15 = inlined_call_operand.vmem [shape: f32[1,256], index: 15, kind: input, shape index: {}]
  %s16 = inlined_call_operand.vmem [shape: f32[128,256], index: 16, kind: input, shape index: {}]
  %s17 = inlined_call_operand.vmem [shape: f32[1,256], index: 17, kind: input, shape index: {}]
  %s18 = inlined_call_operand.vmem [shape: f32[1216,64], index: 18, kind: input, shape index: {}]
  %s19 = inlined_call_operand.vmem [shape: f32[1,64], index: 19, kind: input, shape index: {}]
  %s20 = inlined_call_operand.hbm [shape: f32[2,4], index: 20, kind: output, shape index: {}]
  %s21 = sld [smem:[#allocation0]]
  $region90: #{_lambda_.7} parent=0
    _
  %s23 = ssub.s32 1, %s21
  %s24 = scalar_select 0, %s23, %s21
  %v25 = vstv %s12
  %26 = vst [vmem:[#allocation2] sm:$0x1] %v25
  $region1: #{_lambda_.7} parent=0
    #allocation3 [shape = 'u8[1024]{0}', space=vmem, size = 0x400, scoped, tag = 'output window, operand 0, single buffered']
    #allocation4 [shape = 's32[1]{0}', space=sflag, size = 0x4, scoped, tag = 'scoped memory for _lambda_.7']
    %27 = vsyncpa [#allocation4], 0
    // Predicated region
    $region2: #{_lambda_.7} parent=1 // pred_check
      _
    $region3: #{_lambda_.7} parent=1 // pred_check_branch
      %29 = sbr.rel (0) target = $region5
    $region4: #{_lambda_.7} parent=1 // pred_region
      _
    $region5: #{_lambda_.7} parent=1 // pred_fallthru
      _
    // Predicated region
    $region6: #{_lambda_.7} parent=1 // pred_check
      _
    $region7: #{_lambda_.7} parent=1 // pred_check_branch
      %31 = sbr.rel (0) target = $region9
    $region8: #{_lambda_.7} parent=1 // pred_region
      _
    $region9: #{_lambda_.7} parent=1 // pred_fallthru
      _
    // Predicated region
    $region10: #{_lambda_.7} parent=1 // pred_check
      _
    $region11: #{_lambda_.7} parent=1 // pred_check_branch
      %33 = sbr.rel (0) target = $region13
    $region12: #{_lambda_.7} parent=1 // pred_region
      _
    $region13: #{_lambda_.7} parent=1 // pred_fallthru
      _
    // Predicated region
    $region14: #{_lambda_.7} parent=1 // pred_check
      _
    $region15: #{_lambda_.7} parent=1 // pred_check_branch
      %35 = sbr.rel (0) target = $region17
    $region16: #{_lambda_.7} parent=1 // pred_region
      _
    $region17: #{_lambda_.7} parent=1 // pred_fallthru
      _
    // Predicated region
    $region18: #{_lambda_.7} parent=1 // pred_check
      _
    $region19: #{_lambda_.7} parent=1 // pred_check_branch
      %37 = sbr.rel (0) target = $region21
    $region20: #{_lambda_.7} parent=1 // pred_region
      _
    $region21: #{_lambda_.7} parent=1 // pred_fallthru
      _
    // Predicated region
    $region22: #{_lambda_.7} parent=1 // pred_check
      _
    $region23: #{_lambda_.7} parent=1 // pred_check_branch
      %39 = sbr.rel (0) target = $region25
    $region24: #{_lambda_.7} parent=1 // pred_region
      _
    $region25: #{_lambda_.7} parent=1 // pred_fallthru
      _
    // Predicated region
    $region26: #{_lambda_.7} parent=1 // pred_check
      _
    $region27: #{_lambda_.7} parent=1 // pred_check_branch
      %41 = sbr.rel (0) target = $region29
    $region28: #{_lambda_.7} parent=1 // pred_region
      _
    $region29: #{_lambda_.7} parent=1 // pred_fallthru
      _
    // Predicated region
    $region30: #{_lambda_.7} parent=1 // pred_check
      _
    $region31: #{_lambda_.7} parent=1 // pred_check_branch
      %43 = sbr.rel (0) target = $region33
    $region32: #{_lambda_.7} parent=1 // pred_region
      _
    $region33: #{_lambda_.7} parent=1 // pred_fallthru
      _
    // Predicated region
    $region34: #{_lambda_.7} parent=1 // pred_check
      _
    $region35: #{_lambda_.7} parent=1 // pred_check_branch
      %45 = sbr.rel (0) target = $region37
    $region36: #{_lambda_.7} parent=1 // pred_region
      _
    $region37: #{_lambda_.7} parent=1 // pred_fallthru
      _
    // Predicated region
    $region38: #{_lambda_.7} parent=1 // pred_check
      _
    $region39: #{_lambda_.7} parent=1 // pred_check_branch
      %47 = sbr.rel (0) target = $region41
    $region40: #{_lambda_.7} parent=1 // pred_region
      _
    $region41: #{_lambda_.7} parent=1 // pred_fallthru
      _
    // Predicated region
    $region42: #{_lambda_.7} parent=1 // pred_check
      _
    $region43: #{_lambda_.7} parent=1 // pred_check_branch
      %49 = sbr.rel (0) target = $region45
    $region44: #{_lambda_.7} parent=1 // pred_region
      _
    $region45: #{_lambda_.7} parent=1 // pred_fallthru
      _
    // Predicated region
    $region46: #{_lambda_.7} parent=1 // pred_check
      _
    $region47: #{_lambda_.7} parent=1 // pred_check_branch
      %51 = sbr.rel (0) target = $region49
    $region48: #{_lambda_.7} parent=1 // pred_region
      _
    $region49: #{_lambda_.7} parent=1 // pred_fallthru
      _
    // Predicated region
    $region50: #{_lambda_.7} parent=1 // pred_check
      _
    $region51: #{_lambda_.7} parent=1 // pred_check_branch
      %53 = sbr.rel (0) target = $region53
    $region52: #{_lambda_.7} parent=1 // pred_region
      _
    $region53: #{_lambda_.7} parent=1 // pred_fallthru
      _
    // Predicated region
    $region54: #{_lambda_.7} parent=1 // pred_check
      _
    $region55: #{_lambda_.7} parent=1 // pred_check_branch
      %55 = sbr.rel (0) target = $region57
    $region56: #{_lambda_.7} parent=1 // pred_region
      _
    $region57: #{_lambda_.7} parent=1 // pred_fallthru
      _
    // Predicated region
    $region58: #{_lambda_.7} parent=1 // pred_check
      _
    $region59: #{_lambda_.7} parent=1 // pred_check_branch
      %57 = sbr.rel (0) target = $region61
    $region60: #{_lambda_.7} parent=1 // pred_region
      _
    $region61: #{_lambda_.7} parent=1 // pred_fallthru
      _
    // Predicated region
    $region62: #{_lambda_.7} parent=1 // pred_check
      _
    $region63: #{_lambda_.7} parent=1 // pred_check_branch
      %59 = sbr.rel (0) target = $region65
    $region64: #{_lambda_.7} parent=1 // pred_region
      _
    $region65: #{_lambda_.7} parent=1 // pred_fallthru
      _
    // Predicated region
    $region66: #{_lambda_.7} parent=1 // pred_check
      _
    $region67: #{_lambda_.7} parent=1 // pred_check_branch
      %61 = sbr.rel (0) target = $region69
    $region68: #{_lambda_.7} parent=1 // pred_region
      _
    $region69: #{_lambda_.7} parent=1 // pred_fallthru
      _
    // Predicated region
    $region70: #{_lambda_.7} parent=1 // pred_check
      _
    $region71: #{_lambda_.7} parent=1 // pred_check_branch
      %63 = sbr.rel (0) target = $region73
    $region72: #{_lambda_.7} parent=1 // pred_region
      _
    $region73: #{_lambda_.7} parent=1 // pred_fallthru
      _
    // Predicated region
    $region74: #{_lambda_.7} parent=1 // pred_check
      _
    $region75: #{_lambda_.7} parent=1 // pred_check_branch
      %65 = sbr.rel (0) target = $region77
    $region76: #{_lambda_.7} parent=1 // pred_region
      _
    $region77: #{_lambda_.7} parent=1 // pred_fallthru
      _
    // Predicated region
    $region78: #{_lambda_.7} parent=1 // pred_check
      _
    $region79: #{_lambda_.7} parent=1 // pred_check_branch
      %67 = sbr.rel (0) target = $region81
    $region80: #{_lambda_.7} parent=1 // pred_region
      _
    $region81: #{_lambda_.7} parent=1 // pred_fallthru
      _
    %v68 = vld [vmem:[%s1] sm:$0xff]
    %v69 = vld [vmem:[%s0] sm:$0xff]
    %s70 = scalar_lea.vmem %s0, 8
    %v71 = vld [vmem:[%s70] sm:$0xff]
    %s72 = scalar_lea.vmem %s0, 16
    %v73 = vld [vmem:[%s72] sm:$0xff]
    %v74 = vld [vmem:[%s13] sm:$0xff]
    %v75 = vld [vmem:[%s13 + $0x8] sm:$0xff]
    %v76 = vld [vmem:[%s13 + $0x10] sm:$0xff]
    %v77 = vld [vmem:[%s13 + $0x18] sm:$0xff]
    %v78 = vld [vmem:[%s13 + $0x20] sm:$0xff]
    %v79 = vld [vmem:[%s13 + $0x28] sm:$0xff]
    %v80 = vld [vmem:[%s13 + $0x30] sm:$0xff]
    %v81 = vld [vmem:[%s13 + $0x38] sm:$0xff]
    %v82 = vld [vmem:[%s13 + $0x40] sm:$0xff]
    %v83 = vld [vmem:[%s13 + $0x48] sm:$0xff]
    %v84 = vld [vmem:[%s13 + $0x50] sm:$0xff]
    %v85 = vld [vmem:[%s13 + $0x58] sm:$0xff]
    %v86 = vld [vmem:[%s13 + $0x60] sm:$0xff]
    %v87 = vld [vmem:[%s13 + $0x68] sm:$0xff]
    %v88 = vld [vmem:[%s13 + $0x70] sm:$0xff]
    %v89 = vld [vmem:[%s13 + $0x78] sm:$0xff]
    %v90 = vld [vmem:[%s15] sm:$0x3]
    %v92 = vlaneseq
    %v93 = vshrl.u32 %v92, 7
    %v94 = vsub.s32 0, %v93
    %v95 = vrot.slane %v90, %v94
    %v96 = vlaneseq
    %v97 = vshrl.u32 %v96, 7
    %v98 = vsub.s32 1, %v97
    %v99 = vrot.slane %v90, %v98
    %vm102 = vcmask 523264
    %v104 = vsel %vm102, %v69, 0
    %v107 = vsel %vm102, %v71, 0
    %v110 = vsel %vm102, %v73, 0
    %112 = vmatprep.subr.mxu0 0.0
    %113 = vmatpush1.msra.mxu0 0.0
    %114 = vmatprep.subr.mxu0 0.0
    %115 = vmatpush1.msra.mxu0 0.0
    %116 = vmatprep.subr.mxu0 0.0
    %117 = vmatpush1.msra.mxu0 0.0
    %118 = vmatprep.subr.mxu0 0.0
    %119 = vmatpush1.msra.mxu0 0.0
    %120 = vmatprep.subr.mxu0 0.0
    %121 = vmatpush1.msra.mxu0 0.0
    %122 = vmatprep.subr.mxu0 0.0
    %123 = vmatpush1.msra.mxu0 0.0
    %124 = vmatprep.subr.mxu0 0.0
    %125 = vmatpush1.msra.mxu0 0.0
    %126 = vmatprep.subr.mxu0 0.0
    %127 = vmatpush1.msra.mxu0 0.0
    %128 = vmatprep.subr.mxu0 %v89
    %129 = vmatpush1.msra.mxu0 %v88
    %130 = vmatprep.subr.mxu0 %v87
    %131 = vmatpush1.msra.mxu0 %v86
    %132 = vmatprep.subr.mxu0 %v85
    %133 = vmatpush1.msra.mxu0 %v84
    %134 = vmatprep.subr.mxu0 %v83
    %135 = vmatpush1.msra.mxu0 %v82
    %136 = vmatprep.subr.mxu0 %v81
    %137 = vmatpush1.msra.mxu0 %v80
    %138 = vmatprep.subr.mxu0 %v79
    %139 = vmatpush1.msra.mxu0 %v78
    %140 = vmatprep.subr.mxu0 %v77
    %141 = vmatpush1.msra.mxu0 %v76
    %142 = vmatprep.subr.mxu0 %v75
    %143 = vmatpush1.msra.mxu0 %v74
    %144 = vmatprep.subr.mxu0 0.0
    %145 = vmatpush2.msra.mxu0 0.0
    %146 = vmatprep.subr.mxu0 0.0
    %147 = vmatpush2.msra.mxu0 0.0
    %148 = vmatprep.subr.mxu0 0.0
    %149 = vmatpush2.msra.mxu0 0.0
    %150 = vmatprep.subr.mxu0 0.0
    %151 = vmatpush2.msra.mxu0 0.0
    %152 = vmatprep.subr.mxu0 0.0
    %153 = vmatpush2.msra.mxu0 0.0
    %154 = vmatprep.subr.mxu0 0.0
    %155 = vmatpush2.msra.mxu0 0.0
    %156 = vmatprep.subr.mxu0 0.0
    %157 = vmatpush2.msra.mxu0 0.0
    %158 = vmatprep.subr.mxu0 0.0
    %159 = vmatpush2.msra.mxu0 0.0
    %160 = vmatprep.subr.mxu0 0.0
    %161 = vmatpush2.msra.mxu0 0.0
    %162 = vmatprep.subr.mxu0 0.0
    %163 = vmatpush2.msra.mxu0 0.0
    %164 = vmatprep.subr.mxu0 0.0
    %165 = vmatpush2.msra.mxu0 0.0
    %166 = vmatprep.subr.mxu0 0.0
    %167 = vmatpush2.msra.mxu0 0.0
    %168 = vmatprep.subr.mxu0 0.0
    %169 = vmatpush2.msra.mxu0 0.0
    %170 = vmatprep.subr.mxu0 0.0
    %171 = vmatpush2.msra.mxu0 0.0
    %172 = vmatprep.subr.mxu0 0.0
    %173 = vmatpush2.msra.mxu0 0.0
    %174 = vmatprep.subr.mxu0 0.0
    %175 = vmatpush2.msra.mxu0 0.0
    %176 = vmatprep.mubr.f32.mxu0 0.0
    %177 = vmatmul.mubr.f32.gmra.mxu0 %v104
    %v178 = vpop.f32.mrf.mxu0
    %v179 = vadd.f32 %v95, %v178
    %v180 = vpop.f32.mrf.mxu0
    %v181 = vadd.f32 %v99, %v180
    %182 = vmatprep.mubr.f32.mxu0 0.0
    %183 = vmatmul.mubr.f32.gmra.mxu0 %v107
    %v184 = vpop.f32.mrf.mxu0
    %v185 = vadd.f32 %v95, %v184
    %v186 = vpop.f32.mrf.mxu0
    %v187 = vadd.f32 %v99, %v186
    %188 = vmatprep.mubr.f32.mxu0 0.0
    %189 = vmatmul.mubr.f32.gmra.mxu0 %v110
    %v190 = vpop.f32.mrf.mxu0
    %v191 = vadd.f32 %v95, %v190
    %v192 = vpop.f32.mrf.mxu0
    %v193 = vadd.f32 %v99, %v192
    %194 = vdwg.mxu0
    %v195 = vld [vmem:[%s14] sm:$0xff]
    %v196 = vld [vmem:[%s14 + $0x8] sm:$0xff]
    %v197 = vld [vmem:[%s14 + $0x10] sm:$0xff]
    %v198 = vld [vmem:[%s14 + $0x18] sm:$0xff]
    %v199 = vld [vmem:[%s14 + $0x20] sm:$0xff]
    %v200 = vld [vmem:[%s14 + $0x28] sm:$0xff]
    %v201 = vld [vmem:[%s14 + $0x30] sm:$0xff]
    %v202 = vld [vmem:[%s14 + $0x38] sm:$0xff]
    %v203 = vld [vmem:[%s14 + $0x40] sm:$0xff]
    %v204 = vld [vmem:[%s14 + $0x48] sm:$0xff]
    %v205 = vld [vmem:[%s14 + $0x50] sm:$0xff]
    %v206 = vld [vmem:[%s14 + $0x58] sm:$0xff]
    %v207 = vld [vmem:[%s14 + $0x60] sm:$0xff]
    %v208 = vld [vmem:[%s14 + $0x68] sm:$0xff]
    %v209 = vld [vmem:[%s14 + $0x70] sm:$0xff]
    %v210 = vld [vmem:[%s14 + $0x78] sm:$0xff]
    %v211 = vld [vmem:[%s16] sm:$0xff]
    %v212 = vld [vmem:[%s16 + $0x8] sm:$0xff]
    %v213 = vld [vmem:[%s16 + $0x10] sm:$0xff]
    %v214 = vld [vmem:[%s16 + $0x18] sm:$0xff]
    %v215 = vld [vmem:[%s16 + $0x20] sm:$0xff]
    %v216 = vld [vmem:[%s16 + $0x28] sm:$0xff]
    %v217 = vld [vmem:[%s16 + $0x30] sm:$0xff]
    %v218 = vld [vmem:[%s16 + $0x38] sm:$0xff]
    %v219 = vld [vmem:[%s16 + $0x40] sm:$0xff]
    %v220 = vld [vmem:[%s16 + $0x48] sm:$0xff]
    %v221 = vld [vmem:[%s16 + $0x50] sm:$0xff]
    %v222 = vld [vmem:[%s16 + $0x58] sm:$0xff]
    %v223 = vld [vmem:[%s16 + $0x60] sm:$0xff]
    %v224 = vld [vmem:[%s16 + $0x68] sm:$0xff]
    %v225 = vld [vmem:[%s16 + $0x70] sm:$0xff]
    %v226 = vld [vmem:[%s16 + $0x78] sm:$0xff]
    %v227 = vld [vmem:[%s16 + $0x80] sm:$0xff]
    %v228 = vld [vmem:[%s16 + $0x88] sm:$0xff]
    %v229 = vld [vmem:[%s16 + $0x90] sm:$0xff]
    %v230 = vld [vmem:[%s16 + $0x98] sm:$0xff]
    %v231 = vld [vmem:[%s16 + $0xa0] sm:$0xff]
    %v232 = vld [vmem:[%s16 + $0xa8] sm:$0xff]
    %v233 = vld [vmem:[%s16 + $0xb0] sm:$0xff]
    %v234 = vld [vmem:[%s16 + $0xb8] sm:$0xff]
    %v235 = vld [vmem:[%s16 + $0xc0] sm:$0xff]
    %v236 = vld [vmem:[%s16 + $0xc8] sm:$0xff]
    %v237 = vld [vmem:[%s16 + $0xd0] sm:$0xff]
    %v238 = vld [vmem:[%s16 + $0xd8] sm:$0xff]
    %v239 = vld [vmem:[%s16 + $0xe0] sm:$0xff]
    %v240 = vld [vmem:[%s16 + $0xe8] sm:$0xff]
    %v241 = vld [vmem:[%s16 + $0xf0] sm:$0xff]
    %v242 = vld [vmem:[%s16 + $0xf8] sm:$0xff]
    %v243 = vld [vmem:[%s17] sm:$0x3]
    %v244 = vld [vmem:[%s9] sm:$0xff]
    %v245 = vld [vmem:[%s9 + $0x8] sm:$0xff]
    %v246 = vld [vmem:[%s9 + $0x10] sm:$0xff]
    %v247 = vld [vmem:[%s9 + $0x18] sm:$0xff]
    %v248 = vld [vmem:[%s9 + $0x20] sm:$0xff]
    %v249 = vld [vmem:[%s9 + $0x28] sm:$0xff]
    %v250 = vld [vmem:[%s9 + $0x30] sm:$0xff]
    %v251 = vld [vmem:[%s9 + $0x38] sm:$0xff]
    %v252 = vld [vmem:[%s9 + $0x40] sm:$0xff]
    %v253 = vld [vmem:[%s9 + $0x48] sm:$0xff]
    %v254 = vld [vmem:[%s9 + $0x50] sm:$0xff]
    %v255 = vld [vmem:[%s9 + $0x58] sm:$0xff]
    %v256 = vld [vmem:[%s9 + $0x60] sm:$0xff]
    %v257 = vld [vmem:[%s9 + $0x68] sm:$0xff]
    %v258 = vld [vmem:[%s9 + $0x70] sm:$0xff]
    %v259 = vld [vmem:[%s9 + $0x78] sm:$0xff]
    %v260 = vld [vmem:[%s9 + $0x80] sm:$0xff]
    %v261 = vld [vmem:[%s9 + $0x88] sm:$0xff]
    %v262 = vld [vmem:[%s9 + $0x90] sm:$0xff]
    %v263 = vld [vmem:[%s9 + $0x98] sm:$0xff]
    %v264 = vld [vmem:[%s9 + $0xa0] sm:$0xff]
    %v265 = vld [vmem:[%s9 + $0xa8] sm:$0xff]
    %v266 = vld [vmem:[%s9 + $0xb0] sm:$0xff]
    %v267 = vld [vmem:[%s9 + $0xb8] sm:$0xff]
    %v268 = vld [vmem:[%s9 + $0xc0] sm:$0xff]
    %v269 = vld [vmem:[%s9 + $0xc8] sm:$0xff]
    %v270 = vld [vmem:[%s9 + $0xd0] sm:$0xff]
    %v271 = vld [vmem:[%s9 + $0xd8] sm:$0xff]
    %v272 = vld [vmem:[%s9 + $0xe0] sm:$0xff]
    %v273 = vld [vmem:[%s9 + $0xe8] sm:$0xff]
    %v274 = vld [vmem:[%s9 + $0xf0] sm:$0xff]
    %v275 = vld [vmem:[%s9 + $0xf8] sm:$0xff]
    %v276 = vld [vmem:[%s9 + $0x100] sm:$0xff]
    %v277 = vld [vmem:[%s9 + $0x108] sm:$0xff]
    %v278 = vld [vmem:[%s9 + $0x110] sm:$0xff]
    %v279 = vld [vmem:[%s9 + $0x118] sm:$0xff]
    %v280 = vld [vmem:[%s9 + $0x120] sm:$0xff]
    %v281 = vld [vmem:[%s9 + $0x128] sm:$0xff]
    %v282 = vld [vmem:[%s9 + $0x130] sm:$0xff]
    %v283 = vld [vmem:[%s9 + $0x138] sm:$0xff]
    %v284 = vld [vmem:[%s9 + $0x140] sm:$0xff]
    %v285 = vld [vmem:[%s9 + $0x148] sm:$0xff]
    %v286 = vld [vmem:[%s9 + $0x150] sm:$0xff]
    %v287 = vld [vmem:[%s9 + $0x158] sm:$0xff]
    %v288 = vld [vmem:[%s9 + $0x160] sm:$0xff]
    %v289 = vld [vmem:[%s9 + $0x168] sm:$0xff]
    %v290 = vld [vmem:[%s9 + $0x170] sm:$0xff]
    %v291 = vld [vmem:[%s9 + $0x178] sm:$0xff]
    %v292 = vld [vmem:[%s9 + $0x180] sm:$0xff]
    %v293 = vld [vmem:[%s9 + $0x188] sm:$0xff]
    %v294 = vld [vmem:[%s9 + $0x190] sm:$0xff]
    %v295 = vld [vmem:[%s9 + $0x198] sm:$0xff]
    %v296 = vld [vmem:[%s9 + $0x1a0] sm:$0xff]
    %v297 = vld [vmem:[%s9 + $0x1a8] sm:$0xff]
    %v298 = vld [vmem:[%s9 + $0x1b0] sm:$0xff]
    %v299 = vld [vmem:[%s9 + $0x1b8] sm:$0xff]
    %v300 = vld [vmem:[%s9 + $0x1c0] sm:$0xff]
    %v301 = vld [vmem:[%s9 + $0x1c8] sm:$0xff]
    %v302 = vld [vmem:[%s9 + $0x1d0] sm:$0xff]
    %v303 = vld [vmem:[%s9 + $0x1d8] sm:$0xff]
    %v304 = vld [vmem:[%s9 + $0x1e0] sm:$0xff]
    %v305 = vld [vmem:[%s9 + $0x1e8] sm:$0xff]
    %v306 = vld [vmem:[%s9 + $0x1f0] sm:$0xff]
    %v307 = vld [vmem:[%s9 + $0x1f8] sm:$0xff]
    %v308 = vld [vmem:[%s10] sm:$0x3]
    %v309 = vld [vmem:[%s11] sm:$0x3]
    %v310 = vld [vmem:[#allocation2] sm:$0x1]
    %v311 = vld [vmem:[%s6] sm:$0xff]
    %v312 = vld [vmem:[%s7] sm:$0xff]
    %v313 = vmul.f32 %v69, %v68
    %v314 = vsub.f32 %v69, %v68
    %v315 = vand.u32 2147483647, %v314
    %317 = vrot.lane.b32.xlu0 %v313, 64
    %v318 = vpop.permute.xlu0 %317
    %321 = vrot.lane.b32.xlu0 %v315, 64
    %v322 = vpop.permute.xlu0 %321
    %v324 = vsel %vm102, %v313, %v318
    %v325 = vsel %vm102, %v315, %v322
    %v326 = vmul.f32 %v71, %v68
    %v327 = vsub.f32 %v71, %v68
    %v328 = vand.u32 2147483647, %v327
    %330 = vrot.lane.b32.xlu0 %v326, 64
    %v331 = vpop.permute.xlu0 %330
    %334 = vrot.lane.b32.xlu0 %v328, 64
    %v335 = vpop.permute.xlu0 %334
    %v337 = vsel %vm102, %v326, %v331
    %v338 = vsel %vm102, %v328, %v335
    %v339 = vmul.f32 %v73, %v68
    %v340 = vsub.f32 %v73, %v68
    %v341 = vand.u32 2147483647, %v340
    %343 = vrot.lane.b32.xlu0 %v339, 64
    %v344 = vpop.permute.xlu0 %343
    %347 = vrot.lane.b32.xlu0 %v341, 64
    %v348 = vpop.permute.xlu0 %347
    %v350 = vsel %vm102, %v339, %v344
    %v351 = vsel %vm102, %v341, %v348
    %v353 = vlaneseq
    %v354 = vshrl.u32 %v353, 7
    %v355 = vsub.s32 0, %v354
    %v356 = vrot.slane %v308, %v355
    %v357 = vlaneseq
    %v358 = vshrl.u32 %v357, 7
    %v359 = vsub.s32 1, %v358
    %v360 = vrot.slane %v308, %v359
    %363 = vmatprep.subr.mxu0 %v275
    %364 = vmatpush1.msra.mxu0 %v274
    %365 = vmatprep.subr.mxu0 %v273
    %366 = vmatpush1.msra.mxu0 %v272
    %367 = vmatprep.subr.mxu0 %v271
    %368 = vmatpush1.msra.mxu0 %v270
    %369 = vmatprep.subr.mxu0 %v269
    %370 = vmatpush1.msra.mxu0 %v268
    %371 = vmatprep.subr.mxu0 %v267
    %372 = vmatpush1.msra.mxu0 %v266
    %373 = vmatprep.subr.mxu0 %v265
    %374 = vmatpush1.msra.mxu0 %v264
    %375 = vmatprep.subr.mxu0 %v263
    %376 = vmatpush1.msra.mxu0 %v262
    %377 = vmatprep.subr.mxu0 %v261
    %378 = vmatpush1.msra.mxu0 %v260
    %379 = vmatprep.subr.mxu0 %v259
    %380 = vmatpush1.msra.mxu0 %v258
    %381 = vmatprep.subr.mxu0 %v257
    %382 = vmatpush1.msra.mxu0 %v256
    %383 = vmatprep.subr.mxu0 %v255
    %384 = vmatpush1.msra.mxu0 %v254
    %385 = vmatprep.subr.mxu0 %v253
    %386 = vmatpush1.msra.mxu0 %v252
    %387 = vmatprep.subr.mxu0 %v251
    %388 = vmatpush1.msra.mxu0 %v250
    %389 = vmatprep.subr.mxu0 %v249
    %390 = vmatpush1.msra.mxu0 %v248
    %391 = vmatprep.subr.mxu0 %v247
    %392 = vmatpush1.msra.mxu0 %v246
    %393 = vmatprep.subr.mxu0 %v245
    %394 = vmatpush1.msra.mxu0 %v244
    %395 = vmatprep.subr.mxu0 %v307
    %396 = vmatpush2.msra.mxu0 %v306
    %397 = vmatprep.subr.mxu0 %v305
    %398 = vmatpush2.msra.mxu0 %v304
    %399 = vmatprep.subr.mxu0 %v303
    %400 = vmatpush2.msra.mxu0 %v302
    %401 = vmatprep.subr.mxu0 %v301
    %402 = vmatpush2.msra.mxu0 %v300
    %403 = vmatprep.subr.mxu0 %v299
    %404 = vmatpush2.msra.mxu0 %v298
    %405 = vmatprep.subr.mxu0 %v297
    %406 = vmatpush2.msra.mxu0 %v296
    %407 = vmatprep.subr.mxu0 %v295
    %408 = vmatpush2.msra.mxu0 %v294
    %409 = vmatprep.subr.mxu0 %v293
    %410 = vmatpush2.msra.mxu0 %v292
    %411 = vmatprep.subr.mxu0 %v291
    %412 = vmatpush2.msra.mxu0 %v290
    %413 = vmatprep.subr.mxu0 %v289
    %414 = vmatpush2.msra.mxu0 %v288
    %415 = vmatprep.subr.mxu0 %v287
    %416 = vmatpush2.msra.mxu0 %v286
    %417 = vmatprep.subr.mxu0 %v285
    %418 = vmatpush2.msra.mxu0 %v284
    %419 = vmatprep.subr.mxu0 %v283
    %420 = vmatpush2.msra.mxu0 %v282
    %421 = vmatprep.subr.mxu0 %v281
    %422 = vmatpush2.msra.mxu0 %v280
    %423 = vmatprep.subr.mxu0 %v279
    %424 = vmatpush2.msra.mxu0 %v278
    %425 = vmatprep.subr.mxu0 %v277
    %426 = vmatpush2.msra.mxu0 %v276
    %427 = vmatprep.mubr.f32.mxu0 %v325
    %428 = vmatmul.mubr.f32.gmra.mxu0 %v324
    %v429 = vpop.f32.mrf.mxu0
    %v430 = vadd.f32 %v356, %v429
    %v431 = vpop.f32.mrf.mxu0
    %v432 = vadd.f32 %v360, %v431
    %433 = vmatprep.mubr.f32.mxu0 %v338
    %434 = vmatmul.mubr.f32.gmra.mxu0 %v337
    %v435 = vpop.f32.mrf.mxu0
    %v436 = vadd.f32 %v356, %v435
    %v437 = vpop.f32.mrf.mxu0
    %v438 = vadd.f32 %v360, %v437
    %439 = vmatprep.mubr.f32.mxu0 %v351
    %440 = vmatmul.mubr.f32.gmra.mxu0 %v350
    %v441 = vpop.f32.mrf.mxu0
    %v442 = vadd.f32 %v356, %v441
    %v443 = vpop.f32.mrf.mxu0
    %v444 = vadd.f32 %v360, %v443
    %445 = vdwg.mxu0
    %v446 = vtanh.pop %v430
    %v447 = vtanh.pop %v432
    %v448 = vtanh.pop %v436
    %v449 = vtanh.pop %v438
    %v450 = vtanh.pop %v442
    %v451 = vtanh.pop %v444
    %v453 = vlaneseq
    %v454 = vshrl.u32 %v453, 7
    %v455 = vsub.s32 0, %v454
    %v456 = vrot.slane %v309, %v455
    %v457 = vlaneseq
    %v458 = vshrl.u32 %v457, 7
    %v459 = vsub.s32 1, %v458
    %v460 = vrot.slane %v309, %v459
    %v463 = vmul.f32 %v446, %v456
    %v464 = vmul.f32 %v447, %v460
    %v465 = vmul.f32 %v448, %v456
    %v466 = vmul.f32 %v449, %v460
    %v467 = vmul.f32 %v450, %v456
    %v468 = vmul.f32 %v451, %v460
    %v469 = vadd.f32 %v463, %v464
    %470 = vadd.xlane.f32.xlu0 %v469
    %v471 = vpop.xlane.xlu0 %470
    %v472 = vadd.f32 %v465, %v466
    %473 = vadd.xlane.f32.xlu0 %v472
    %v474 = vpop.xlane.xlu0 %473
    %v475 = vadd.f32 %v467, %v468
    %476 = vadd.xlane.f32.xlu0 %v475
    %v477 = vpop.xlane.xlu0 %476
    %v479 = vlaneseq
    %v480 = vshrl.u32 %v479, 7
    %v481 = vsub.s32 0, %v480
    %v482 = vrot.slane %v310, %v481
    %v484 = vadd.f32 %v471, %v482
    %v485 = vadd.f32 %v474, %v482
    %v486 = vadd.f32 %v477, %v482
    %488 = vrot.lane.b32.xlu0 %v485, 1
    %v489 = vpop.permute.xlu0 %488
    %492 = vrot.lane.b32.xlu0 %v486, 2
    %v493 = vpop.permute.xlu0 %492
    %vm495 = vcmask 7168
    %v496 = vsel %vm495, %v484, %v489
    %vm497 = vcmask 15360
    %v498 = vsel %vm497, %v496, %v493
    %vm499 = vcmp.eq.f32.partialorder %v311, 0.0
    %v500 = vsel %vm499, -9999999.0, %v498
    %vm501 = vcmask 23552
    %v502 = vsel %vm501, %v500, -inf
    %503 = vmax.xlane.f32.xlu0 %v502
    %v504 = vpop.xlane.xlu0 %503
    %v505 = vsub.f32 %v500, %v504
    %v506 = vmul.f32 %v505, 1.442695
    %v507 = vpow.pop %v506
    %v508 = vsel %vm501, %v507, 0.0
    %509 = vadd.xlane.f32.xlu0 %v508
    %v510 = vpop.xlane.xlu0 %509
    %v511 = vrcp.pop %v510
    %v512 = vmul.f32 %v507, %v511
    %v514 = vsel %vm102, 0.0, 0
    %516 = vmatprep.subr.mxu0 0.0
    %517 = vmatpush1.msra.mxu0 0.0
    %518 = vmatprep.subr.mxu0 0.0
    %519 = vmatpush1.msra.mxu0 0.0
    %520 = vmatprep.subr.mxu0 0.0
    %521 = vmatpush1.msra.mxu0 0.0
    %522 = vmatprep.subr.mxu0 0.0
    %523 = vmatpush1.msra.mxu0 0.0
    %524 = vmatprep.subr.mxu0 0.0
    %525 = vmatpush1.msra.mxu0 0.0
    %526 = vmatprep.subr.mxu0 0.0
    %527 = vmatpush1.msra.mxu0 0.0
    %528 = vmatprep.subr.mxu0 0.0
    %529 = vmatpush1.msra.mxu0 0.0
    %530 = vmatprep.subr.mxu0 0.0
    %531 = vmatpush1.msra.mxu0 0.0
    %532 = vmatprep.subr.mxu0 %v210
    %533 = vmatpush1.msra.mxu0 %v209
    %534 = vmatprep.subr.mxu0 %v208
    %535 = vmatpush1.msra.mxu0 %v207
    %536 = vmatprep.subr.mxu0 %v206
    %537 = vmatpush1.msra.mxu0 %v205
    %538 = vmatprep.subr.mxu0 %v204
    %539 = vmatpush1.msra.mxu0 %v203
    %540 = vmatprep.subr.mxu0 %v202
    %541 = vmatpush1.msra.mxu0 %v201
    %542 = vmatprep.subr.mxu0 %v200
    %543 = vmatpush1.msra.mxu0 %v199
    %544 = vmatprep.subr.mxu0 %v198
    %545 = vmatpush1.msra.mxu0 %v197
    %546 = vmatprep.subr.mxu0 %v196
    %547 = vmatpush1.msra.mxu0 %v195
    %548 = vmatprep.subr.mxu0 0.0
    %549 = vmatpush2.msra.mxu0 0.0
    %550 = vmatprep.subr.mxu0 0.0
    %551 = vmatpush2.msra.mxu0 0.0
    %552 = vmatprep.subr.mxu0 0.0
    %553 = vmatpush2.msra.mxu0 0.0
    %554 = vmatprep.subr.mxu0 0.0
    %555 = vmatpush2.msra.mxu0 0.0
    %556 = vmatprep.subr.mxu0 0.0
    %557 = vmatpush2.msra.mxu0 0.0
    %558 = vmatprep.subr.mxu0 0.0
    %559 = vmatpush2.msra.mxu0 0.0
    %560 = vmatprep.subr.mxu0 0.0
    %561 = vmatpush2.msra.mxu0 0.0
    %562 = vmatprep.subr.mxu0 0.0
    %563 = vmatpush2.msra.mxu0 0.0
    %564 = vmatprep.subr.mxu0 0.0
    %565 = vmatpush2.msra.mxu0 0.0
    %566 = vmatprep.subr.mxu0 0.0
    %567 = vmatpush2.msra.mxu0 0.0
    %568 = vmatprep.subr.mxu0 0.0
    %569 = vmatpush2.msra.mxu0 0.0
    %570 = vmatprep.subr.mxu0 0.0
    %571 = vmatpush2.msra.mxu0 0.0
    %572 = vmatprep.subr.mxu0 0.0
    %573 = vmatpush2.msra.mxu0 0.0
    %574 = vmatprep.subr.mxu0 0.0
    %575 = vmatpush2.msra.mxu0 0.0
    %576 = vmatprep.subr.mxu0 0.0
    %577 = vmatpush2.msra.mxu0 0.0
    %578 = vmatprep.subr.mxu0 0.0
    %579 = vmatpush2.msra.mxu0 0.0
    %580 = vmatprep.mubr.f32.mxu0 0.0
    %581 = vmatmul.mubr.f32.gmra.mxu0 %v514
    %v582 = vpop.f32.mrf.mxu0
    %v583 = vadd.f32 0.0, %v582
    %v584 = vpop.f32.mrf.mxu0
    %v585 = vadd.f32 0.0, %v584
    %586 = vdwg.mxu0
    %v587 = vadd.f32 %v179, %v583
    %v588 = vadd.f32 %v181, %v585
    %v589 = vxor.u32 %v587, 2147483648
    %v590 = vxor.u32 %v588, 2147483648
    %v591 = vmul.f32 %v589, 1.442695
    %v592 = vpow.pop %v591
    %v593 = vmul.f32 %v590, 1.442695
    %v594 = vpow.pop %v593
    %v595 = vadd.f32 %v592, 1.0
    %v596 = vadd.f32 %v594, 1.0
    %v597 = vrcp.pop %v595
    %v598 = vmul.f32 1.0, %v597
    %v599 = vrcp.pop %v596
    %v600 = vmul.f32 1.0, %v599
    %v601 = vtanh.pop %v588
    %v602 = vmul.f32 %v598, 0.0
    %604 = vrot.lane.b32.xlu0 %v601, 64
    %v605 = vpop.permute.xlu0 %604
    %v607 = vmul.f32 %v598, %v605
    %609 = vrot.lane.b32.xlu0 %v607, 64
    %v610 = vpop.permute.xlu0 %609
    %v612 = vadd.f32 %v602, %v610
    %v613 = vtanh.pop %v612
    %615 = vrot.lane.b32.xlu0 %v613, 64
    %v616 = vpop.permute.xlu0 %615
    %v618 = vmul.f32 %v600, %v616
    %620 = vset.pattern.permute.xlu0 0
    %621 = vperm.xlu0 %620, %v512
    %v622 = vpop.permute.xlu0 %621
    %v624 = vmul.f32 %v622, %v618
    %v625 = vsub.f32 1.0, %v512
    %627 = vset.pattern.permute.xlu0 0
    %628 = vperm.xlu0 %627, %v625
    %v629 = vpop.permute.xlu0 %628
    %v631 = vmul.f32 %v629, 0.0
    %v632 = vadd.f32 %v624, %v631
    %634 = vset.pattern.permute.xlu0 0
    %635 = vperm.xlu0 %634, %v312
    %v636 = vpop.permute.xlu0 %635
    %v638 = vmul.f32 %v636, %v632
    %v639 = vadd.f32 %v638, 0.0
    %v640 = vmul.f32 %v636, %v612
    %v641 = vadd.f32 %v640, 0.0
    %v643 = vsel %vm102, %v632, 0
    %645 = vmatprep.subr.mxu0 0.0
    %646 = vmatpush1.msra.mxu0 0.0
    %647 = vmatprep.subr.mxu0 0.0
    %648 = vmatpush1.msra.mxu0 0.0
    %649 = vmatprep.subr.mxu0 0.0
    %650 = vmatpush1.msra.mxu0 0.0
    %651 = vmatprep.subr.mxu0 0.0
    %652 = vmatpush1.msra.mxu0 0.0
    %653 = vmatprep.subr.mxu0 0.0
    %654 = vmatpush1.msra.mxu0 0.0
    %655 = vmatprep.subr.mxu0 0.0
    %656 = vmatpush1.msra.mxu0 0.0
    %657 = vmatprep.subr.mxu0 0.0
    %658 = vmatpush1.msra.mxu0 0.0
    %659 = vmatprep.subr.mxu0 0.0
    %660 = vmatpush1.msra.mxu0 0.0
    %661 = vmatprep.subr.mxu0 %v210
    %662 = vmatpush1.msra.mxu0 %v209
    %663 = vmatprep.subr.mxu0 %v208
    %664 = vmatpush1.msra.mxu0 %v207
    %665 = vmatprep.subr.mxu0 %v206
    %666 = vmatpush1.msra.mxu0 %v205
    %667 = vmatprep.subr.mxu0 %v204
    %668 = vmatpush1.msra.mxu0 %v203
    %669 = vmatprep.subr.mxu0 %v202
    %670 = vmatpush1.msra.mxu0 %v201
    %671 = vmatprep.subr.mxu0 %v200
    %672 = vmatpush1.msra.mxu0 %v199
    %673 = vmatprep.subr.mxu0 %v198
    %674 = vmatpush1.msra.mxu0 %v197
    %675 = vmatprep.subr.mxu0 %v196
    %676 = vmatpush1.msra.mxu0 %v195
    %677 = vmatprep.subr.mxu0 0.0
    %678 = vmatpush2.msra.mxu0 0.0
    %679 = vmatprep.subr.mxu0 0.0
    %680 = vmatpush2.msra.mxu0 0.0
    %681 = vmatprep.subr.mxu0 0.0
    %682 = vmatpush2.msra.mxu0 0.0
    %683 = vmatprep.subr.mxu0 0.0
    %684 = vmatpush2.msra.mxu0 0.0
    %685 = vmatprep.subr.mxu0 0.0
    %686 = vmatpush2.msra.mxu0 0.0
    %687 = vmatprep.subr.mxu0 0.0
    %688 = vmatpush2.msra.mxu0 0.0
    %689 = vmatprep.subr.mxu0 0.0
    %690 = vmatpush2.msra.mxu0 0.0
    %691 = vmatprep.subr.mxu0 0.0
    %692 = vmatpush2.msra.mxu0 0.0
    %693 = vmatprep.subr.mxu0 0.0
    %694 = vmatpush2.msra.mxu0 0.0
    %695 = vmatprep.subr.mxu0 0.0
    %696 = vmatpush2.msra.mxu0 0.0
    %697 = vmatprep.subr.mxu0 0.0
    %698 = vmatpush2.msra.mxu0 0.0
    %699 = vmatprep.subr.mxu0 0.0
    %700 = vmatpush2.msra.mxu0 0.0
    %701 = vmatprep.subr.mxu0 0.0
    %702 = vmatpush2.msra.mxu0 0.0
    %703 = vmatprep.subr.mxu0 0.0
    %704 = vmatpush2.msra.mxu0 0.0
    %705 = vmatprep.subr.mxu0 0.0
    %706 = vmatpush2.msra.mxu0 0.0
    %707 = vmatprep.subr.mxu0 0.0
    %708 = vmatpush2.msra.mxu0 0.0
    %709 = vmatprep.mubr.f32.mxu0 0.0
    %710 = vmatmul.mubr.f32.gmra.mxu0 %v643
    %v711 = vpop.f32.mrf.mxu0
    %v712 = vadd.f32 0.0, %v711
    %v713 = vpop.f32.mrf.mxu0
    %v714 = vadd.f32 0.0, %v713
    %715 = vdwg.mxu0
    %v716 = vadd.f32 %v185, %v712
    %v717 = vadd.f32 %v187, %v714
    %v718 = vxor.u32 %v716, 2147483648
    %v719 = vxor.u32 %v717, 2147483648
    %v720 = vmul.f32 %v718, 1.442695
    %v721 = vpow.pop %v720
    %v722 = vmul.f32 %v719, 1.442695
    %v723 = vpow.pop %v722
    %v724 = vadd.f32 %v721, 1.0
    %v725 = vadd.f32 %v723, 1.0
    %v726 = vrcp.pop %v724
    %v727 = vmul.f32 1.0, %v726
    %v728 = vrcp.pop %v725
    %v729 = vmul.f32 1.0, %v728
    %v730 = vtanh.pop %v717
    %v731 = vmul.f32 %v727, %v612
    %733 = vrot.lane.b32.xlu0 %v730, 64
    %v734 = vpop.permute.xlu0 %733
    %v736 = vmul.f32 %v727, %v734
    %738 = vrot.lane.b32.xlu0 %v736, 64
    %v739 = vpop.permute.xlu0 %738
    %v741 = vadd.f32 %v731, %v739
    %v742 = vtanh.pop %v741
    %744 = vrot.lane.b32.xlu0 %v742, 64
    %v745 = vpop.permute.xlu0 %744
    %v747 = vmul.f32 %v729, %v745
    %748 = vset.pattern.permute.xlu0 1
    %749 = vperm.xlu0 %748, %v512
    %v750 = vpop.permute.xlu0 %749
    %v752 = vmul.f32 %v750, %v747
    %753 = vset.pattern.permute.xlu0 1
    %754 = vperm.xlu0 %753, %v625
    %v755 = vpop.permute.xlu0 %754
    %v757 = vmul.f32 %v755, %v632
    %v758 = vadd.f32 %v752, %v757
    %759 = vset.pattern.permute.xlu0 1
    %760 = vperm.xlu0 %759, %v312
    %v761 = vpop.permute.xlu0 %760
    %v763 = vmul.f32 %v761, %v758
    %v764 = vadd.f32 %v639, %v763
    %v765 = vmul.f32 %v761, %v741
    %v766 = vadd.f32 %v641, %v765
    %v768 = vsel %vm102, %v758, 0
    %770 = vmatprep.subr.mxu0 0.0
    %771 = vmatpush1.msra.mxu0 0.0
    %772 = vmatprep.subr.mxu0 0.0
    %773 = vmatpush1.msra.mxu0 0.0
    %774 = vmatprep.subr.mxu0 0.0
    %775 = vmatpush1.msra.mxu0 0.0
    %776 = vmatprep.subr.mxu0 0.0
    %777 = vmatpush1.msra.mxu0 0.0
    %778 = vmatprep.subr.mxu0 0.0
    %779 = vmatpush1.msra.mxu0 0.0
    %780 = vmatprep.subr.mxu0 0.0
    %781 = vmatpush1.msra.mxu0 0.0
    %782 = vmatprep.subr.mxu0 0.0
    %783 = vmatpush1.msra.mxu0 0.0
    %784 = vmatprep.subr.mxu0 0.0
    %785 = vmatpush1.msra.mxu0 0.0
    %786 = vmatprep.subr.mxu0 %v210
    %787 = vmatpush1.msra.mxu0 %v209
    %788 = vmatprep.subr.mxu0 %v208
    %789 = vmatpush1.msra.mxu0 %v207
    %790 = vmatprep.subr.mxu0 %v206
    %791 = vmatpush1.msra.mxu0 %v205
    %792 = vmatprep.subr.mxu0 %v204
    %793 = vmatpush1.msra.mxu0 %v203
    %794 = vmatprep.subr.mxu0 %v202
    %795 = vmatpush1.msra.mxu0 %v201
    %796 = vmatprep.subr.mxu0 %v200
    %797 = vmatpush1.msra.mxu0 %v199
    %798 = vmatprep.subr.mxu0 %v198
    %799 = vmatpush1.msra.mxu0 %v197
    %800 = vmatprep.subr.mxu0 %v196
    %801 = vmatpush1.msra.mxu0 %v195
    %802 = vmatprep.subr.mxu0 0.0
    %803 = vmatpush2.msra.mxu0 0.0
    %804 = vmatprep.subr.mxu0 0.0
    %805 = vmatpush2.msra.mxu0 0.0
    %806 = vmatprep.subr.mxu0 0.0
    %807 = vmatpush2.msra.mxu0 0.0
    %808 = vmatprep.subr.mxu0 0.0
    %809 = vmatpush2.msra.mxu0 0.0
    %810 = vmatprep.subr.mxu0 0.0
    %811 = vmatpush2.msra.mxu0 0.0
    %812 = vmatprep.subr.mxu0 0.0
    %813 = vmatpush2.msra.mxu0 0.0
    %814 = vmatprep.subr.mxu0 0.0
    %815 = vmatpush2.msra.mxu0 0.0
    %816 = vmatprep.subr.mxu0 0.0
    %817 = vmatpush2.msra.mxu0 0.0
    %818 = vmatprep.subr.mxu0 0.0
    %819 = vmatpush2.msra.mxu0 0.0
    %820 = vmatprep.subr.mxu0 0.0
    %821 = vmatpush2.msra.mxu0 0.0
    %822 = vmatprep.subr.mxu0 0.0
    %823 = vmatpush2.msra.mxu0 0.0
    %824 = vmatprep.subr.mxu0 0.0
    %825 = vmatpush2.msra.mxu0 0.0
    %826 = vmatprep.subr.mxu0 0.0
    %827 = vmatpush2.msra.mxu0 0.0
    %828 = vmatprep.subr.mxu0 0.0
    %829 = vmatpush2.msra.mxu0 0.0
    %830 = vmatprep.subr.mxu0 0.0
    %831 = vmatpush2.msra.mxu0 0.0
    %832 = vmatprep.subr.mxu0 0.0
    %833 = vmatpush2.msra.mxu0 0.0
    %834 = vmatprep.mubr.f32.mxu0 0.0
    %835 = vmatmul.mubr.f32.gmra.mxu0 %v768
    %v836 = vpop.f32.mrf.mxu0
    %v837 = vadd.f32 0.0, %v836
    %v838 = vpop.f32.mrf.mxu0
    %v839 = vadd.f32 0.0, %v838
    %840 = vdwg.mxu0
    %v841 = vadd.f32 %v191, %v837
    %v842 = vadd.f32 %v193, %v839
    %v843 = vxor.u32 %v841, 2147483648
    %v844 = vxor.u32 %v842, 2147483648
    %v845 = vmul.f32 %v843, 1.442695
    %v846 = vpow.pop %v845
    %v847 = vmul.f32 %v844, 1.442695
    %v848 = vpow.pop %v847
    %v849 = vadd.f32 %v846, 1.0
    %v850 = vadd.f32 %v848, 1.0
    %v851 = vrcp.pop %v849
    %v852 = vmul.f32 1.0, %v851
    %v853 = vrcp.pop %v850
    %v854 = vmul.f32 1.0, %v853
    %v855 = vtanh.pop %v842
    %v856 = vmul.f32 %v852, %v741
    %858 = vrot.lane.b32.xlu0 %v855, 64
    %v859 = vpop.permute.xlu0 %858
    %v861 = vmul.f32 %v852, %v859
    %863 = vrot.lane.b32.xlu0 %v861, 64
    %v864 = vpop.permute.xlu0 %863
    %v866 = vadd.f32 %v856, %v864
    %v867 = vtanh.pop %v866
    %869 = vrot.lane.b32.xlu0 %v867, 64
    %v870 = vpop.permute.xlu0 %869
    %v872 = vmul.f32 %v854, %v870
    %873 = vset.pattern.permute.xlu0 2
    %874 = vperm.xlu0 %873, %v512
    %v875 = vpop.permute.xlu0 %874
    %v877 = vmul.f32 %v875, %v872
    %878 = vset.pattern.permute.xlu0 2
    %879 = vperm.xlu0 %878, %v625
    %v880 = vpop.permute.xlu0 %879
    %v882 = vmul.f32 %v880, %v758
    %v883 = vadd.f32 %v877, %v882
    %884 = vset.pattern.permute.xlu0 2
    %885 = vperm.xlu0 %884, %v312
    %v886 = vpop.permute.xlu0 %885
    %v888 = vmul.f32 %v886, %v883
    %v889 = vadd.f32 %v764, %v888
    %v890 = vmul.f32 %v886, %v866
    %v891 = vadd.f32 %v766, %v890
    %893 = vrot.lane.b32.xlu0 %v68, 64
    %v894 = vpop.permute.xlu0 %893
    %v896 = vsel %vm102, %v889, %v894
    %v898 = vlaneseq
    %v899 = vshrl.u32 %v898, 7
    %v900 = vsub.s32 0, %v899
    %v901 = vrot.slane %v243, %v900
    %v902 = vlaneseq
    %v903 = vshrl.u32 %v902, 7
    %v904 = vsub.s32 1, %v903
    %v905 = vrot.slane %v243, %v904
    %908 = vmatprep.subr.mxu0 %v242
    %909 = vmatpush1.msra.mxu0 %v241
    %910 = vmatprep.subr.mxu0 %v240
    %911 = vmatpush1.msra.mxu0 %v239
    %912 = vmatprep.subr.mxu0 %v238
    %913 = vmatpush1.msra.mxu0 %v237
    %914 = vmatprep.subr.mxu0 %v236
    %915 = vmatpush1.msra.mxu0 %v235
    %916 = vmatprep.subr.mxu0 %v234
    %917 = vmatpush1.msra.mxu0 %v233
    %918 = vmatprep.subr.mxu0 %v232
    %919 = vmatpush1.msra.mxu0 %v231
    %920 = vmatprep.subr.mxu0 %v230
    %921 = vmatpush1.msra.mxu0 %v229
    %922 = vmatprep.subr.mxu0 %v228
    %923 = vmatpush1.msra.mxu0 %v227
    %924 = vmatprep.subr.mxu0 %v226
    %925 = vmatpush1.msra.mxu0 %v225
    %926 = vmatprep.subr.mxu0 %v224
    %927 = vmatpush1.msra.mxu0 %v223
    %928 = vmatprep.subr.mxu0 %v222
    %929 = vmatpush1.msra.mxu0 %v221
    %930 = vmatprep.subr.mxu0 %v220
    %931 = vmatpush1.msra.mxu0 %v219
    %932 = vmatprep.subr.mxu0 %v218
    %933 = vmatpush1.msra.mxu0 %v217
    %934 = vmatprep.subr.mxu0 %v216
    %935 = vmatpush1.msra.mxu0 %v215
    %936 = vmatprep.subr.mxu0 %v214
    %937 = vmatpush1.msra.mxu0 %v213
    %938 = vmatprep.subr.mxu0 %v212
    %939 = vmatpush1.msra.mxu0 %v211
    %940 = vmatprep.subr.mxu0 0.0
    %941 = vmatpush2.msra.mxu0 0.0
    %942 = vmatprep.subr.mxu0 0.0
    %943 = vmatpush2.msra.mxu0 0.0
    %944 = vmatprep.subr.mxu0 0.0
    %945 = vmatpush2.msra.mxu0 0.0
    %946 = vmatprep.subr.mxu0 0.0
    %947 = vmatpush2.msra.mxu0 0.0
    %948 = vmatprep.subr.mxu0 0.0
    %949 = vmatpush2.msra.mxu0 0.0
    %950 = vmatprep.subr.mxu0 0.0
    %951 = vmatpush2.msra.mxu0 0.0
    %952 = vmatprep.subr.mxu0 0.0
    %953 = vmatpush2.msra.mxu0 0.0
    %954 = vmatprep.subr.mxu0 0.0
    %955 = vmatpush2.msra.mxu0 0.0
    %956 = vmatprep.subr.mxu0 0.0
    %957 = vmatpush2.msra.mxu0 0.0
    %958 = vmatprep.subr.mxu0 0.0
    %959 = vmatpush2.msra.mxu0 0.0
    %960 = vmatprep.subr.mxu0 0.0
    %961 = vmatpush2.msra.mxu0 0.0
    %962 = vmatprep.subr.mxu0 0.0
    %963 = vmatpush2.msra.mxu0 0.0
    %964 = vmatprep.subr.mxu0 0.0
    %965 = vmatpush2.msra.mxu0 0.0
    %966 = vmatprep.subr.mxu0 0.0
    %967 = vmatpush2.msra.mxu0 0.0
    %968 = vmatprep.subr.mxu0 0.0
    %969 = vmatpush2.msra.mxu0 0.0
    %970 = vmatprep.subr.mxu0 0.0
    %971 = vmatpush2.msra.mxu0 0.0
    %972 = vmatprep.mubr.f32.mxu0 0.0
    %973 = vmatmul.mubr.f32.gmra.mxu0 %v896
    %v974 = vpop.f32.mrf.mxu0
    %v975 = vadd.f32 %v901, %v974
    %v976 = vpop.f32.mrf.mxu0
    %v977 = vadd.f32 %v905, %v976
    %978 = vdwg.mxu0
    %v979 = vxor.u32 %v975, 2147483648
    %v980 = vxor.u32 %v977, 2147483648
    %v981 = vmul.f32 %v979, 1.442695
    %v982 = vpow.pop %v981
    %v983 = vmul.f32 %v980, 1.442695
    %v984 = vpow.pop %v983
    %v985 = vadd.f32 %v982, 1.0
    %v986 = vadd.f32 %v984, 1.0
    %v987 = vrcp.pop %v985
    %v988 = vmul.f32 1.0, %v987
    %v989 = vrcp.pop %v986
    %v990 = vmul.f32 1.0, %v989
    %v991 = vtanh.pop %v977
    %v992 = vmul.f32 %v988, %v891
    %994 = vrot.lane.b32.xlu0 %v991, 64
    %v995 = vpop.permute.xlu0 %994
    %v997 = vmul.f32 %v988, %v995
    %999 = vrot.lane.b32.xlu0 %v997, 64
    %v1000 = vpop.permute.xlu0 %999
    %v1002 = vadd.f32 %v992, %v1000
    %v1003 = vtanh.pop %v1002
    %1005 = vrot.lane.b32.xlu0 %v1003, 64
    %v1006 = vpop.permute.xlu0 %1005
    %v1008 = vmul.f32 %v990, %v1006
    %v1009 = vmul.f32 %v69, %v1008
    %v1010 = vsub.f32 %v69, %v1008
    %v1011 = vand.u32 2147483647, %v1010
    %1013 = vrot.lane.b32.xlu0 %v1009, 64
    %v1014 = vpop.permute.xlu0 %1013
    %1017 = vrot.lane.b32.xlu0 %v1011, 64
    %v1018 = vpop.permute.xlu0 %1017
    %v1020 = vsel %vm102, %v313, %v1014
    %v1021 = vsel %vm102, %v315, %v1018
    %v1022 = vmul.f32 %v71, %v1008
    %v1023 = vsub.f32 %v71, %v1008
    %v1024 = vand.u32 2147483647, %v1023
    %1026 = vrot.lane.b32.xlu0 %v1022, 64
    %v1027 = vpop.permute.xlu0 %1026
    %1030 = vrot.lane.b32.xlu0 %v1024, 64
    %v1031 = vpop.permute.xlu0 %1030
    %v1033 = vsel %vm102, %v326, %v1027
    %v1034 = vsel %vm102, %v328, %v1031
    %v1035 = vmul.f32 %v73, %v1008
    %v1036 = vsub.f32 %v73, %v1008
    %v1037 = vand.u32 2147483647, %v1036
    %1039 = vrot.lane.b32.xlu0 %v1035, 64
    %v1040 = vpop.permute.xlu0 %1039
    %1043 = vrot.lane.b32.xlu0 %v1037, 64
    %v1044 = vpop.permute.xlu0 %1043
    %v1046 = vsel %vm102, %v339, %v1040
    %v1047 = vsel %vm102, %v341, %v1044
    %1048 = vmatprep.subr.mxu0 %v275
    %1049 = vmatpush1.msra.mxu0 %v274
    %1050 = vmatprep.subr.mxu0 %v273
    %1051 = vmatpush1.msra.mxu0 %v272
    %1052 = vmatprep.subr.mxu0 %v271
    %1053 = vmatpush1.msra.mxu0 %v270
    %1054 = vmatprep.subr.mxu0 %v269
    %1055 = vmatpush1.msra.mxu0 %v268
    %1056 = vmatprep.subr.mxu0 %v267
    %1057 = vmatpush1.msra.mxu0 %v266
    %1058 = vmatprep.subr.mxu0 %v265
    %1059 = vmatpush1.msra.mxu0 %v264
    %1060 = vmatprep.subr.mxu0 %v263
    %1061 = vmatpush1.msra.mxu0 %v262
    %1062 = vmatprep.subr.mxu0 %v261
    %1063 = vmatpush1.msra.mxu0 %v260
    %1064 = vmatprep.subr.mxu0 %v259
    %1065 = vmatpush1.msra.mxu0 %v258
    %1066 = vmatprep.subr.mxu0 %v257
    %1067 = vmatpush1.msra.mxu0 %v256
    %1068 = vmatprep.subr.mxu0 %v255
    %1069 = vmatpush1.msra.mxu0 %v254
    %1070 = vmatprep.subr.mxu0 %v253
    %1071 = vmatpush1.msra.mxu0 %v252
    %1072 = vmatprep.subr.mxu0 %v251
    %1073 = vmatpush1.msra.mxu0 %v250
    %1074 = vmatprep.subr.mxu0 %v249
    %1075 = vmatpush1.msra.mxu0 %v248
    %1076 = vmatprep.subr.mxu0 %v247
    %1077 = vmatpush1.msra.mxu0 %v246
    %1078 = vmatprep.subr.mxu0 %v245
    %1079 = vmatpush1.msra.mxu0 %v244
    %1080 = vmatprep.subr.mxu0 %v307
    %1081 = vmatpush2.msra.mxu0 %v306
    %1082 = vmatprep.subr.mxu0 %v305
    %1083 = vmatpush2.msra.mxu0 %v304
    %1084 = vmatprep.subr.mxu0 %v303
    %1085 = vmatpush2.msra.mxu0 %v302
    %1086 = vmatprep.subr.mxu0 %v301
    %1087 = vmatpush2.msra.mxu0 %v300
    %1088 = vmatprep.subr.mxu0 %v299
    %1089 = vmatpush2.msra.mxu0 %v298
    %1090 = vmatprep.subr.mxu0 %v297
    %1091 = vmatpush2.msra.mxu0 %v296
    %1092 = vmatprep.subr.mxu0 %v295
    %1093 = vmatpush2.msra.mxu0 %v294
    %1094 = vmatprep.subr.mxu0 %v293
    %1095 = vmatpush2.msra.mxu0 %v292
    %1096 = vmatprep.subr.mxu0 %v291
    %1097 = vmatpush2.msra.mxu0 %v290
    %1098 = vmatprep.subr.mxu0 %v289
    %1099 = vmatpush2.msra.mxu0 %v288
    %1100 = vmatprep.subr.mxu0 %v287
    %1101 = vmatpush2.msra.mxu0 %v286
    %1102 = vmatprep.subr.mxu0 %v285
    %1103 = vmatpush2.msra.mxu0 %v284
    %1104 = vmatprep.subr.mxu0 %v283
    %1105 = vmatpush2.msra.mxu0 %v282
    %1106 = vmatprep.subr.mxu0 %v281
    %1107 = vmatpush2.msra.mxu0 %v280
    %1108 = vmatprep.subr.mxu0 %v279
    %1109 = vmatpush2.msra.mxu0 %v278
    %1110 = vmatprep.subr.mxu0 %v277
    %1111 = vmatpush2.msra.mxu0 %v276
    %1112 = vmatprep.mubr.f32.mxu0 %v1021
    %1113 = vmatmul.mubr.f32.gmra.mxu0 %v1020
    %v1114 = vpop.f32.mrf.mxu0
    %v1115 = vadd.f32 %v356, %v1114
    %v1116 = vpop.f32.mrf.mxu0
    %v1117 = vadd.f32 %v360, %v1116
    %1118 = vmatprep.mubr.f32.mxu0 %v1034
    %1119 = vmatmul.mubr.f32.gmra.mxu0 %v1033
    %v1120 = vpop.f32.mrf.mxu0
    %v1121 = vadd.f32 %v356, %v1120
    %v1122 = vpop.f32.mrf.mxu0
    %v1123 = vadd.f32 %v360, %v1122
    %1124 = vmatprep.mubr.f32.mxu0 %v1047
    %1125 = vmatmul.mubr.f32.gmra.mxu0 %v1046
    %v1126 = vpop.f32.mrf.mxu0
    %v1127 = vadd.f32 %v356, %v1126
    %v1128 = vpop.f32.mrf.mxu0
    %v1129 = vadd.f32 %v360, %v1128
    %1130 = vdwg.mxu0
    %v1131 = vtanh.pop %v1115
    %v1132 = vtanh.pop %v1117
    %v1133 = vtanh.pop %v1121
    %v1134 = vtanh.pop %v1123
    %v1135 = vtanh.pop %v1127
    %v1136 = vtanh.pop %v1129
    %v1137 = vmul.f32 %v1131, %v456
    %v1138 = vmul.f32 %v1132, %v460
    %v1139 = vmul.f32 %v1133, %v456
    %v1140 = vmul.f32 %v1134, %v460
    %v1141 = vmul.f32 %v1135, %v456
    %v1142 = vmul.f32 %v1136, %v460
    %v1143 = vadd.f32 %v1137, %v1138
    %1144 = vadd.xlane.f32.xlu0 %v1143
    %v1145 = vpop.xlane.xlu0 %1144
    %v1146 = vadd.f32 %v1139, %v1140
    %1147 = vadd.xlane.f32.xlu0 %v1146
    %v1148 = vpop.xlane.xlu0 %1147
    %v1149 = vadd.f32 %v1141, %v1142
    %1150 = vadd.xlane.f32.xlu0 %v1149
    %v1151 = vpop.xlane.xlu0 %1150
    %v1152 = vadd.f32 %v1145, %v482
    %v1153 = vadd.f32 %v1148, %v482
    %v1154 = vadd.f32 %v1151, %v482
    %1156 = vrot.lane.b32.xlu0 %v1153, 1
    %v1157 = vpop.permute.xlu0 %1156
    %1160 = vrot.lane.b32.xlu0 %v1154, 2
    %v1161 = vpop.permute.xlu0 %1160
    %v1163 = vsel %vm495, %v1152, %v1157
    %v1164 = vsel %vm497, %v1163, %v1161
    %v1165 = vsel %vm499, -9999999.0, %v1164
    %v1166 = vsel %vm501, %v1165, -inf
    %1167 = vmax.xlane.f32.xlu0 %v1166
    %v1168 = vpop.xlane.xlu0 %1167
    %v1169 = vsub.f32 %v1165, %v1168
    %v1170 = vmul.f32 %v1169, 1.442695
    %v1171 = vpow.pop %v1170
    %v1172 = vsel %vm501, %v1171, 0.0
    %1173 = vadd.xlane.f32.xlu0 %v1172
    %v1174 = vpop.xlane.xlu0 %1173
    %v1175 = vrcp.pop %v1174
    %v1176 = vmul.f32 %v1171, %v1175
    %1178 = vset.pattern.permute.xlu0 0
    %1179 = vperm.xlu0 %1178, %v1176
    %v1180 = vpop.permute.xlu0 %1179
    %v1182 = vmul.f32 %v1180, %v618
    %v1183 = vsub.f32 1.0, %v1176
    %1185 = vset.pattern.permute.xlu0 0
    %1186 = vperm.xlu0 %1185, %v1183
    %v1187 = vpop.permute.xlu0 %1186
    %v1189 = vmul.f32 %v1187, 0.0
    %v1190 = vadd.f32 %v1182, %v1189
    %v1191 = vmul.f32 %v636, %v1190
    %v1192 = vadd.f32 %v1191, 0.0
    %v1194 = vsel %vm102, %v1190, 0
    %1196 = vmatprep.subr.mxu0 0.0
    %1197 = vmatpush1.msra.mxu0 0.0
    %1198 = vmatprep.subr.mxu0 0.0
    %1199 = vmatpush1.msra.mxu0 0.0
    %1200 = vmatprep.subr.mxu0 0.0
    %1201 = vmatpush1.msra.mxu0 0.0
    %1202 = vmatprep.subr.mxu0 0.0
    %1203 = vmatpush1.msra.mxu0 0.0
    %1204 = vmatprep.subr.mxu0 0.0
    %1205 = vmatpush1.msra.mxu0 0.0
    %1206 = vmatprep.subr.mxu0 0.0
    %1207 = vmatpush1.msra.mxu0 0.0
    %1208 = vmatprep.subr.mxu0 0.0
    %1209 = vmatpush1.msra.mxu0 0.0
    %1210 = vmatprep.subr.mxu0 0.0
    %1211 = vmatpush1.msra.mxu0 0.0
    %1212 = vmatprep.subr.mxu0 %v210
    %1213 = vmatpush1.msra.mxu0 %v209
    %1214 = vmatprep.subr.mxu0 %v208
    %1215 = vmatpush1.msra.mxu0 %v207
    %1216 = vmatprep.subr.mxu0 %v206
    %1217 = vmatpush1.msra.mxu0 %v205
    %1218 = vmatprep.subr.mxu0 %v204
    %1219 = vmatpush1.msra.mxu0 %v203
    %1220 = vmatprep.subr.mxu0 %v202
    %1221 = vmatpush1.msra.mxu0 %v201
    %1222 = vmatprep.subr.mxu0 %v200
    %1223 = vmatpush1.msra.mxu0 %v199
    %1224 = vmatprep.subr.mxu0 %v198
    %1225 = vmatpush1.msra.mxu0 %v197
    %1226 = vmatprep.subr.mxu0 %v196
    %1227 = vmatpush1.msra.mxu0 %v195
    %1228 = vmatprep.subr.mxu0 0.0
    %1229 = vmatpush2.msra.mxu0 0.0
    %1230 = vmatprep.subr.mxu0 0.0
    %1231 = vmatpush2.msra.mxu0 0.0
    %1232 = vmatprep.subr.mxu0 0.0
    %1233 = vmatpush2.msra.mxu0 0.0
    %1234 = vmatprep.subr.mxu0 0.0
    %1235 = vmatpush2.msra.mxu0 0.0
    %1236 = vmatprep.subr.mxu0 0.0
    %1237 = vmatpush2.msra.mxu0 0.0
    %1238 = vmatprep.subr.mxu0 0.0
    %1239 = vmatpush2.msra.mxu0 0.0
    %1240 = vmatprep.subr.mxu0 0.0
    %1241 = vmatpush2.msra.mxu0 0.0
    %1242 = vmatprep.subr.mxu0 0.0
    %1243 = vmatpush2.msra.mxu0 0.0
    %1244 = vmatprep.subr.mxu0 0.0
    %1245 = vmatpush2.msra.mxu0 0.0
    %1246 = vmatprep.subr.mxu0 0.0
    %1247 = vmatpush2.msra.mxu0 0.0
    %1248 = vmatprep.subr.mxu0 0.0
    %1249 = vmatpush2.msra.mxu0 0.0
    %1250 = vmatprep.subr.mxu0 0.0
    %1251 = vmatpush2.msra.mxu0 0.0
    %1252 = vmatprep.subr.mxu0 0.0
    %1253 = vmatpush2.msra.mxu0 0.0
    %1254 = vmatprep.subr.mxu0 0.0
    %1255 = vmatpush2.msra.mxu0 0.0
    %1256 = vmatprep.subr.mxu0 0.0
    %1257 = vmatpush2.msra.mxu0 0.0
    %1258 = vmatprep.subr.mxu0 0.0
    %1259 = vmatpush2.msra.mxu0 0.0
    %1260 = vmatprep.mubr.f32.mxu0 0.0
    %1261 = vmatmul.mubr.f32.gmra.mxu0 %v1194
    %v1262 = vpop.f32.mrf.mxu0
    %v1263 = vadd.f32 0.0, %v1262
    %v1264 = vpop.f32.mrf.mxu0
    %v1265 = vadd.f32 0.0, %v1264
    %1266 = vdwg.mxu0
    %v1267 = vadd.f32 %v185, %v1263
    %v1268 = vadd.f32 %v187, %v1265
    %v1269 = vxor.u32 %v1267, 2147483648
    %v1270 = vxor.u32 %v1268, 2147483648
    %v1271 = vmul.f32 %v1269, 1.442695
    %v1272 = vpow.pop %v1271
    %v1273 = vmul.f32 %v1270, 1.442695
    %v1274 = vpow.pop %v1273
    %v1275 = vadd.f32 %v1272, 1.0
    %v1276 = vadd.f32 %v1274, 1.0
    %v1277 = vrcp.pop %v1275
    %v1278 = vmul.f32 1.0, %v1277
    %v1279 = vrcp.pop %v1276
    %v1280 = vmul.f32 1.0, %v1279
    %v1281 = vtanh.pop %v1268
    %v1282 = vmul.f32 %v1278, %v612
    %1284 = vrot.lane.b32.xlu0 %v1281, 64
    %v1285 = vpop.permute.xlu0 %1284
    %v1287 = vmul.f32 %v1278, %v1285
    %1289 = vrot.lane.b32.xlu0 %v1287, 64
    %v1290 = vpop.permute.xlu0 %1289
    %v1292 = vadd.f32 %v1282, %v1290
    %v1293 = vtanh.pop %v1292
    %1295 = vrot.lane.b32.xlu0 %v1293, 64
    %v1296 = vpop.permute.xlu0 %1295
    %v1298 = vmul.f32 %v1280, %v1296
    %1299 = vset.pattern.permute.xlu0 1
    %1300 = vperm.xlu0 %1299, %v1176
    %v1301 = vpop.permute.xlu0 %1300
    %v1303 = vmul.f32 %v1301, %v1298
    %1304 = vset.pattern.permute.xlu0 1
    %1305 = vperm.xlu0 %1304, %v1183
    %v1306 = vpop.permute.xlu0 %1305
    %v1308 = vmul.f32 %v1306, %v1190
    %v1309 = vadd.f32 %v1303, %v1308
    %v1310 = vmul.f32 %v761, %v1309
    %v1311 = vadd.f32 %v1192, %v1310
    %v1312 = vmul.f32 %v761, %v1292
    %v1313 = vadd.f32 %v641, %v1312
    %v1315 = vsel %vm102, %v1309, 0
    %1317 = vmatprep.subr.mxu0 0.0
    %1318 = vmatpush1.msra.mxu0 0.0
    %1319 = vmatprep.subr.mxu0 0.0
    %1320 = vmatpush1.msra.mxu0 0.0
    %1321 = vmatprep.subr.mxu0 0.0
    %1322 = vmatpush1.msra.mxu0 0.0
    %1323 = vmatprep.subr.mxu0 0.0
    %1324 = vmatpush1.msra.mxu0 0.0
    %1325 = vmatprep.subr.mxu0 0.0
    %1326 = vmatpush1.msra.mxu0 0.0
    %1327 = vmatprep.subr.mxu0 0.0
    %1328 = vmatpush1.msra.mxu0 0.0
    %1329 = vmatprep.subr.mxu0 0.0
    %1330 = vmatpush1.msra.mxu0 0.0
    %1331 = vmatprep.subr.mxu0 0.0
    %1332 = vmatpush1.msra.mxu0 0.0
    %1333 = vmatprep.subr.mxu0 %v210
    %1334 = vmatpush1.msra.mxu0 %v209
    %1335 = vmatprep.subr.mxu0 %v208
    %1336 = vmatpush1.msra.mxu0 %v207
    %1337 = vmatprep.subr.mxu0 %v206
    %1338 = vmatpush1.msra.mxu0 %v205
    %1339 = vmatprep.subr.mxu0 %v204
    %1340 = vmatpush1.msra.mxu0 %v203
    %1341 = vmatprep.subr.mxu0 %v202
    %1342 = vmatpush1.msra.mxu0 %v201
    %1343 = vmatprep.subr.mxu0 %v200
    %1344 = vmatpush1.msra.mxu0 %v199
    %1345 = vmatprep.subr.mxu0 %v198
    %1346 = vmatpush1.msra.mxu0 %v197
    %1347 = vmatprep.subr.mxu0 %v196
    %1348 = vmatpush1.msra.mxu0 %v195
    %1349 = vmatprep.subr.mxu0 0.0
    %1350 = vmatpush2.msra.mxu0 0.0
    %1351 = vmatprep.subr.mxu0 0.0
    %1352 = vmatpush2.msra.mxu0 0.0
    %1353 = vmatprep.subr.mxu0 0.0
    %1354 = vmatpush2.msra.mxu0 0.0
    %1355 = vmatprep.subr.mxu0 0.0
    %1356 = vmatpush2.msra.mxu0 0.0
    %1357 = vmatprep.subr.mxu0 0.0
    %1358 = vmatpush2.msra.mxu0 0.0
    %1359 = vmatprep.subr.mxu0 0.0
    %1360 = vmatpush2.msra.mxu0 0.0
    %1361 = vmatprep.subr.mxu0 0.0
    %1362 = vmatpush2.msra.mxu0 0.0
    %1363 = vmatprep.subr.mxu0 0.0
    %1364 = vmatpush2.msra.mxu0 0.0
    %1365 = vmatprep.subr.mxu0 0.0
    %1366 = vmatpush2.msra.mxu0 0.0
    %1367 = vmatprep.subr.mxu0 0.0
    %1368 = vmatpush2.msra.mxu0 0.0
    %1369 = vmatprep.subr.mxu0 0.0
    %1370 = vmatpush2.msra.mxu0 0.0
    %1371 = vmatprep.subr.mxu0 0.0
    %1372 = vmatpush2.msra.mxu0 0.0
    %1373 = vmatprep.subr.mxu0 0.0
    %1374 = vmatpush2.msra.mxu0 0.0
    %1375 = vmatprep.subr.mxu0 0.0
    %1376 = vmatpush2.msra.mxu0 0.0
    %1377 = vmatprep.subr.mxu0 0.0
    %1378 = vmatpush2.msra.mxu0 0.0
    %1379 = vmatprep.subr.mxu0 0.0
    %1380 = vmatpush2.msra.mxu0 0.0
    %1381 = vmatprep.mubr.f32.mxu0 0.0
    %1382 = vmatmul.mubr.f32.gmra.mxu0 %v1315
    %v1383 = vpop.f32.mrf.mxu0
    %v1384 = vadd.f32 0.0, %v1383
    %v1385 = vpop.f32.mrf.mxu0
    %v1386 = vadd.f32 0.0, %v1385
    %1387 = vdwg.mxu0
    %v1388 = vadd.f32 %v191, %v1384
    %v1389 = vadd.f32 %v193, %v1386
    %v1390 = vxor.u32 %v1388, 2147483648
    %v1391 = vxor.u32 %v1389, 2147483648
    %v1392 = vmul.f32 %v1390, 1.442695
    %v1393 = vpow.pop %v1392
    %v1394 = vmul.f32 %v1391, 1.442695
    %v1395 = vpow.pop %v1394
    %v1396 = vadd.f32 %v1393, 1.0
    %v1397 = vadd.f32 %v1395, 1.0
    %v1398 = vrcp.pop %v1396
    %v1399 = vmul.f32 1.0, %v1398
    %v1400 = vrcp.pop %v1397
    %v1401 = vmul.f32 1.0, %v1400
    %v1402 = vtanh.pop %v1389
    %v1403 = vmul.f32 %v1399, %v1292
    %1405 = vrot.lane.b32.xlu0 %v1402, 64
    %v1406 = vpop.permute.xlu0 %1405
    %v1408 = vmul.f32 %v1399, %v1406
    %1410 = vrot.lane.b32.xlu0 %v1408, 64
    %v1411 = vpop.permute.xlu0 %1410
    %v1413 = vadd.f32 %v1403, %v1411
    %v1414 = vtanh.pop %v1413
    %1416 = vrot.lane.b32.xlu0 %v1414, 64
    %v1417 = vpop.permute.xlu0 %1416
    %v1419 = vmul.f32 %v1401, %v1417
    %1420 = vset.pattern.permute.xlu0 2
    %1421 = vperm.xlu0 %1420, %v1176
    %v1422 = vpop.permute.xlu0 %1421
    %v1424 = vmul.f32 %v1422, %v1419
    %1425 = vset.pattern.permute.xlu0 2
    %1426 = vperm.xlu0 %1425, %v1183
    %v1427 = vpop.permute.xlu0 %1426
    %v1429 = vmul.f32 %v1427, %v1309
    %v1430 = vadd.f32 %v1424, %v1429
    %v1431 = vmul.f32 %v886, %v1430
    %v1432 = vadd.f32 %v1311, %v1431
    %v1433 = vmul.f32 %v886, %v1413
    %v1434 = vadd.f32 %v1313, %v1433
    %1436 = vrot.lane.b32.xlu0 %v1008, 64
    %v1437 = vpop.permute.xlu0 %1436
    %v1439 = vsel %vm102, %v1432, %v1437
    %1440 = vmatprep.subr.mxu0 %v242
    %1441 = vmatpush1.msra.mxu0 %v241
    %1442 = vmatprep.subr.mxu0 %v240
    %1443 = vmatpush1.msra.mxu0 %v239
    %1444 = vmatprep.subr.mxu0 %v238
    %1445 = vmatpush1.msra.mxu0 %v237
    %1446 = vmatprep.subr.mxu0 %v236
    %1447 = vmatpush1.msra.mxu0 %v235
    %1448 = vmatprep.subr.mxu0 %v234
    %1449 = vmatpush1.msra.mxu0 %v233
    %1450 = vmatprep.subr.mxu0 %v232
    %1451 = vmatpush1.msra.mxu0 %v231
    %1452 = vmatprep.subr.mxu0 %v230
    %1453 = vmatpush1.msra.mxu0 %v229
    %1454 = vmatprep.subr.mxu0 %v228
    %1455 = vmatpush1.msra.mxu0 %v227
    %1456 = vmatprep.subr.mxu0 %v226
    %1457 = vmatpush1.msra.mxu0 %v225
    %1458 = vmatprep.subr.mxu0 %v224
    %1459 = vmatpush1.msra.mxu0 %v223
    %1460 = vmatprep.subr.mxu0 %v222
    %1461 = vmatpush1.msra.mxu0 %v221
    %1462 = vmatprep.subr.mxu0 %v220
    %1463 = vmatpush1.msra.mxu0 %v219
    %1464 = vmatprep.subr.mxu0 %v218
    %1465 = vmatpush1.msra.mxu0 %v217
    %1466 = vmatprep.subr.mxu0 %v216
    %1467 = vmatpush1.msra.mxu0 %v215
    %1468 = vmatprep.subr.mxu0 %v214
    %1469 = vmatpush1.msra.mxu0 %v213
    %1470 = vmatprep.subr.mxu0 %v212
    %1471 = vmatpush1.msra.mxu0 %v211
    %1472 = vmatprep.subr.mxu0 0.0
    %1473 = vmatpush2.msra.mxu0 0.0
    %1474 = vmatprep.subr.mxu0 0.0
    %1475 = vmatpush2.msra.mxu0 0.0
    %1476 = vmatprep.subr.mxu0 0.0
    %1477 = vmatpush2.msra.mxu0 0.0
    %1478 = vmatprep.subr.mxu0 0.0
    %1479 = vmatpush2.msra.mxu0 0.0
    %1480 = vmatprep.subr.mxu0 0.0
    %1481 = vmatpush2.msra.mxu0 0.0
    %1482 = vmatprep.subr.mxu0 0.0
    %1483 = vmatpush2.msra.mxu0 0.0
    %1484 = vmatprep.subr.mxu0 0.0
    %1485 = vmatpush2.msra.mxu0 0.0
    %1486 = vmatprep.subr.mxu0 0.0
    %1487 = vmatpush2.msra.mxu0 0.0
    %1488 = vmatprep.subr.mxu0 0.0
    %1489 = vmatpush2.msra.mxu0 0.0
    %1490 = vmatprep.subr.mxu0 0.0
    %1491 = vmatpush2.msra.mxu0 0.0
    %1492 = vmatprep.subr.mxu0 0.0
    %1493 = vmatpush2.msra.mxu0 0.0
    %1494 = vmatprep.subr.mxu0 0.0
    %1495 = vmatpush2.msra.mxu0 0.0
    %1496 = vmatprep.subr.mxu0 0.0
    %1497 = vmatpush2.msra.mxu0 0.0
    %1498 = vmatprep.subr.mxu0 0.0
    %1499 = vmatpush2.msra.mxu0 0.0
    %1500 = vmatprep.subr.mxu0 0.0
    %1501 = vmatpush2.msra.mxu0 0.0
    %1502 = vmatprep.subr.mxu0 0.0
    %1503 = vmatpush2.msra.mxu0 0.0
    %1504 = vmatprep.mubr.f32.mxu0 0.0
    %1505 = vmatmul.mubr.f32.gmra.mxu0 %v1439
    %v1506 = vpop.f32.mrf.mxu0
    %v1507 = vadd.f32 %v901, %v1506
    %v1508 = vpop.f32.mrf.mxu0
    %v1509 = vadd.f32 %v905, %v1508
    %1510 = vdwg.mxu0
    %v1511 = vxor.u32 %v1507, 2147483648
    %v1512 = vxor.u32 %v1509, 2147483648
    %v1513 = vmul.f32 %v1511, 1.442695
    %v1514 = vpow.pop %v1513
    %v1515 = vmul.f32 %v1512, 1.442695
    %v1516 = vpow.pop %v1515
    %v1517 = vadd.f32 %v1514, 1.0
    %v1518 = vadd.f32 %v1516, 1.0
    %v1519 = vrcp.pop %v1517
    %v1520 = vmul.f32 1.0, %v1519
    %v1521 = vrcp.pop %v1518
    %v1522 = vmul.f32 1.0, %v1521
    %v1523 = vtanh.pop %v1509
    %v1524 = vmul.f32 %v1520, %v1434
    %1526 = vrot.lane.b32.xlu0 %v1523, 64
    %v1527 = vpop.permute.xlu0 %1526
    %v1529 = vmul.f32 %v1520, %v1527
    %1531 = vrot.lane.b32.xlu0 %v1529, 64
    %v1532 = vpop.permute.xlu0 %1531
    %v1534 = vadd.f32 %v1524, %v1532
    %v1535 = vtanh.pop %v1534
    %1537 = vrot.lane.b32.xlu0 %v1535, 64
    %v1538 = vpop.permute.xlu0 %1537
    %v1540 = vmul.f32 %v1522, %v1538
    %v1541 = vld [vmem:[%s3] sm:$0xff]
    %v1542 = vld [vmem:[%s3 + $0x8] sm:$0xff]
    %v1543 = vld [vmem:[%s3 + $0x10] sm:$0xff]
    %v1544 = vld [vmem:[%s3 + $0x18] sm:$0xff]
    %v1545 = vld [vmem:[%s4] sm:$0xff]
    %v1546 = vld [vmem:[%s4 + $0x8] sm:$0xff]
    %v1547 = vld [vmem:[%s4 + $0x10] sm:$0xff]
    %v1548 = vld [vmem:[%s4 + $0x18] sm:$0xff]
    %v1549 = vld [vmem:[%s5] sm:$0xff]
    %1554 = vrot.lane.b32.xlu0 %v1541, 64
    %v1555 = vpop.permute.xlu0 %1554
    %1556 = vrot.lane.b32.xlu0 %v1542, 64
    %v1557 = vpop.permute.xlu0 %1556
    %1558 = vrot.lane.b32.xlu0 %v1543, 64
    %v1559 = vpop.permute.xlu0 %1558
    %1560 = vrot.lane.b32.xlu0 %v1544, 64
    %v1561 = vpop.permute.xlu0 %1560
    %v1562 = vsel %vm102, %v1555, %v1557
    %v1563 = vsel %vm102, %v1557, %v1559
    %v1564 = vsel %vm102, %v1559, %v1561
    %1574 = vrot.lane.b32.xlu0 %v1545, 64
    %v1575 = vpop.permute.xlu0 %1574
    %1576 = vrot.lane.b32.xlu0 %v1546, 64
    %v1577 = vpop.permute.xlu0 %1576
    %1578 = vrot.lane.b32.xlu0 %v1547, 64
    %v1579 = vpop.permute.xlu0 %1578
    %1580 = vrot.lane.b32.xlu0 %v1548, 64
    %v1581 = vpop.permute.xlu0 %1580
    %v1582 = vsel %vm102, %v1575, %v1577
    %v1583 = vsel %vm102, %v1577, %v1579
    %v1584 = vsel %vm102, %v1579, %v1581
    %1591 = vrot.lane.b32.xlu0 %v1549, 64
    %v1592 = vpop.permute.xlu0 %1591
    %v1594 = vsel %vm102, %v1540, %v1555
    %v1595 = vsel %vm102, %v1561, %v1575
    %v1596 = vsel %vm102, %v1581, %v1592
    %v1597 = vld [vmem:[%s18] sm:$0xff]
    %v1598 = vld [vmem:[%s18 + $0x8] sm:$0xff]
    %v1599 = vld [vmem:[%s18 + $0x10] sm:$0xff]
    %v1600 = vld [vmem:[%s18 + $0x18] sm:$0xff]
    %v1601 = vld [vmem:[%s18 + $0x20] sm:$0xff]
    %v1602 = vld [vmem:[%s18 + $0x28] sm:$0xff]
    %v1603 = vld [vmem:[%s18 + $0x30] sm:$0xff]
    %v1604 = vld [vmem:[%s18 + $0x38] sm:$0xff]
    %v1605 = vld [vmem:[%s18 + $0x40] sm:$0xff]
    %v1606 = vld [vmem:[%s18 + $0x48] sm:$0xff]
    %v1607 = vld [vmem:[%s18 + $0x50] sm:$0xff]
    %v1608 = vld [vmem:[%s18 + $0x58] sm:$0xff]
    %v1609 = vld [vmem:[%s18 + $0x60] sm:$0xff]
    %v1610 = vld [vmem:[%s18 + $0x68] sm:$0xff]
    %v1611 = vld [vmem:[%s18 + $0x70] sm:$0xff]
    %v1612 = vld [vmem:[%s18 + $0x78] sm:$0xff]
    %v1613 = vld [vmem:[%s18 + $0x80] sm:$0xff]
    %v1614 = vld [vmem:[%s18 + $0x88] sm:$0xff]
    %v1615 = vld [vmem:[%s18 + $0x90] sm:$0xff]
    %v1616 = vld [vmem:[%s18 + $0x98] sm:$0xff]
    %v1617 = vld [vmem:[%s18 + $0xa0] sm:$0xff]
    %v1618 = vld [vmem:[%s18 + $0xa8] sm:$0xff]
    %v1619 = vld [vmem:[%s18 + $0xb0] sm:$0xff]
    %v1620 = vld [vmem:[%s18 + $0xb8] sm:$0xff]
    %v1621 = vld [vmem:[%s18 + $0xc0] sm:$0xff]
    %v1622 = vld [vmem:[%s18 + $0xc8] sm:$0xff]
    %v1623 = vld [vmem:[%s18 + $0xd0] sm:$0xff]
    %v1624 = vld [vmem:[%s18 + $0xd8] sm:$0xff]
    %v1625 = vld [vmem:[%s18 + $0xe0] sm:$0xff]
    %v1626 = vld [vmem:[%s18 + $0xe8] sm:$0xff]
    %v1627 = vld [vmem:[%s18 + $0xf0] sm:$0xff]
    %v1628 = vld [vmem:[%s18 + $0xf8] sm:$0xff]
    %v1629 = vld [vmem:[%s18 + $0x100] sm:$0xff]
    %v1630 = vld [vmem:[%s18 + $0x108] sm:$0xff]
    %v1631 = vld [vmem:[%s18 + $0x110] sm:$0xff]
    %v1632 = vld [vmem:[%s18 + $0x118] sm:$0xff]
    %v1633 = vld [vmem:[%s18 + $0x120] sm:$0xff]
    %v1634 = vld [vmem:[%s18 + $0x128] sm:$0xff]
    %v1635 = vld [vmem:[%s18 + $0x130] sm:$0xff]
    %v1636 = vld [vmem:[%s18 + $0x138] sm:$0xff]
    %v1637 = vld [vmem:[%s18 + $0x140] sm:$0xff]
    %v1638 = vld [vmem:[%s18 + $0x148] sm:$0xff]
    %v1639 = vld [vmem:[%s18 + $0x150] sm:$0xff]
    %v1640 = vld [vmem:[%s18 + $0x158] sm:$0xff]
    %v1641 = vld [vmem:[%s18 + $0x160] sm:$0xff]
    %v1642 = vld [vmem:[%s18 + $0x168] sm:$0xff]
    %v1643 = vld [vmem:[%s18 + $0x170] sm:$0xff]
    %v1644 = vld [vmem:[%s18 + $0x178] sm:$0xff]
    %v1645 = vld [vmem:[%s18 + $0x180] sm:$0xff]
    %v1646 = vld [vmem:[%s18 + $0x188] sm:$0xff]
    %v1647 = vld [vmem:[%s18 + $0x190] sm:$0xff]
    %v1648 = vld [vmem:[%s18 + $0x198] sm:$0xff]
    %v1649 = vld [vmem:[%s18 + $0x1a0] sm:$0xff]
    %v1650 = vld [vmem:[%s18 + $0x1a8] sm:$0xff]
    %v1651 = vld [vmem:[%s18 + $0x1b0] sm:$0xff]
    %v1652 = vld [vmem:[%s18 + $0x1b8] sm:$0xff]
    %v1653 = vld [vmem:[%s18 + $0x1c0] sm:$0xff]
    %v1654 = vld [vmem:[%s18 + $0x1c8] sm:$0xff]
    %v1655 = vld [vmem:[%s18 + $0x1d0] sm:$0xff]
    %v1656 = vld [vmem:[%s18 + $0x1d8] sm:$0xff]
    %v1657 = vld [vmem:[%s18 + $0x1e0] sm:$0xff]
    %v1658 = vld [vmem:[%s18 + $0x1e8] sm:$0xff]
    %v1659 = vld [vmem:[%s18 + $0x1f0] sm:$0xff]
    %v1660 = vld [vmem:[%s18 + $0x1f8] sm:$0xff]
    %v1661 = vld [vmem:[%s18 + $0x200] sm:$0xff]
    %v1662 = vld [vmem:[%s18 + $0x208] sm:$0xff]
    %v1663 = vld [vmem:[%s18 + $0x210] sm:$0xff]
    %v1664 = vld [vmem:[%s18 + $0x218] sm:$0xff]
    %v1665 = vld [vmem:[%s18 + $0x220] sm:$0xff]
    %v1666 = vld [vmem:[%s18 + $0x228] sm:$0xff]
    %v1667 = vld [vmem:[%s18 + $0x230] sm:$0xff]
    %v1668 = vld [vmem:[%s18 + $0x238] sm:$0xff]
    %v1669 = vld [vmem:[%s18 + $0x240] sm:$0xff]
    %v1670 = vld [vmem:[%s18 + $0x248] sm:$0xff]
    %v1671 = vld [vmem:[%s18 + $0x250] sm:$0xff]
    %v1672 = vld [vmem:[%s18 + $0x258] sm:$0xff]
    %v1673 = vld [vmem:[%s18 + $0x260] sm:$0xff]
    %v1674 = vld [vmem:[%s18 + $0x268] sm:$0xff]
    %v1675 = vld [vmem:[%s18 + $0x270] sm:$0xff]
    %v1676 = vld [vmem:[%s18 + $0x278] sm:$0xff]
    %v1677 = vld [vmem:[%s18 + $0x280] sm:$0xff]
    %v1678 = vld [vmem:[%s18 + $0x288] sm:$0xff]
    %v1679 = vld [vmem:[%s18 + $0x290] sm:$0xff]
    %v1680 = vld [vmem:[%s18 + $0x298] sm:$0xff]
    %v1681 = vld [vmem:[%s18 + $0x2a0] sm:$0xff]
    %v1682 = vld [vmem:[%s18 + $0x2a8] sm:$0xff]
    %v1683 = vld [vmem:[%s18 + $0x2b0] sm:$0xff]
    %v1684 = vld [vmem:[%s18 + $0x2b8] sm:$0xff]
    %v1685 = vld [vmem:[%s18 + $0x2c0] sm:$0xff]
    %v1686 = vld [vmem:[%s18 + $0x2c8] sm:$0xff]
    %v1687 = vld [vmem:[%s18 + $0x2d0] sm:$0xff]
    %v1688 = vld [vmem:[%s18 + $0x2d8] sm:$0xff]
    %v1689 = vld [vmem:[%s18 + $0x2e0] sm:$0xff]
    %v1690 = vld [vmem:[%s18 + $0x2e8] sm:$0xff]
    %v1691 = vld [vmem:[%s18 + $0x2f0] sm:$0xff]
    %v1692 = vld [vmem:[%s18 + $0x2f8] sm:$0xff]
    %v1693 = vld [vmem:[%s18 + $0x300] sm:$0xff]
    %v1694 = vld [vmem:[%s18 + $0x308] sm:$0xff]
    %v1695 = vld [vmem:[%s18 + $0x310] sm:$0xff]
    %v1696 = vld [vmem:[%s18 + $0x318] sm:$0xff]
    %v1697 = vld [vmem:[%s18 + $0x320] sm:$0xff]
    %v1698 = vld [vmem:[%s18 + $0x328] sm:$0xff]
    %v1699 = vld [vmem:[%s18 + $0x330] sm:$0xff]
    %v1700 = vld [vmem:[%s18 + $0x338] sm:$0xff]
    %v1701 = vld [vmem:[%s18 + $0x340] sm:$0xff]
    %v1702 = vld [vmem:[%s18 + $0x348] sm:$0xff]
    %v1703 = vld [vmem:[%s18 + $0x350] sm:$0xff]
    %v1704 = vld [vmem:[%s18 + $0x358] sm:$0xff]
    %v1705 = vld [vmem:[%s18 + $0x360] sm:$0xff]
    %v1706 = vld [vmem:[%s18 + $0x368] sm:$0xff]
    %v1707 = vld [vmem:[%s18 + $0x370] sm:$0xff]
    %v1708 = vld [vmem:[%s18 + $0x378] sm:$0xff]
    %v1709 = vld [vmem:[%s18 + $0x380] sm:$0xff]
    %v1710 = vld [vmem:[%s18 + $0x388] sm:$0xff]
    %v1711 = vld [vmem:[%s18 + $0x390] sm:$0xff]
    %v1712 = vld [vmem:[%s18 + $0x398] sm:$0xff]
    %v1713 = vld [vmem:[%s18 + $0x3a0] sm:$0xff]
    %v1714 = vld [vmem:[%s18 + $0x3a8] sm:$0xff]
    %v1715 = vld [vmem:[%s18 + $0x3b0] sm:$0xff]
    %v1716 = vld [vmem:[%s18 + $0x3b8] sm:$0xff]
    %v1717 = vld [vmem:[%s18 + $0x3c0] sm:$0xff]
    %v1718 = vld [vmem:[%s18 + $0x3c8] sm:$0xff]
    %v1719 = vld [vmem:[%s18 + $0x3d0] sm:$0xff]
    %v1720 = vld [vmem:[%s18 + $0x3d8] sm:$0xff]
    %v1721 = vld [vmem:[%s18 + $0x3e0] sm:$0xff]
    %v1722 = vld [vmem:[%s18 + $0x3e8] sm:$0xff]
    %v1723 = vld [vmem:[%s18 + $0x3f0] sm:$0xff]
    %v1724 = vld [vmem:[%s18 + $0x3f8] sm:$0xff]
    %v1725 = vld [vmem:[%s18 + $0x400] sm:$0xff]
    %v1726 = vld [vmem:[%s18 + $0x408] sm:$0xff]
    %v1727 = vld [vmem:[%s18 + $0x410] sm:$0xff]
    %v1728 = vld [vmem:[%s18 + $0x418] sm:$0xff]
    %v1729 = vld [vmem:[%s18 + $0x420] sm:$0xff]
    %v1730 = vld [vmem:[%s18 + $0x428] sm:$0xff]
    %v1731 = vld [vmem:[%s18 + $0x430] sm:$0xff]
    %v1732 = vld [vmem:[%s18 + $0x438] sm:$0xff]
    %v1733 = vld [vmem:[%s18 + $0x440] sm:$0xff]
    %v1734 = vld [vmem:[%s18 + $0x448] sm:$0xff]
    %v1735 = vld [vmem:[%s18 + $0x450] sm:$0xff]
    %v1736 = vld [vmem:[%s18 + $0x458] sm:$0xff]
    %v1737 = vld [vmem:[%s18 + $0x460] sm:$0xff]
    %v1738 = vld [vmem:[%s18 + $0x468] sm:$0xff]
    %v1739 = vld [vmem:[%s18 + $0x470] sm:$0xff]
    %v1740 = vld [vmem:[%s18 + $0x478] sm:$0xff]
    %v1741 = vld [vmem:[%s18 + $0x480] sm:$0xff]
    %v1742 = vld [vmem:[%s18 + $0x488] sm:$0xff]
    %v1743 = vld [vmem:[%s18 + $0x490] sm:$0xff]
    %v1744 = vld [vmem:[%s18 + $0x498] sm:$0xff]
    %v1745 = vld [vmem:[%s18 + $0x4a0] sm:$0xff]
    %v1746 = vld [vmem:[%s18 + $0x4a8] sm:$0xff]
    %v1747 = vld [vmem:[%s18 + $0x4b0] sm:$0xff]
    %v1748 = vld [vmem:[%s18 + $0x4b8] sm:$0xff]
    %v1749 = vld [vmem:[%s19] sm:$0x1]
    %v1751 = vlaneseq
    %v1752 = vshrl.u32 %v1751, 7
    %v1753 = vsub.s32 0, %v1752
    %v1754 = vrot.slane %v1749, %v1753
    %v1756 = vsel %vm102, %v1592, 0
    %1758 = vmatprep.subr.mxu0 0.0
    %1759 = vmatpush1.msra.mxu0 %v1612
    %1760 = vmatprep.subr.mxu0 0.0
    %1761 = vmatpush1.msra.mxu0 %v1611
    %1762 = vmatprep.subr.mxu0 0.0
    %1763 = vmatpush1.msra.mxu0 %v1610
    %1764 = vmatprep.subr.mxu0 0.0
    %1765 = vmatpush1.msra.mxu0 %v1609
    %1766 = vmatprep.subr.mxu0 0.0
    %1767 = vmatpush1.msra.mxu0 %v1608
    %1768 = vmatprep.subr.mxu0 0.0
    %1769 = vmatpush1.msra.mxu0 %v1607
    %1770 = vmatprep.subr.mxu0 0.0
    %1771 = vmatpush1.msra.mxu0 %v1606
    %1772 = vmatprep.subr.mxu0 0.0
    %1773 = vmatpush1.msra.mxu0 %v1605
    %1774 = vmatprep.subr.mxu0 0.0
    %1775 = vmatpush1.msra.mxu0 %v1604
    %1776 = vmatprep.subr.mxu0 0.0
    %1777 = vmatpush1.msra.mxu0 %v1603
    %1778 = vmatprep.subr.mxu0 0.0
    %1779 = vmatpush1.msra.mxu0 %v1602
    %1780 = vmatprep.subr.mxu0 0.0
    %1781 = vmatpush1.msra.mxu0 %v1601
    %1782 = vmatprep.subr.mxu0 0.0
    %1783 = vmatpush1.msra.mxu0 %v1600
    %1784 = vmatprep.subr.mxu0 0.0
    %1785 = vmatpush1.msra.mxu0 %v1599
    %1786 = vmatprep.subr.mxu0 0.0
    %1787 = vmatpush1.msra.mxu0 %v1598
    %1788 = vmatprep.subr.mxu0 0.0
    %1789 = vmatpush1.msra.mxu0 %v1597
    %1790 = vmatprep.subr.mxu0 0.0
    %1791 = vmatpush2.msra.mxu0 %v1628
    %1792 = vmatprep.subr.mxu0 0.0
    %1793 = vmatpush2.msra.mxu0 %v1627
    %1794 = vmatprep.subr.mxu0 0.0
    %1795 = vmatpush2.msra.mxu0 %v1626
    %1796 = vmatprep.subr.mxu0 0.0
    %1797 = vmatpush2.msra.mxu0 %v1625
    %1798 = vmatprep.subr.mxu0 0.0
    %1799 = vmatpush2.msra.mxu0 %v1624
    %1800 = vmatprep.subr.mxu0 0.0
    %1801 = vmatpush2.msra.mxu0 %v1623
    %1802 = vmatprep.subr.mxu0 0.0
    %1803 = vmatpush2.msra.mxu0 %v1622
    %1804 = vmatprep.subr.mxu0 0.0
    %1805 = vmatpush2.msra.mxu0 %v1621
    %1806 = vmatprep.subr.mxu0 0.0
    %1807 = vmatpush2.msra.mxu0 %v1620
    %1808 = vmatprep.subr.mxu0 0.0
    %1809 = vmatpush2.msra.mxu0 %v1619
    %1810 = vmatprep.subr.mxu0 0.0
    %1811 = vmatpush2.msra.mxu0 %v1618
    %1812 = vmatprep.subr.mxu0 0.0
    %1813 = vmatpush2.msra.mxu0 %v1617
    %1814 = vmatprep.subr.mxu0 0.0
    %1815 = vmatpush2.msra.mxu0 %v1616
    %1816 = vmatprep.subr.mxu0 0.0
    %1817 = vmatpush2.msra.mxu0 %v1615
    %1818 = vmatprep.subr.mxu0 0.0
    %1819 = vmatpush2.msra.mxu0 %v1614
    %1820 = vmatprep.subr.mxu0 0.0
    %1821 = vmatpush2.msra.mxu0 %v1613
    %1822 = vmatprep.mubr.f32.mxu0 %v1562
    %1823 = vmatmul.mubr.f32.gmra.mxu0 %v1594
    %v1824 = vpop.f32.mrf.mxu0
    %v1825 = vadd.f32 %v1754, %v1824
    %v1826 = vpop.f32.mrf.mxu0
    %1827 = vdwg.mxu0
    %1828 = vmatprep.subr.mxu0 0.0
    %1829 = vmatpush1.msra.mxu0 %v1644
    %1830 = vmatprep.subr.mxu0 0.0
    %1831 = vmatpush1.msra.mxu0 %v1643
    %1832 = vmatprep.subr.mxu0 0.0
    %1833 = vmatpush1.msra.mxu0 %v1642
    %1834 = vmatprep.subr.mxu0 0.0
    %1835 = vmatpush1.msra.mxu0 %v1641
    %1836 = vmatprep.subr.mxu0 0.0
    %1837 = vmatpush1.msra.mxu0 %v1640
    %1838 = vmatprep.subr.mxu0 0.0
    %1839 = vmatpush1.msra.mxu0 %v1639
    %1840 = vmatprep.subr.mxu0 0.0
    %1841 = vmatpush1.msra.mxu0 %v1638
    %1842 = vmatprep.subr.mxu0 0.0
    %1843 = vmatpush1.msra.mxu0 %v1637
    %1844 = vmatprep.subr.mxu0 0.0
    %1845 = vmatpush1.msra.mxu0 %v1636
    %1846 = vmatprep.subr.mxu0 0.0
    %1847 = vmatpush1.msra.mxu0 %v1635
    %1848 = vmatprep.subr.mxu0 0.0
    %1849 = vmatpush1.msra.mxu0 %v1634
    %1850 = vmatprep.subr.mxu0 0.0
    %1851 = vmatpush1.msra.mxu0 %v1633
    %1852 = vmatprep.subr.mxu0 0.0
    %1853 = vmatpush1.msra.mxu0 %v1632
    %1854 = vmatprep.subr.mxu0 0.0
    %1855 = vmatpush1.msra.mxu0 %v1631
    %1856 = vmatprep.subr.mxu0 0.0
    %1857 = vmatpush1.msra.mxu0 %v1630
    %1858 = vmatprep.subr.mxu0 0.0
    %1859 = vmatpush1.msra.mxu0 %v1629
    %1860 = vmatprep.subr.mxu0 0.0
    %1861 = vmatpush2.msra.mxu0 %v1660
    %1862 = vmatprep.subr.mxu0 0.0
    %1863 = vmatpush2.msra.mxu0 %v1659
    %1864 = vmatprep.subr.mxu0 0.0
    %1865 = vmatpush2.msra.mxu0 %v1658
    %1866 = vmatprep.subr.mxu0 0.0
    %1867 = vmatpush2.msra.mxu0 %v1657
    %1868 = vmatprep.subr.mxu0 0.0
    %1869 = vmatpush2.msra.mxu0 %v1656
    %1870 = vmatprep.subr.mxu0 0.0
    %1871 = vmatpush2.msra.mxu0 %v1655
    %1872 = vmatprep.subr.mxu0 0.0
    %1873 = vmatpush2.msra.mxu0 %v1654
    %1874 = vmatprep.subr.mxu0 0.0
    %1875 = vmatpush2.msra.mxu0 %v1653
    %1876 = vmatprep.subr.mxu0 0.0
    %1877 = vmatpush2.msra.mxu0 %v1652
    %1878 = vmatprep.subr.mxu0 0.0
    %1879 = vmatpush2.msra.mxu0 %v1651
    %1880 = vmatprep.subr.mxu0 0.0
    %1881 = vmatpush2.msra.mxu0 %v1650
    %1882 = vmatprep.subr.mxu0 0.0
    %1883 = vmatpush2.msra.mxu0 %v1649
    %1884 = vmatprep.subr.mxu0 0.0
    %1885 = vmatpush2.msra.mxu0 %v1648
    %1886 = vmatprep.subr.mxu0 0.0
    %1887 = vmatpush2.msra.mxu0 %v1647
    %1888 = vmatprep.subr.mxu0 0.0
    %1889 = vmatpush2.msra.mxu0 %v1646
    %1890 = vmatprep.subr.mxu0 0.0
    %1891 = vmatpush2.msra.mxu0 %v1645
    %1892 = vmatprep.mubr.f32.mxu0 %v1564
    %1893 = vmatmul.mubr.f32.gmra.mxu0 %v1563
    %v1894 = vpop.f32.mrf.mxu0
    %v1895 = vadd.f32 %v1825, %v1894
    %v1896 = vpop.f32.mrf.mxu0
    %1897 = vdwg.mxu0
    %1898 = vmatprep.subr.mxu0 0.0
    %1899 = vmatpush1.msra.mxu0 %v1676
    %1900 = vmatprep.subr.mxu0 0.0
    %1901 = vmatpush1.msra.mxu0 %v1675
    %1902 = vmatprep.subr.mxu0 0.0
    %1903 = vmatpush1.msra.mxu0 %v1674
    %1904 = vmatprep.subr.mxu0 0.0
    %1905 = vmatpush1.msra.mxu0 %v1673
    %1906 = vmatprep.subr.mxu0 0.0
    %1907 = vmatpush1.msra.mxu0 %v1672
    %1908 = vmatprep.subr.mxu0 0.0
    %1909 = vmatpush1.msra.mxu0 %v1671
    %1910 = vmatprep.subr.mxu0 0.0
    %1911 = vmatpush1.msra.mxu0 %v1670
    %1912 = vmatprep.subr.mxu0 0.0
    %1913 = vmatpush1.msra.mxu0 %v1669
    %1914 = vmatprep.subr.mxu0 0.0
    %1915 = vmatpush1.msra.mxu0 %v1668
    %1916 = vmatprep.subr.mxu0 0.0
    %1917 = vmatpush1.msra.mxu0 %v1667
    %1918 = vmatprep.subr.mxu0 0.0
    %1919 = vmatpush1.msra.mxu0 %v1666
    %1920 = vmatprep.subr.mxu0 0.0
    %1921 = vmatpush1.msra.mxu0 %v1665
    %1922 = vmatprep.subr.mxu0 0.0
    %1923 = vmatpush1.msra.mxu0 %v1664
    %1924 = vmatprep.subr.mxu0 0.0
    %1925 = vmatpush1.msra.mxu0 %v1663
    %1926 = vmatprep.subr.mxu0 0.0
    %1927 = vmatpush1.msra.mxu0 %v1662
    %1928 = vmatprep.subr.mxu0 0.0
    %1929 = vmatpush1.msra.mxu0 %v1661
    %1930 = vmatprep.subr.mxu0 0.0
    %1931 = vmatpush2.msra.mxu0 %v1692
    %1932 = vmatprep.subr.mxu0 0.0
    %1933 = vmatpush2.msra.mxu0 %v1691
    %1934 = vmatprep.subr.mxu0 0.0
    %1935 = vmatpush2.msra.mxu0 %v1690
    %1936 = vmatprep.subr.mxu0 0.0
    %1937 = vmatpush2.msra.mxu0 %v1689
    %1938 = vmatprep.subr.mxu0 0.0
    %1939 = vmatpush2.msra.mxu0 %v1688
    %1940 = vmatprep.subr.mxu0 0.0
    %1941 = vmatpush2.msra.mxu0 %v1687
    %1942 = vmatprep.subr.mxu0 0.0
    %1943 = vmatpush2.msra.mxu0 %v1686
    %1944 = vmatprep.subr.mxu0 0.0
    %1945 = vmatpush2.msra.mxu0 %v1685
    %1946 = vmatprep.subr.mxu0 0.0
    %1947 = vmatpush2.msra.mxu0 %v1684
    %1948 = vmatprep.subr.mxu0 0.0
    %1949 = vmatpush2.msra.mxu0 %v1683
    %1950 = vmatprep.subr.mxu0 0.0
    %1951 = vmatpush2.msra.mxu0 %v1682
    %1952 = vmatprep.subr.mxu0 0.0
    %1953 = vmatpush2.msra.mxu0 %v1681
    %1954 = vmatprep.subr.mxu0 0.0
    %1955 = vmatpush2.msra.mxu0 %v1680
    %1956 = vmatprep.subr.mxu0 0.0
    %1957 = vmatpush2.msra.mxu0 %v1679
    %1958 = vmatprep.subr.mxu0 0.0
    %1959 = vmatpush2.msra.mxu0 %v1678
    %1960 = vmatprep.subr.mxu0 0.0
    %1961 = vmatpush2.msra.mxu0 %v1677
    %1962 = vmatprep.mubr.f32.mxu0 %v1582
    %1963 = vmatmul.mubr.f32.gmra.mxu0 %v1595
    %v1964 = vpop.f32.mrf.mxu0
    %v1965 = vadd.f32 %v1895, %v1964
    %v1966 = vpop.f32.mrf.mxu0
    %1967 = vdwg.mxu0
    %1968 = vmatprep.subr.mxu0 0.0
    %1969 = vmatpush1.msra.mxu0 %v1708
    %1970 = vmatprep.subr.mxu0 0.0
    %1971 = vmatpush1.msra.mxu0 %v1707
    %1972 = vmatprep.subr.mxu0 0.0
    %1973 = vmatpush1.msra.mxu0 %v1706
    %1974 = vmatprep.subr.mxu0 0.0
    %1975 = vmatpush1.msra.mxu0 %v1705
    %1976 = vmatprep.subr.mxu0 0.0
    %1977 = vmatpush1.msra.mxu0 %v1704
    %1978 = vmatprep.subr.mxu0 0.0
    %1979 = vmatpush1.msra.mxu0 %v1703
    %1980 = vmatprep.subr.mxu0 0.0
    %1981 = vmatpush1.msra.mxu0 %v1702
    %1982 = vmatprep.subr.mxu0 0.0
    %1983 = vmatpush1.msra.mxu0 %v1701
    %1984 = vmatprep.subr.mxu0 0.0
    %1985 = vmatpush1.msra.mxu0 %v1700
    %1986 = vmatprep.subr.mxu0 0.0
    %1987 = vmatpush1.msra.mxu0 %v1699
    %1988 = vmatprep.subr.mxu0 0.0
    %1989 = vmatpush1.msra.mxu0 %v1698
    %1990 = vmatprep.subr.mxu0 0.0
    %1991 = vmatpush1.msra.mxu0 %v1697
    %1992 = vmatprep.subr.mxu0 0.0
    %1993 = vmatpush1.msra.mxu0 %v1696
    %1994 = vmatprep.subr.mxu0 0.0
    %1995 = vmatpush1.msra.mxu0 %v1695
    %1996 = vmatprep.subr.mxu0 0.0
    %1997 = vmatpush1.msra.mxu0 %v1694
    %1998 = vmatprep.subr.mxu0 0.0
    %1999 = vmatpush1.msra.mxu0 %v1693
    %2000 = vmatprep.subr.mxu0 0.0
    %2001 = vmatpush2.msra.mxu0 %v1724
    %2002 = vmatprep.subr.mxu0 0.0
    %2003 = vmatpush2.msra.mxu0 %v1723
    %2004 = vmatprep.subr.mxu0 0.0
    %2005 = vmatpush2.msra.mxu0 %v1722
    %2006 = vmatprep.subr.mxu0 0.0
    %2007 = vmatpush2.msra.mxu0 %v1721
    %2008 = vmatprep.subr.mxu0 0.0
    %2009 = vmatpush2.msra.mxu0 %v1720
    %2010 = vmatprep.subr.mxu0 0.0
    %2011 = vmatpush2.msra.mxu0 %v1719
    %2012 = vmatprep.subr.mxu0 0.0
    %2013 = vmatpush2.msra.mxu0 %v1718
    %2014 = vmatprep.subr.mxu0 0.0
    %2015 = vmatpush2.msra.mxu0 %v1717
    %2016 = vmatprep.subr.mxu0 0.0
    %2017 = vmatpush2.msra.mxu0 %v1716
    %2018 = vmatprep.subr.mxu0 0.0
    %2019 = vmatpush2.msra.mxu0 %v1715
    %2020 = vmatprep.subr.mxu0 0.0
    %2021 = vmatpush2.msra.mxu0 %v1714
    %2022 = vmatprep.subr.mxu0 0.0
    %2023 = vmatpush2.msra.mxu0 %v1713
    %2024 = vmatprep.subr.mxu0 0.0
    %2025 = vmatpush2.msra.mxu0 %v1712
    %2026 = vmatprep.subr.mxu0 0.0
    %2027 = vmatpush2.msra.mxu0 %v1711
    %2028 = vmatprep.subr.mxu0 0.0
    %2029 = vmatpush2.msra.mxu0 %v1710
    %2030 = vmatprep.subr.mxu0 0.0
    %2031 = vmatpush2.msra.mxu0 %v1709
    %2032 = vmatprep.mubr.f32.mxu0 %v1584
    %2033 = vmatmul.mubr.f32.gmra.mxu0 %v1583
    %v2034 = vpop.f32.mrf.mxu0
    %v2035 = vadd.f32 %v1965, %v2034
    %v2036 = vpop.f32.mrf.mxu0
    %2037 = vdwg.mxu0
    %2038 = vmatprep.subr.mxu0 0.0
    %2039 = vmatpush1.msra.mxu0 %v1740
    %2040 = vmatprep.subr.mxu0 0.0
    %2041 = vmatpush1.msra.mxu0 %v1739
    %2042 = vmatprep.subr.mxu0 0.0
    %2043 = vmatpush1.msra.mxu0 %v1738
    %2044 = vmatprep.subr.mxu0 0.0
    %2045 = vmatpush1.msra.mxu0 %v1737
    %2046 = vmatprep.subr.mxu0 0.0
    %2047 = vmatpush1.msra.mxu0 %v1736
    %2048 = vmatprep.subr.mxu0 0.0
    %2049 = vmatpush1.msra.mxu0 %v1735
    %2050 = vmatprep.subr.mxu0 0.0
    %2051 = vmatpush1.msra.mxu0 %v1734
    %2052 = vmatprep.subr.mxu0 0.0
    %2053 = vmatpush1.msra.mxu0 %v1733
    %2054 = vmatprep.subr.mxu0 0.0
    %2055 = vmatpush1.msra.mxu0 %v1732
    %2056 = vmatprep.subr.mxu0 0.0
    %2057 = vmatpush1.msra.mxu0 %v1731
    %2058 = vmatprep.subr.mxu0 0.0
    %2059 = vmatpush1.msra.mxu0 %v1730
    %2060 = vmatprep.subr.mxu0 0.0
    %2061 = vmatpush1.msra.mxu0 %v1729
    %2062 = vmatprep.subr.mxu0 0.0
    %2063 = vmatpush1.msra.mxu0 %v1728
    %2064 = vmatprep.subr.mxu0 0.0
    %2065 = vmatpush1.msra.mxu0 %v1727
    %2066 = vmatprep.subr.mxu0 0.0
    %2067 = vmatpush1.msra.mxu0 %v1726
    %2068 = vmatprep.subr.mxu0 0.0
    %2069 = vmatpush1.msra.mxu0 %v1725
    %2070 = vmatprep.subr.mxu0 0.0
    %2071 = vmatpush2.msra.mxu0 0.0
    %2072 = vmatprep.subr.mxu0 0.0
    %2073 = vmatpush2.msra.mxu0 0.0
    %2074 = vmatprep.subr.mxu0 0.0
    %2075 = vmatpush2.msra.mxu0 0.0
    %2076 = vmatprep.subr.mxu0 0.0
    %2077 = vmatpush2.msra.mxu0 0.0
    %2078 = vmatprep.subr.mxu0 0.0
    %2079 = vmatpush2.msra.mxu0 0.0
    %2080 = vmatprep.subr.mxu0 0.0
    %2081 = vmatpush2.msra.mxu0 0.0
    %2082 = vmatprep.subr.mxu0 0.0
    %2083 = vmatpush2.msra.mxu0 0.0
    %2084 = vmatprep.subr.mxu0 0.0
    %2085 = vmatpush2.msra.mxu0 0.0
    %2086 = vmatprep.subr.mxu0 0.0
    %2087 = vmatpush2.msra.mxu0 %v1748
    %2088 = vmatprep.subr.mxu0 0.0
    %2089 = vmatpush2.msra.mxu0 %v1747
    %2090 = vmatprep.subr.mxu0 0.0
    %2091 = vmatpush2.msra.mxu0 %v1746
    %2092 = vmatprep.subr.mxu0 0.0
    %2093 = vmatpush2.msra.mxu0 %v1745
    %2094 = vmatprep.subr.mxu0 0.0
    %2095 = vmatpush2.msra.mxu0 %v1744
    %2096 = vmatprep.subr.mxu0 0.0
    %2097 = vmatpush2.msra.mxu0 %v1743
    %2098 = vmatprep.subr.mxu0 0.0
    %2099 = vmatpush2.msra.mxu0 %v1742
    %2100 = vmatprep.subr.mxu0 0.0
    %2101 = vmatpush2.msra.mxu0 %v1741
    %2102 = vmatprep.mubr.f32.mxu0 %v1756
    %2103 = vmatmul.mubr.f32.gmra.mxu0 %v1596
    %v2104 = vpop.f32.mrf.mxu0
    %v2105 = vadd.f32 %v2035, %v2104
    %v2106 = vpop.f32.mrf.mxu0
    %2107 = vdwg.mxu0
    %v2108 = vld [vmem:[%s2] sm:$0x3]
    %v2110 = vsel %vm102, %v2108, 0
    %v2113 = vsel %vm102, %v2105, 0
    %2115 = vmatprep.subr.mxu0 0.0
    %2116 = vmatpush1.xpose.msra.mxu0 0.0
    %2117 = vmatprep.subr.mxu0 0.0
    %2118 = vmatpush1.xpose.msra.mxu0 0.0
    %2119 = vmatprep.subr.mxu0 0.0
    %2120 = vmatpush1.xpose.msra.mxu0 0.0
    %2121 = vmatprep.subr.mxu0 0.0
    %2122 = vmatpush1.xpose.msra.mxu0 0.0
    %2123 = vmatprep.subr.mxu0 0.0
    %2124 = vmatpush1.xpose.msra.mxu0 0.0
    %2125 = vmatprep.subr.mxu0 0.0
    %2126 = vmatpush1.xpose.msra.mxu0 0.0
    %2127 = vmatprep.subr.mxu0 0.0
    %2128 = vmatpush1.xpose.msra.mxu0 0.0
    %2129 = vmatprep.subr.mxu0 0.0
    %2130 = vmatpush1.xpose.msra.mxu0 0.0
    %2131 = vmatprep.subr.mxu0 0.0
    %2132 = vmatpush1.xpose.msra.mxu0 0.0
    %2133 = vmatprep.subr.mxu0 0.0
    %2134 = vmatpush1.xpose.msra.mxu0 0.0
    %2135 = vmatprep.subr.mxu0 0.0
    %2136 = vmatpush1.xpose.msra.mxu0 0.0
    %2137 = vmatprep.subr.mxu0 0.0
    %2138 = vmatpush1.xpose.msra.mxu0 0.0
    %2139 = vmatprep.subr.mxu0 0.0
    %2140 = vmatpush1.xpose.msra.mxu0 0.0
    %2141 = vmatprep.subr.mxu0 0.0
    %2142 = vmatpush1.xpose.msra.mxu0 0.0
    %2143 = vmatprep.subr.mxu0 0.0
    %2144 = vmatpush1.xpose.msra.mxu0 0.0
    %2145 = vmatprep.subr.mxu0 0.0
    %2146 = vmatpush1.xpose.msra.mxu0 %v2113
    %2147 = vmatprep.subr.mxu0 0.0
    %2148 = vmatpush2.xpose.msra.mxu0 0.0
    %2149 = vmatprep.subr.mxu0 0.0
    %2150 = vmatpush2.xpose.msra.mxu0 0.0
    %2151 = vmatprep.subr.mxu0 0.0
    %2152 = vmatpush2.xpose.msra.mxu0 0.0
    %2153 = vmatprep.subr.mxu0 0.0
    %2154 = vmatpush2.xpose.msra.mxu0 0.0
    %2155 = vmatprep.subr.mxu0 0.0
    %2156 = vmatpush2.xpose.msra.mxu0 0.0
    %2157 = vmatprep.subr.mxu0 0.0
    %2158 = vmatpush2.xpose.msra.mxu0 0.0
    %2159 = vmatprep.subr.mxu0 0.0
    %2160 = vmatpush2.xpose.msra.mxu0 0.0
    %2161 = vmatprep.subr.mxu0 0.0
    %2162 = vmatpush2.xpose.msra.mxu0 0.0
    %2163 = vmatprep.subr.mxu0 0.0
    %2164 = vmatpush2.xpose.msra.mxu0 0.0
    %2165 = vmatprep.subr.mxu0 0.0
    %2166 = vmatpush2.xpose.msra.mxu0 0.0
    %2167 = vmatprep.subr.mxu0 0.0
    %2168 = vmatpush2.xpose.msra.mxu0 0.0
    %2169 = vmatprep.subr.mxu0 0.0
    %2170 = vmatpush2.xpose.msra.mxu0 0.0
    %2171 = vmatprep.subr.mxu0 0.0
    %2172 = vmatpush2.xpose.msra.mxu0 0.0
    %2173 = vmatprep.subr.mxu0 0.0
    %2174 = vmatpush2.xpose.msra.mxu0 0.0
    %2175 = vmatprep.subr.mxu0 0.0
    %2176 = vmatpush2.xpose.msra.mxu0 0.0
    %2177 = vmatprep.subr.mxu0 0.0
    %2178 = vmatpush2.xpose.msra.mxu0 0.0
    %2179 = vmatprep.mubr.f32.mxu0 0.0
    %2180 = vmatmul.mubr.f32.gmra.mxu0 %v2110
    %v2181 = vpop.f32.mrf.mxu0
    %v2182 = vadd.f32 0.0, %v2181
    %v2183 = vpop.f32.mrf.mxu0
    %2184 = vdwg.mxu0
    %v2185 = vld [vmem:[%s8] sm:$0x3]
    %vm2186 = vcmp.eq.f32.partialorder %v2185, 0.0
    %v2187 = vsel %vm2186, -9999999.0, %v2182
    %vm2188 = vcmask 24576
    %v2189 = vsel %vm2188, %v2187, -inf
    %2190 = vmax.xlane.f32.xlu0 %v2189
    %v2191 = vpop.xlane.xlu0 %2190
    %v2192 = vsub.f32 %v2187, %v2191
    %v2193 = vmul.f32 %v2192, 1.442695
    %v2194 = vpow.pop %v2193
    %v2195 = vsel %vm2188, %v2194, 0.0
    %2196 = vadd.xlane.f32.xlu0 %v2195
    %v2197 = vpop.xlane.xlu0 %2196
    %v2198 = vrcp.pop %v2197
    %v2199 = vmul.f32 %v2194, %v2198
    %2200 = vst.msk [vmem:[#allocation3] sm:$0x1] %vm2188, %v2199
    %2202 = vrot.lane.b32.xlu0 %v2182, 124
    %v2203 = vpop.permute.xlu0 %2202
    %v2205 = vsel %vm2186, -9999999.0, %v2203
    %vm2206 = vcmask 25601
    %v2207 = vsel %vm2206, %v2205, -inf
    %2208 = vmax.xlane.f32.xlu0 %v2207
    %v2209 = vpop.xlane.xlu0 %2208
    %v2210 = vsub.f32 %v2205, %v2209
    %v2211 = vmul.f32 %v2210, 1.442695
    %v2212 = vpow.pop %v2211
    %v2213 = vsel %vm2206, %v2212, 0.0
    %2214 = vadd.xlane.f32.xlu0 %v2213
    %v2215 = vpop.xlane.xlu0 %2214
    %v2216 = vrcp.pop %v2215
    %v2217 = vmul.f32 %v2212, %v2216
    %2218 = vst.msk [vmem:[#allocation3] sm:$0x2] %vm2206, %v2217
    // Predicated region
    $region82: #{_lambda_.7} parent=1 // pred_check
      _
    $region83: #{_lambda_.7} parent=1 // pred_check_branch
      %2220 = sbr.rel (0) target = $region85
    $region84: #{_lambda_.7} parent=1 // pred_region
      %s2222 = ssub.s32 32, 32
      %2223 = vsyncadd [#allocation4], %s2222
      %s2225 = sshll.u32 [#allocation3], 4
      %s2226 = int_to_ptr.vmem [resolvable:$true] %s2225
      %2228 = dma.vmem_to_hbm [thread:$0]  %s2226, 32, %s20, [#allocation4]
    $region85: #{_lambda_.7} parent=1 // pred_fallthru
      _
    // Predicated region
    $region86: #{_lambda_.7} parent=1 // pred_check
      _
    $region87: #{_lambda_.7} parent=1 // pred_check_branch
      %2230 = sbr.rel (0) target = $region89
    $region88: #{_lambda_.7} parent=1 // pred_region
      %2231 = dma.done [#allocation4], 32
    $region89: #{_lambda_.7} parent=1 // pred_fallthru
      _
    %2232 = vsyncpa [#allocation4], 1

</llo_original>
